<compile_context>
chip_gen: v5e
topology: v5e:2x2
jax: 0.10.0
libtpu: 0.0.40
codegen_flags: <defaults>
</compile_context>

<pallas_src>
import functools

import jax
import jax.numpy as jnp
from jax.experimental import pallas as pl
from jax.experimental.pallas import tpu as pltpu

_LANE = 128


# ---------------------------------------------------------------------------
# Tiling / padding helpers (plain Python ints, resolved at trace time).
# ---------------------------------------------------------------------------

def _pad_and_tile(n, max_tile_lanes=2048):
    """Choose (padded_n, tile_n, grid_n) for a flat lane extent `n`.

    padded_n = tile_n * grid_n with tile_n a multiple of 128, so every grid step
    writes a full, unmasked, lane-dense output tile (biggest measured lever,
    especially on v5e's single vector-store slot).  grid_n is kept even (>= 2)
    whenever there is more than one 128-lane block of work so both v7x
    TensorCores get balanced work.
    """
    blocks = pl.cdiv(n, _LANE)
    max_blocks = max_tile_lanes // _LANE
    if blocks <= max_blocks:
        grid = 2 if blocks >= 2 else 1
    else:
        grid = pl.cdiv(blocks, max_blocks)
        if grid % 2:
            grid += 1
    tile_blocks = pl.cdiv(blocks, grid)
    tile_n = tile_blocks * _LANE
    return tile_n * grid, tile_n, grid


@functools.lru_cache(maxsize=None)
def _vmem_limit_bytes():
    # Generation-aware VMEM cap: ~100 MiB on v5e/v6e (128 MiB physical),
    # ~48 MiB on v7x (64 MiB physical).
    try:
        cap = int(pltpu.get_tpu_info().vmem_capacity_bytes)
    except Exception:
        cap = 64 * 1024 * 1024
    return max(32 * 1024 * 1024, min(cap - 16 * 1024 * 1024, 100 * 1024 * 1024))


# ---------------------------------------------------------------------------
# Fused conv (shifted-window taps) + BN-shift + activation (+ residual, + regress) kernel.
# ---------------------------------------------------------------------------

def _conv_bn_act_kernel(*refs, tap_offsets, tile_n, relu, has_res, has_reg, halo):
    """acc = sum_t  W'[t] @ x[:, off_t : off_t + tile_n]          (W' has BN scale folded)
       y   = [relu](acc + shift) [+ residual]
       optional fused regress head:  p = tanh(W_reg @ y)          (all accumulation in f32)
    """
    it = iter(refs)
    x_lo = next(it)                       # (C_in, tile_n)        current tile
    x_hi = next(it) if halo else None     # (C_in, tile_n)        next tile (halo for taps)
    w = next(it)                          # (n_taps, C_out, C_in) BN-scaled weights
    shift = next(it)                      # (C_out, 1)            folded BN shift
    res = next(it) if has_res else None   # (C_out, tile_n)       residual (block input)
    wreg = next(it) if has_reg else None  # (out_nc, C_out)       regress weight
    out = next(it)                        # (C_out, tile_n)
    reg_out = next(it) if has_reg else None  # (out_nc, tile_n)
    xw = next(it) if halo else None       # VMEM scratch (C_in, 2*tile_n)

    if halo:
        # Assemble a contiguous window [j*tile_n, (j+2)*tile_n) so every shifted tap
        # slice stays inside one VMEM buffer (aligned stores, unaligned tap loads).
        xw[:, :tile_n] = x_lo[...]
        xw[:, tile_n:] = x_hi[...]

    acc = None
    for t, off in enumerate(tap_offsets):
        xs = xw[:, off:off + tile_n] if halo else x_lo[...]
        part = jnp.dot(w[t], xs, preferred_element_type=jnp.float32)
        acc = part if acc is None else acc + part

    acc = acc + shift[...]
    if relu:
        acc = jnp.maximum(acc, 0.0)
    if has_res:
        acc = acc + res[...].astype(jnp.float32)
    out[...] = acc.astype(out.dtype)

    if has_reg:
        reg = jnp.dot(wreg[...], acc, preferred_element_type=jnp.float32)
        reg_out[...] = jnp.tanh(reg).astype(reg_out.dtype)


def fused_conv(x_flat, w_taps, shift, *, tap_offsets, out_len, tile_n, grid_n,
               relu=False, residual=None, w_reg=None):
    """Run the fused conv kernel over a flat, channel-major activation.

    x_flat  : (C_in, L_in)  flat activation; for 3x3 convs this is the reflect-padded
              "frame" layout (valid pixel (b,y,x) of the output reads taps at flat
              offsets dy*Wpp + dx), and L_in >= out_len + tile_n (halo tile).
    w_taps  : (n_taps, C_out, C_in) per-tap weights with the BN scale already folded in.
    shift   : (C_out, 1) folded BN shift.
    residual: (C_out, out_len) or None; added after the BN shift (no activation).
    w_reg   : (out_nc, C_out) or None; fused regress 1x1 conv + tanh second output.
    """
    c_in = x_flat.shape[0]
    n_taps, c_out, _ = w_taps.shape
    halo = max(tap_offsets) > 0
    has_res = residual is not None
    has_reg = w_reg is not None
    if halo:
        assert max(tap_offsets) < tile_n, "tap window exceeds the halo tile"
        assert x_flat.shape[1] >= out_len + tile_n, "missing halo lanes on the input"

    in_specs = [pl.BlockSpec((c_in, tile_n), lambda j: (0, j))]
    args = [x_flat]
    if halo:
        # Halo operand: the next tile of the same array (index j+1).  Never OOB because
        # the wrapper pads the input to out_len + tile_n lanes.
        in_specs.append(pl.BlockSpec((c_in, tile_n), lambda j: (0, j + 1)))
        args.append(x_flat)
    in_specs += [
        pl.BlockSpec((n_taps, c_out, c_in), lambda j: (0, 0, 0)),  # resident weights
        pl.BlockSpec((c_out, 1), lambda j: (0, 0)),                # folded BN shift
    ]
    args += [w_taps, shift]

    io_aliases = {}
    if has_res:
        io_aliases = {len(args): 0}   # reuse the residual buffer in place for the output
        in_specs.append(pl.BlockSpec((c_out, tile_n), lambda j: (0, j)))
        args.append(residual)
    if has_reg:
        out_nc = w_reg.shape[0]
        in_specs.append(pl.BlockSpec((out_nc, c_out), lambda j: (0, 0)))
        args.append(w_reg)

    out_shape = jax.ShapeDtypeStruct((c_out, out_len), jnp.float32)
    out_specs = pl.BlockSpec((c_out, tile_n), lambda j: (0, j))
    if has_reg:
        out_shape = (out_shape,
                     jax.ShapeDtypeStruct((w_reg.shape[0], out_len), jnp.float32))
        out_specs = (out_specs,
                     pl.BlockSpec((w_reg.shape[0], tile_n), lambda j: (0, j)))

    scratch = []
    if halo:
        scratch.append(pltpu.VMEM((c_in, 2 * tile_n), jnp.float32))

    kernel = functools.partial(
        _conv_bn_act_kernel, tap_offsets=tuple(tap_offsets), tile_n=tile_n,
        relu=relu, has_res=has_res, has_reg=has_reg, halo=halo)

    return pl.pallas_call(
        kernel,
        out_shape=out_shape,
        grid_spec=pltpu.PrefetchScalarGridSpec(
            num_scalar_prefetch=0,
            grid=(grid_n,),
            in_specs=in_specs,
            out_specs=out_specs,
            scratch_shapes=tuple(scratch)),
        input_output_aliases=io_aliases,
        compiler_params=pltpu.CompilerParams(
            dimension_semantics=("parallel",),      # shards tiles across 2 TCs on v7x
            vmem_limit_bytes=_vmem_limit_bytes()),
    )(*args)


# ---------------------------------------------------------------------------
# Layout helpers (cheap jnp ops on small arrays, fused by XLA inside the jit).
# ---------------------------------------------------------------------------

def _bn_scale_shift(gamma, beta, mean, var, eps=1e-5):
    scale = gamma / jnp.sqrt(var + eps)
    shift = beta - mean * scale
    return scale.reshape(-1, 1), shift.reshape(-1, 1)


def _scaled_tap_weights(w, scale):
    # (C_out, C_in, kh, kw) -> (kh*kw, C_out, C_in), tap order (dy, dx), with the BN
    # scale folded per output channel (wrapper-side fold on the tiny weight tensor).
    c_out, c_in = w.shape[0], w.shape[1]
    taps = jnp.transpose(w, (2, 3, 0, 1)).reshape(-1, c_out, c_in)
    return taps * scale[None, :, :]


def _flat_lanes(x_cm, target_len):
    # (C, ...) channel-major -> (C, target_len) with zero lane padding.
    c = x_cm.shape[0]
    flat = x_cm.reshape(c, -1)
    return jnp.pad(flat, ((0, 0), (0, target_len - flat.shape[1])))


def _to_frame(feat_valid, target_len):
    # (C, B, Hs, Ws) -> reflect pad -> flat "frame" layout (C, B*Hpp*Wpp), lane padded.
    fr = jnp.pad(feat_valid, ((0, 0), (0, 0), (1, 1), (1, 1)), mode="reflect")
    return _flat_lanes(fr, target_len)


def _from_frame(flat, b, hpp, wpp, hs, ws):
    # (C, >=B*Hpp*Wpp) frame-anchored output -> valid (C, B, Hs, Ws).
    c = flat.shape[0]
    return flat[:, :b * hpp * wpp].reshape(c, b, hpp, wpp)[:, :, :hs, :ws]


# ---------------------------------------------------------------------------
# Augmenter forward (Pallas) and pure-JAX reference.
# ---------------------------------------------------------------------------

def augmenter_forward(params, x):
    """Pallas forward of Augmenter (use_cgtx=False, use_dropout=False, eval-mode BN)."""
    b, c_in, h, w = x.shape
    nc = params["stem_w"].shape[0]
    out_nc = params["regress_w"].shape[0]
    hs, ws = h + 2, w + 2            # spatial after the stem's ReflectionPad2d(1)
    hpp, wpp = hs + 2, ws + 2        # padded "frame" inside each ResnetBlock

    # ---- stem: ReflectionPad2d(1) -> 1x1 conv -> BN -> ReLU -----------------
    xp = jnp.pad(x, ((0, 0), (0, 0), (1, 1), (1, 1)), mode="reflect")
    x_cm = jnp.transpose(xp, (1, 0, 2, 3))                    # (c_in, b, hs, ws)
    lv = b * hs * ws
    lv_pad, tn_v, g_v = _pad_and_tile(lv)
    s0, t0 = _bn_scale_shift(*params["stem_bn"])
    feat_flat = fused_conv(
        _flat_lanes(x_cm, lv_pad),
        _scaled_tap_weights(params["stem_w"], s0), t0,
        tap_offsets=(0,), out_len=lv_pad, tile_n=tn_v, grid_n=g_v, relu=True)
    feat = feat_flat[:, :lv].reshape(nc, b, hs, ws)           # channel-major valid feature

    # ---- ResNet blocks (+ fused regress head on the last conv2) -------------
    lf = b * hpp * wpp
    lf_pad, tn_f, g_f = _pad_and_tile(lf)
    lin_pad = lf_pad + tn_f                                   # + one halo tile of lanes
    offs = tuple(dy * wpp + dx for dy in range(3) for dx in range(3))
    w_reg = params["regress_w"].reshape(out_nc, nc)

    p_flat = None
    n_blocks = len(params["blocks"])
    for bi, blk in enumerate(params["blocks"]):
        s1, t1 = _bn_scale_shift(*blk["bn1"])
        s2, t2 = _bn_scale_shift(*blk["bn2"])

        feat_frame = _to_frame(feat, lin_pad)                 # (nc, lin_pad)
        h1_flat = fused_conv(feat_frame, _scaled_tap_weights(blk["w1"], s1), t1,
                             tap_offsets=offs, out_len=lf_pad, tile_n=tn_f,
                             grid_n=g_f, relu=True)
        h1 = _from_frame(h1_flat, b, hpp, wpp, hs, ws)
        h1_frame = _to_frame(h1, lin_pad)

        # Residual aligned with the frame-anchored conv2 output: the block input's valid
        # pixel for output position p lives at frame offset p + wpp + 1.
        res = feat_frame[:, wpp + 1: wpp + 1 + lf_pad]

        last = bi == n_blocks - 1
        outs = fused_conv(h1_frame, _scaled_tap_weights(blk["w2"], s2), t2,
                          tap_offsets=offs, out_len=lf_pad, tile_n=tn_f,
                          grid_n=g_f, relu=False, residual=res,
                          w_reg=w_reg if last else None)
        if last:
            _, p_flat = outs                                  # fused regress (tanh) output
        else:
            feat = _from_frame(outs, b, hpp, wpp, hs, ws)

    p = _from_frame(p_flat, b, hpp, wpp, hs, ws)              # (out_nc, b, hs, ws)
    return jnp.transpose(p, (1, 0, 2, 3))                     # (b, out_nc, hs, ws)


def _conv_ref(x, w):
    return jax.lax.conv_general_dilated(
        x, w, window_strides=(1, 1), padding="VALID",
        dimension_numbers=("NCHW", "OIHW", "NCHW"),
        precision=jax.lax.Precision.HIGHEST)


def _bn_ref(x, gamma, beta, mean, var, eps=1e-5):
    inv = gamma / jnp.sqrt(var + eps)
    return x * inv[None, :, None, None] + (beta - mean * inv)[None, :, None, None]


def _reflect_pad_ref(x):
    return jnp.pad(x, ((0, 0), (0, 0), (1, 1), (1, 1)), mode="reflect")


def augmenter_ref(params, x):
    h = jax.nn.relu(_bn_ref(_conv_ref(_reflect_pad_ref(x), params["stem_w"]),
                            *params["stem_bn"]))
    for blk in params["blocks"]:
        t = jax.nn.relu(_bn_ref(_conv_ref(_reflect_pad_ref(h), blk["w1"]), *blk["bn1"]))
        t = _bn_ref(_conv_ref(_reflect_pad_ref(t), blk["w2"]), *blk["bn2"])
        h = h + t
    return jnp.tanh(_conv_ref(h, params["regress_w"]))


# ---------------------------------------------------------------------------
# Deterministic parameter construction.
# ---------------------------------------------------------------------------

def init_params(key, input_nc, output_nc, nc=32, n_blocks=3):
    def conv_w(k, c_out, c_in, ksz):
        fan_in = c_in * ksz * ksz
        bound = 1.0 / jnp.sqrt(jnp.float32(fan_in))
        return jax.random.uniform(k, (c_out, c_in, ksz, ksz),
                                  minval=-bound, maxval=bound, dtype=jnp.float32)

    def bn_p(k, c):
        k1, k2, k3, k4 = jax.random.split(k, 4)
        gamma = jax.random.uniform(k1, (c,), minval=0.5, maxval=1.5, dtype=jnp.float32)
        beta = 0.1 * jax.random.normal(k2, (c,), dtype=jnp.float32)
        mean = 0.1 * jax.random.normal(k3, (c,), dtype=jnp.float32)
        var = jax.random.uniform(k4, (c,), minval=0.5, maxval=1.5, dtype=jnp.float32)
        return (gamma, beta, mean, var)

    keys = jax.random.split(key, 3 + n_blocks)
    params = {
        "stem_w": conv_w(keys[0], nc, input_nc, 1),
        "stem_bn": bn_p(keys[1], nc),
        "regress_w": conv_w(keys[2], output_nc, nc, 1),
        "blocks": [],
    }
    for i in range(n_blocks):
        kb = jax.random.split(keys[3 + i], 4)
        params["blocks"].append({
            "w1": conv_w(kb[0], nc, nc, 3),
            "bn1": bn_p(kb[1], nc),
            "w2": conv_w(kb[2], nc, nc, 3),
            "bn2": bn_p(kb[3], nc),
        })
    return params


if __name__ == "__main__":
    # Small synthetic config: input_nc = output_nc = 4, nc = 32, n_blocks = 3.
    B, C_IN, H, W = 2, 4, 16, 16
    NC, N_BLOCKS = 32, 3

    key = jax.random.PRNGKey(0)
    k_x, k_p = jax.random.split(key)
    x = jax.random.normal(k_x, (B, C_IN, H, W), dtype=jnp.float32)
    params = init_params(k_p, input_nc=C_IN, output_nc=C_IN, nc=NC, n_blocks=N_BLOCKS)

    fwd = jax.jit(augmenter_forward)
    out = fwd(params, x)
    jax.block_until_ready(out)

    ref = augmenter_ref(params, x)
    # Output spatial grows by 2 (ReflectionPad2d(1) before the 1x1 stem conv).
    assert out.shape == (B, C_IN, H + 2, W + 2), out.shape
    assert bool(jnp.allclose(out, ref, atol=2e-3, rtol=2e-3)), \
        float(jnp.max(jnp.abs(out - ref)))

    print("KERNEL_OK")
</pallas_src>

<mosaic_0001>
module attributes {stable_mosaic.version = 11 : i64} {
  func.func @_conv_bn_act_kernel(%arg0: i32, %arg1: memref<4x384xf32, #tpu.memory_space<vmem>>, %arg2: memref<1x32x4xf32, #tpu.memory_space<vmem>>, %arg3: memref<32x1xf32, #tpu.memory_space<vmem>>, %arg4: memref<32x384xf32, #tpu.memory_space<vmem>>) attributes {dimension_semantics = [#tpu.dimension_semantics<parallel>], iteration_bounds = array<i64: 2>, scalar_prefetch = 0 : i64, scratch_operands = 0 : i64, tpu.core_type = #tpu.core_type<tc>, window_params = [{transform_indices = @transform_0, window_bounds = array<i64: 4, 384>}, {pipeline_mode = #tpu.pipeline_mode<synchronous>, transform_indices = @transform_1, window_bounds = array<i64: 1, 32, 4>}, {pipeline_mode = #tpu.pipeline_mode<synchronous>, transform_indices = @transform_2, window_bounds = array<i64: 32, 1>}, {transform_indices = @transform_3, window_bounds = array<i64: 32, 384>}]} {
    %c0 = arith.constant 0 : index
    %c0_0 = arith.constant 0 : index
    %0 = vector.load %arg1[%c0, %c0_0] : memref<4x384xf32, #tpu.memory_space<vmem>>, vector<4x384xf32>
    %c0_1 = arith.constant 0 : index
    %c0_2 = arith.constant 0 : index
    %c0_3 = arith.constant 0 : index
    %1 = vector.load %arg2[%c0_1, %c0_2, %c0_3] : memref<1x32x4xf32, #tpu.memory_space<vmem>>, vector<1x32x4xf32>
    %2 = vector.shape_cast %1 : vector<1x32x4xf32> to vector<32x4xf32>
    %cst = arith.constant dense<0.000000e+00> : vector<32x384xf32>
    %3 = tpu.matmul %2, %0, %cst {dimension_numbers = #tpu.dot_dimension_numbers<[1], [0], [0], [1], [0, 0, 1, 1], [], []>} : vector<32x4xf32>, vector<4x384xf32>, vector<32x384xf32> -> vector<32x384xf32>
    %c0_4 = arith.constant 0 : index
    %c0_5 = arith.constant 0 : index
    %4 = vector.load %arg3[%c0_4, %c0_5] : memref<32x1xf32, #tpu.memory_space<vmem>>, vector<32x1xf32>
    %5 = vector.broadcast %4 : vector<32x1xf32> to vector<32x384xf32>
    %6 = arith.addf %3, %5 : vector<32x384xf32>
    %cst_6 = arith.constant 0.000000e+00 : f32
    %7 = vector.broadcast %cst_6 : f32 to vector<32x384xf32>
    %8 = arith.maximumf %6, %7 : vector<32x384xf32>
    %c0_7 = arith.constant 0 : index
    %c0_8 = arith.constant 0 : index
    %9 = vector.load %arg4[%c0_7, %c0_8] : memref<32x384xf32, #tpu.memory_space<vmem>>, vector<32x384xf32>
    tpu.vector_store %arg4[%c0_7, %c0_8], %8 {strides = array<i32>} : memref<32x384xf32, #tpu.memory_space<vmem>>, vector<32x384xf32>,
    return
  }
  func.func @transform_0(%arg0: i32) -> (i32, i32) {
    %c0_i32 = arith.constant 0 : i32
    %c0_i32_0 = arith.constant 0 : i32
    return %c0_i32, %arg0 : i32, i32
  }
  func.func @transform_1(%arg0: i32) -> (i32, i32, i32) {
    %c0_i32 = arith.constant 0 : i32
    %c0_i32_0 = arith.constant 0 : i32
    %c0_i32_1 = arith.constant 0 : i32
    %c0_i32_2 = arith.constant 0 : i32
    return %c0_i32, %c0_i32_0, %c0_i32_1 : i32, i32, i32
  }
  func.func @transform_2(%arg0: i32) -> (i32, i32) {
    %c0_i32 = arith.constant 0 : i32
    %c0_i32_0 = arith.constant 0 : i32
    %c0_i32_1 = arith.constant 0 : i32
    return %c0_i32, %c0_i32_0 : i32, i32
  }
  func.func @transform_3(%arg0: i32) -> (i32, i32) {
    %c0_i32 = arith.constant 0 : i32
    %c0_i32_0 = arith.constant 0 : i32
    return %c0_i32, %arg0 : i32, i32
  }
}

module attributes {stable_mosaic.version = 11 : i64} {
  func.func @_conv_bn_act_kernel(%arg0: i32, %arg1: memref<32x512xf32, #tpu.memory_space<vmem>>, %arg2: memref<32x512xf32, #tpu.memory_space<vmem>>, %arg3: memref<9x32x32xf32, #tpu.memory_space<vmem>>, %arg4: memref<32x1xf32, #tpu.memory_space<vmem>>, %arg5: memref<32x512xf32, #tpu.memory_space<vmem>>, %arg6: memref<32x1024xf32, #tpu.memory_space<vmem>>) attributes {dimension_semantics = [#tpu.dimension_semantics<parallel>], iteration_bounds = array<i64: 2>, scalar_prefetch = 0 : i64, scratch_operands = 1 : i64, tpu.core_type = #tpu.core_type<tc>, window_params = [{transform_indices = @transform_0, window_bounds = array<i64: 32, 512>}, {transform_indices = @transform_1, window_bounds = array<i64: 32, 512>}, {pipeline_mode = #tpu.pipeline_mode<synchronous>, transform_indices = @transform_2, window_bounds = array<i64: 9, 32, 32>}, {pipeline_mode = #tpu.pipeline_mode<synchronous>, transform_indices = @transform_3, window_bounds = array<i64: 32, 1>}, {transform_indices = @transform_4, window_bounds = array<i64: 32, 512>}]} {
    %c0 = arith.constant 0 : index
    %c0_0 = arith.constant 0 : index
    %0 = vector.load %arg1[%c0, %c0_0] : memref<32x512xf32, #tpu.memory_space<vmem>>, vector<32x512xf32>
    %c0_1 = arith.constant 0 : index
    %c0_2 = arith.constant 0 : index
    %1 = vector.load %arg6[%c0_1, %c0_2] : memref<32x1024xf32, #tpu.memory_space<vmem>>, vector<32x512xf32>
    tpu.vector_store %arg6[%c0_1, %c0_2], %0 {strides = array<i32>} : memref<32x1024xf32, #tpu.memory_space<vmem>>, vector<32x512xf32>,
    %c0_3 = arith.constant 0 : index
    %c0_4 = arith.constant 0 : index
    %2 = vector.load %arg2[%c0_3, %c0_4] : memref<32x512xf32, #tpu.memory_space<vmem>>, vector<32x512xf32>
    %c0_5 = arith.constant 0 : index
    %c512 = arith.constant 512 : index
    %3 = vector.load %arg6[%c0_5, %c512] : memref<32x1024xf32, #tpu.memory_space<vmem>>, vector<32x512xf32>
    tpu.vector_store %arg6[%c0_5, %c512], %2 {strides = array<i32>} : memref<32x1024xf32, #tpu.memory_space<vmem>>, vector<32x512xf32>,
    %c0_6 = arith.constant 0 : index
    %c0_7 = arith.constant 0 : index
    %4 = vector.load %arg6[%c0_6, %c0_7] : memref<32x1024xf32, #tpu.memory_space<vmem>>, vector<32x512xf32>
    %c0_8 = arith.constant 0 : index
    %c0_9 = arith.constant 0 : index
    %c0_10 = arith.constant 0 : index
    %5 = vector.load %arg3[%c0_8, %c0_9, %c0_10] : memref<9x32x32xf32, #tpu.memory_space<vmem>>, vector<1x32x32xf32>
    %6 = vector.shape_cast %5 : vector<1x32x32xf32> to vector<32x32xf32>
    %cst = arith.constant dense<0.000000e+00> : vector<32x512xf32>
    %7 = tpu.matmul %6, %4, %cst {dimension_numbers = #tpu.dot_dimension_numbers<[1], [0], [0], [1], [0, 0, 1, 1], [], []>} : vector<32x32xf32>, vector<32x512xf32>, vector<32x512xf32> -> vector<32x512xf32>
    %c0_11 = arith.constant 0 : index
    %c1 = arith.constant 1 : index
    %8 = vector.load %arg6[%c0_11, %c1] : memref<32x1024xf32, #tpu.memory_space<vmem>>, vector<32x512xf32>
    %c1_12 = arith.constant 1 : index
    %c0_13 = arith.constant 0 : index
    %c0_14 = arith.constant 0 : index
    %9 = vector.load %arg3[%c1_12, %c0_13, %c0_14] : memref<9x32x32xf32, #tpu.memory_space<vmem>>, vector<1x32x32xf32>
    %10 = vector.shape_cast %9 : vector<1x32x32xf32> to vector<32x32xf32>
    %cst_15 = arith.constant dense<0.000000e+00> : vector<32x512xf32>
    %11 = tpu.matmul %10, %8, %cst_15 {dimension_numbers = #tpu.dot_dimension_numbers<[1], [0], [0], [1], [0, 0, 1, 1], [], []>} : vector<32x32xf32>, vector<32x512xf32>, vector<32x512xf32> -> vector<32x512xf32>
    %12 = arith.addf %7, %11 : vector<32x512xf32>
    %c0_16 = arith.constant 0 : index
    %c2 = arith.constant 2 : index
    %13 = vector.load %arg6[%c0_16, %c2] : memref<32x1024xf32, #tpu.memory_space<vmem>>, vector<32x512xf32>
    %c2_17 = arith.constant 2 : index
    %c0_18 = arith.constant 0 : index
    %c0_19 = arith.constant 0 : index
    %14 = vector.load %arg3[%c2_17, %c0_18, %c0_19] : memref<9x32x32xf32, #tpu.memory_space<vmem>>, vector<1x32x32xf32>
    %15 = vector.shape_cast %14 : vector<1x32x32xf32> to vector<32x32xf32>
    %cst_20 = arith.constant dense<0.000000e+00> : vector<32x512xf32>
    %16 = tpu.matmul %15, %13, %cst_20 {dimension_numbers = #tpu.dot_dimension_numbers<[1], [0], [0], [1], [0, 0, 1, 1], [], []>} : vector<32x32xf32>, vector<32x512xf32>, vector<32x512xf32> -> vector<32x512xf32>
    %17 = arith.addf %12, %16 : vector<32x512xf32>
    %c0_21 = arith.constant 0 : index
    %c20 = arith.constant 20 : index
    %18 = vector.load %arg6[%c0_21, %c20] : memref<32x1024xf32, #tpu.memory_space<vmem>>, vector<32x512xf32>
    %c3 = arith.constant 3 : index
    %c0_22 = arith.constant 0 : index
    %c0_23 = arith.constant 0 : index
    %19 = vector.load %arg3[%c3, %c0_22, %c0_23] : memref<9x32x32xf32, #tpu.memory_space<vmem>>, vector<1x32x32xf32>
    %20 = vector.shape_cast %19 : vector<1x32x32xf32> to vector<32x32xf32>
    %cst_24 = arith.constant dense<0.000000e+00> : vector<32x512xf32>
    %21 = tpu.matmul %20, %18, %cst_24 {dimension_numbers = #tpu.dot_dimension_numbers<[1], [0], [0], [1], [0, 0, 1, 1], [], []>} : vector<32x32xf32>, vector<32x512xf32>, vector<32x512xf32> -> vector<32x512xf32>
    %22 = arith.addf %17, %21 : vector<32x512xf32>
    %c0_25 = arith.constant 0 : index
    %c21 = arith.constant 21 : index
    %23 = vector.load %arg6[%c0_25, %c21] : memref<32x1024xf32, #tpu.memory_space<vmem>>, vector<32x512xf32>
    %c4 = arith.constant 4 : index
    %c0_26 = arith.constant 0 : index
    %c0_27 = arith.constant 0 : index
    %24 = vector.load %arg3[%c4, %c0_26, %c0_27] : memref<9x32x32xf32, #tpu.memory_space<vmem>>, vector<1x32x32xf32>
    %25 = vector.shape_cast %24 : vector<1x32x32xf32> to vector<32x32xf32>
    %cst_28 = arith.constant dense<0.000000e+00> : vector<32x512xf32>
    %26 = tpu.matmul %25, %23, %cst_28 {dimension_numbers = #tpu.dot_dimension_numbers<[1], [0], [0], [1], [0, 0, 1, 1], [], []>} : vector<32x32xf32>, vector<32x512xf32>, vector<32x512xf32> -> vector<32x512xf32>
    %27 = arith.addf %22, %26 : vector<32x512xf32>
    %c0_29 = arith.constant 0 : index
    %c22 = arith.constant 22 : index
    %28 = vector.load %arg6[%c0_29, %c22] : memref<32x1024xf32, #tpu.memory_space<vmem>>, vector<32x512xf32>
    %c5 = arith.constant 5 : index
    %c0_30 = arith.constant 0 : index
    %c0_31 = arith.constant 0 : index
    %29 = vector.load %arg3[%c5, %c0_30, %c0_31] : memref<9x32x32xf32, #tpu.memory_space<vmem>>, vector<1x32x32xf32>
    %30 = vector.shape_cast %29 : vector<1x32x32xf32> to vector<32x32xf32>
    %cst_32 = arith.constant dense<0.000000e+00> : vector<32x512xf32>
    %31 = tpu.matmul %30, %28, %cst_32 {dimension_numbers = #tpu.dot_dimension_numbers<[1], [0], [0], [1], [0, 0, 1, 1], [], []>} : vector<32x32xf32>, vector<32x512xf32>, vector<32x512xf32> -> vector<32x512xf32>
    %32 = arith.addf %27, %31 : vector<32x512xf32>
    %c0_33 = arith.constant 0 : index
    %c40 = arith.constant 40 : index
    %33 = vector.load %arg6[%c0_33, %c40] : memref<32x1024xf32, #tpu.memory_space<vmem>>, vector<32x512xf32>
    %c6 = arith.constant 6 : index
    %c0_34 = arith.constant 0 : index
    %c0_35 = arith.constant 0 : index
    %34 = vector.load %arg3[%c6, %c0_34, %c0_35] : memref<9x32x32xf32, #tpu.memory_space<vmem>>, vector<1x32x32xf32>
    %35 = vector.shape_cast %34 : vector<1x32x32xf32> to vector<32x32xf32>
    %cst_36 = arith.constant dense<0.000000e+00> : vector<32x512xf32>
    %36 = tpu.matmul %35, %33, %cst_36 {dimension_numbers = #tpu.dot_dimension_numbers<[1], [0], [0], [1], [0, 0, 1, 1], [], []>} : vector<32x32xf32>, vector<32x512xf32>, vector<32x512xf32> -> vector<32x512xf32>
    %37 = arith.addf %32, %36 : vector<32x512xf32>
    %c0_37 = arith.constant 0 : index
    %c41 = arith.constant 41 : index
    %38 = vector.load %arg6[%c0_37, %c41] : memref<32x1024xf32, #tpu.memory_space<vmem>>, vector<32x512xf32>
    %c7 = arith.constant 7 : index
    %c0_38 = arith.constant 0 : index
    %c0_39 = arith.constant 0 : index
    %39 = vector.load %arg3[%c7, %c0_38, %c0_39] : memref<9x32x32xf32, #tpu.memory_space<vmem>>, vector<1x32x32xf32>
    %40 = vector.shape_cast %39 : vector<1x32x32xf32> to vector<32x32xf32>
    %cst_40 = arith.constant dense<0.000000e+00> : vector<32x512xf32>
    %41 = tpu.matmul %40, %38, %cst_40 {dimension_numbers = #tpu.dot_dimension_numbers<[1], [0], [0], [1], [0, 0, 1, 1], [], []>} : vector<32x32xf32>, vector<32x512xf32>, vector<32x512xf32> -> vector<32x512xf32>
    %42 = arith.addf %37, %41 : vector<32x512xf32>
    %c0_41 = arith.constant 0 : index
    %c42 = arith.constant 42 : index
    %43 = vector.load %arg6[%c0_41, %c42] : memref<32x1024xf32, #tpu.memory_space<vmem>>, vector<32x512xf32>
    %c8 = arith.constant 8 : index
    %c0_42 = arith.constant 0 : index
    %c0_43 = arith.constant 0 : index
    %44 = vector.load %arg3[%c8, %c0_42, %c0_43] : memref<9x32x32xf32, #tpu.memory_space<vmem>>, vector<1x32x32xf32>
    %45 = vector.shape_cast %44 : vector<1x32x32xf32> to vector<32x32xf32>
    %cst_44 = arith.constant dense<0.000000e+00> : vector<32x512xf32>
    %46 = tpu.matmul %45, %43, %cst_44 {dimension_numbers = #tpu.dot_dimension_numbers<[1], [0], [0], [1], [0, 0, 1, 1], [], []>} : vector<32x32xf32>, vector<32x512xf32>, vector<32x512xf32> -> vector<32x512xf32>
    %47 = arith.addf %42, %46 : vector<32x512xf32>
    %c0_45 = arith.constant 0 : index
    %c0_46 = arith.constant 0 : index
    %48 = vector.load %arg4[%c0_45, %c0_46] : memref<32x1xf32, #tpu.memory_space<vmem>>, vector<32x1xf32>
    %49 = vector.broadcast %48 : vector<32x1xf32> to vector<32x512xf32>
    %50 = arith.addf %47, %49 : vector<32x512xf32>
    %cst_47 = arith.constant 0.000000e+00 : f32
    %51 = vector.broadcast %cst_47 : f32 to vector<32x512xf32>
    %52 = arith.maximumf %50, %51 : vector<32x512xf32>
    %c0_48 = arith.constant 0 : index
    %c0_49 = arith.constant 0 : index
    %53 = vector.load %arg5[%c0_48, %c0_49] : memref<32x512xf32, #tpu.memory_space<vmem>>, vector<32x512xf32>
    tpu.vector_store %arg5[%c0_48, %c0_49], %52 {strides = array<i32>} : memref<32x512xf32, #tpu.memory_space<vmem>>, vector<32x512xf32>,
    return
  }
  func.func @transform_0(%arg0: i32) -> (i32, i32) {
    %c0_i32 = arith.constant 0 : i32
    %c0_i32_0 = arith.constant 0 : i32
    return %c0_i32, %arg0 : i32, i32
  }
  func.func @transform_1(%arg0: i32) -> (i32, i32) {
    %c1_i32 = arith.constant 1 : i32
    %0 = arith.addi %arg0, %c1_i32 : i32
    %c0_i32 = arith.constant 0 : i32
    %c0_i32_0 = arith.constant 0 : i32
    return %c0_i32, %0 : i32, i32
  }
  func.func @transform_2(%arg0: i32) -> (i32, i32, i32) {
    %c0_i32 = arith.constant 0 : i32
    %c0_i32_0 = arith.constant 0 : i32
    %c0_i32_1 = arith.constant 0 : i32
    %c0_i32_2 = arith.constant 0 : i32
    return %c0_i32, %c0_i32_0, %c0_i32_1 : i32, i32, i32
  }
  func.func @transform_3(%arg0: i32) -> (i32, i32) {
    %c0_i32 = arith.constant 0 : i32
    %c0_i32_0 = arith.constant 0 : i32
    %c0_i32_1 = arith.constant 0 : i32
    return %c0_i32, %c0_i32_0 : i32, i32
  }
  func.func @transform_4(%arg0: i32) -> (i32, i32) {
    %c0_i32 = arith.constant 0 : i32
    %c0_i32_0 = arith.constant 0 : i32
    return %c0_i32, %arg0 : i32, i32
  }
}

module attributes {stable_mosaic.version = 11 : i64} {
  func.func @_conv_bn_act_kernel(%arg0: i32, %arg1: memref<32x512xf32, #tpu.memory_space<vmem>>, %arg2: memref<32x512xf32, #tpu.memory_space<vmem>>, %arg3: memref<9x32x32xf32, #tpu.memory_space<vmem>>, %arg4: memref<32x1xf32, #tpu.memory_space<vmem>>, %arg5: memref<32x512xf32, #tpu.memory_space<vmem>>, %arg6: memref<32x512xf32, #tpu.memory_space<vmem>>, %arg7: memref<32x1024xf32, #tpu.memory_space<vmem>>) attributes {dimension_semantics = [#tpu.dimension_semantics<parallel>], iteration_bounds = array<i64: 2>, scalar_prefetch = 0 : i64, scratch_operands = 1 : i64, tpu.core_type = #tpu.core_type<tc>, window_params = [{transform_indices = @transform_0, window_bounds = array<i64: 32, 512>}, {transform_indices = @transform_1, window_bounds = array<i64: 32, 512>}, {pipeline_mode = #tpu.pipeline_mode<synchronous>, transform_indices = @transform_2, window_bounds = array<i64: 9, 32, 32>}, {pipeline_mode = #tpu.pipeline_mode<synchronous>, transform_indices = @transform_3, window_bounds = array<i64: 32, 1>}, {transform_indices = @transform_4, window_bounds = array<i64: 32, 512>}, {transform_indices = @transform_5, window_bounds = array<i64: 32, 512>}]} {
    %c0 = arith.constant 0 : index
    %c0_0 = arith.constant 0 : index
    %0 = vector.load %arg1[%c0, %c0_0] : memref<32x512xf32, #tpu.memory_space<vmem>>, vector<32x512xf32>
    %c0_1 = arith.constant 0 : index
    %c0_2 = arith.constant 0 : index
    %1 = vector.load %arg7[%c0_1, %c0_2] : memref<32x1024xf32, #tpu.memory_space<vmem>>, vector<32x512xf32>
    tpu.vector_store %arg7[%c0_1, %c0_2], %0 {strides = array<i32>} : memref<32x1024xf32, #tpu.memory_space<vmem>>, vector<32x512xf32>,
    %c0_3 = arith.constant 0 : index
    %c0_4 = arith.constant 0 : index
    %2 = vector.load %arg2[%c0_3, %c0_4] : memref<32x512xf32, #tpu.memory_space<vmem>>, vector<32x512xf32>
    %c0_5 = arith.constant 0 : index
    %c512 = arith.constant 512 : index
    %3 = vector.load %arg7[%c0_5, %c512] : memref<32x1024xf32, #tpu.memory_space<vmem>>, vector<32x512xf32>
    tpu.vector_store %arg7[%c0_5, %c512], %2 {strides = array<i32>} : memref<32x1024xf32, #tpu.memory_space<vmem>>, vector<32x512xf32>,
    %c0_6 = arith.constant 0 : index
    %c0_7 = arith.constant 0 : index
    %4 = vector.load %arg7[%c0_6, %c0_7] : memref<32x1024xf32, #tpu.memory_space<vmem>>, vector<32x512xf32>
    %c0_8 = arith.constant 0 : index
    %c0_9 = arith.constant 0 : index
    %c0_10 = arith.constant 0 : index
    %5 = vector.load %arg3[%c0_8, %c0_9, %c0_10] : memref<9x32x32xf32, #tpu.memory_space<vmem>>, vector<1x32x32xf32>
    %6 = vector.shape_cast %5 : vector<1x32x32xf32> to vector<32x32xf32>
    %cst = arith.constant dense<0.000000e+00> : vector<32x512xf32>
    %7 = tpu.matmul %6, %4, %cst {dimension_numbers = #tpu.dot_dimension_numbers<[1], [0], [0], [1], [0, 0, 1, 1], [], []>} : vector<32x32xf32>, vector<32x512xf32>, vector<32x512xf32> -> vector<32x512xf32>
    %c0_11 = arith.constant 0 : index
    %c1 = arith.constant 1 : index
    %8 = vector.load %arg7[%c0_11, %c1] : memref<32x1024xf32, #tpu.memory_space<vmem>>, vector<32x512xf32>
    %c1_12 = arith.constant 1 : index
    %c0_13 = arith.constant 0 : index
    %c0_14 = arith.constant 0 : index
    %9 = vector.load %arg3[%c1_12, %c0_13, %c0_14] : memref<9x32x32xf32, #tpu.memory_space<vmem>>, vector<1x32x32xf32>
    %10 = vector.shape_cast %9 : vector<1x32x32xf32> to vector<32x32xf32>
    %cst_15 = arith.constant dense<0.000000e+00> : vector<32x512xf32>
    %11 = tpu.matmul %10, %8, %cst_15 {dimension_numbers = #tpu.dot_dimension_numbers<[1], [0], [0], [1], [0, 0, 1, 1], [], []>} : vector<32x32xf32>, vector<32x512xf32>, vector<32x512xf32> -> vector<32x512xf32>
    %12 = arith.addf %7, %11 : vector<32x512xf32>
    %c0_16 = arith.constant 0 : index
    %c2 = arith.constant 2 : index
    %13 = vector.load %arg7[%c0_16, %c2] : memref<32x1024xf32, #tpu.memory_space<vmem>>, vector<32x512xf32>
    %c2_17 = arith.constant 2 : index
    %c0_18 = arith.constant 0 : index
    %c0_19 = arith.constant 0 : index
    %14 = vector.load %arg3[%c2_17, %c0_18, %c0_19] : memref<9x32x32xf32, #tpu.memory_space<vmem>>, vector<1x32x32xf32>
    %15 = vector.shape_cast %14 : vector<1x32x32xf32> to vector<32x32xf32>
    %cst_20 = arith.constant dense<0.000000e+00> : vector<32x512xf32>
    %16 = tpu.matmul %15, %13, %cst_20 {dimension_numbers = #tpu.dot_dimension_numbers<[1], [0], [0], [1], [0, 0, 1, 1], [], []>} : vector<32x32xf32>, vector<32x512xf32>, vector<32x512xf32> -> vector<32x512xf32>
    %17 = arith.addf %12, %16 : vector<32x512xf32>
    %c0_21 = arith.constant 0 : index
    %c20 = arith.constant 20 : index
    %18 = vector.load %arg7[%c0_21, %c20] : memref<32x1024xf32, #tpu.memory_space<vmem>>, vector<32x512xf32>
    %c3 = arith.constant 3 : index
    %c0_22 = arith.constant 0 : index
    %c0_23 = arith.constant 0 : index
    %19 = vector.load %arg3[%c3, %c0_22, %c0_23] : memref<9x32x32xf32, #tpu.memory_space<vmem>>, vector<1x32x32xf32>
    %20 = vector.shape_cast %19 : vector<1x32x32xf32> to vector<32x32xf32>
    %cst_24 = arith.constant dense<0.000000e+00> : vector<32x512xf32>
    %21 = tpu.matmul %20, %18, %cst_24 {dimension_numbers = #tpu.dot_dimension_numbers<[1], [0], [0], [1], [0, 0, 1, 1], [], []>} : vector<32x32xf32>, vector<32x512xf32>, vector<32x512xf32> -> vector<32x512xf32>
    %22 = arith.addf %17, %21 : vector<32x512xf32>
    %c0_25 = arith.constant 0 : index
    %c21 = arith.constant 21 : index
    %23 = vector.load %arg7[%c0_25, %c21] : memref<32x1024xf32, #tpu.memory_space<vmem>>, vector<32x512xf32>
    %c4 = arith.constant 4 : index
    %c0_26 = arith.constant 0 : index
    %c0_27 = arith.constant 0 : index
    %24 = vector.load %arg3[%c4, %c0_26, %c0_27] : memref<9x32x32xf32, #tpu.memory_space<vmem>>, vector<1x32x32xf32>
    %25 = vector.shape_cast %24 : vector<1x32x32xf32> to vector<32x32xf32>
    %cst_28 = arith.constant dense<0.000000e+00> : vector<32x512xf32>
    %26 = tpu.matmul %25, %23, %cst_28 {dimension_numbers = #tpu.dot_dimension_numbers<[1], [0], [0], [1], [0, 0, 1, 1], [], []>} : vector<32x32xf32>, vector<32x512xf32>, vector<32x512xf32> -> vector<32x512xf32>
    %27 = arith.addf %22, %26 : vector<32x512xf32>
    %c0_29 = arith.constant 0 : index
    %c22 = arith.constant 22 : index
    %28 = vector.load %arg7[%c0_29, %c22] : memref<32x1024xf32, #tpu.memory_space<vmem>>, vector<32x512xf32>
    %c5 = arith.constant 5 : index
    %c0_30 = arith.constant 0 : index
    %c0_31 = arith.constant 0 : index
    %29 = vector.load %arg3[%c5, %c0_30, %c0_31] : memref<9x32x32xf32, #tpu.memory_space<vmem>>, vector<1x32x32xf32>
    %30 = vector.shape_cast %29 : vector<1x32x32xf32> to vector<32x32xf32>
    %cst_32 = arith.constant dense<0.000000e+00> : vector<32x512xf32>
    %31 = tpu.matmul %30, %28, %cst_32 {dimension_numbers = #tpu.dot_dimension_numbers<[1], [0], [0], [1], [0, 0, 1, 1], [], []>} : vector<32x32xf32>, vector<32x512xf32>, vector<32x512xf32> -> vector<32x512xf32>
    %32 = arith.addf %27, %31 : vector<32x512xf32>
    %c0_33 = arith.constant 0 : index
    %c40 = arith.constant 40 : index
    %33 = vector.load %arg7[%c0_33, %c40] : memref<32x1024xf32, #tpu.memory_space<vmem>>, vector<32x512xf32>
    %c6 = arith.constant 6 : index
    %c0_34 = arith.constant 0 : index
    %c0_35 = arith.constant 0 : index
    %34 = vector.load %arg3[%c6, %c0_34, %c0_35] : memref<9x32x32xf32, #tpu.memory_space<vmem>>, vector<1x32x32xf32>
    %35 = vector.shape_cast %34 : vector<1x32x32xf32> to vector<32x32xf32>
    %cst_36 = arith.constant dense<0.000000e+00> : vector<32x512xf32>
    %36 = tpu.matmul %35, %33, %cst_36 {dimension_numbers = #tpu.dot_dimension_numbers<[1], [0], [0], [1], [0, 0, 1, 1], [], []>} : vector<32x32xf32>, vector<32x512xf32>, vector<32x512xf32> -> vector<32x512xf32>
    %37 = arith.addf %32, %36 : vector<32x512xf32>
    %c0_37 = arith.constant 0 : index
    %c41 = arith.constant 41 : index
    %38 = vector.load %arg7[%c0_37, %c41] : memref<32x1024xf32, #tpu.memory_space<vmem>>, vector<32x512xf32>
    %c7 = arith.constant 7 : index
    %c0_38 = arith.constant 0 : index
    %c0_39 = arith.constant 0 : index
    %39 = vector.load %arg3[%c7, %c0_38, %c0_39] : memref<9x32x32xf32, #tpu.memory_space<vmem>>, vector<1x32x32xf32>
    %40 = vector.shape_cast %39 : vector<1x32x32xf32> to vector<32x32xf32>
    %cst_40 = arith.constant dense<0.000000e+00> : vector<32x512xf32>
    %41 = tpu.matmul %40, %38, %cst_40 {dimension_numbers = #tpu.dot_dimension_numbers<[1], [0], [0], [1], [0, 0, 1, 1], [], []>} : vector<32x32xf32>, vector<32x512xf32>, vector<32x512xf32> -> vector<32x512xf32>
    %42 = arith.addf %37, %41 : vector<32x512xf32>
    %c0_41 = arith.constant 0 : index
    %c42 = arith.constant 42 : index
    %43 = vector.load %arg7[%c0_41, %c42] : memref<32x1024xf32, #tpu.memory_space<vmem>>, vector<32x512xf32>
    %c8 = arith.constant 8 : index
    %c0_42 = arith.constant 0 : index
    %c0_43 = arith.constant 0 : index
    %44 = vector.load %arg3[%c8, %c0_42, %c0_43] : memref<9x32x32xf32, #tpu.memory_space<vmem>>, vector<1x32x32xf32>
    %45 = vector.shape_cast %44 : vector<1x32x32xf32> to vector<32x32xf32>
    %cst_44 = arith.constant dense<0.000000e+00> : vector<32x512xf32>
    %46 = tpu.matmul %45, %43, %cst_44 {dimension_numbers = #tpu.dot_dimension_numbers<[1], [0], [0], [1], [0, 0, 1, 1], [], []>} : vector<32x32xf32>, vector<32x512xf32>, vector<32x512xf32> -> vector<32x512xf32>
    %47 = arith.addf %42, %46 : vector<32x512xf32>
    %c0_45 = arith.constant 0 : index
    %c0_46 = arith.constant 0 : index
    %48 = vector.load %arg4[%c0_45, %c0_46] : memref<32x1xf32, #tpu.memory_space<vmem>>, vector<32x1xf32>
    %49 = vector.broadcast %48 : vector<32x1xf32> to vector<32x512xf32>
    %50 = arith.addf %47, %49 : vector<32x512xf32>
    %c0_47 = arith.constant 0 : index
    %c0_48 = arith.constant 0 : index
    %51 = vector.load %arg5[%c0_47, %c0_48] : memref<32x512xf32, #tpu.memory_space<vmem>>, vector<32x512xf32>
    %52 = arith.addf %50, %51 : vector<32x512xf32>
    %c0_49 = arith.constant 0 : index
    %c0_50 = arith.constant 0 : index
    %53 = vector.load %arg6[%c0_49, %c0_50] : memref<32x512xf32, #tpu.memory_space<vmem>>, vector<32x512xf32>
    tpu.vector_store %arg6[%c0_49, %c0_50], %52 {strides = array<i32>} : memref<32x512xf32, #tpu.memory_space<vmem>>, vector<32x512xf32>,
    return
  }
  func.func @transform_0(%arg0: i32) -> (i32, i32) {
    %c0_i32 = arith.constant 0 : i32
    %c0_i32_0 = arith.constant 0 : i32
    return %c0_i32, %arg0 : i32, i32
  }
  func.func @transform_1(%arg0: i32) -> (i32, i32) {
    %c1_i32 = arith.constant 1 : i32
    %0 = arith.addi %arg0, %c1_i32 : i32
    %c0_i32 = arith.constant 0 : i32
    %c0_i32_0 = arith.constant 0 : i32
    return %c0_i32, %0 : i32, i32
  }
  func.func @transform_2(%arg0: i32) -> (i32, i32, i32) {
    %c0_i32 = arith.constant 0 : i32
    %c0_i32_0 = arith.constant 0 : i32
    %c0_i32_1 = arith.constant 0 : i32
    %c0_i32_2 = arith.constant 0 : i32
    return %c0_i32, %c0_i32_0, %c0_i32_1 : i32, i32, i32
  }
  func.func @transform_3(%arg0: i32) -> (i32, i32) {
    %c0_i32 = arith.constant 0 : i32
    %c0_i32_0 = arith.constant 0 : i32
    %c0_i32_1 = arith.constant 0 : i32
    return %c0_i32, %c0_i32_0 : i32, i32
  }
  func.func @transform_4(%arg0: i32) -> (i32, i32) {
    %c0_i32 = arith.constant 0 : i32
    %c0_i32_0 = arith.constant 0 : i32
    return %c0_i32, %arg0 : i32, i32
  }
  func.func @transform_5(%arg0: i32) -> (i32, i32) {
    %c0_i32 = arith.constant 0 : i32
    %c0_i32_0 = arith.constant 0 : i32
    return %c0_i32, %arg0 : i32, i32
  }
}

module attributes {stable_mosaic.version = 11 : i64} {
  func.func @_conv_bn_act_kernel(%arg0: i32, %arg1: memref<32x512xf32, #tpu.memory_space<vmem>>, %arg2: memref<32x512xf32, #tpu.memory_space<vmem>>, %arg3: memref<9x32x32xf32, #tpu.memory_space<vmem>>, %arg4: memref<32x1xf32, #tpu.memory_space<vmem>>, %arg5: memref<32x512xf32, #tpu.memory_space<vmem>>, %arg6: memref<4x32xf32, #tpu.memory_space<vmem>>, %arg7: memref<32x512xf32, #tpu.memory_space<vmem>>, %arg8: memref<4x512xf32, #tpu.memory_space<vmem>>, %arg9: memref<32x1024xf32, #tpu.memory_space<vmem>>) attributes {dimension_semantics = [#tpu.dimension_semantics<parallel>], iteration_bounds = array<i64: 2>, scalar_prefetch = 0 : i64, scratch_operands = 1 : i64, tpu.core_type = #tpu.core_type<tc>, window_params = [{transform_indices = @transform_0, window_bounds = array<i64: 32, 512>}, {transform_indices = @transform_1, window_bounds = array<i64: 32, 512>}, {pipeline_mode = #tpu.pipeline_mode<synchronous>, transform_indices = @transform_2, window_bounds = array<i64: 9, 32, 32>}, {pipeline_mode = #tpu.pipeline_mode<synchronous>, transform_indices = @transform_3, window_bounds = array<i64: 32, 1>}, {transform_indices = @transform_4, window_bounds = array<i64: 32, 512>}, {pipeline_mode = #tpu.pipeline_mode<synchronous>, transform_indices = @transform_5, window_bounds = array<i64: 4, 32>}, {transform_indices = @transform_6, window_bounds = array<i64: 32, 512>}, {transform_indices = @transform_7, window_bounds = array<i64: 4, 512>}]} {
    %c0 = arith.constant 0 : index
    %c0_0 = arith.constant 0 : index
    %0 = vector.load %arg1[%c0, %c0_0] : memref<32x512xf32, #tpu.memory_space<vmem>>, vector<32x512xf32>
    %c0_1 = arith.constant 0 : index
    %c0_2 = arith.constant 0 : index
    %1 = vector.load %arg9[%c0_1, %c0_2] : memref<32x1024xf32, #tpu.memory_space<vmem>>, vector<32x512xf32>
    tpu.vector_store %arg9[%c0_1, %c0_2], %0 {strides = array<i32>} : memref<32x1024xf32, #tpu.memory_space<vmem>>, vector<32x512xf32>,
    %c0_3 = arith.constant 0 : index
    %c0_4 = arith.constant 0 : index
    %2 = vector.load %arg2[%c0_3, %c0_4] : memref<32x512xf32, #tpu.memory_space<vmem>>, vector<32x512xf32>
    %c0_5 = arith.constant 0 : index
    %c512 = arith.constant 512 : index
    %3 = vector.load %arg9[%c0_5, %c512] : memref<32x1024xf32, #tpu.memory_space<vmem>>, vector<32x512xf32>
    tpu.vector_store %arg9[%c0_5, %c512], %2 {strides = array<i32>} : memref<32x1024xf32, #tpu.memory_space<vmem>>, vector<32x512xf32>,
    %c0_6 = arith.constant 0 : index
    %c0_7 = arith.constant 0 : index
    %4 = vector.load %arg9[%c0_6, %c0_7] : memref<32x1024xf32, #tpu.memory_space<vmem>>, vector<32x512xf32>
    %c0_8 = arith.constant 0 : index
    %c0_9 = arith.constant 0 : index
    %c0_10 = arith.constant 0 : index
    %5 = vector.load %arg3[%c0_8, %c0_9, %c0_10] : memref<9x32x32xf32, #tpu.memory_space<vmem>>, vector<1x32x32xf32>
    %6 = vector.shape_cast %5 : vector<1x32x32xf32> to vector<32x32xf32>
    %cst = arith.constant dense<0.000000e+00> : vector<32x512xf32>
    %7 = tpu.matmul %6, %4, %cst {dimension_numbers = #tpu.dot_dimension_numbers<[1], [0], [0], [1], [0, 0, 1, 1], [], []>} : vector<32x32xf32>, vector<32x512xf32>, vector<32x512xf32> -> vector<32x512xf32>
    %c0_11 = arith.constant 0 : index
    %c1 = arith.constant 1 : index
    %8 = vector.load %arg9[%c0_11, %c1] : memref<32x1024xf32, #tpu.memory_space<vmem>>, vector<32x512xf32>
    %c1_12 = arith.constant 1 : index
    %c0_13 = arith.constant 0 : index
    %c0_14 = arith.constant 0 : index
    %9 = vector.load %arg3[%c1_12, %c0_13, %c0_14] : memref<9x32x32xf32, #tpu.memory_space<vmem>>, vector<1x32x32xf32>
    %10 = vector.shape_cast %9 : vector<1x32x32xf32> to vector<32x32xf32>
    %cst_15 = arith.constant dense<0.000000e+00> : vector<32x512xf32>
    %11 = tpu.matmul %10, %8, %cst_15 {dimension_numbers = #tpu.dot_dimension_numbers<[1], [0], [0], [1], [0, 0, 1, 1], [], []>} : vector<32x32xf32>, vector<32x512xf32>, vector<32x512xf32> -> vector<32x512xf32>
    %12 = arith.addf %7, %11 : vector<32x512xf32>
    %c0_16 = arith.constant 0 : index
    %c2 = arith.constant 2 : index
    %13 = vector.load %arg9[%c0_16, %c2] : memref<32x1024xf32, #tpu.memory_space<vmem>>, vector<32x512xf32>
    %c2_17 = arith.constant 2 : index
    %c0_18 = arith.constant 0 : index
    %c0_19 = arith.constant 0 : index
    %14 = vector.load %arg3[%c2_17, %c0_18, %c0_19] : memref<9x32x32xf32, #tpu.memory_space<vmem>>, vector<1x32x32xf32>
    %15 = vector.shape_cast %14 : vector<1x32x32xf32> to vector<32x32xf32>
    %cst_20 = arith.constant dense<0.000000e+00> : vector<32x512xf32>
    %16 = tpu.matmul %15, %13, %cst_20 {dimension_numbers = #tpu.dot_dimension_numbers<[1], [0], [0], [1], [0, 0, 1, 1], [], []>} : vector<32x32xf32>, vector<32x512xf32>, vector<32x512xf32> -> vector<32x512xf32>
    %17 = arith.addf %12, %16 : vector<32x512xf32>
    %c0_21 = arith.constant 0 : index
    %c20 = arith.constant 20 : index
    %18 = vector.load %arg9[%c0_21, %c20] : memref<32x1024xf32, #tpu.memory_space<vmem>>, vector<32x512xf32>
    %c3 = arith.constant 3 : index
    %c0_22 = arith.constant 0 : index
    %c0_23 = arith.constant 0 : index
    %19 = vector.load %arg3[%c3, %c0_22, %c0_23] : memref<9x32x32xf32, #tpu.memory_space<vmem>>, vector<1x32x32xf32>
    %20 = vector.shape_cast %19 : vector<1x32x32xf32> to vector<32x32xf32>
    %cst_24 = arith.constant dense<0.000000e+00> : vector<32x512xf32>
    %21 = tpu.matmul %20, %18, %cst_24 {dimension_numbers = #tpu.dot_dimension_numbers<[1], [0], [0], [1], [0, 0, 1, 1], [], []>} : vector<32x32xf32>, vector<32x512xf32>, vector<32x512xf32> -> vector<32x512xf32>
    %22 = arith.addf %17, %21 : vector<32x512xf32>
    %c0_25 = arith.constant 0 : index
    %c21 = arith.constant 21 : index
    %23 = vector.load %arg9[%c0_25, %c21] : memref<32x1024xf32, #tpu.memory_space<vmem>>, vector<32x512xf32>
    %c4 = arith.constant 4 : index
    %c0_26 = arith.constant 0 : index
    %c0_27 = arith.constant 0 : index
    %24 = vector.load %arg3[%c4, %c0_26, %c0_27] : memref<9x32x32xf32, #tpu.memory_space<vmem>>, vector<1x32x32xf32>
    %25 = vector.shape_cast %24 : vector<1x32x32xf32> to vector<32x32xf32>
    %cst_28 = arith.constant dense<0.000000e+00> : vector<32x512xf32>
    %26 = tpu.matmul %25, %23, %cst_28 {dimension_numbers = #tpu.dot_dimension_numbers<[1], [0], [0], [1], [0, 0, 1, 1], [], []>} : vector<32x32xf32>, vector<32x512xf32>, vector<32x512xf32> -> vector<32x512xf32>
    %27 = arith.addf %22, %26 : vector<32x512xf32>
    %c0_29 = arith.constant 0 : index
    %c22 = arith.constant 22 : index
    %28 = vector.load %arg9[%c0_29, %c22] : memref<32x1024xf32, #tpu.memory_space<vmem>>, vector<32x512xf32>
    %c5 = arith.constant 5 : index
    %c0_30 = arith.constant 0 : index
    %c0_31 = arith.constant 0 : index
    %29 = vector.load %arg3[%c5, %c0_30, %c0_31] : memref<9x32x32xf32, #tpu.memory_space<vmem>>, vector<1x32x32xf32>
    %30 = vector.shape_cast %29 : vector<1x32x32xf32> to vector<32x32xf32>
    %cst_32 = arith.constant dense<0.000000e+00> : vector<32x512xf32>
    %31 = tpu.matmul %30, %28, %cst_32 {dimension_numbers = #tpu.dot_dimension_numbers<[1], [0], [0], [1], [0, 0, 1, 1], [], []>} : vector<32x32xf32>, vector<32x512xf32>, vector<32x512xf32> -> vector<32x512xf32>
    %32 = arith.addf %27, %31 : vector<32x512xf32>
    %c0_33 = arith.constant 0 : index
    %c40 = arith.constant 40 : index
    %33 = vector.load %arg9[%c0_33, %c40] : memref<32x1024xf32, #tpu.memory_space<vmem>>, vector<32x512xf32>
    %c6 = arith.constant 6 : index
    %c0_34 = arith.constant 0 : index
    %c0_35 = arith.constant 0 : index
    %34 = vector.load %arg3[%c6, %c0_34, %c0_35] : memref<9x32x32xf32, #tpu.memory_space<vmem>>, vector<1x32x32xf32>
    %35 = vector.shape_cast %34 : vector<1x32x32xf32> to vector<32x32xf32>
    %cst_36 = arith.constant dense<0.000000e+00> : vector<32x512xf32>
    %36 = tpu.matmul %35, %33, %cst_36 {dimension_numbers = #tpu.dot_dimension_numbers<[1], [0], [0], [1], [0, 0, 1, 1], [], []>} : vector<32x32xf32>, vector<32x512xf32>, vector<32x512xf32> -> vector<32x512xf32>
    %37 = arith.addf %32, %36 : vector<32x512xf32>
    %c0_37 = arith.constant 0 : index
    %c41 = arith.constant 41 : index
    %38 = vector.load %arg9[%c0_37, %c41] : memref<32x1024xf32, #tpu.memory_space<vmem>>, vector<32x512xf32>
    %c7 = arith.constant 7 : index
    %c0_38 = arith.constant 0 : index
    %c0_39 = arith.constant 0 : index
    %39 = vector.load %arg3[%c7, %c0_38, %c0_39] : memref<9x32x32xf32, #tpu.memory_space<vmem>>, vector<1x32x32xf32>
    %40 = vector.shape_cast %39 : vector<1x32x32xf32> to vector<32x32xf32>
    %cst_40 = arith.constant dense<0.000000e+00> : vector<32x512xf32>
    %41 = tpu.matmul %40, %38, %cst_40 {dimension_numbers = #tpu.dot_dimension_numbers<[1], [0], [0], [1], [0, 0, 1, 1], [], []>} : vector<32x32xf32>, vector<32x512xf32>, vector<32x512xf32> -> vector<32x512xf32>
    %42 = arith.addf %37, %41 : vector<32x512xf32>
    %c0_41 = arith.constant 0 : index
    %c42 = arith.constant 42 : index
    %43 = vector.load %arg9[%c0_41, %c42] : memref<32x1024xf32, #tpu.memory_space<vmem>>, vector<32x512xf32>
    %c8 = arith.constant 8 : index
    %c0_42 = arith.constant 0 : index
    %c0_43 = arith.constant 0 : index
    %44 = vector.load %arg3[%c8, %c0_42, %c0_43] : memref<9x32x32xf32, #tpu.memory_space<vmem>>, vector<1x32x32xf32>
    %45 = vector.shape_cast %44 : vector<1x32x32xf32> to vector<32x32xf32>
    %cst_44 = arith.constant dense<0.000000e+00> : vector<32x512xf32>
    %46 = tpu.matmul %45, %43, %cst_44 {dimension_numbers = #tpu.dot_dimension_numbers<[1], [0], [0], [1], [0, 0, 1, 1], [], []>} : vector<32x32xf32>, vector<32x512xf32>, vector<32x512xf32> -> vector<32x512xf32>
    %47 = arith.addf %42, %46 : vector<32x512xf32>
    %c0_45 = arith.constant 0 : index
    %c0_46 = arith.constant 0 : index
    %48 = vector.load %arg4[%c0_45, %c0_46] : memref<32x1xf32, #tpu.memory_space<vmem>>, vector<32x1xf32>
    %49 = vector.broadcast %48 : vector<32x1xf32> to vector<32x512xf32>
    %50 = arith.addf %47, %49 : vector<32x512xf32>
    %c0_47 = arith.constant 0 : index
    %c0_48 = arith.constant 0 : index
    %51 = vector.load %arg5[%c0_47, %c0_48] : memref<32x512xf32, #tpu.memory_space<vmem>>, vector<32x512xf32>
    %52 = arith.addf %50, %51 : vector<32x512xf32>
    %c0_49 = arith.constant 0 : index
    %c0_50 = arith.constant 0 : index
    %53 = vector.load %arg7[%c0_49, %c0_50] : memref<32x512xf32, #tpu.memory_space<vmem>>, vector<32x512xf32>
    tpu.vector_store %arg7[%c0_49, %c0_50], %52 {strides = array<i32>} : memref<32x512xf32, #tpu.memory_space<vmem>>, vector<32x512xf32>,
    %c0_51 = arith.constant 0 : index
    %c0_52 = arith.constant 0 : index
    %54 = vector.load %arg6[%c0_51, %c0_52] : memref<4x32xf32, #tpu.memory_space<vmem>>, vector<4x32xf32>
    %cst_53 = arith.constant dense<0.000000e+00> : vector<4x512xf32>
    %55 = tpu.matmul %54, %52, %cst_53 {dimension_numbers = #tpu.dot_dimension_numbers<[1], [0], [0], [1], [0, 0, 1, 1], [], []>} : vector<4x32xf32>, vector<32x512xf32>, vector<4x512xf32> -> vector<4x512xf32>
    %56 = math.tanh %55 : vector<4x512xf32>
    %c0_54 = arith.constant 0 : index
    %c0_55 = arith.constant 0 : index
    %57 = vector.load %arg8[%c0_54, %c0_55] : memref<4x512xf32, #tpu.memory_space<vmem>>, vector<4x512xf32>
    tpu.vector_store %arg8[%c0_54, %c0_55], %56 {strides = array<i32>} : memref<4x512xf32, #tpu.memory_space<vmem>>, vector<4x512xf32>,
    return
  }
  func.func @transform_0(%arg0: i32) -> (i32, i32) {
    %c0_i32 = arith.constant 0 : i32
    %c0_i32_0 = arith.constant 0 : i32
    return %c0_i32, %arg0 : i32, i32
  }
  func.func @transform_1(%arg0: i32) -> (i32, i32) {
    %c1_i32 = arith.constant 1 : i32
    %0 = arith.addi %arg0, %c1_i32 : i32
    %c0_i32 = arith.constant 0 : i32
    %c0_i32_0 = arith.constant 0 : i32
    return %c0_i32, %0 : i32, i32
  }
  func.func @transform_2(%arg0: i32) -> (i32, i32, i32) {
    %c0_i32 = arith.constant 0 : i32
    %c0_i32_0 = arith.constant 0 : i32
    %c0_i32_1 = arith.constant 0 : i32
    %c0_i32_2 = arith.constant 0 : i32
    return %c0_i32, %c0_i32_0, %c0_i32_1 : i32, i32, i32
  }
  func.func @transform_3(%arg0: i32) -> (i32, i32) {
    %c0_i32 = arith.constant 0 : i32
    %c0_i32_0 = arith.constant 0 : i32
    %c0_i32_1 = arith.constant 0 : i32
    return %c0_i32, %c0_i32_0 : i32, i32
  }
  func.func @transform_4(%arg0: i32) -> (i32, i32) {
    %c0_i32 = arith.constant 0 : i32
    %c0_i32_0 = arith.constant 0 : i32
    return %c0_i32, %arg0 : i32, i32
  }
  func.func @transform_5(%arg0: i32) -> (i32, i32) {
    %c0_i32 = arith.constant 0 : i32
    %c0_i32_0 = arith.constant 0 : i32
    %c0_i32_1 = arith.constant 0 : i32
    return %c0_i32, %c0_i32_0 : i32, i32
  }
  func.func @transform_6(%arg0: i32) -> (i32, i32) {
    %c0_i32 = arith.constant 0 : i32
    %c0_i32_0 = arith.constant 0 : i32
    return %c0_i32, %arg0 : i32, i32
  }
  func.func @transform_7(%arg0: i32) -> (i32, i32) {
    %c0_i32 = arith.constant 0 : i32
    %c0_i32_0 = arith.constant 0 : i32
    return %c0_i32, %arg0 : i32, i32
  }
}

</mosaic_0001>

<llo_original>
// kernel: augmenter_forward.7
$region0: #{augmenter_forward.7}
  #allocation0 [shape = 'u32[]', space=smem, size = 0x4, offset = 0x4, fixed_abs, tag = 'smem constant byte address 0x4 - core index']
  #allocation1 [shape = 'u32[72,128]{1,0:T(1,128)}', space=vmem, size = 0x9000, scoped, tag = 'internal scratch']
  %s0 = inlined_call_operand.vmem [shape: f32[4,768], index: 0, kind: input, shape index: {}]
  %s1 = inlined_call_operand.vmem [shape: f32[1,32,4], index: 1, kind: input, shape index: {}]
  %s2 = inlined_call_operand.vmem [shape: f32[32,1], index: 2, kind: input, shape index: {}]
  %s3 = inlined_call_operand.vmem [shape: f32[32,768], index: 3, kind: output, shape index: {}]
  %s4 = sld [smem:[#allocation0]]
  $region64: #{augmenter_forward.7} parent=0
    _
  %s6 = ssub.s32 1, %s4
  %s7 = scalar_select 0, %s6, %s4
  $region1: #{augmenter_forward.7} parent=0
    #allocation2 [shape = 'u8[98304]{0}', space=vmem, size = 0x18000, scoped, tag = 'output window, operand 0']
    loop: start=0, step=1, limit=4
    $region2: #{augmenter_forward.7} parent=1 // loop_pre_header
      _
    $region3: #{augmenter_forward.7} parent=1 // loop_header
      %s9 = sphi 0, %s13
      %p10 = scmp.ge.s32.totalorder %s9, 4
      %s19 = sphi 0, %s21
      %s22 = sphi 0, %s19
      %s23 = sphi 0, %s22
      %s39 = sphi 0, %s23
      %s43 = sphi 0, %s43
      %s45 = sphi 0, %s43
      %s46 = sphi 0, %s45
      %s60 = sphi 0, %s46
      %s64 = sphi 0, %s64
      %s66 = sphi 0, %s64
      %s67 = sphi 0, %s66
      %s81 = sphi 0, %s67
      %s87 = sphi 0, %s89
      %s90 = sphi 0, %s87
      %s91 = sphi 0, %s90
      %s107 = sphi 0, %s91
    $region4: #{augmenter_forward.7} parent=1 // loop_header_branch
      %12 = sbr.rel (%p10) target = $region8
    $region5: #{augmenter_forward.7} parent=1 // loop_body
      %s14 = ssub.s32 %s9, 1
      %s15 = ssub.s32 %s9, 2
      %s16 = sadd.s32 %s9, 1
      %s17 = ssub.s32 %s9, %s16
      %p18 = scmp.eq.s32.totalorder %s17, 0
      %s20 = sadd.s32 %s19, 1
      %s21 = scalar_select %p18, %s19, %s20
      %p24 = pneg %p18
      %p25 = scmp.eq.s32.totalorder %s9, 1
      %p26 = por %p24, %p25
      %p27 = scmp.ne.s32.totalorder %s19, %s22
      %p28 = scmp.eq.s32.totalorder %s9, 0
      %p29 = por %p27, %p28
      %p30 = scmp.ne.s32.totalorder %s19, %s22
      %p31 = scmp.eq.s32.totalorder %s14, 1
      %p32 = por %p30, %p31
      %p33 = scmp.ne.s32.totalorder %s22, %s23
      %p34 = scmp.eq.s32.totalorder %s14, 0
      %p35 = por %p33, %p34
      %p36 = scmp.ne.s32.totalorder %s22, %s23
      %p37 = scmp.eq.s32.totalorder %s15, 1
      %p38 = por %p36, %p37
      %p40 = scmp.ne.s32.totalorder %s23, %s39
      %p41 = scmp.eq.s32.totalorder %s15, 0
      %p42 = por %p40, %p41
      %s44 = sadd.s32 %s43, 1
      %p47 = scmp.eq.s32.totalorder %s9, 1
      %p48 = scmp.ne.s32.totalorder %s43, %s45
      %p49 = scmp.eq.s32.totalorder %s9, 0
      %p50 = por %p48, %p49
      %p51 = scmp.ne.s32.totalorder %s43, %s45
      %p52 = scmp.eq.s32.totalorder %s14, 1
      %p53 = por %p51, %p52
      %p54 = scmp.ne.s32.totalorder %s45, %s46
      %p55 = scmp.eq.s32.totalorder %s14, 0
      %p56 = por %p54, %p55
      %p57 = scmp.ne.s32.totalorder %s45, %s46
      %p58 = scmp.eq.s32.totalorder %s15, 1
      %p59 = por %p57, %p58
      %p61 = scmp.ne.s32.totalorder %s46, %s60
      %p62 = scmp.eq.s32.totalorder %s15, 0
      %p63 = por %p61, %p62
      %s65 = sadd.s32 %s64, 1
      %p68 = scmp.eq.s32.totalorder %s9, 1
      %p69 = scmp.ne.s32.totalorder %s64, %s66
      %p70 = scmp.eq.s32.totalorder %s9, 0
      %p71 = por %p69, %p70
      %p72 = scmp.ne.s32.totalorder %s64, %s66
      %p73 = scmp.eq.s32.totalorder %s14, 1
      %p74 = por %p72, %p73
      %p75 = scmp.ne.s32.totalorder %s66, %s67
      %p76 = scmp.eq.s32.totalorder %s14, 0
      %p77 = por %p75, %p76
      %p78 = scmp.ne.s32.totalorder %s66, %s67
      %p79 = scmp.eq.s32.totalorder %s15, 1
      %p80 = por %p78, %p79
      %p82 = scmp.ne.s32.totalorder %s67, %s81
      %p83 = scmp.eq.s32.totalorder %s15, 0
      %p84 = por %p82, %p83
      %s85 = ssub.s32 %s9, %s16
      %p86 = scmp.eq.s32.totalorder %s85, 0
      %s88 = sadd.s32 %s87, 1
      %s89 = scalar_select %p86, %s87, %s88
      %p92 = pneg %p86
      %p93 = scmp.eq.s32.totalorder %s9, 1
      %p94 = por %p92, %p93
      %p95 = scmp.ne.s32.totalorder %s87, %s90
      %p96 = scmp.eq.s32.totalorder %s9, 0
      %p97 = por %p95, %p96
      %p98 = scmp.ne.s32.totalorder %s87, %s90
      %p99 = scmp.eq.s32.totalorder %s14, 1
      %p100 = por %p98, %p99
      %p101 = scmp.ne.s32.totalorder %s90, %s91
      %p102 = scmp.eq.s32.totalorder %s14, 0
      %p103 = por %p101, %p102
      %p104 = scmp.ne.s32.totalorder %s90, %s91
      %p105 = scmp.eq.s32.totalorder %s15, 1
      %p106 = por %p104, %p105
      %p108 = scmp.ne.s32.totalorder %s91, %s107
      %p109 = scmp.eq.s32.totalorder %s15, 0
      %p110 = por %p108, %p109
      %p111 = scmp.le.s32.totalorder 1, %s9
      %p112 = scmp.lt.s32.totalorder %s9, 3
      %p113 = pnand %p111, %p112
      %p114 = pneg %p113
      // Predicated region
      $region9: #{augmenter_forward.7} parent=5 // pred_check
        _
      $region10: #{augmenter_forward.7} parent=5 // pred_check_branch
        %116 = sbr.rel (%p113) target = $region12
      $region11: #{augmenter_forward.7} parent=5 // pred_region
        %s117 = ssub.s32 %s9, 1
        // Predicated region
        $region13: #{augmenter_forward.7} parent=11 // pred_check
          %p118 = pneg %p56
        $region14: #{augmenter_forward.7} parent=11 // pred_check_branch
          %120 = sbr.rel (%p118) target = $region16
        $region15: #{augmenter_forward.7} parent=11 // pred_region
          _
        $region16: #{augmenter_forward.7} parent=11 // pred_fallthru
          _
        // Predicated region
        $region17: #{augmenter_forward.7} parent=11 // pred_check
          %p121 = pneg %p77
        $region18: #{augmenter_forward.7} parent=11 // pred_check_branch
          %123 = sbr.rel (%p121) target = $region20
        $region19: #{augmenter_forward.7} parent=11 // pred_region
          _
        $region20: #{augmenter_forward.7} parent=11 // pred_fallthru
          _
      $region12: #{augmenter_forward.7} parent=5 // pred_fallthru
        _
      %p124 = scmp.lt.s32.totalorder %s9, 2
      // Predicated region
      $region21: #{augmenter_forward.7} parent=5 // pred_check
        %p125 = pneg %p124
      $region22: #{augmenter_forward.7} parent=5 // pred_check_branch
        %127 = sbr.rel (%p125) target = $region24
      $region23: #{augmenter_forward.7} parent=5 // pred_region
        // Predicated region
        $region25: #{augmenter_forward.7} parent=23 // pred_check
          %p128 = pneg %p29
        $region26: #{augmenter_forward.7} parent=23 // pred_check_branch
          %130 = sbr.rel (%p128) target = $region28
        $region27: #{augmenter_forward.7} parent=23 // pred_region
          %s131 = smul.u32 3, %s9
          %p132 = scmp.lt.s32.totalorder %s131, 5
          %s133 = scalar_select %p132, %s131, 5
          %s134 = smul.addr %s133, 4
          %s135 = scalar_lea.vmem %s0, %s134
          %s136 = smul.u32 3, %s9
        $region28: #{augmenter_forward.7} parent=23 // pred_fallthru
          _
      $region24: #{augmenter_forward.7} parent=5 // pred_fallthru
        _
      %p137 = scmp.le.s32.totalorder 1, %s9
      %p138 = scmp.lt.s32.totalorder %s9, 3
      %p139 = pnand %p137, %p138
      %p140 = pneg %p139
      // Predicated region
      $region29: #{augmenter_forward.7} parent=5 // pred_check
        _
      $region30: #{augmenter_forward.7} parent=5 // pred_check_branch
        %142 = sbr.rel (%p139) target = $region32
      $region31: #{augmenter_forward.7} parent=5 // pred_region
        %s143 = ssub.s32 %s9, 1
        %s144 = smul.u32 3, %s14
        %p145 = scmp.lt.s32.totalorder %s144, 5
        %s146 = scalar_select %p145, %s144, 5
        %s147 = smul.addr %s146, 4
        %s148 = scalar_lea.vmem %s0, %s147
        %p149 = pneg %p35
        %p150 = pneg %p32
        %p151 = pneg %p56
        %p152 = pneg %p53
        %p153 = pneg %p77
        %p154 = pneg %p74
        %p155 = pneg %p103
        %p156 = pneg %p100
        %s157 = sand.u32 %s90, 1
        %s158 = sand.u32 %s90, 1
        %s159 = smul.addr %s158, 96
        %s160 = scalar_lea.vmem [#allocation2], %s159
        %s161 = smul.u32 3, %s14
        %p162 = scmp.lt.s32.totalorder %s161, 5
        %s163 = scalar_select %p162, %s161, 5
        %s164 = smul.addr %s163, 4
        %s165 = scalar_lea.vmem %s0, %s164
        %s166 = smul.u32 3, %s14
        %s167 = smul.u32 3, %s14
        %v168 = vld [vmem:[%s165] sm:$0xff]
        %v169 = vld [vmem:[%s165 + $0x8] sm:$0xf]
        %v170 = vld [vmem:[%s1] sm:$0xff]
        %v171 = vld [vmem:[%s1 + $0x8] sm:$0xff]
        %v172 = vld [vmem:[%s1 + $0x10] sm:$0xff]
        %v173 = vld [vmem:[%s1 + $0x18] sm:$0xff]
        %v174 = vld [vmem:[%s2] sm:$0xff]
        %v175 = vld [vmem:[%s2 + $0x8] sm:$0xff]
        %v176 = vld [vmem:[%s2 + $0x10] sm:$0xff]
        %v177 = vld [vmem:[%s2 + $0x18] sm:$0xff]
        %179 = vset.pattern.permute.xlu0 0
        %180 = vperm.xlu0 %179, %v174
        %v181 = vpop.permute.xlu0 %180
        %184 = vset.pattern.permute.xlu0 0
        %185 = vperm.xlu0 %184, %v175
        %v186 = vpop.permute.xlu0 %185
        %189 = vset.pattern.permute.xlu0 0
        %190 = vperm.xlu0 %189, %v176
        %v191 = vpop.permute.xlu0 %190
        %194 = vset.pattern.permute.xlu0 0
        %195 = vperm.xlu0 %194, %v177
        %v196 = vpop.permute.xlu0 %195
        %200 = vst [vmem:[#allocation1] ss:$2 sm:$0xff] %v168
        %s201 = scalar_lea.vmem [#allocation1], 16
        %202 = vst [vmem:[%s201] ss:$2 sm:$0xff] %v169
        %v203 = vld.sshfl [vmem:[#allocation1] sm:$0xff pattern:$0x75316420]
        %v204 = vld.sshfl [vmem:[#allocation1 + $0x8] sm:$0xff pattern:$0x75316420]
        %v205 = vld.sshfl [vmem:[#allocation1 + $0x10] sm:$0xff pattern:$0x75316420]
        %vm206 = vcmask 31744
        %v208 = vsel %vm206, %v170, 0
        %v211 = vsel %vm206, %v171, 0
        %v214 = vsel %vm206, %v172, 0
        %v217 = vsel %vm206, %v173, 0
        %vm219 = vcmask 1043456
        %v220 = vsel %vm219, %v203, 0
        %v222 = vsel %vm219, %v204, 0
        %v224 = vsel %vm219, %v205, 0
        %226 = vmatpush.msra.mxu0 0.0
        %227 = vmatpush.msra.mxu0 0.0
        %228 = vmatpush.msra.mxu0 0.0
        %229 = vmatpush.msra.mxu0 0.0
        %230 = vmatpush.msra.mxu0 0.0
        %231 = vmatpush.msra.mxu0 0.0
        %232 = vmatpush.msra.mxu0 0.0
        %233 = vmatpush.msra.mxu0 0.0
        %234 = vmatpush.msra.mxu0 0.0
        %235 = vmatpush.msra.mxu0 0.0
        %236 = vmatpush.msra.mxu0 0.0
        %237 = vmatpush.msra.mxu0 0.0
        %238 = vmatpush.msra.mxu0 0.0
        %239 = vmatpush.msra.mxu0 0.0
        %240 = vmatpush.msra.mxu0 0.0
        %241 = vmatpush.msra.mxu0 %v220
        %242 = vmatmul.f32.gmra.mxu0 %v208
        %v243 = vpop.f32.mrf.mxu0
        %v244 = vadd.f32 %v181, %v243
        %245 = vmatmul.f32.gmra.mxu0 %v211
        %v246 = vpop.f32.mrf.mxu0
        %v247 = vadd.f32 %v186, %v246
        %248 = vmatmul.f32.gmra.mxu0 %v214
        %v249 = vpop.f32.mrf.mxu0
        %v250 = vadd.f32 %v191, %v249
        %251 = vmatmul.f32.gmra.mxu0 %v217
        %v252 = vpop.f32.mrf.mxu0
        %v253 = vadd.f32 %v196, %v252
        %254 = vdwg.mxu0
        %255 = vmatpush.msra.mxu0 0.0
        %256 = vmatpush.msra.mxu0 0.0
        %257 = vmatpush.msra.mxu0 0.0
        %258 = vmatpush.msra.mxu0 0.0
        %259 = vmatpush.msra.mxu0 0.0
        %260 = vmatpush.msra.mxu0 0.0
        %261 = vmatpush.msra.mxu0 0.0
        %262 = vmatpush.msra.mxu0 0.0
        %263 = vmatpush.msra.mxu0 0.0
        %264 = vmatpush.msra.mxu0 0.0
        %265 = vmatpush.msra.mxu0 0.0
        %266 = vmatpush.msra.mxu0 0.0
        %267 = vmatpush.msra.mxu0 0.0
        %268 = vmatpush.msra.mxu0 0.0
        %269 = vmatpush.msra.mxu0 0.0
        %270 = vmatpush.msra.mxu0 %v222
        %271 = vmatmul.f32.gmra.mxu0 %v208
        %v272 = vpop.f32.mrf.mxu0
        %v273 = vadd.f32 %v181, %v272
        %274 = vmatmul.f32.gmra.mxu0 %v211
        %v275 = vpop.f32.mrf.mxu0
        %v276 = vadd.f32 %v186, %v275
        %277 = vmatmul.f32.gmra.mxu0 %v214
        %v278 = vpop.f32.mrf.mxu0
        %v279 = vadd.f32 %v191, %v278
        %280 = vmatmul.f32.gmra.mxu0 %v217
        %v281 = vpop.f32.mrf.mxu0
        %v282 = vadd.f32 %v196, %v281
        %283 = vdwg.mxu0
        %284 = vmatpush.msra.mxu0 0.0
        %285 = vmatpush.msra.mxu0 0.0
        %286 = vmatpush.msra.mxu0 0.0
        %287 = vmatpush.msra.mxu0 0.0
        %288 = vmatpush.msra.mxu0 0.0
        %289 = vmatpush.msra.mxu0 0.0
        %290 = vmatpush.msra.mxu0 0.0
        %291 = vmatpush.msra.mxu0 0.0
        %292 = vmatpush.msra.mxu0 0.0
        %293 = vmatpush.msra.mxu0 0.0
        %294 = vmatpush.msra.mxu0 0.0
        %295 = vmatpush.msra.mxu0 0.0
        %296 = vmatpush.msra.mxu0 0.0
        %297 = vmatpush.msra.mxu0 0.0
        %298 = vmatpush.msra.mxu0 0.0
        %299 = vmatpush.msra.mxu0 %v224
        %300 = vmatmul.f32.gmra.mxu0 %v208
        %v301 = vpop.f32.mrf.mxu0
        %v302 = vadd.f32 %v181, %v301
        %303 = vmatmul.f32.gmra.mxu0 %v211
        %v304 = vpop.f32.mrf.mxu0
        %v305 = vadd.f32 %v186, %v304
        %306 = vmatmul.f32.gmra.mxu0 %v214
        %v307 = vpop.f32.mrf.mxu0
        %v308 = vadd.f32 %v191, %v307
        %309 = vmatmul.f32.gmra.mxu0 %v217
        %v310 = vpop.f32.mrf.mxu0
        %v311 = vadd.f32 %v196, %v310
        %312 = vdwg.mxu0
        %v313 = vmax.f32 %v244, 0.0
        %v314 = vmax.f32 %v273, 0.0
        %v315 = vmax.f32 %v302, 0.0
        %v316 = vmax.f32 %v247, 0.0
        %v317 = vmax.f32 %v276, 0.0
        %v318 = vmax.f32 %v305, 0.0
        %v319 = vmax.f32 %v250, 0.0
        %v320 = vmax.f32 %v279, 0.0
        %v321 = vmax.f32 %v308, 0.0
        %v322 = vmax.f32 %v253, 0.0
        %v323 = vmax.f32 %v282, 0.0
        %v324 = vmax.f32 %v311, 0.0
        %325 = vst [vmem:[%s160] sm:$0xff] %v313
        %326 = vst [vmem:[%s160 + $0x8] sm:$0xff] %v314
        %327 = vst [vmem:[%s160 + $0x10] sm:$0xff] %v315
        %328 = vst [vmem:[%s160 + $0x18] sm:$0xff] %v316
        %329 = vst [vmem:[%s160 + $0x20] sm:$0xff] %v317
        %330 = vst [vmem:[%s160 + $0x28] sm:$0xff] %v318
        %331 = vst [vmem:[%s160 + $0x30] sm:$0xff] %v319
        %332 = vst [vmem:[%s160 + $0x38] sm:$0xff] %v320
        %333 = vst [vmem:[%s160 + $0x40] sm:$0xff] %v321
        %334 = vst [vmem:[%s160 + $0x48] sm:$0xff] %v322
        %335 = vst [vmem:[%s160 + $0x50] sm:$0xff] %v323
        %336 = vst [vmem:[%s160 + $0x58] sm:$0xff] %v324
        %s337 = sand.u32 %s90, 1
        %s338 = sand.u32 %s90, 1
        %s339 = smul.addr %s338, 96
        %s340 = scalar_lea.vmem [#allocation2], %s339
        // Predicated region
        $region33: #{augmenter_forward.7} parent=31 // pred_check
          %p341 = pneg %p100
        $region34: #{augmenter_forward.7} parent=31 // pred_check_branch
          %343 = sbr.rel (%p341) target = $region36
        $region35: #{augmenter_forward.7} parent=31 // pred_region
          %s344 = smul.u32 3, %s14
          %s345 = smul.addr %s344, 8
          %s346 = scalar_lea.vmem %s3, %s345
          // Predicated region
          $region37: #{augmenter_forward.7} parent=35 // pred_check
            _
          $region38: #{augmenter_forward.7} parent=35 // pred_check_branch
            %348 = sbr.rel (0) target = $region40
          $region39: #{augmenter_forward.7} parent=35 // pred_region
            // Predicated region
            $region41: #{augmenter_forward.7} parent=39 // pred_check
              _
            $region42: #{augmenter_forward.7} parent=39 // pred_check_branch
              %350 = sbr.rel (0) target = $region44
            $region43: #{augmenter_forward.7} parent=39 // pred_region
              loop: start=0, step=1, limit=1
              $region45: #{augmenter_forward.7} parent=43 // loop_pre_header
                _
              $region46: #{augmenter_forward.7} parent=43 // loop_header
                %s352 = sphi 0, %s356
                %p353 = scmp.ge.s32.totalorder %s352, 1
                %s357 = sphi %s340, %s340
                %s358 = sphi %s346, %s346
              $region47: #{augmenter_forward.7} parent=43 // loop_header_branch
                %355 = sbr.rel (%p353) target = $region51
              $region48: #{augmenter_forward.7} parent=43 // loop_body
                %v359 = vld [vmem:[%s357] sm:$0xff]
                %360 = vst [vmem:[%s358] sm:$0xff] %v359
                %v361 = vld [vmem:[%s357 + $0x8] sm:$0xff]
                %362 = vst [vmem:[%s358 + $0x8] sm:$0xff] %v361
                %v363 = vld [vmem:[%s357 + $0x10] sm:$0xff]
                %364 = vst [vmem:[%s358 + $0x10] sm:$0xff] %v363
                %v365 = vld [vmem:[%s357 + $0x18] sm:$0xff]
                %366 = vst [vmem:[%s358 + $0x30] sm:$0xff] %v365
                %v367 = vld [vmem:[%s357 + $0x20] sm:$0xff]
                %368 = vst [vmem:[%s358 + $0x38] sm:$0xff] %v367
                %v369 = vld [vmem:[%s357 + $0x28] sm:$0xff]
                %370 = vst [vmem:[%s358 + $0x40] sm:$0xff] %v369
                %v371 = vld [vmem:[%s357 + $0x30] sm:$0xff]
                %372 = vst [vmem:[%s358 + $0x60] sm:$0xff] %v371
                %v373 = vld [vmem:[%s357 + $0x38] sm:$0xff]
                %374 = vst [vmem:[%s358 + $0x68] sm:$0xff] %v373
                %v375 = vld [vmem:[%s357 + $0x40] sm:$0xff]
                %376 = vst [vmem:[%s358 + $0x70] sm:$0xff] %v375
                %v377 = vld [vmem:[%s357 + $0x48] sm:$0xff]
                %378 = vst [vmem:[%s358 + $0x90] sm:$0xff] %v377
                %v379 = vld [vmem:[%s357 + $0x50] sm:$0xff]
                %380 = vst [vmem:[%s358 + $0x98] sm:$0xff] %v379
                %v381 = vld [vmem:[%s357 + $0x58] sm:$0xff]
                %382 = vst [vmem:[%s358 + $0xa0] sm:$0xff] %v381
              $region49: #{augmenter_forward.7} parent=43 // loop_footer
                %s356 = sadd.s32 1, %s352
              $region50: #{augmenter_forward.7} parent=43 // loop_footer_branch
                %351 = sbr.rel target = $region46
              $region51: #{augmenter_forward.7} parent=43 // loop_exit
                _
            $region44: #{augmenter_forward.7} parent=39 // pred_fallthru
              _
            // Predicated region
            $region52: #{augmenter_forward.7} parent=39 // pred_check
              _
            $region53: #{augmenter_forward.7} parent=39 // pred_check_branch
              %384 = sbr.rel target = $region55
            $region54: #{augmenter_forward.7} parent=39 // pred_region
              _
            $region55: #{augmenter_forward.7} parent=39 // pred_fallthru
              _
          $region40: #{augmenter_forward.7} parent=35 // pred_fallthru
            _
          %385 = vnop
        $region36: #{augmenter_forward.7} parent=31 // pred_fallthru
          _
      $region32: #{augmenter_forward.7} parent=5 // pred_fallthru
        _
      %p386 = scmp.le.s32.totalorder 2, %s9
      // Predicated region
      $region56: #{augmenter_forward.7} parent=5 // pred_check
        %p387 = pneg %p386
      $region57: #{augmenter_forward.7} parent=5 // pred_check_branch
        %389 = sbr.rel (%p387) target = $region59
      $region58: #{augmenter_forward.7} parent=5 // pred_region
        %s390 = ssub.s32 %s9, 2
        // Predicated region
        $region60: #{augmenter_forward.7} parent=58 // pred_check
          %p391 = pneg %p106
        $region61: #{augmenter_forward.7} parent=58 // pred_check_branch
          %393 = sbr.rel (%p391) target = $region63
        $region62: #{augmenter_forward.7} parent=58 // pred_region
          %s394 = sand.u32 %s91, 1
          %s395 = sand.u32 %s91, 1
          %s396 = smul.addr %s395, 96
          %s397 = scalar_lea.vmem [#allocation2], %s396
        $region63: #{augmenter_forward.7} parent=58 // pred_fallthru
          _
      $region59: #{augmenter_forward.7} parent=5 // pred_fallthru
        _
    $region6: #{augmenter_forward.7} parent=1 // loop_footer
      %s13 = sadd.s32 1, %s9
    $region7: #{augmenter_forward.7} parent=1 // loop_footer_branch
      %8 = sbr.rel target = $region3
    $region8: #{augmenter_forward.7} parent=1 // loop_exit
      _

// kernel: augmenter_forward.8
$region0: #{augmenter_forward.8}
  #allocation0 [shape = 'u32[]', space=smem, size = 0x4, offset = 0x4, fixed_abs, tag = 'smem constant byte address 0x4 - core index']
  #allocation1 [shape = 'u32[72,128]{1,0:T(1,128)}', space=vmem, size = 0x9000, scoped, tag = 'internal scratch']
  #allocation2 [shape = 'f32[32,1024]{1,0:T(8,128)}', space=vmem, size = 0x20000, scoped, tag = 'scratch operand']
  %s0 = inlined_call_operand.vmem [shape: f32[32,1536], index: 0, kind: input, shape index: {}, may-alias: {0,1}]
  %s1 = inlined_call_operand.vmem [shape: f32[32,1536], index: 1, kind: input, shape index: {}, may-alias: {0,1}]
  %s2 = inlined_call_operand.vmem [shape: f32[9,32,32], index: 2, kind: input, shape index: {}]
  %s3 = inlined_call_operand.vmem [shape: f32[32,1], index: 3, kind: input, shape index: {}]
  %s4 = inlined_call_operand.vmem [shape: f32[32,1024], index: 4, kind: output, shape index: {}]
  %s5 = sld [smem:[#allocation0]]
  $region114: #{augmenter_forward.8} parent=0
    _
  %s7 = ssub.s32 1, %s5
  %s8 = scalar_select 0, %s7, %s5
  $region1: #{augmenter_forward.8} parent=0
    #allocation3 [shape = 'u8[131072]{0}', space=vmem, size = 0x20000, scoped, tag = 'input window, operand 0']
    #allocation4 [shape = 'u8[131072]{0}', space=vmem, size = 0x20000, scoped, tag = 'input window, operand 1']
    #allocation5 [shape = 'u8[131072]{0}', space=vmem, size = 0x20000, scoped, tag = 'output window, operand 0']
    loop: start=0, step=1, limit=4
    $region2: #{augmenter_forward.8} parent=1 // loop_pre_header
      _
    $region3: #{augmenter_forward.8} parent=1 // loop_header
      %s10 = sphi 0, %s14
      %p11 = scmp.ge.s32.totalorder %s10, 4
      %s20 = sphi 0, %s22
      %s23 = sphi 0, %s20
      %s24 = sphi 0, %s23
      %s40 = sphi 0, %s24
      %s48 = sphi 0, %s50
      %s51 = sphi 0, %s48
      %s52 = sphi 0, %s51
      %s68 = sphi 0, %s52
      %s72 = sphi 0, %s72
      %s74 = sphi 0, %s72
      %s75 = sphi 0, %s74
      %s89 = sphi 0, %s75
      %s93 = sphi 0, %s93
      %s95 = sphi 0, %s93
      %s96 = sphi 0, %s95
      %s110 = sphi 0, %s96
      %s116 = sphi 0, %s118
      %s119 = sphi 0, %s116
      %s120 = sphi 0, %s119
      %s136 = sphi 0, %s120
    $region4: #{augmenter_forward.8} parent=1 // loop_header_branch
      %13 = sbr.rel (%p11) target = $region8
    $region5: #{augmenter_forward.8} parent=1 // loop_body
      %s15 = ssub.s32 %s10, 1
      %s16 = ssub.s32 %s10, 2
      %s17 = sadd.s32 %s10, 1
      %s18 = ssub.s32 %s10, %s17
      %p19 = scmp.eq.s32.totalorder %s18, 0
      %s21 = sadd.s32 %s20, 1
      %s22 = scalar_select %p19, %s20, %s21
      %p25 = pneg %p19
      %p26 = scmp.eq.s32.totalorder %s10, 1
      %p27 = por %p25, %p26
      %p28 = scmp.ne.s32.totalorder %s20, %s23
      %p29 = scmp.eq.s32.totalorder %s10, 0
      %p30 = por %p28, %p29
      %p31 = scmp.ne.s32.totalorder %s20, %s23
      %p32 = scmp.eq.s32.totalorder %s15, 1
      %p33 = por %p31, %p32
      %p34 = scmp.ne.s32.totalorder %s23, %s24
      %p35 = scmp.eq.s32.totalorder %s15, 0
      %p36 = por %p34, %p35
      %p37 = scmp.ne.s32.totalorder %s23, %s24
      %p38 = scmp.eq.s32.totalorder %s16, 1
      %p39 = por %p37, %p38
      %p41 = scmp.ne.s32.totalorder %s24, %s40
      %p42 = scmp.eq.s32.totalorder %s16, 0
      %p43 = por %p41, %p42
      %s44 = sadd.s32 %s10, 1
      %s45 = sadd.s32 %s17, 1
      %s46 = ssub.s32 %s44, %s45
      %p47 = scmp.eq.s32.totalorder %s46, 0
      %s49 = sadd.s32 %s48, 1
      %s50 = scalar_select %p47, %s48, %s49
      %p53 = pneg %p47
      %p54 = scmp.eq.s32.totalorder %s10, 1
      %p55 = por %p53, %p54
      %p56 = scmp.ne.s32.totalorder %s48, %s51
      %p57 = scmp.eq.s32.totalorder %s10, 0
      %p58 = por %p56, %p57
      %p59 = scmp.ne.s32.totalorder %s48, %s51
      %p60 = scmp.eq.s32.totalorder %s15, 1
      %p61 = por %p59, %p60
      %p62 = scmp.ne.s32.totalorder %s51, %s52
      %p63 = scmp.eq.s32.totalorder %s15, 0
      %p64 = por %p62, %p63
      %p65 = scmp.ne.s32.totalorder %s51, %s52
      %p66 = scmp.eq.s32.totalorder %s16, 1
      %p67 = por %p65, %p66
      %p69 = scmp.ne.s32.totalorder %s52, %s68
      %p70 = scmp.eq.s32.totalorder %s16, 0
      %p71 = por %p69, %p70
      %s73 = sadd.s32 %s72, 1
      %p76 = scmp.eq.s32.totalorder %s10, 1
      %p77 = scmp.ne.s32.totalorder %s72, %s74
      %p78 = scmp.eq.s32.totalorder %s10, 0
      %p79 = por %p77, %p78
      %p80 = scmp.ne.s32.totalorder %s72, %s74
      %p81 = scmp.eq.s32.totalorder %s15, 1
      %p82 = por %p80, %p81
      %p83 = scmp.ne.s32.totalorder %s74, %s75
      %p84 = scmp.eq.s32.totalorder %s15, 0
      %p85 = por %p83, %p84
      %p86 = scmp.ne.s32.totalorder %s74, %s75
      %p87 = scmp.eq.s32.totalorder %s16, 1
      %p88 = por %p86, %p87
      %p90 = scmp.ne.s32.totalorder %s75, %s89
      %p91 = scmp.eq.s32.totalorder %s16, 0
      %p92 = por %p90, %p91
      %s94 = sadd.s32 %s93, 1
      %p97 = scmp.eq.s32.totalorder %s10, 1
      %p98 = scmp.ne.s32.totalorder %s93, %s95
      %p99 = scmp.eq.s32.totalorder %s10, 0
      %p100 = por %p98, %p99
      %p101 = scmp.ne.s32.totalorder %s93, %s95
      %p102 = scmp.eq.s32.totalorder %s15, 1
      %p103 = por %p101, %p102
      %p104 = scmp.ne.s32.totalorder %s95, %s96
      %p105 = scmp.eq.s32.totalorder %s15, 0
      %p106 = por %p104, %p105
      %p107 = scmp.ne.s32.totalorder %s95, %s96
      %p108 = scmp.eq.s32.totalorder %s16, 1
      %p109 = por %p107, %p108
      %p111 = scmp.ne.s32.totalorder %s96, %s110
      %p112 = scmp.eq.s32.totalorder %s16, 0
      %p113 = por %p111, %p112
      %s114 = ssub.s32 %s10, %s17
      %p115 = scmp.eq.s32.totalorder %s114, 0
      %s117 = sadd.s32 %s116, 1
      %s118 = scalar_select %p115, %s116, %s117
      %p121 = pneg %p115
      %p122 = scmp.eq.s32.totalorder %s10, 1
      %p123 = por %p121, %p122
      %p124 = scmp.ne.s32.totalorder %s116, %s119
      %p125 = scmp.eq.s32.totalorder %s10, 0
      %p126 = por %p124, %p125
      %p127 = scmp.ne.s32.totalorder %s116, %s119
      %p128 = scmp.eq.s32.totalorder %s15, 1
      %p129 = por %p127, %p128
      %p130 = scmp.ne.s32.totalorder %s119, %s120
      %p131 = scmp.eq.s32.totalorder %s15, 0
      %p132 = por %p130, %p131
      %p133 = scmp.ne.s32.totalorder %s119, %s120
      %p134 = scmp.eq.s32.totalorder %s16, 1
      %p135 = por %p133, %p134
      %p137 = scmp.ne.s32.totalorder %s120, %s136
      %p138 = scmp.eq.s32.totalorder %s16, 0
      %p139 = por %p137, %p138
      %p140 = scmp.le.s32.totalorder 1, %s10
      %p141 = scmp.lt.s32.totalorder %s10, 3
      %p142 = pnand %p140, %p141
      %p143 = pneg %p142
      // Predicated region
      $region9: #{augmenter_forward.8} parent=5 // pred_check
        _
      $region10: #{augmenter_forward.8} parent=5 // pred_check_branch
        %145 = sbr.rel (%p142) target = $region12
      $region11: #{augmenter_forward.8} parent=5 // pred_region
        %s146 = ssub.s32 %s10, 1
        // Predicated region
        $region13: #{augmenter_forward.8} parent=11 // pred_check
          %p147 = pneg %p85
        $region14: #{augmenter_forward.8} parent=11 // pred_check_branch
          %149 = sbr.rel (%p147) target = $region16
        $region15: #{augmenter_forward.8} parent=11 // pred_region
          _
        $region16: #{augmenter_forward.8} parent=11 // pred_fallthru
          _
        // Predicated region
        $region17: #{augmenter_forward.8} parent=11 // pred_check
          %p150 = pneg %p106
        $region18: #{augmenter_forward.8} parent=11 // pred_check_branch
          %152 = sbr.rel (%p150) target = $region20
        $region19: #{augmenter_forward.8} parent=11 // pred_region
          _
        $region20: #{augmenter_forward.8} parent=11 // pred_fallthru
          _
      $region12: #{augmenter_forward.8} parent=5 // pred_fallthru
        _
      %p153 = scmp.lt.s32.totalorder %s10, 2
      // Predicated region
      $region21: #{augmenter_forward.8} parent=5 // pred_check
        %p154 = pneg %p153
      $region22: #{augmenter_forward.8} parent=5 // pred_check_branch
        %156 = sbr.rel (%p154) target = $region24
      $region23: #{augmenter_forward.8} parent=5 // pred_region
        // Predicated region
        $region25: #{augmenter_forward.8} parent=23 // pred_check
          %p157 = pneg %p30
        $region26: #{augmenter_forward.8} parent=23 // pred_check_branch
          %159 = sbr.rel (%p157) target = $region28
        $region27: #{augmenter_forward.8} parent=23 // pred_region
          %s160 = sand.u32 %s20, 1
          %s161 = sand.u32 %s20, 1
          %s162 = smul.addr %s161, 128
          %s163 = scalar_lea.vmem [#allocation3], %s162
          %s164 = smul.u32 4, %s10
          %s165 = smul.addr %s164, 8
          %s166 = scalar_lea.vmem %s0, %s165
          // Predicated region
          $region29: #{augmenter_forward.8} parent=27 // pred_check
            _
          $region30: #{augmenter_forward.8} parent=27 // pred_check_branch
            %168 = sbr.rel (0) target = $region32
          $region31: #{augmenter_forward.8} parent=27 // pred_region
            // Predicated region
            $region33: #{augmenter_forward.8} parent=31 // pred_check
              _
            $region34: #{augmenter_forward.8} parent=31 // pred_check_branch
              %170 = sbr.rel (0) target = $region36
            $region35: #{augmenter_forward.8} parent=31 // pred_region
              loop: start=0, step=1, limit=1
              $region37: #{augmenter_forward.8} parent=35 // loop_pre_header
                _
              $region38: #{augmenter_forward.8} parent=35 // loop_header
                %s172 = sphi 0, %s176
                %p173 = scmp.ge.s32.totalorder %s172, 1
                %s177 = sphi %s166, %s166
                %s178 = sphi %s163, %s163
              $region39: #{augmenter_forward.8} parent=35 // loop_header_branch
                %175 = sbr.rel (%p173) target = $region43
              $region40: #{augmenter_forward.8} parent=35 // loop_body
                %v179 = vld [vmem:[%s177] sm:$0xff]
                %180 = vst [vmem:[%s178] sm:$0xff] %v179
                %v181 = vld [vmem:[%s177 + $0x8] sm:$0xff]
                %182 = vst [vmem:[%s178 + $0x8] sm:$0xff] %v181
                %v183 = vld [vmem:[%s177 + $0x10] sm:$0xff]
                %184 = vst [vmem:[%s178 + $0x10] sm:$0xff] %v183
                %v185 = vld [vmem:[%s177 + $0x18] sm:$0xff]
                %186 = vst [vmem:[%s178 + $0x18] sm:$0xff] %v185
                %v187 = vld [vmem:[%s177 + $0x60] sm:$0xff]
                %188 = vst [vmem:[%s178 + $0x20] sm:$0xff] %v187
                %v189 = vld [vmem:[%s177 + $0x68] sm:$0xff]
                %190 = vst [vmem:[%s178 + $0x28] sm:$0xff] %v189
                %v191 = vld [vmem:[%s177 + $0x70] sm:$0xff]
                %192 = vst [vmem:[%s178 + $0x30] sm:$0xff] %v191
                %v193 = vld [vmem:[%s177 + $0x78] sm:$0xff]
                %194 = vst [vmem:[%s178 + $0x38] sm:$0xff] %v193
                %v195 = vld [vmem:[%s177 + $0xc0] sm:$0xff]
                %196 = vst [vmem:[%s178 + $0x40] sm:$0xff] %v195
                %v197 = vld [vmem:[%s177 + $0xc8] sm:$0xff]
                %198 = vst [vmem:[%s178 + $0x48] sm:$0xff] %v197
                %v199 = vld [vmem:[%s177 + $0xd0] sm:$0xff]
                %200 = vst [vmem:[%s178 + $0x50] sm:$0xff] %v199
                %v201 = vld [vmem:[%s177 + $0xd8] sm:$0xff]
                %202 = vst [vmem:[%s178 + $0x58] sm:$0xff] %v201
                %v203 = vld [vmem:[%s177 + $0x120] sm:$0xff]
                %204 = vst [vmem:[%s178 + $0x60] sm:$0xff] %v203
                %v205 = vld [vmem:[%s177 + $0x128] sm:$0xff]
                %206 = vst [vmem:[%s178 + $0x68] sm:$0xff] %v205
                %v207 = vld [vmem:[%s177 + $0x130] sm:$0xff]
                %208 = vst [vmem:[%s178 + $0x70] sm:$0xff] %v207
                %v209 = vld [vmem:[%s177 + $0x138] sm:$0xff]
                %210 = vst [vmem:[%s178 + $0x78] sm:$0xff] %v209
              $region41: #{augmenter_forward.8} parent=35 // loop_footer
                %s176 = sadd.s32 1, %s172
              $region42: #{augmenter_forward.8} parent=35 // loop_footer_branch
                %171 = sbr.rel target = $region38
              $region43: #{augmenter_forward.8} parent=35 // loop_exit
                _
            $region36: #{augmenter_forward.8} parent=31 // pred_fallthru
              _
            // Predicated region
            $region44: #{augmenter_forward.8} parent=31 // pred_check
              _
            $region45: #{augmenter_forward.8} parent=31 // pred_check_branch
              %212 = sbr.rel target = $region47
            $region46: #{augmenter_forward.8} parent=31 // pred_region
              _
            $region47: #{augmenter_forward.8} parent=31 // pred_fallthru
              _
          $region32: #{augmenter_forward.8} parent=27 // pred_fallthru
            _
          %213 = vnop
        $region28: #{augmenter_forward.8} parent=23 // pred_fallthru
          _
        // Predicated region
        $region48: #{augmenter_forward.8} parent=23 // pred_check
          %p214 = pneg %p58
        $region49: #{augmenter_forward.8} parent=23 // pred_check_branch
          %216 = sbr.rel (%p214) target = $region51
        $region50: #{augmenter_forward.8} parent=23 // pred_region
          %s217 = sand.u32 %s48, 1
          %s218 = sand.u32 %s48, 1
          %s219 = smul.addr %s218, 128
          %s220 = scalar_lea.vmem [#allocation4], %s219
          %s221 = sadd.s32 %s10, 1
          %s222 = smul.u32 4, %s221
          %s223 = smul.addr %s222, 8
          %s224 = scalar_lea.vmem %s1, %s223
          // Predicated region
          $region52: #{augmenter_forward.8} parent=50 // pred_check
            _
          $region53: #{augmenter_forward.8} parent=50 // pred_check_branch
            %226 = sbr.rel (0) target = $region55
          $region54: #{augmenter_forward.8} parent=50 // pred_region
            // Predicated region
            $region56: #{augmenter_forward.8} parent=54 // pred_check
              _
            $region57: #{augmenter_forward.8} parent=54 // pred_check_branch
              %228 = sbr.rel (0) target = $region59
            $region58: #{augmenter_forward.8} parent=54 // pred_region
              loop: start=0, step=1, limit=1
              $region60: #{augmenter_forward.8} parent=58 // loop_pre_header
                _
              $region61: #{augmenter_forward.8} parent=58 // loop_header
                %s230 = sphi 0, %s234
                %p231 = scmp.ge.s32.totalorder %s230, 1
                %s235 = sphi %s224, %s224
                %s236 = sphi %s220, %s220
              $region62: #{augmenter_forward.8} parent=58 // loop_header_branch
                %233 = sbr.rel (%p231) target = $region66
              $region63: #{augmenter_forward.8} parent=58 // loop_body
                %v237 = vld [vmem:[%s235] sm:$0xff]
                %238 = vst [vmem:[%s236] sm:$0xff] %v237
                %v239 = vld [vmem:[%s235 + $0x8] sm:$0xff]
                %240 = vst [vmem:[%s236 + $0x8] sm:$0xff] %v239
                %v241 = vld [vmem:[%s235 + $0x10] sm:$0xff]
                %242 = vst [vmem:[%s236 + $0x10] sm:$0xff] %v241
                %v243 = vld [vmem:[%s235 + $0x18] sm:$0xff]
                %244 = vst [vmem:[%s236 + $0x18] sm:$0xff] %v243
                %v245 = vld [vmem:[%s235 + $0x60] sm:$0xff]
                %246 = vst [vmem:[%s236 + $0x20] sm:$0xff] %v245
                %v247 = vld [vmem:[%s235 + $0x68] sm:$0xff]
                %248 = vst [vmem:[%s236 + $0x28] sm:$0xff] %v247
                %v249 = vld [vmem:[%s235 + $0x70] sm:$0xff]
                %250 = vst [vmem:[%s236 + $0x30] sm:$0xff] %v249
                %v251 = vld [vmem:[%s235 + $0x78] sm:$0xff]
                %252 = vst [vmem:[%s236 + $0x38] sm:$0xff] %v251
                %v253 = vld [vmem:[%s235 + $0xc0] sm:$0xff]
                %254 = vst [vmem:[%s236 + $0x40] sm:$0xff] %v253
                %v255 = vld [vmem:[%s235 + $0xc8] sm:$0xff]
                %256 = vst [vmem:[%s236 + $0x48] sm:$0xff] %v255
                %v257 = vld [vmem:[%s235 + $0xd0] sm:$0xff]
                %258 = vst [vmem:[%s236 + $0x50] sm:$0xff] %v257
                %v259 = vld [vmem:[%s235 + $0xd8] sm:$0xff]
                %260 = vst [vmem:[%s236 + $0x58] sm:$0xff] %v259
                %v261 = vld [vmem:[%s235 + $0x120] sm:$0xff]
                %262 = vst [vmem:[%s236 + $0x60] sm:$0xff] %v261
                %v263 = vld [vmem:[%s235 + $0x128] sm:$0xff]
                %264 = vst [vmem:[%s236 + $0x68] sm:$0xff] %v263
                %v265 = vld [vmem:[%s235 + $0x130] sm:$0xff]
                %266 = vst [vmem:[%s236 + $0x70] sm:$0xff] %v265
                %v267 = vld [vmem:[%s235 + $0x138] sm:$0xff]
                %268 = vst [vmem:[%s236 + $0x78] sm:$0xff] %v267
              $region64: #{augmenter_forward.8} parent=58 // loop_footer
                %s234 = sadd.s32 1, %s230
              $region65: #{augmenter_forward.8} parent=58 // loop_footer_branch
                %229 = sbr.rel target = $region61
              $region66: #{augmenter_forward.8} parent=58 // loop_exit
                _
            $region59: #{augmenter_forward.8} parent=54 // pred_fallthru
              _
            // Predicated region
            $region67: #{augmenter_forward.8} parent=54 // pred_check
              _
            $region68: #{augmenter_forward.8} parent=54 // pred_check_branch
              %270 = sbr.rel target = $region70
            $region69: #{augmenter_forward.8} parent=54 // pred_region
              _
            $region70: #{augmenter_forward.8} parent=54 // pred_fallthru
              _
          $region55: #{augmenter_forward.8} parent=50 // pred_fallthru
            _
          %271 = vnop
        $region51: #{augmenter_forward.8} parent=23 // pred_fallthru
          _
      $region24: #{augmenter_forward.8} parent=5 // pred_fallthru
        _
      %p272 = scmp.le.s32.totalorder 1, %s10
      %p273 = scmp.lt.s32.totalorder %s10, 3
      %p274 = pnand %p272, %p273
      %p275 = pneg %p274
      // Predicated region
      $region71: #{augmenter_forward.8} parent=5 // pred_check
        _
      $region72: #{augmenter_forward.8} parent=5 // pred_check_branch
        %277 = sbr.rel (%p274) target = $region74
      $region73: #{augmenter_forward.8} parent=5 // pred_region
        %s278 = ssub.s32 %s10, 1
        %s279 = sand.u32 %s23, 1
        %s280 = sand.u32 %s23, 1
        %s281 = smul.addr %s280, 128
        %s282 = scalar_lea.vmem [#allocation3], %s281
        // Predicated region
        $region75: #{augmenter_forward.8} parent=73 // pred_check
          %p283 = pneg %p36
        $region76: #{augmenter_forward.8} parent=73 // pred_check_branch
          %285 = sbr.rel (%p283) target = $region78
        $region77: #{augmenter_forward.8} parent=73 // pred_region
          _
        $region78: #{augmenter_forward.8} parent=73 // pred_fallthru
          _
        %s286 = sand.u32 %s51, 1
        %s287 = sand.u32 %s51, 1
        %s288 = smul.addr %s287, 128
        %s289 = scalar_lea.vmem [#allocation4], %s288
        // Predicated region
        $region79: #{augmenter_forward.8} parent=73 // pred_check
          %p290 = pneg %p64
        $region80: #{augmenter_forward.8} parent=73 // pred_check_branch
          %292 = sbr.rel (%p290) target = $region82
        $region81: #{augmenter_forward.8} parent=73 // pred_region
          _
        $region82: #{augmenter_forward.8} parent=73 // pred_fallthru
          _
        %s293 = sand.u32 %s23, 1
        %s294 = sand.u32 %s23, 1
        %s295 = smul.addr %s294, 128
        %s296 = scalar_lea.vmem [#allocation3], %s295
        %p297 = pneg %p36
        %p298 = pneg %p33
        %s299 = sand.u32 %s51, 1
        %s300 = sand.u32 %s51, 1
        %s301 = smul.addr %s300, 128
        %s302 = scalar_lea.vmem [#allocation4], %s301
        %p303 = pneg %p64
        %p304 = pneg %p61
        %p305 = pneg %p85
        %p306 = pneg %p82
        %p307 = pneg %p106
        %p308 = pneg %p103
        %p309 = pneg %p132
        %p310 = pneg %p129
        %s311 = sand.u32 %s119, 1
        %s312 = sand.u32 %s119, 1
        %s313 = smul.addr %s312, 128
        %s314 = scalar_lea.vmem [#allocation5], %s313
        %s315 = smul.u32 4, %s15
        %s316 = sadd.s32 %s15, 1
        %s317 = smul.u32 4, %s316
        %s318 = smul.u32 4, %s15
        %v319 = vld [vmem:[%s282] sm:$0xff]
        %v320 = vld [vmem:[%s282 + $0x8] sm:$0xff]
        %v321 = vld [vmem:[%s282 + $0x10] sm:$0xff]
        %v322 = vld [vmem:[%s282 + $0x18] sm:$0xff]
        %v323 = vld [vmem:[%s282 + $0x20] sm:$0xff]
        %v324 = vld [vmem:[%s282 + $0x28] sm:$0xff]
        %v325 = vld [vmem:[%s282 + $0x30] sm:$0xff]
        %v326 = vld [vmem:[%s282 + $0x38] sm:$0xff]
        %v327 = vld [vmem:[%s282 + $0x40] sm:$0xff]
        %v328 = vld [vmem:[%s282 + $0x48] sm:$0xff]
        %v329 = vld [vmem:[%s282 + $0x50] sm:$0xff]
        %v330 = vld [vmem:[%s282 + $0x58] sm:$0xff]
        %v331 = vld [vmem:[%s282 + $0x60] sm:$0xff]
        %v332 = vld [vmem:[%s282 + $0x68] sm:$0xff]
        %v333 = vld [vmem:[%s282 + $0x70] sm:$0xff]
        %v334 = vld [vmem:[%s282 + $0x78] sm:$0xff]
        %335 = vst [vmem:[#allocation2] sm:$0xff] %v319
        %336 = vst [vmem:[#allocation2 + $0x8] sm:$0xff] %v320
        %337 = vst [vmem:[#allocation2 + $0x10] sm:$0xff] %v321
        %338 = vst [vmem:[#allocation2 + $0x18] sm:$0xff] %v322
        %339 = vst [vmem:[#allocation2 + $0x40] sm:$0xff] %v323
        %340 = vst [vmem:[#allocation2 + $0x48] sm:$0xff] %v324
        %341 = vst [vmem:[#allocation2 + $0x50] sm:$0xff] %v325
        %342 = vst [vmem:[#allocation2 + $0x58] sm:$0xff] %v326
        %343 = vst [vmem:[#allocation2 + $0x80] sm:$0xff] %v327
        %344 = vst [vmem:[#allocation2 + $0x88] sm:$0xff] %v328
        %345 = vst [vmem:[#allocation2 + $0x90] sm:$0xff] %v329
        %346 = vst [vmem:[#allocation2 + $0x98] sm:$0xff] %v330
        %347 = vst [vmem:[#allocation2 + $0xc0] sm:$0xff] %v331
        %348 = vst [vmem:[#allocation2 + $0xc8] sm:$0xff] %v332
        %349 = vst [vmem:[#allocation2 + $0xd0] sm:$0xff] %v333
        %350 = vst [vmem:[#allocation2 + $0xd8] sm:$0xff] %v334
        %v351 = vld [vmem:[%s289] sm:$0xff]
        %v352 = vld [vmem:[%s289 + $0x8] sm:$0xff]
        %v353 = vld [vmem:[%s289 + $0x10] sm:$0xff]
        %v354 = vld [vmem:[%s289 + $0x18] sm:$0xff]
        %v355 = vld [vmem:[%s289 + $0x20] sm:$0xff]
        %v356 = vld [vmem:[%s289 + $0x28] sm:$0xff]
        %v357 = vld [vmem:[%s289 + $0x30] sm:$0xff]
        %v358 = vld [vmem:[%s289 + $0x38] sm:$0xff]
        %v359 = vld [vmem:[%s289 + $0x40] sm:$0xff]
        %v360 = vld [vmem:[%s289 + $0x48] sm:$0xff]
        %v361 = vld [vmem:[%s289 + $0x50] sm:$0xff]
        %v362 = vld [vmem:[%s289 + $0x58] sm:$0xff]
        %v363 = vld [vmem:[%s289 + $0x60] sm:$0xff]
        %v364 = vld [vmem:[%s289 + $0x68] sm:$0xff]
        %v365 = vld [vmem:[%s289 + $0x70] sm:$0xff]
        %v366 = vld [vmem:[%s289 + $0x78] sm:$0xff]
        %367 = vst [vmem:[#allocation2 + $0x20] sm:$0xff] %v351
        %368 = vst [vmem:[#allocation2 + $0x28] sm:$0xff] %v352
        %369 = vst [vmem:[#allocation2 + $0x30] sm:$0xff] %v353
        %370 = vst [vmem:[#allocation2 + $0x38] sm:$0xff] %v354
        %371 = vst [vmem:[#allocation2 + $0x60] sm:$0xff] %v355
        %372 = vst [vmem:[#allocation2 + $0x68] sm:$0xff] %v356
        %373 = vst [vmem:[#allocation2 + $0x70] sm:$0xff] %v357
        %374 = vst [vmem:[#allocation2 + $0x78] sm:$0xff] %v358
        %375 = vst [vmem:[#allocation2 + $0xa0] sm:$0xff] %v359
        %376 = vst [vmem:[#allocation2 + $0xa8] sm:$0xff] %v360
        %377 = vst [vmem:[#allocation2 + $0xb0] sm:$0xff] %v361
        %378 = vst [vmem:[#allocation2 + $0xb8] sm:$0xff] %v362
        %379 = vst [vmem:[#allocation2 + $0xe0] sm:$0xff] %v363
        %380 = vst [vmem:[#allocation2 + $0xe8] sm:$0xff] %v364
        %381 = vst [vmem:[#allocation2 + $0xf0] sm:$0xff] %v365
        %382 = vst [vmem:[#allocation2 + $0xf8] sm:$0xff] %v366
        %v383 = vld [vmem:[#allocation2] sm:$0xff]
        %v384 = vld [vmem:[#allocation2 + $0x8] sm:$0xff]
        %v385 = vld [vmem:[#allocation2 + $0x10] sm:$0xff]
        %v386 = vld [vmem:[#allocation2 + $0x18] sm:$0xff]
        %v387 = vld [vmem:[#allocation2 + $0x40] sm:$0xff]
        %v388 = vld [vmem:[#allocation2 + $0x48] sm:$0xff]
        %v389 = vld [vmem:[#allocation2 + $0x50] sm:$0xff]
        %v390 = vld [vmem:[#allocation2 + $0x58] sm:$0xff]
        %v391 = vld [vmem:[#allocation2 + $0x80] sm:$0xff]
        %v392 = vld [vmem:[#allocation2 + $0x88] sm:$0xff]
        %v393 = vld [vmem:[#allocation2 + $0x90] sm:$0xff]
        %v394 = vld [vmem:[#allocation2 + $0x98] sm:$0xff]
        %v395 = vld [vmem:[#allocation2 + $0xc0] sm:$0xff]
        %v396 = vld [vmem:[#allocation2 + $0xc8] sm:$0xff]
        %v397 = vld [vmem:[#allocation2 + $0xd0] sm:$0xff]
        %v398 = vld [vmem:[#allocation2 + $0xd8] sm:$0xff]
        %v399 = vld [vmem:[%s2] sm:$0xff]
        %v400 = vld [vmem:[%s2 + $0x8] sm:$0xff]
        %v401 = vld [vmem:[%s2 + $0x10] sm:$0xff]
        %v402 = vld [vmem:[%s2 + $0x18] sm:$0xff]
        %v403 = vld [vmem:[#allocation2 + $0x20] sm:$0xff]
        %v404 = vld [vmem:[#allocation2 + $0x60] sm:$0xff]
        %v405 = vld [vmem:[#allocation2 + $0xa0] sm:$0xff]
        %v406 = vld [vmem:[#allocation2 + $0xe0] sm:$0xff]
        %s407 = scalar_lea.vmem %s2, 32
        %v408 = vld [vmem:[%s407] sm:$0xff]
        %v409 = vld [vmem:[%s407 + $0x8] sm:$0xff]
        %v410 = vld [vmem:[%s407 + $0x10] sm:$0xff]
        %v411 = vld [vmem:[%s407 + $0x18] sm:$0xff]
        %432 = vrot.lane.b32.xlu0 %v383, 127
        %v433 = vpop.permute.xlu0 %432
        %434 = vrot.lane.b32.xlu0 %v384, 127
        %v435 = vpop.permute.xlu0 %434
        %436 = vrot.lane.b32.xlu0 %v385, 127
        %v437 = vpop.permute.xlu0 %436
        %438 = vrot.lane.b32.xlu0 %v386, 127
        %v439 = vpop.permute.xlu0 %438
        %440 = vrot.lane.b32.xlu0 %v403, 127
        %v441 = vpop.permute.xlu0 %440
        %442 = vrot.lane.b32.xlu0 %v387, 127
        %v443 = vpop.permute.xlu0 %442
        %444 = vrot.lane.b32.xlu0 %v388, 127
        %v445 = vpop.permute.xlu0 %444
        %446 = vrot.lane.b32.xlu0 %v389, 127
        %v447 = vpop.permute.xlu0 %446
        %448 = vrot.lane.b32.xlu0 %v390, 127
        %v449 = vpop.permute.xlu0 %448
        %450 = vrot.lane.b32.xlu0 %v404, 127
        %v451 = vpop.permute.xlu0 %450
        %452 = vrot.lane.b32.xlu0 %v391, 127
        %v453 = vpop.permute.xlu0 %452
        %454 = vrot.lane.b32.xlu0 %v392, 127
        %v455 = vpop.permute.xlu0 %454
        %456 = vrot.lane.b32.xlu0 %v393, 127
        %v457 = vpop.permute.xlu0 %456
        %458 = vrot.lane.b32.xlu0 %v394, 127
        %v459 = vpop.permute.xlu0 %458
        %460 = vrot.lane.b32.xlu0 %v405, 127
        %v461 = vpop.permute.xlu0 %460
        %462 = vrot.lane.b32.xlu0 %v395, 127
        %v463 = vpop.permute.xlu0 %462
        %464 = vrot.lane.b32.xlu0 %v396, 127
        %v465 = vpop.permute.xlu0 %464
        %466 = vrot.lane.b32.xlu0 %v397, 127
        %v467 = vpop.permute.xlu0 %466
        %468 = vrot.lane.b32.xlu0 %v398, 127
        %v469 = vpop.permute.xlu0 %468
        %470 = vrot.lane.b32.xlu0 %v406, 127
        %v471 = vpop.permute.xlu0 %470
        %vm472 = vcmask 1039360
        %v473 = vsel %vm472, %v433, %v435
        %v474 = vsel %vm472, %v435, %v437
        %v475 = vsel %vm472, %v437, %v439
        %v476 = vsel %vm472, %v439, %v441
        %v477 = vsel %vm472, %v443, %v445
        %v478 = vsel %vm472, %v445, %v447
        %v479 = vsel %vm472, %v447, %v449
        %v480 = vsel %vm472, %v449, %v451
        %v481 = vsel %vm472, %v453, %v455
        %v482 = vsel %vm472, %v455, %v457
        %v483 = vsel %vm472, %v457, %v459
        %v484 = vsel %vm472, %v459, %v461
        %v485 = vsel %vm472, %v463, %v465
        %v486 = vsel %vm472, %v465, %v467
        %v487 = vsel %vm472, %v467, %v469
        %v488 = vsel %vm472, %v469, %v471
        %vm505 = vcmask 261120
        %v507 = vsel %vm505, %v408, 0
        %v510 = vsel %vm505, %v409, 0
        %v513 = vsel %vm505, %v410, 0
        %v516 = vsel %vm505, %v411, 0
        %518 = vmatpush.msra.mxu0 0.0
        %519 = vmatpush.msra.mxu0 0.0
        %520 = vmatpush.msra.mxu0 0.0
        %521 = vmatpush.msra.mxu0 0.0
        %522 = vmatpush.msra.mxu0 0.0
        %523 = vmatpush.msra.mxu0 0.0
        %524 = vmatpush.msra.mxu0 0.0
        %525 = vmatpush.msra.mxu0 0.0
        %526 = vmatpush.msra.mxu0 0.0
        %527 = vmatpush.msra.mxu0 0.0
        %528 = vmatpush.msra.mxu0 0.0
        %529 = vmatpush.msra.mxu0 0.0
        %530 = vmatpush.msra.mxu0 %v485
        %531 = vmatpush.msra.mxu0 %v481
        %532 = vmatpush.msra.mxu0 %v477
        %533 = vmatpush.msra.mxu0 %v473
        %534 = vmatmul.f32.gmra.mxu0 %v507
        %v535 = vpop.f32.mrf.mxu0
        %v536 = vadd.f32 0.0, %v535
        %537 = vmatmul.f32.gmra.mxu0 %v510
        %v538 = vpop.f32.mrf.mxu0
        %v539 = vadd.f32 0.0, %v538
        %540 = vmatmul.f32.gmra.mxu0 %v513
        %v541 = vpop.f32.mrf.mxu0
        %v542 = vadd.f32 0.0, %v541
        %543 = vmatmul.f32.gmra.mxu0 %v516
        %v544 = vpop.f32.mrf.mxu0
        %v545 = vadd.f32 0.0, %v544
        %546 = vdwg.mxu0
        %547 = vmatpush.msra.mxu0 0.0
        %548 = vmatpush.msra.mxu0 0.0
        %549 = vmatpush.msra.mxu0 0.0
        %550 = vmatpush.msra.mxu0 0.0
        %551 = vmatpush.msra.mxu0 0.0
        %552 = vmatpush.msra.mxu0 0.0
        %553 = vmatpush.msra.mxu0 0.0
        %554 = vmatpush.msra.mxu0 0.0
        %555 = vmatpush.msra.mxu0 0.0
        %556 = vmatpush.msra.mxu0 0.0
        %557 = vmatpush.msra.mxu0 0.0
        %558 = vmatpush.msra.mxu0 0.0
        %559 = vmatpush.msra.mxu0 %v486
        %560 = vmatpush.msra.mxu0 %v482
        %561 = vmatpush.msra.mxu0 %v478
        %562 = vmatpush.msra.mxu0 %v474
        %563 = vmatmul.f32.gmra.mxu0 %v507
        %v564 = vpop.f32.mrf.mxu0
        %v565 = vadd.f32 0.0, %v564
        %566 = vmatmul.f32.gmra.mxu0 %v510
        %v567 = vpop.f32.mrf.mxu0
        %v568 = vadd.f32 0.0, %v567
        %569 = vmatmul.f32.gmra.mxu0 %v513
        %v570 = vpop.f32.mrf.mxu0
        %v571 = vadd.f32 0.0, %v570
        %572 = vmatmul.f32.gmra.mxu0 %v516
        %v573 = vpop.f32.mrf.mxu0
        %v574 = vadd.f32 0.0, %v573
        %575 = vdwg.mxu0
        %576 = vmatpush.msra.mxu0 0.0
        %577 = vmatpush.msra.mxu0 0.0
        %578 = vmatpush.msra.mxu0 0.0
        %579 = vmatpush.msra.mxu0 0.0
        %580 = vmatpush.msra.mxu0 0.0
        %581 = vmatpush.msra.mxu0 0.0
        %582 = vmatpush.msra.mxu0 0.0
        %583 = vmatpush.msra.mxu0 0.0
        %584 = vmatpush.msra.mxu0 0.0
        %585 = vmatpush.msra.mxu0 0.0
        %586 = vmatpush.msra.mxu0 0.0
        %587 = vmatpush.msra.mxu0 0.0
        %588 = vmatpush.msra.mxu0 %v487
        %589 = vmatpush.msra.mxu0 %v483
        %590 = vmatpush.msra.mxu0 %v479
        %591 = vmatpush.msra.mxu0 %v475
        %592 = vmatmul.f32.gmra.mxu0 %v507
        %v593 = vpop.f32.mrf.mxu0
        %v594 = vadd.f32 0.0, %v593
        %595 = vmatmul.f32.gmra.mxu0 %v510
        %v596 = vpop.f32.mrf.mxu0
        %v597 = vadd.f32 0.0, %v596
        %598 = vmatmul.f32.gmra.mxu0 %v513
        %v599 = vpop.f32.mrf.mxu0
        %v600 = vadd.f32 0.0, %v599
        %601 = vmatmul.f32.gmra.mxu0 %v516
        %v602 = vpop.f32.mrf.mxu0
        %v603 = vadd.f32 0.0, %v602
        %604 = vdwg.mxu0
        %605 = vmatpush.msra.mxu0 0.0
        %606 = vmatpush.msra.mxu0 0.0
        %607 = vmatpush.msra.mxu0 0.0
        %608 = vmatpush.msra.mxu0 0.0
        %609 = vmatpush.msra.mxu0 0.0
        %610 = vmatpush.msra.mxu0 0.0
        %611 = vmatpush.msra.mxu0 0.0
        %612 = vmatpush.msra.mxu0 0.0
        %613 = vmatpush.msra.mxu0 0.0
        %614 = vmatpush.msra.mxu0 0.0
        %615 = vmatpush.msra.mxu0 0.0
        %616 = vmatpush.msra.mxu0 0.0
        %617 = vmatpush.msra.mxu0 %v488
        %618 = vmatpush.msra.mxu0 %v484
        %619 = vmatpush.msra.mxu0 %v480
        %620 = vmatpush.msra.mxu0 %v476
        %621 = vmatmul.f32.gmra.mxu0 %v507
        %v622 = vpop.f32.mrf.mxu0
        %v623 = vadd.f32 0.0, %v622
        %624 = vmatmul.f32.gmra.mxu0 %v510
        %v625 = vpop.f32.mrf.mxu0
        %v626 = vadd.f32 0.0, %v625
        %627 = vmatmul.f32.gmra.mxu0 %v513
        %v628 = vpop.f32.mrf.mxu0
        %v629 = vadd.f32 0.0, %v628
        %630 = vmatmul.f32.gmra.mxu0 %v516
        %v631 = vpop.f32.mrf.mxu0
        %v632 = vadd.f32 0.0, %v631
        %633 = vdwg.mxu0
        %v635 = vsel %vm505, %v399, 0
        %v638 = vsel %vm505, %v400, 0
        %v641 = vsel %vm505, %v401, 0
        %v644 = vsel %vm505, %v402, 0
        %646 = vmatpush.msra.mxu0 0.0
        %647 = vmatpush.msra.mxu0 0.0
        %648 = vmatpush.msra.mxu0 0.0
        %649 = vmatpush.msra.mxu0 0.0
        %650 = vmatpush.msra.mxu0 0.0
        %651 = vmatpush.msra.mxu0 0.0
        %652 = vmatpush.msra.mxu0 0.0
        %653 = vmatpush.msra.mxu0 0.0
        %654 = vmatpush.msra.mxu0 0.0
        %655 = vmatpush.msra.mxu0 0.0
        %656 = vmatpush.msra.mxu0 0.0
        %657 = vmatpush.msra.mxu0 0.0
        %658 = vmatpush.msra.mxu0 %v395
        %659 = vmatpush.msra.mxu0 %v391
        %660 = vmatpush.msra.mxu0 %v387
        %661 = vmatpush.msra.mxu0 %v383
        %662 = vmatmul.f32.gmra.mxu0 %v635
        %v663 = vpop.f32.mrf.mxu0
        %v664 = vadd.f32 %v536, %v663
        %665 = vmatmul.f32.gmra.mxu0 %v638
        %v666 = vpop.f32.mrf.mxu0
        %v667 = vadd.f32 %v539, %v666
        %668 = vmatmul.f32.gmra.mxu0 %v641
        %v669 = vpop.f32.mrf.mxu0
        %v670 = vadd.f32 %v542, %v669
        %671 = vmatmul.f32.gmra.mxu0 %v644
        %v672 = vpop.f32.mrf.mxu0
        %v673 = vadd.f32 %v545, %v672
        %674 = vdwg.mxu0
        %675 = vmatpush.msra.mxu0 0.0
        %676 = vmatpush.msra.mxu0 0.0
        %677 = vmatpush.msra.mxu0 0.0
        %678 = vmatpush.msra.mxu0 0.0
        %679 = vmatpush.msra.mxu0 0.0
        %680 = vmatpush.msra.mxu0 0.0
        %681 = vmatpush.msra.mxu0 0.0
        %682 = vmatpush.msra.mxu0 0.0
        %683 = vmatpush.msra.mxu0 0.0
        %684 = vmatpush.msra.mxu0 0.0
        %685 = vmatpush.msra.mxu0 0.0
        %686 = vmatpush.msra.mxu0 0.0
        %687 = vmatpush.msra.mxu0 %v396
        %688 = vmatpush.msra.mxu0 %v392
        %689 = vmatpush.msra.mxu0 %v388
        %690 = vmatpush.msra.mxu0 %v384
        %691 = vmatmul.f32.gmra.mxu0 %v635
        %v692 = vpop.f32.mrf.mxu0
        %v693 = vadd.f32 %v565, %v692
        %694 = vmatmul.f32.gmra.mxu0 %v638
        %v695 = vpop.f32.mrf.mxu0
        %v696 = vadd.f32 %v568, %v695
        %697 = vmatmul.f32.gmra.mxu0 %v641
        %v698 = vpop.f32.mrf.mxu0
        %v699 = vadd.f32 %v571, %v698
        %700 = vmatmul.f32.gmra.mxu0 %v644
        %v701 = vpop.f32.mrf.mxu0
        %v702 = vadd.f32 %v574, %v701
        %703 = vdwg.mxu0
        %704 = vmatpush.msra.mxu0 0.0
        %705 = vmatpush.msra.mxu0 0.0
        %706 = vmatpush.msra.mxu0 0.0
        %707 = vmatpush.msra.mxu0 0.0
        %708 = vmatpush.msra.mxu0 0.0
        %709 = vmatpush.msra.mxu0 0.0
        %710 = vmatpush.msra.mxu0 0.0
        %711 = vmatpush.msra.mxu0 0.0
        %712 = vmatpush.msra.mxu0 0.0
        %713 = vmatpush.msra.mxu0 0.0
        %714 = vmatpush.msra.mxu0 0.0
        %715 = vmatpush.msra.mxu0 0.0
        %716 = vmatpush.msra.mxu0 %v397
        %717 = vmatpush.msra.mxu0 %v393
        %718 = vmatpush.msra.mxu0 %v389
        %719 = vmatpush.msra.mxu0 %v385
        %720 = vmatmul.f32.gmra.mxu0 %v635
        %v721 = vpop.f32.mrf.mxu0
        %v722 = vadd.f32 %v594, %v721
        %723 = vmatmul.f32.gmra.mxu0 %v638
        %v724 = vpop.f32.mrf.mxu0
        %v725 = vadd.f32 %v597, %v724
        %726 = vmatmul.f32.gmra.mxu0 %v641
        %v727 = vpop.f32.mrf.mxu0
        %v728 = vadd.f32 %v600, %v727
        %729 = vmatmul.f32.gmra.mxu0 %v644
        %v730 = vpop.f32.mrf.mxu0
        %v731 = vadd.f32 %v603, %v730
        %732 = vdwg.mxu0
        %733 = vmatpush.msra.mxu0 0.0
        %734 = vmatpush.msra.mxu0 0.0
        %735 = vmatpush.msra.mxu0 0.0
        %736 = vmatpush.msra.mxu0 0.0
        %737 = vmatpush.msra.mxu0 0.0
        %738 = vmatpush.msra.mxu0 0.0
        %739 = vmatpush.msra.mxu0 0.0
        %740 = vmatpush.msra.mxu0 0.0
        %741 = vmatpush.msra.mxu0 0.0
        %742 = vmatpush.msra.mxu0 0.0
        %743 = vmatpush.msra.mxu0 0.0
        %744 = vmatpush.msra.mxu0 0.0
        %745 = vmatpush.msra.mxu0 %v398
        %746 = vmatpush.msra.mxu0 %v394
        %747 = vmatpush.msra.mxu0 %v390
        %748 = vmatpush.msra.mxu0 %v386
        %749 = vmatmul.f32.gmra.mxu0 %v635
        %v750 = vpop.f32.mrf.mxu0
        %v751 = vadd.f32 %v623, %v750
        %752 = vmatmul.f32.gmra.mxu0 %v638
        %v753 = vpop.f32.mrf.mxu0
        %v754 = vadd.f32 %v626, %v753
        %755 = vmatmul.f32.gmra.mxu0 %v641
        %v756 = vpop.f32.mrf.mxu0
        %v757 = vadd.f32 %v629, %v756
        %758 = vmatmul.f32.gmra.mxu0 %v644
        %v759 = vpop.f32.mrf.mxu0
        %v760 = vadd.f32 %v632, %v759
        %761 = vdwg.mxu0
        %s762 = scalar_lea.vmem %s2, 64
        %v763 = vld [vmem:[%s762] sm:$0xff]
        %v764 = vld [vmem:[%s762 + $0x8] sm:$0xff]
        %v765 = vld [vmem:[%s762 + $0x10] sm:$0xff]
        %v766 = vld [vmem:[%s762 + $0x18] sm:$0xff]
        %767 = vrot.lane.b32.xlu0 %v383, 126
        %v768 = vpop.permute.xlu0 %767
        %769 = vrot.lane.b32.xlu0 %v384, 126
        %v770 = vpop.permute.xlu0 %769
        %771 = vrot.lane.b32.xlu0 %v385, 126
        %v772 = vpop.permute.xlu0 %771
        %773 = vrot.lane.b32.xlu0 %v386, 126
        %v774 = vpop.permute.xlu0 %773
        %775 = vrot.lane.b32.xlu0 %v403, 126
        %v776 = vpop.permute.xlu0 %775
        %777 = vrot.lane.b32.xlu0 %v387, 126
        %v778 = vpop.permute.xlu0 %777
        %779 = vrot.lane.b32.xlu0 %v388, 126
        %v780 = vpop.permute.xlu0 %779
        %781 = vrot.lane.b32.xlu0 %v389, 126
        %v782 = vpop.permute.xlu0 %781
        %783 = vrot.lane.b32.xlu0 %v390, 126
        %v784 = vpop.permute.xlu0 %783
        %785 = vrot.lane.b32.xlu0 %v404, 126
        %v786 = vpop.permute.xlu0 %785
        %787 = vrot.lane.b32.xlu0 %v391, 126
        %v788 = vpop.permute.xlu0 %787
        %789 = vrot.lane.b32.xlu0 %v392, 126
        %v790 = vpop.permute.xlu0 %789
        %791 = vrot.lane.b32.xlu0 %v393, 126
        %v792 = vpop.permute.xlu0 %791
        %793 = vrot.lane.b32.xlu0 %v394, 126
        %v794 = vpop.permute.xlu0 %793
        %795 = vrot.lane.b32.xlu0 %v405, 126
        %v796 = vpop.permute.xlu0 %795
        %797 = vrot.lane.b32.xlu0 %v395, 126
        %v798 = vpop.permute.xlu0 %797
        %799 = vrot.lane.b32.xlu0 %v396, 126
        %v800 = vpop.permute.xlu0 %799
        %801 = vrot.lane.b32.xlu0 %v397, 126
        %v802 = vpop.permute.xlu0 %801
        %803 = vrot.lane.b32.xlu0 %v398, 126
        %v804 = vpop.permute.xlu0 %803
        %805 = vrot.lane.b32.xlu0 %v406, 126
        %v806 = vpop.permute.xlu0 %805
        %vm807 = vcmask 1031168
        %v808 = vsel %vm807, %v768, %v770
        %v809 = vsel %vm807, %v770, %v772
        %v810 = vsel %vm807, %v772, %v774
        %v811 = vsel %vm807, %v774, %v776
        %v812 = vsel %vm807, %v778, %v780
        %v813 = vsel %vm807, %v780, %v782
        %v814 = vsel %vm807, %v782, %v784
        %v815 = vsel %vm807, %v784, %v786
        %v816 = vsel %vm807, %v788, %v790
        %v817 = vsel %vm807, %v790, %v792
        %v818 = vsel %vm807, %v792, %v794
        %v819 = vsel %vm807, %v794, %v796
        %v820 = vsel %vm807, %v798, %v800
        %v821 = vsel %vm807, %v800, %v802
        %v822 = vsel %vm807, %v802, %v804
        %v823 = vsel %vm807, %v804, %v806
        %v841 = vsel %vm505, %v763, 0
        %v844 = vsel %vm505, %v764, 0
        %v847 = vsel %vm505, %v765, 0
        %v850 = vsel %vm505, %v766, 0
        %852 = vmatpush.msra.mxu0 0.0
        %853 = vmatpush.msra.mxu0 0.0
        %854 = vmatpush.msra.mxu0 0.0
        %855 = vmatpush.msra.mxu0 0.0
        %856 = vmatpush.msra.mxu0 0.0
        %857 = vmatpush.msra.mxu0 0.0
        %858 = vmatpush.msra.mxu0 0.0
        %859 = vmatpush.msra.mxu0 0.0
        %860 = vmatpush.msra.mxu0 0.0
        %861 = vmatpush.msra.mxu0 0.0
        %862 = vmatpush.msra.mxu0 0.0
        %863 = vmatpush.msra.mxu0 0.0
        %864 = vmatpush.msra.mxu0 %v820
        %865 = vmatpush.msra.mxu0 %v816
        %866 = vmatpush.msra.mxu0 %v812
        %867 = vmatpush.msra.mxu0 %v808
        %868 = vmatmul.f32.gmra.mxu0 %v841
        %v869 = vpop.f32.mrf.mxu0
        %v870 = vadd.f32 0.0, %v869
        %871 = vmatmul.f32.gmra.mxu0 %v844
        %v872 = vpop.f32.mrf.mxu0
        %v873 = vadd.f32 0.0, %v872
        %874 = vmatmul.f32.gmra.mxu0 %v847
        %v875 = vpop.f32.mrf.mxu0
        %v876 = vadd.f32 0.0, %v875
        %877 = vmatmul.f32.gmra.mxu0 %v850
        %v878 = vpop.f32.mrf.mxu0
        %v879 = vadd.f32 0.0, %v878
        %880 = vdwg.mxu0
        %881 = vmatpush.msra.mxu0 0.0
        %882 = vmatpush.msra.mxu0 0.0
        %883 = vmatpush.msra.mxu0 0.0
        %884 = vmatpush.msra.mxu0 0.0
        %885 = vmatpush.msra.mxu0 0.0
        %886 = vmatpush.msra.mxu0 0.0
        %887 = vmatpush.msra.mxu0 0.0
        %888 = vmatpush.msra.mxu0 0.0
        %889 = vmatpush.msra.mxu0 0.0
        %890 = vmatpush.msra.mxu0 0.0
        %891 = vmatpush.msra.mxu0 0.0
        %892 = vmatpush.msra.mxu0 0.0
        %893 = vmatpush.msra.mxu0 %v821
        %894 = vmatpush.msra.mxu0 %v817
        %895 = vmatpush.msra.mxu0 %v813
        %896 = vmatpush.msra.mxu0 %v809
        %897 = vmatmul.f32.gmra.mxu0 %v841
        %v898 = vpop.f32.mrf.mxu0
        %v899 = vadd.f32 0.0, %v898
        %900 = vmatmul.f32.gmra.mxu0 %v844
        %v901 = vpop.f32.mrf.mxu0
        %v902 = vadd.f32 0.0, %v901
        %903 = vmatmul.f32.gmra.mxu0 %v847
        %v904 = vpop.f32.mrf.mxu0
        %v905 = vadd.f32 0.0, %v904
        %906 = vmatmul.f32.gmra.mxu0 %v850
        %v907 = vpop.f32.mrf.mxu0
        %v908 = vadd.f32 0.0, %v907
        %909 = vdwg.mxu0
        %910 = vmatpush.msra.mxu0 0.0
        %911 = vmatpush.msra.mxu0 0.0
        %912 = vmatpush.msra.mxu0 0.0
        %913 = vmatpush.msra.mxu0 0.0
        %914 = vmatpush.msra.mxu0 0.0
        %915 = vmatpush.msra.mxu0 0.0
        %916 = vmatpush.msra.mxu0 0.0
        %917 = vmatpush.msra.mxu0 0.0
        %918 = vmatpush.msra.mxu0 0.0
        %919 = vmatpush.msra.mxu0 0.0
        %920 = vmatpush.msra.mxu0 0.0
        %921 = vmatpush.msra.mxu0 0.0
        %922 = vmatpush.msra.mxu0 %v822
        %923 = vmatpush.msra.mxu0 %v818
        %924 = vmatpush.msra.mxu0 %v814
        %925 = vmatpush.msra.mxu0 %v810
        %926 = vmatmul.f32.gmra.mxu0 %v841
        %v927 = vpop.f32.mrf.mxu0
        %v928 = vadd.f32 0.0, %v927
        %929 = vmatmul.f32.gmra.mxu0 %v844
        %v930 = vpop.f32.mrf.mxu0
        %v931 = vadd.f32 0.0, %v930
        %932 = vmatmul.f32.gmra.mxu0 %v847
        %v933 = vpop.f32.mrf.mxu0
        %v934 = vadd.f32 0.0, %v933
        %935 = vmatmul.f32.gmra.mxu0 %v850
        %v936 = vpop.f32.mrf.mxu0
        %v937 = vadd.f32 0.0, %v936
        %938 = vdwg.mxu0
        %939 = vmatpush.msra.mxu0 0.0
        %940 = vmatpush.msra.mxu0 0.0
        %941 = vmatpush.msra.mxu0 0.0
        %942 = vmatpush.msra.mxu0 0.0
        %943 = vmatpush.msra.mxu0 0.0
        %944 = vmatpush.msra.mxu0 0.0
        %945 = vmatpush.msra.mxu0 0.0
        %946 = vmatpush.msra.mxu0 0.0
        %947 = vmatpush.msra.mxu0 0.0
        %948 = vmatpush.msra.mxu0 0.0
        %949 = vmatpush.msra.mxu0 0.0
        %950 = vmatpush.msra.mxu0 0.0
        %951 = vmatpush.msra.mxu0 %v823
        %952 = vmatpush.msra.mxu0 %v819
        %953 = vmatpush.msra.mxu0 %v815
        %954 = vmatpush.msra.mxu0 %v811
        %955 = vmatmul.f32.gmra.mxu0 %v841
        %v956 = vpop.f32.mrf.mxu0
        %v957 = vadd.f32 0.0, %v956
        %958 = vmatmul.f32.gmra.mxu0 %v844
        %v959 = vpop.f32.mrf.mxu0
        %v960 = vadd.f32 0.0, %v959
        %961 = vmatmul.f32.gmra.mxu0 %v847
        %v962 = vpop.f32.mrf.mxu0
        %v963 = vadd.f32 0.0, %v962
        %964 = vmatmul.f32.gmra.mxu0 %v850
        %v965 = vpop.f32.mrf.mxu0
        %v966 = vadd.f32 0.0, %v965
        %967 = vdwg.mxu0
        %v968 = vadd.f32 %v664, %v870
        %v969 = vadd.f32 %v693, %v899
        %v970 = vadd.f32 %v722, %v928
        %v971 = vadd.f32 %v751, %v957
        %v972 = vadd.f32 %v667, %v873
        %v973 = vadd.f32 %v696, %v902
        %v974 = vadd.f32 %v725, %v931
        %v975 = vadd.f32 %v754, %v960
        %v976 = vadd.f32 %v670, %v876
        %v977 = vadd.f32 %v699, %v905
        %v978 = vadd.f32 %v728, %v934
        %v979 = vadd.f32 %v757, %v963
        %v980 = vadd.f32 %v673, %v879
        %v981 = vadd.f32 %v702, %v908
        %v982 = vadd.f32 %v731, %v937
        %v983 = vadd.f32 %v760, %v966
        %s984 = scalar_lea.vmem %s2, 96
        %v985 = vld [vmem:[%s984] sm:$0xff]
        %v986 = vld [vmem:[%s984 + $0x8] sm:$0xff]
        %v987 = vld [vmem:[%s984 + $0x10] sm:$0xff]
        %v988 = vld [vmem:[%s984 + $0x18] sm:$0xff]
        %989 = vrot.lane.b32.xlu0 %v383, 108
        %v990 = vpop.permute.xlu0 %989
        %991 = vrot.lane.b32.xlu0 %v384, 108
        %v992 = vpop.permute.xlu0 %991
        %993 = vrot.lane.b32.xlu0 %v385, 108
        %v994 = vpop.permute.xlu0 %993
        %995 = vrot.lane.b32.xlu0 %v386, 108
        %v996 = vpop.permute.xlu0 %995
        %997 = vrot.lane.b32.xlu0 %v403, 108
        %v998 = vpop.permute.xlu0 %997
        %999 = vrot.lane.b32.xlu0 %v387, 108
        %v1000 = vpop.permute.xlu0 %999
        %1001 = vrot.lane.b32.xlu0 %v388, 108
        %v1002 = vpop.permute.xlu0 %1001
        %1003 = vrot.lane.b32.xlu0 %v389, 108
        %v1004 = vpop.permute.xlu0 %1003
        %1005 = vrot.lane.b32.xlu0 %v390, 108
        %v1006 = vpop.permute.xlu0 %1005
        %1007 = vrot.lane.b32.xlu0 %v404, 108
        %v1008 = vpop.permute.xlu0 %1007
        %1009 = vrot.lane.b32.xlu0 %v391, 108
        %v1010 = vpop.permute.xlu0 %1009
        %1011 = vrot.lane.b32.xlu0 %v392, 108
        %v1012 = vpop.permute.xlu0 %1011
        %1013 = vrot.lane.b32.xlu0 %v393, 108
        %v1014 = vpop.permute.xlu0 %1013
        %1015 = vrot.lane.b32.xlu0 %v394, 108
        %v1016 = vpop.permute.xlu0 %1015
        %1017 = vrot.lane.b32.xlu0 %v405, 108
        %v1018 = vpop.permute.xlu0 %1017
        %1019 = vrot.lane.b32.xlu0 %v395, 108
        %v1020 = vpop.permute.xlu0 %1019
        %1021 = vrot.lane.b32.xlu0 %v396, 108
        %v1022 = vpop.permute.xlu0 %1021
        %1023 = vrot.lane.b32.xlu0 %v397, 108
        %v1024 = vpop.permute.xlu0 %1023
        %1025 = vrot.lane.b32.xlu0 %v398, 108
        %v1026 = vpop.permute.xlu0 %1025
        %1027 = vrot.lane.b32.xlu0 %v406, 108
        %v1028 = vpop.permute.xlu0 %1027
        %vm1029 = vcmask 883712
        %v1030 = vsel %vm1029, %v990, %v992
        %v1031 = vsel %vm1029, %v992, %v994
        %v1032 = vsel %vm1029, %v994, %v996
        %v1033 = vsel %vm1029, %v996, %v998
        %v1034 = vsel %vm1029, %v1000, %v1002
        %v1035 = vsel %vm1029, %v1002, %v1004
        %v1036 = vsel %vm1029, %v1004, %v1006
        %v1037 = vsel %vm1029, %v1006, %v1008
        %v1038 = vsel %vm1029, %v1010, %v1012
        %v1039 = vsel %vm1029, %v1012, %v1014
        %v1040 = vsel %vm1029, %v1014, %v1016
        %v1041 = vsel %vm1029, %v1016, %v1018
        %v1042 = vsel %vm1029, %v1020, %v1022
        %v1043 = vsel %vm1029, %v1022, %v1024
        %v1044 = vsel %vm1029, %v1024, %v1026
        %v1045 = vsel %vm1029, %v1026, %v1028
        %v1063 = vsel %vm505, %v985, 0
        %v1066 = vsel %vm505, %v986, 0
        %v1069 = vsel %vm505, %v987, 0
        %v1072 = vsel %vm505, %v988, 0
        %1074 = vmatpush.msra.mxu0 0.0
        %1075 = vmatpush.msra.mxu0 0.0
        %1076 = vmatpush.msra.mxu0 0.0
        %1077 = vmatpush.msra.mxu0 0.0
        %1078 = vmatpush.msra.mxu0 0.0
        %1079 = vmatpush.msra.mxu0 0.0
        %1080 = vmatpush.msra.mxu0 0.0
        %1081 = vmatpush.msra.mxu0 0.0
        %1082 = vmatpush.msra.mxu0 0.0
        %1083 = vmatpush.msra.mxu0 0.0
        %1084 = vmatpush.msra.mxu0 0.0
        %1085 = vmatpush.msra.mxu0 0.0
        %1086 = vmatpush.msra.mxu0 %v1042
        %1087 = vmatpush.msra.mxu0 %v1038
        %1088 = vmatpush.msra.mxu0 %v1034
        %1089 = vmatpush.msra.mxu0 %v1030
        %1090 = vmatmul.f32.gmra.mxu0 %v1063
        %v1091 = vpop.f32.mrf.mxu0
        %v1092 = vadd.f32 0.0, %v1091
        %1093 = vmatmul.f32.gmra.mxu0 %v1066
        %v1094 = vpop.f32.mrf.mxu0
        %v1095 = vadd.f32 0.0, %v1094
        %1096 = vmatmul.f32.gmra.mxu0 %v1069
        %v1097 = vpop.f32.mrf.mxu0
        %v1098 = vadd.f32 0.0, %v1097
        %1099 = vmatmul.f32.gmra.mxu0 %v1072
        %v1100 = vpop.f32.mrf.mxu0
        %v1101 = vadd.f32 0.0, %v1100
        %1102 = vdwg.mxu0
        %1103 = vmatpush.msra.mxu0 0.0
        %1104 = vmatpush.msra.mxu0 0.0
        %1105 = vmatpush.msra.mxu0 0.0
        %1106 = vmatpush.msra.mxu0 0.0
        %1107 = vmatpush.msra.mxu0 0.0
        %1108 = vmatpush.msra.mxu0 0.0
        %1109 = vmatpush.msra.mxu0 0.0
        %1110 = vmatpush.msra.mxu0 0.0
        %1111 = vmatpush.msra.mxu0 0.0
        %1112 = vmatpush.msra.mxu0 0.0
        %1113 = vmatpush.msra.mxu0 0.0
        %1114 = vmatpush.msra.mxu0 0.0
        %1115 = vmatpush.msra.mxu0 %v1043
        %1116 = vmatpush.msra.mxu0 %v1039
        %1117 = vmatpush.msra.mxu0 %v1035
        %1118 = vmatpush.msra.mxu0 %v1031
        %1119 = vmatmul.f32.gmra.mxu0 %v1063
        %v1120 = vpop.f32.mrf.mxu0
        %v1121 = vadd.f32 0.0, %v1120
        %1122 = vmatmul.f32.gmra.mxu0 %v1066
        %v1123 = vpop.f32.mrf.mxu0
        %v1124 = vadd.f32 0.0, %v1123
        %1125 = vmatmul.f32.gmra.mxu0 %v1069
        %v1126 = vpop.f32.mrf.mxu0
        %v1127 = vadd.f32 0.0, %v1126
        %1128 = vmatmul.f32.gmra.mxu0 %v1072
        %v1129 = vpop.f32.mrf.mxu0
        %v1130 = vadd.f32 0.0, %v1129
        %1131 = vdwg.mxu0
        %1132 = vmatpush.msra.mxu0 0.0
        %1133 = vmatpush.msra.mxu0 0.0
        %1134 = vmatpush.msra.mxu0 0.0
        %1135 = vmatpush.msra.mxu0 0.0
        %1136 = vmatpush.msra.mxu0 0.0
        %1137 = vmatpush.msra.mxu0 0.0
        %1138 = vmatpush.msra.mxu0 0.0
        %1139 = vmatpush.msra.mxu0 0.0
        %1140 = vmatpush.msra.mxu0 0.0
        %1141 = vmatpush.msra.mxu0 0.0
        %1142 = vmatpush.msra.mxu0 0.0
        %1143 = vmatpush.msra.mxu0 0.0
        %1144 = vmatpush.msra.mxu0 %v1044
        %1145 = vmatpush.msra.mxu0 %v1040
        %1146 = vmatpush.msra.mxu0 %v1036
        %1147 = vmatpush.msra.mxu0 %v1032
        %1148 = vmatmul.f32.gmra.mxu0 %v1063
        %v1149 = vpop.f32.mrf.mxu0
        %v1150 = vadd.f32 0.0, %v1149
        %1151 = vmatmul.f32.gmra.mxu0 %v1066
        %v1152 = vpop.f32.mrf.mxu0
        %v1153 = vadd.f32 0.0, %v1152
        %1154 = vmatmul.f32.gmra.mxu0 %v1069
        %v1155 = vpop.f32.mrf.mxu0
        %v1156 = vadd.f32 0.0, %v1155
        %1157 = vmatmul.f32.gmra.mxu0 %v1072
        %v1158 = vpop.f32.mrf.mxu0
        %v1159 = vadd.f32 0.0, %v1158
        %1160 = vdwg.mxu0
        %1161 = vmatpush.msra.mxu0 0.0
        %1162 = vmatpush.msra.mxu0 0.0
        %1163 = vmatpush.msra.mxu0 0.0
        %1164 = vmatpush.msra.mxu0 0.0
        %1165 = vmatpush.msra.mxu0 0.0
        %1166 = vmatpush.msra.mxu0 0.0
        %1167 = vmatpush.msra.mxu0 0.0
        %1168 = vmatpush.msra.mxu0 0.0
        %1169 = vmatpush.msra.mxu0 0.0
        %1170 = vmatpush.msra.mxu0 0.0
        %1171 = vmatpush.msra.mxu0 0.0
        %1172 = vmatpush.msra.mxu0 0.0
        %1173 = vmatpush.msra.mxu0 %v1045
        %1174 = vmatpush.msra.mxu0 %v1041
        %1175 = vmatpush.msra.mxu0 %v1037
        %1176 = vmatpush.msra.mxu0 %v1033
        %1177 = vmatmul.f32.gmra.mxu0 %v1063
        %v1178 = vpop.f32.mrf.mxu0
        %v1179 = vadd.f32 0.0, %v1178
        %1180 = vmatmul.f32.gmra.mxu0 %v1066
        %v1181 = vpop.f32.mrf.mxu0
        %v1182 = vadd.f32 0.0, %v1181
        %1183 = vmatmul.f32.gmra.mxu0 %v1069
        %v1184 = vpop.f32.mrf.mxu0
        %v1185 = vadd.f32 0.0, %v1184
        %1186 = vmatmul.f32.gmra.mxu0 %v1072
        %v1187 = vpop.f32.mrf.mxu0
        %v1188 = vadd.f32 0.0, %v1187
        %1189 = vdwg.mxu0
        %v1190 = vadd.f32 %v968, %v1092
        %v1191 = vadd.f32 %v969, %v1121
        %v1192 = vadd.f32 %v970, %v1150
        %v1193 = vadd.f32 %v971, %v1179
        %v1194 = vadd.f32 %v972, %v1095
        %v1195 = vadd.f32 %v973, %v1124
        %v1196 = vadd.f32 %v974, %v1153
        %v1197 = vadd.f32 %v975, %v1182
        %v1198 = vadd.f32 %v976, %v1098
        %v1199 = vadd.f32 %v977, %v1127
        %v1200 = vadd.f32 %v978, %v1156
        %v1201 = vadd.f32 %v979, %v1185
        %v1202 = vadd.f32 %v980, %v1101
        %v1203 = vadd.f32 %v981, %v1130
        %v1204 = vadd.f32 %v982, %v1159
        %v1205 = vadd.f32 %v983, %v1188
        %s1206 = scalar_lea.vmem %s2, 128
        %v1207 = vld [vmem:[%s1206] sm:$0xff]
        %v1208 = vld [vmem:[%s1206 + $0x8] sm:$0xff]
        %v1209 = vld [vmem:[%s1206 + $0x10] sm:$0xff]
        %v1210 = vld [vmem:[%s1206 + $0x18] sm:$0xff]
        %1211 = vrot.lane.b32.xlu0 %v383, 107
        %v1212 = vpop.permute.xlu0 %1211
        %1213 = vrot.lane.b32.xlu0 %v384, 107
        %v1214 = vpop.permute.xlu0 %1213
        %1215 = vrot.lane.b32.xlu0 %v385, 107
        %v1216 = vpop.permute.xlu0 %1215
        %1217 = vrot.lane.b32.xlu0 %v386, 107
        %v1218 = vpop.permute.xlu0 %1217
        %1219 = vrot.lane.b32.xlu0 %v403, 107
        %v1220 = vpop.permute.xlu0 %1219
        %1221 = vrot.lane.b32.xlu0 %v387, 107
        %v1222 = vpop.permute.xlu0 %1221
        %1223 = vrot.lane.b32.xlu0 %v388, 107
        %v1224 = vpop.permute.xlu0 %1223
        %1225 = vrot.lane.b32.xlu0 %v389, 107
        %v1226 = vpop.permute.xlu0 %1225
        %1227 = vrot.lane.b32.xlu0 %v390, 107
        %v1228 = vpop.permute.xlu0 %1227
        %1229 = vrot.lane.b32.xlu0 %v404, 107
        %v1230 = vpop.permute.xlu0 %1229
        %1231 = vrot.lane.b32.xlu0 %v391, 107
        %v1232 = vpop.permute.xlu0 %1231
        %1233 = vrot.lane.b32.xlu0 %v392, 107
        %v1234 = vpop.permute.xlu0 %1233
        %1235 = vrot.lane.b32.xlu0 %v393, 107
        %v1236 = vpop.permute.xlu0 %1235
        %1237 = vrot.lane.b32.xlu0 %v394, 107
        %v1238 = vpop.permute.xlu0 %1237
        %1239 = vrot.lane.b32.xlu0 %v405, 107
        %v1240 = vpop.permute.xlu0 %1239
        %1241 = vrot.lane.b32.xlu0 %v395, 107
        %v1242 = vpop.permute.xlu0 %1241
        %1243 = vrot.lane.b32.xlu0 %v396, 107
        %v1244 = vpop.permute.xlu0 %1243
        %1245 = vrot.lane.b32.xlu0 %v397, 107
        %v1246 = vpop.permute.xlu0 %1245
        %1247 = vrot.lane.b32.xlu0 %v398, 107
        %v1248 = vpop.permute.xlu0 %1247
        %1249 = vrot.lane.b32.xlu0 %v406, 107
        %v1250 = vpop.permute.xlu0 %1249
        %vm1251 = vcmask 875520
        %v1252 = vsel %vm1251, %v1212, %v1214
        %v1253 = vsel %vm1251, %v1214, %v1216
        %v1254 = vsel %vm1251, %v1216, %v1218
        %v1255 = vsel %vm1251, %v1218, %v1220
        %v1256 = vsel %vm1251, %v1222, %v1224
        %v1257 = vsel %vm1251, %v1224, %v1226
        %v1258 = vsel %vm1251, %v1226, %v1228
        %v1259 = vsel %vm1251, %v1228, %v1230
        %v1260 = vsel %vm1251, %v1232, %v1234
        %v1261 = vsel %vm1251, %v1234, %v1236
        %v1262 = vsel %vm1251, %v1236, %v1238
        %v1263 = vsel %vm1251, %v1238, %v1240
        %v1264 = vsel %vm1251, %v1242, %v1244
        %v1265 = vsel %vm1251, %v1244, %v1246
        %v1266 = vsel %vm1251, %v1246, %v1248
        %v1267 = vsel %vm1251, %v1248, %v1250
        %v1285 = vsel %vm505, %v1207, 0
        %v1288 = vsel %vm505, %v1208, 0
        %v1291 = vsel %vm505, %v1209, 0
        %v1294 = vsel %vm505, %v1210, 0
        %1296 = vmatpush.msra.mxu0 0.0
        %1297 = vmatpush.msra.mxu0 0.0
        %1298 = vmatpush.msra.mxu0 0.0
        %1299 = vmatpush.msra.mxu0 0.0
        %1300 = vmatpush.msra.mxu0 0.0
        %1301 = vmatpush.msra.mxu0 0.0
        %1302 = vmatpush.msra.mxu0 0.0
        %1303 = vmatpush.msra.mxu0 0.0
        %1304 = vmatpush.msra.mxu0 0.0
        %1305 = vmatpush.msra.mxu0 0.0
        %1306 = vmatpush.msra.mxu0 0.0
        %1307 = vmatpush.msra.mxu0 0.0
        %1308 = vmatpush.msra.mxu0 %v1264
        %1309 = vmatpush.msra.mxu0 %v1260
        %1310 = vmatpush.msra.mxu0 %v1256
        %1311 = vmatpush.msra.mxu0 %v1252
        %1312 = vmatmul.f32.gmra.mxu0 %v1285
        %v1313 = vpop.f32.mrf.mxu0
        %v1314 = vadd.f32 0.0, %v1313
        %1315 = vmatmul.f32.gmra.mxu0 %v1288
        %v1316 = vpop.f32.mrf.mxu0
        %v1317 = vadd.f32 0.0, %v1316
        %1318 = vmatmul.f32.gmra.mxu0 %v1291
        %v1319 = vpop.f32.mrf.mxu0
        %v1320 = vadd.f32 0.0, %v1319
        %1321 = vmatmul.f32.gmra.mxu0 %v1294
        %v1322 = vpop.f32.mrf.mxu0
        %v1323 = vadd.f32 0.0, %v1322
        %1324 = vdwg.mxu0
        %1325 = vmatpush.msra.mxu0 0.0
        %1326 = vmatpush.msra.mxu0 0.0
        %1327 = vmatpush.msra.mxu0 0.0
        %1328 = vmatpush.msra.mxu0 0.0
        %1329 = vmatpush.msra.mxu0 0.0
        %1330 = vmatpush.msra.mxu0 0.0
        %1331 = vmatpush.msra.mxu0 0.0
        %1332 = vmatpush.msra.mxu0 0.0
        %1333 = vmatpush.msra.mxu0 0.0
        %1334 = vmatpush.msra.mxu0 0.0
        %1335 = vmatpush.msra.mxu0 0.0
        %1336 = vmatpush.msra.mxu0 0.0
        %1337 = vmatpush.msra.mxu0 %v1265
        %1338 = vmatpush.msra.mxu0 %v1261
        %1339 = vmatpush.msra.mxu0 %v1257
        %1340 = vmatpush.msra.mxu0 %v1253
        %1341 = vmatmul.f32.gmra.mxu0 %v1285
        %v1342 = vpop.f32.mrf.mxu0
        %v1343 = vadd.f32 0.0, %v1342
        %1344 = vmatmul.f32.gmra.mxu0 %v1288
        %v1345 = vpop.f32.mrf.mxu0
        %v1346 = vadd.f32 0.0, %v1345
        %1347 = vmatmul.f32.gmra.mxu0 %v1291
        %v1348 = vpop.f32.mrf.mxu0
        %v1349 = vadd.f32 0.0, %v1348
        %1350 = vmatmul.f32.gmra.mxu0 %v1294
        %v1351 = vpop.f32.mrf.mxu0
        %v1352 = vadd.f32 0.0, %v1351
        %1353 = vdwg.mxu0
        %1354 = vmatpush.msra.mxu0 0.0
        %1355 = vmatpush.msra.mxu0 0.0
        %1356 = vmatpush.msra.mxu0 0.0
        %1357 = vmatpush.msra.mxu0 0.0
        %1358 = vmatpush.msra.mxu0 0.0
        %1359 = vmatpush.msra.mxu0 0.0
        %1360 = vmatpush.msra.mxu0 0.0
        %1361 = vmatpush.msra.mxu0 0.0
        %1362 = vmatpush.msra.mxu0 0.0
        %1363 = vmatpush.msra.mxu0 0.0
        %1364 = vmatpush.msra.mxu0 0.0
        %1365 = vmatpush.msra.mxu0 0.0
        %1366 = vmatpush.msra.mxu0 %v1266
        %1367 = vmatpush.msra.mxu0 %v1262
        %1368 = vmatpush.msra.mxu0 %v1258
        %1369 = vmatpush.msra.mxu0 %v1254
        %1370 = vmatmul.f32.gmra.mxu0 %v1285
        %v1371 = vpop.f32.mrf.mxu0
        %v1372 = vadd.f32 0.0, %v1371
        %1373 = vmatmul.f32.gmra.mxu0 %v1288
        %v1374 = vpop.f32.mrf.mxu0
        %v1375 = vadd.f32 0.0, %v1374
        %1376 = vmatmul.f32.gmra.mxu0 %v1291
        %v1377 = vpop.f32.mrf.mxu0
        %v1378 = vadd.f32 0.0, %v1377
        %1379 = vmatmul.f32.gmra.mxu0 %v1294
        %v1380 = vpop.f32.mrf.mxu0
        %v1381 = vadd.f32 0.0, %v1380
        %1382 = vdwg.mxu0
        %1383 = vmatpush.msra.mxu0 0.0
        %1384 = vmatpush.msra.mxu0 0.0
        %1385 = vmatpush.msra.mxu0 0.0
        %1386 = vmatpush.msra.mxu0 0.0
        %1387 = vmatpush.msra.mxu0 0.0
        %1388 = vmatpush.msra.mxu0 0.0
        %1389 = vmatpush.msra.mxu0 0.0
        %1390 = vmatpush.msra.mxu0 0.0
        %1391 = vmatpush.msra.mxu0 0.0
        %1392 = vmatpush.msra.mxu0 0.0
        %1393 = vmatpush.msra.mxu0 0.0
        %1394 = vmatpush.msra.mxu0 0.0
        %1395 = vmatpush.msra.mxu0 %v1267
        %1396 = vmatpush.msra.mxu0 %v1263
        %1397 = vmatpush.msra.mxu0 %v1259
        %1398 = vmatpush.msra.mxu0 %v1255
        %1399 = vmatmul.f32.gmra.mxu0 %v1285
        %v1400 = vpop.f32.mrf.mxu0
        %v1401 = vadd.f32 0.0, %v1400
        %1402 = vmatmul.f32.gmra.mxu0 %v1288
        %v1403 = vpop.f32.mrf.mxu0
        %v1404 = vadd.f32 0.0, %v1403
        %1405 = vmatmul.f32.gmra.mxu0 %v1291
        %v1406 = vpop.f32.mrf.mxu0
        %v1407 = vadd.f32 0.0, %v1406
        %1408 = vmatmul.f32.gmra.mxu0 %v1294
        %v1409 = vpop.f32.mrf.mxu0
        %v1410 = vadd.f32 0.0, %v1409
        %1411 = vdwg.mxu0
        %v1412 = vadd.f32 %v1190, %v1314
        %v1413 = vadd.f32 %v1191, %v1343
        %v1414 = vadd.f32 %v1192, %v1372
        %v1415 = vadd.f32 %v1193, %v1401
        %v1416 = vadd.f32 %v1194, %v1317
        %v1417 = vadd.f32 %v1195, %v1346
        %v1418 = vadd.f32 %v1196, %v1375
        %v1419 = vadd.f32 %v1197, %v1404
        %v1420 = vadd.f32 %v1198, %v1320
        %v1421 = vadd.f32 %v1199, %v1349
        %v1422 = vadd.f32 %v1200, %v1378
        %v1423 = vadd.f32 %v1201, %v1407
        %v1424 = vadd.f32 %v1202, %v1323
        %v1425 = vadd.f32 %v1203, %v1352
        %v1426 = vadd.f32 %v1204, %v1381
        %v1427 = vadd.f32 %v1205, %v1410
        %s1428 = scalar_lea.vmem %s2, 160
        %v1429 = vld [vmem:[%s1428] sm:$0xff]
        %v1430 = vld [vmem:[%s1428 + $0x8] sm:$0xff]
        %v1431 = vld [vmem:[%s1428 + $0x10] sm:$0xff]
        %v1432 = vld [vmem:[%s1428 + $0x18] sm:$0xff]
        %1433 = vrot.lane.b32.xlu0 %v383, 106
        %v1434 = vpop.permute.xlu0 %1433
        %1435 = vrot.lane.b32.xlu0 %v384, 106
        %v1436 = vpop.permute.xlu0 %1435
        %1437 = vrot.lane.b32.xlu0 %v385, 106
        %v1438 = vpop.permute.xlu0 %1437
        %1439 = vrot.lane.b32.xlu0 %v386, 106
        %v1440 = vpop.permute.xlu0 %1439
        %1441 = vrot.lane.b32.xlu0 %v403, 106
        %v1442 = vpop.permute.xlu0 %1441
        %1443 = vrot.lane.b32.xlu0 %v387, 106
        %v1444 = vpop.permute.xlu0 %1443
        %1445 = vrot.lane.b32.xlu0 %v388, 106
        %v1446 = vpop.permute.xlu0 %1445
        %1447 = vrot.lane.b32.xlu0 %v389, 106
        %v1448 = vpop.permute.xlu0 %1447
        %1449 = vrot.lane.b32.xlu0 %v390, 106
        %v1450 = vpop.permute.xlu0 %1449
        %1451 = vrot.lane.b32.xlu0 %v404, 106
        %v1452 = vpop.permute.xlu0 %1451
        %1453 = vrot.lane.b32.xlu0 %v391, 106
        %v1454 = vpop.permute.xlu0 %1453
        %1455 = vrot.lane.b32.xlu0 %v392, 106
        %v1456 = vpop.permute.xlu0 %1455
        %1457 = vrot.lane.b32.xlu0 %v393, 106
        %v1458 = vpop.permute.xlu0 %1457
        %1459 = vrot.lane.b32.xlu0 %v394, 106
        %v1460 = vpop.permute.xlu0 %1459
        %1461 = vrot.lane.b32.xlu0 %v405, 106
        %v1462 = vpop.permute.xlu0 %1461
        %1463 = vrot.lane.b32.xlu0 %v395, 106
        %v1464 = vpop.permute.xlu0 %1463
        %1465 = vrot.lane.b32.xlu0 %v396, 106
        %v1466 = vpop.permute.xlu0 %1465
        %1467 = vrot.lane.b32.xlu0 %v397, 106
        %v1468 = vpop.permute.xlu0 %1467
        %1469 = vrot.lane.b32.xlu0 %v398, 106
        %v1470 = vpop.permute.xlu0 %1469
        %1471 = vrot.lane.b32.xlu0 %v406, 106
        %v1472 = vpop.permute.xlu0 %1471
        %vm1473 = vcmask 867328
        %v1474 = vsel %vm1473, %v1434, %v1436
        %v1475 = vsel %vm1473, %v1436, %v1438
        %v1476 = vsel %vm1473, %v1438, %v1440
        %v1477 = vsel %vm1473, %v1440, %v1442
        %v1478 = vsel %vm1473, %v1444, %v1446
        %v1479 = vsel %vm1473, %v1446, %v1448
        %v1480 = vsel %vm1473, %v1448, %v1450
        %v1481 = vsel %vm1473, %v1450, %v1452
        %v1482 = vsel %vm1473, %v1454, %v1456
        %v1483 = vsel %vm1473, %v1456, %v1458
        %v1484 = vsel %vm1473, %v1458, %v1460
        %v1485 = vsel %vm1473, %v1460, %v1462
        %v1486 = vsel %vm1473, %v1464, %v1466
        %v1487 = vsel %vm1473, %v1466, %v1468
        %v1488 = vsel %vm1473, %v1468, %v1470
        %v1489 = vsel %vm1473, %v1470, %v1472
        %v1507 = vsel %vm505, %v1429, 0
        %v1510 = vsel %vm505, %v1430, 0
        %v1513 = vsel %vm505, %v1431, 0
        %v1516 = vsel %vm505, %v1432, 0
        %1518 = vmatpush.msra.mxu0 0.0
        %1519 = vmatpush.msra.mxu0 0.0
        %1520 = vmatpush.msra.mxu0 0.0
        %1521 = vmatpush.msra.mxu0 0.0
        %1522 = vmatpush.msra.mxu0 0.0
        %1523 = vmatpush.msra.mxu0 0.0
        %1524 = vmatpush.msra.mxu0 0.0
        %1525 = vmatpush.msra.mxu0 0.0
        %1526 = vmatpush.msra.mxu0 0.0
        %1527 = vmatpush.msra.mxu0 0.0
        %1528 = vmatpush.msra.mxu0 0.0
        %1529 = vmatpush.msra.mxu0 0.0
        %1530 = vmatpush.msra.mxu0 %v1486
        %1531 = vmatpush.msra.mxu0 %v1482
        %1532 = vmatpush.msra.mxu0 %v1478
        %1533 = vmatpush.msra.mxu0 %v1474
        %1534 = vmatmul.f32.gmra.mxu0 %v1507
        %v1535 = vpop.f32.mrf.mxu0
        %v1536 = vadd.f32 0.0, %v1535
        %1537 = vmatmul.f32.gmra.mxu0 %v1510
        %v1538 = vpop.f32.mrf.mxu0
        %v1539 = vadd.f32 0.0, %v1538
        %1540 = vmatmul.f32.gmra.mxu0 %v1513
        %v1541 = vpop.f32.mrf.mxu0
        %v1542 = vadd.f32 0.0, %v1541
        %1543 = vmatmul.f32.gmra.mxu0 %v1516
        %v1544 = vpop.f32.mrf.mxu0
        %v1545 = vadd.f32 0.0, %v1544
        %1546 = vdwg.mxu0
        %1547 = vmatpush.msra.mxu0 0.0
        %1548 = vmatpush.msra.mxu0 0.0
        %1549 = vmatpush.msra.mxu0 0.0
        %1550 = vmatpush.msra.mxu0 0.0
        %1551 = vmatpush.msra.mxu0 0.0
        %1552 = vmatpush.msra.mxu0 0.0
        %1553 = vmatpush.msra.mxu0 0.0
        %1554 = vmatpush.msra.mxu0 0.0
        %1555 = vmatpush.msra.mxu0 0.0
        %1556 = vmatpush.msra.mxu0 0.0
        %1557 = vmatpush.msra.mxu0 0.0
        %1558 = vmatpush.msra.mxu0 0.0
        %1559 = vmatpush.msra.mxu0 %v1487
        %1560 = vmatpush.msra.mxu0 %v1483
        %1561 = vmatpush.msra.mxu0 %v1479
        %1562 = vmatpush.msra.mxu0 %v1475
        %1563 = vmatmul.f32.gmra.mxu0 %v1507
        %v1564 = vpop.f32.mrf.mxu0
        %v1565 = vadd.f32 0.0, %v1564
        %1566 = vmatmul.f32.gmra.mxu0 %v1510
        %v1567 = vpop.f32.mrf.mxu0
        %v1568 = vadd.f32 0.0, %v1567
        %1569 = vmatmul.f32.gmra.mxu0 %v1513
        %v1570 = vpop.f32.mrf.mxu0
        %v1571 = vadd.f32 0.0, %v1570
        %1572 = vmatmul.f32.gmra.mxu0 %v1516
        %v1573 = vpop.f32.mrf.mxu0
        %v1574 = vadd.f32 0.0, %v1573
        %1575 = vdwg.mxu0
        %1576 = vmatpush.msra.mxu0 0.0
        %1577 = vmatpush.msra.mxu0 0.0
        %1578 = vmatpush.msra.mxu0 0.0
        %1579 = vmatpush.msra.mxu0 0.0
        %1580 = vmatpush.msra.mxu0 0.0
        %1581 = vmatpush.msra.mxu0 0.0
        %1582 = vmatpush.msra.mxu0 0.0
        %1583 = vmatpush.msra.mxu0 0.0
        %1584 = vmatpush.msra.mxu0 0.0
        %1585 = vmatpush.msra.mxu0 0.0
        %1586 = vmatpush.msra.mxu0 0.0
        %1587 = vmatpush.msra.mxu0 0.0
        %1588 = vmatpush.msra.mxu0 %v1488
        %1589 = vmatpush.msra.mxu0 %v1484
        %1590 = vmatpush.msra.mxu0 %v1480
        %1591 = vmatpush.msra.mxu0 %v1476
        %1592 = vmatmul.f32.gmra.mxu0 %v1507
        %v1593 = vpop.f32.mrf.mxu0
        %v1594 = vadd.f32 0.0, %v1593
        %1595 = vmatmul.f32.gmra.mxu0 %v1510
        %v1596 = vpop.f32.mrf.mxu0
        %v1597 = vadd.f32 0.0, %v1596
        %1598 = vmatmul.f32.gmra.mxu0 %v1513
        %v1599 = vpop.f32.mrf.mxu0
        %v1600 = vadd.f32 0.0, %v1599
        %1601 = vmatmul.f32.gmra.mxu0 %v1516
        %v1602 = vpop.f32.mrf.mxu0
        %v1603 = vadd.f32 0.0, %v1602
        %1604 = vdwg.mxu0
        %1605 = vmatpush.msra.mxu0 0.0
        %1606 = vmatpush.msra.mxu0 0.0
        %1607 = vmatpush.msra.mxu0 0.0
        %1608 = vmatpush.msra.mxu0 0.0
        %1609 = vmatpush.msra.mxu0 0.0
        %1610 = vmatpush.msra.mxu0 0.0
        %1611 = vmatpush.msra.mxu0 0.0
        %1612 = vmatpush.msra.mxu0 0.0
        %1613 = vmatpush.msra.mxu0 0.0
        %1614 = vmatpush.msra.mxu0 0.0
        %1615 = vmatpush.msra.mxu0 0.0
        %1616 = vmatpush.msra.mxu0 0.0
        %1617 = vmatpush.msra.mxu0 %v1489
        %1618 = vmatpush.msra.mxu0 %v1485
        %1619 = vmatpush.msra.mxu0 %v1481
        %1620 = vmatpush.msra.mxu0 %v1477
        %1621 = vmatmul.f32.gmra.mxu0 %v1507
        %v1622 = vpop.f32.mrf.mxu0
        %v1623 = vadd.f32 0.0, %v1622
        %1624 = vmatmul.f32.gmra.mxu0 %v1510
        %v1625 = vpop.f32.mrf.mxu0
        %v1626 = vadd.f32 0.0, %v1625
        %1627 = vmatmul.f32.gmra.mxu0 %v1513
        %v1628 = vpop.f32.mrf.mxu0
        %v1629 = vadd.f32 0.0, %v1628
        %1630 = vmatmul.f32.gmra.mxu0 %v1516
        %v1631 = vpop.f32.mrf.mxu0
        %v1632 = vadd.f32 0.0, %v1631
        %1633 = vdwg.mxu0
        %v1634 = vadd.f32 %v1412, %v1536
        %v1635 = vadd.f32 %v1413, %v1565
        %v1636 = vadd.f32 %v1414, %v1594
        %v1637 = vadd.f32 %v1415, %v1623
        %v1638 = vadd.f32 %v1416, %v1539
        %v1639 = vadd.f32 %v1417, %v1568
        %v1640 = vadd.f32 %v1418, %v1597
        %v1641 = vadd.f32 %v1419, %v1626
        %v1642 = vadd.f32 %v1420, %v1542
        %v1643 = vadd.f32 %v1421, %v1571
        %v1644 = vadd.f32 %v1422, %v1600
        %v1645 = vadd.f32 %v1423, %v1629
        %v1646 = vadd.f32 %v1424, %v1545
        %v1647 = vadd.f32 %v1425, %v1574
        %v1648 = vadd.f32 %v1426, %v1603
        %v1649 = vadd.f32 %v1427, %v1632
        %s1650 = scalar_lea.vmem %s2, 192
        %v1651 = vld [vmem:[%s1650] sm:$0xff]
        %v1652 = vld [vmem:[%s1650 + $0x8] sm:$0xff]
        %v1653 = vld [vmem:[%s1650 + $0x10] sm:$0xff]
        %v1654 = vld [vmem:[%s1650 + $0x18] sm:$0xff]
        %1655 = vrot.lane.b32.xlu0 %v383, 88
        %v1656 = vpop.permute.xlu0 %1655
        %1657 = vrot.lane.b32.xlu0 %v384, 88
        %v1658 = vpop.permute.xlu0 %1657
        %1659 = vrot.lane.b32.xlu0 %v385, 88
        %v1660 = vpop.permute.xlu0 %1659
        %1661 = vrot.lane.b32.xlu0 %v386, 88
        %v1662 = vpop.permute.xlu0 %1661
        %1663 = vrot.lane.b32.xlu0 %v403, 88
        %v1664 = vpop.permute.xlu0 %1663
        %1665 = vrot.lane.b32.xlu0 %v387, 88
        %v1666 = vpop.permute.xlu0 %1665
        %1667 = vrot.lane.b32.xlu0 %v388, 88
        %v1668 = vpop.permute.xlu0 %1667
        %1669 = vrot.lane.b32.xlu0 %v389, 88
        %v1670 = vpop.permute.xlu0 %1669
        %1671 = vrot.lane.b32.xlu0 %v390, 88
        %v1672 = vpop.permute.xlu0 %1671
        %1673 = vrot.lane.b32.xlu0 %v404, 88
        %v1674 = vpop.permute.xlu0 %1673
        %1675 = vrot.lane.b32.xlu0 %v391, 88
        %v1676 = vpop.permute.xlu0 %1675
        %1677 = vrot.lane.b32.xlu0 %v392, 88
        %v1678 = vpop.permute.xlu0 %1677
        %1679 = vrot.lane.b32.xlu0 %v393, 88
        %v1680 = vpop.permute.xlu0 %1679
        %1681 = vrot.lane.b32.xlu0 %v394, 88
        %v1682 = vpop.permute.xlu0 %1681
        %1683 = vrot.lane.b32.xlu0 %v405, 88
        %v1684 = vpop.permute.xlu0 %1683
        %1685 = vrot.lane.b32.xlu0 %v395, 88
        %v1686 = vpop.permute.xlu0 %1685
        %1687 = vrot.lane.b32.xlu0 %v396, 88
        %v1688 = vpop.permute.xlu0 %1687
        %1689 = vrot.lane.b32.xlu0 %v397, 88
        %v1690 = vpop.permute.xlu0 %1689
        %1691 = vrot.lane.b32.xlu0 %v398, 88
        %v1692 = vpop.permute.xlu0 %1691
        %1693 = vrot.lane.b32.xlu0 %v406, 88
        %v1694 = vpop.permute.xlu0 %1693
        %vm1695 = vcmask 719872
        %v1696 = vsel %vm1695, %v1656, %v1658
        %v1697 = vsel %vm1695, %v1658, %v1660
        %v1698 = vsel %vm1695, %v1660, %v1662
        %v1699 = vsel %vm1695, %v1662, %v1664
        %v1700 = vsel %vm1695, %v1666, %v1668
        %v1701 = vsel %vm1695, %v1668, %v1670
        %v1702 = vsel %vm1695, %v1670, %v1672
        %v1703 = vsel %vm1695, %v1672, %v1674
        %v1704 = vsel %vm1695, %v1676, %v1678
        %v1705 = vsel %vm1695, %v1678, %v1680
        %v1706 = vsel %vm1695, %v1680, %v1682
        %v1707 = vsel %vm1695, %v1682, %v1684
        %v1708 = vsel %vm1695, %v1686, %v1688
        %v1709 = vsel %vm1695, %v1688, %v1690
        %v1710 = vsel %vm1695, %v1690, %v1692
        %v1711 = vsel %vm1695, %v1692, %v1694
        %v1729 = vsel %vm505, %v1651, 0
        %v1732 = vsel %vm505, %v1652, 0
        %v1735 = vsel %vm505, %v1653, 0
        %v1738 = vsel %vm505, %v1654, 0
        %1740 = vmatpush.msra.mxu0 0.0
        %1741 = vmatpush.msra.mxu0 0.0
        %1742 = vmatpush.msra.mxu0 0.0
        %1743 = vmatpush.msra.mxu0 0.0
        %1744 = vmatpush.msra.mxu0 0.0
        %1745 = vmatpush.msra.mxu0 0.0
        %1746 = vmatpush.msra.mxu0 0.0
        %1747 = vmatpush.msra.mxu0 0.0
        %1748 = vmatpush.msra.mxu0 0.0
        %1749 = vmatpush.msra.mxu0 0.0
        %1750 = vmatpush.msra.mxu0 0.0
        %1751 = vmatpush.msra.mxu0 0.0
        %1752 = vmatpush.msra.mxu0 %v1708
        %1753 = vmatpush.msra.mxu0 %v1704
        %1754 = vmatpush.msra.mxu0 %v1700
        %1755 = vmatpush.msra.mxu0 %v1696
        %1756 = vmatmul.f32.gmra.mxu0 %v1729
        %v1757 = vpop.f32.mrf.mxu0
        %v1758 = vadd.f32 0.0, %v1757
        %1759 = vmatmul.f32.gmra.mxu0 %v1732
        %v1760 = vpop.f32.mrf.mxu0
        %v1761 = vadd.f32 0.0, %v1760
        %1762 = vmatmul.f32.gmra.mxu0 %v1735
        %v1763 = vpop.f32.mrf.mxu0
        %v1764 = vadd.f32 0.0, %v1763
        %1765 = vmatmul.f32.gmra.mxu0 %v1738
        %v1766 = vpop.f32.mrf.mxu0
        %v1767 = vadd.f32 0.0, %v1766
        %1768 = vdwg.mxu0
        %1769 = vmatpush.msra.mxu0 0.0
        %1770 = vmatpush.msra.mxu0 0.0
        %1771 = vmatpush.msra.mxu0 0.0
        %1772 = vmatpush.msra.mxu0 0.0
        %1773 = vmatpush.msra.mxu0 0.0
        %1774 = vmatpush.msra.mxu0 0.0
        %1775 = vmatpush.msra.mxu0 0.0
        %1776 = vmatpush.msra.mxu0 0.0
        %1777 = vmatpush.msra.mxu0 0.0
        %1778 = vmatpush.msra.mxu0 0.0
        %1779 = vmatpush.msra.mxu0 0.0
        %1780 = vmatpush.msra.mxu0 0.0
        %1781 = vmatpush.msra.mxu0 %v1709
        %1782 = vmatpush.msra.mxu0 %v1705
        %1783 = vmatpush.msra.mxu0 %v1701
        %1784 = vmatpush.msra.mxu0 %v1697
        %1785 = vmatmul.f32.gmra.mxu0 %v1729
        %v1786 = vpop.f32.mrf.mxu0
        %v1787 = vadd.f32 0.0, %v1786
        %1788 = vmatmul.f32.gmra.mxu0 %v1732
        %v1789 = vpop.f32.mrf.mxu0
        %v1790 = vadd.f32 0.0, %v1789
        %1791 = vmatmul.f32.gmra.mxu0 %v1735
        %v1792 = vpop.f32.mrf.mxu0
        %v1793 = vadd.f32 0.0, %v1792
        %1794 = vmatmul.f32.gmra.mxu0 %v1738
        %v1795 = vpop.f32.mrf.mxu0
        %v1796 = vadd.f32 0.0, %v1795
        %1797 = vdwg.mxu0
        %1798 = vmatpush.msra.mxu0 0.0
        %1799 = vmatpush.msra.mxu0 0.0
        %1800 = vmatpush.msra.mxu0 0.0
        %1801 = vmatpush.msra.mxu0 0.0
        %1802 = vmatpush.msra.mxu0 0.0
        %1803 = vmatpush.msra.mxu0 0.0
        %1804 = vmatpush.msra.mxu0 0.0
        %1805 = vmatpush.msra.mxu0 0.0
        %1806 = vmatpush.msra.mxu0 0.0
        %1807 = vmatpush.msra.mxu0 0.0
        %1808 = vmatpush.msra.mxu0 0.0
        %1809 = vmatpush.msra.mxu0 0.0
        %1810 = vmatpush.msra.mxu0 %v1710
        %1811 = vmatpush.msra.mxu0 %v1706
        %1812 = vmatpush.msra.mxu0 %v1702
        %1813 = vmatpush.msra.mxu0 %v1698
        %1814 = vmatmul.f32.gmra.mxu0 %v1729
        %v1815 = vpop.f32.mrf.mxu0
        %v1816 = vadd.f32 0.0, %v1815
        %1817 = vmatmul.f32.gmra.mxu0 %v1732
        %v1818 = vpop.f32.mrf.mxu0
        %v1819 = vadd.f32 0.0, %v1818
        %1820 = vmatmul.f32.gmra.mxu0 %v1735
        %v1821 = vpop.f32.mrf.mxu0
        %v1822 = vadd.f32 0.0, %v1821
        %1823 = vmatmul.f32.gmra.mxu0 %v1738
        %v1824 = vpop.f32.mrf.mxu0
        %v1825 = vadd.f32 0.0, %v1824
        %1826 = vdwg.mxu0
        %1827 = vmatpush.msra.mxu0 0.0
        %1828 = vmatpush.msra.mxu0 0.0
        %1829 = vmatpush.msra.mxu0 0.0
        %1830 = vmatpush.msra.mxu0 0.0
        %1831 = vmatpush.msra.mxu0 0.0
        %1832 = vmatpush.msra.mxu0 0.0
        %1833 = vmatpush.msra.mxu0 0.0
        %1834 = vmatpush.msra.mxu0 0.0
        %1835 = vmatpush.msra.mxu0 0.0
        %1836 = vmatpush.msra.mxu0 0.0
        %1837 = vmatpush.msra.mxu0 0.0
        %1838 = vmatpush.msra.mxu0 0.0
        %1839 = vmatpush.msra.mxu0 %v1711
        %1840 = vmatpush.msra.mxu0 %v1707
        %1841 = vmatpush.msra.mxu0 %v1703
        %1842 = vmatpush.msra.mxu0 %v1699
        %1843 = vmatmul.f32.gmra.mxu0 %v1729
        %v1844 = vpop.f32.mrf.mxu0
        %v1845 = vadd.f32 0.0, %v1844
        %1846 = vmatmul.f32.gmra.mxu0 %v1732
        %v1847 = vpop.f32.mrf.mxu0
        %v1848 = vadd.f32 0.0, %v1847
        %1849 = vmatmul.f32.gmra.mxu0 %v1735
        %v1850 = vpop.f32.mrf.mxu0
        %v1851 = vadd.f32 0.0, %v1850
        %1852 = vmatmul.f32.gmra.mxu0 %v1738
        %v1853 = vpop.f32.mrf.mxu0
        %v1854 = vadd.f32 0.0, %v1853
        %1855 = vdwg.mxu0
        %v1856 = vadd.f32 %v1634, %v1758
        %v1857 = vadd.f32 %v1635, %v1787
        %v1858 = vadd.f32 %v1636, %v1816
        %v1859 = vadd.f32 %v1637, %v1845
        %v1860 = vadd.f32 %v1638, %v1761
        %v1861 = vadd.f32 %v1639, %v1790
        %v1862 = vadd.f32 %v1640, %v1819
        %v1863 = vadd.f32 %v1641, %v1848
        %v1864 = vadd.f32 %v1642, %v1764
        %v1865 = vadd.f32 %v1643, %v1793
        %v1866 = vadd.f32 %v1644, %v1822
        %v1867 = vadd.f32 %v1645, %v1851
        %v1868 = vadd.f32 %v1646, %v1767
        %v1869 = vadd.f32 %v1647, %v1796
        %v1870 = vadd.f32 %v1648, %v1825
        %v1871 = vadd.f32 %v1649, %v1854
        %s1872 = scalar_lea.vmem %s2, 224
        %v1873 = vld [vmem:[%s1872] sm:$0xff]
        %v1874 = vld [vmem:[%s1872 + $0x8] sm:$0xff]
        %v1875 = vld [vmem:[%s1872 + $0x10] sm:$0xff]
        %v1876 = vld [vmem:[%s1872 + $0x18] sm:$0xff]
        %1877 = vrot.lane.b32.xlu0 %v383, 87
        %v1878 = vpop.permute.xlu0 %1877
        %1879 = vrot.lane.b32.xlu0 %v384, 87
        %v1880 = vpop.permute.xlu0 %1879
        %1881 = vrot.lane.b32.xlu0 %v385, 87
        %v1882 = vpop.permute.xlu0 %1881
        %1883 = vrot.lane.b32.xlu0 %v386, 87
        %v1884 = vpop.permute.xlu0 %1883
        %1885 = vrot.lane.b32.xlu0 %v403, 87
        %v1886 = vpop.permute.xlu0 %1885
        %1887 = vrot.lane.b32.xlu0 %v387, 87
        %v1888 = vpop.permute.xlu0 %1887
        %1889 = vrot.lane.b32.xlu0 %v388, 87
        %v1890 = vpop.permute.xlu0 %1889
        %1891 = vrot.lane.b32.xlu0 %v389, 87
        %v1892 = vpop.permute.xlu0 %1891
        %1893 = vrot.lane.b32.xlu0 %v390, 87
        %v1894 = vpop.permute.xlu0 %1893
        %1895 = vrot.lane.b32.xlu0 %v404, 87
        %v1896 = vpop.permute.xlu0 %1895
        %1897 = vrot.lane.b32.xlu0 %v391, 87
        %v1898 = vpop.permute.xlu0 %1897
        %1899 = vrot.lane.b32.xlu0 %v392, 87
        %v1900 = vpop.permute.xlu0 %1899
        %1901 = vrot.lane.b32.xlu0 %v393, 87
        %v1902 = vpop.permute.xlu0 %1901
        %1903 = vrot.lane.b32.xlu0 %v394, 87
        %v1904 = vpop.permute.xlu0 %1903
        %1905 = vrot.lane.b32.xlu0 %v405, 87
        %v1906 = vpop.permute.xlu0 %1905
        %1907 = vrot.lane.b32.xlu0 %v395, 87
        %v1908 = vpop.permute.xlu0 %1907
        %1909 = vrot.lane.b32.xlu0 %v396, 87
        %v1910 = vpop.permute.xlu0 %1909
        %1911 = vrot.lane.b32.xlu0 %v397, 87
        %v1912 = vpop.permute.xlu0 %1911
        %1913 = vrot.lane.b32.xlu0 %v398, 87
        %v1914 = vpop.permute.xlu0 %1913
        %1915 = vrot.lane.b32.xlu0 %v406, 87
        %v1916 = vpop.permute.xlu0 %1915
        %vm1917 = vcmask 711680
        %v1918 = vsel %vm1917, %v1878, %v1880
        %v1919 = vsel %vm1917, %v1880, %v1882
        %v1920 = vsel %vm1917, %v1882, %v1884
        %v1921 = vsel %vm1917, %v1884, %v1886
        %v1922 = vsel %vm1917, %v1888, %v1890
        %v1923 = vsel %vm1917, %v1890, %v1892
        %v1924 = vsel %vm1917, %v1892, %v1894
        %v1925 = vsel %vm1917, %v1894, %v1896
        %v1926 = vsel %vm1917, %v1898, %v1900
        %v1927 = vsel %vm1917, %v1900, %v1902
        %v1928 = vsel %vm1917, %v1902, %v1904
        %v1929 = vsel %vm1917, %v1904, %v1906
        %v1930 = vsel %vm1917, %v1908, %v1910
        %v1931 = vsel %vm1917, %v1910, %v1912
        %v1932 = vsel %vm1917, %v1912, %v1914
        %v1933 = vsel %vm1917, %v1914, %v1916
        %v1951 = vsel %vm505, %v1873, 0
        %v1954 = vsel %vm505, %v1874, 0
        %v1957 = vsel %vm505, %v1875, 0
        %v1960 = vsel %vm505, %v1876, 0
        %1962 = vmatpush.msra.mxu0 0.0
        %1963 = vmatpush.msra.mxu0 0.0
        %1964 = vmatpush.msra.mxu0 0.0
        %1965 = vmatpush.msra.mxu0 0.0
        %1966 = vmatpush.msra.mxu0 0.0
        %1967 = vmatpush.msra.mxu0 0.0
        %1968 = vmatpush.msra.mxu0 0.0
        %1969 = vmatpush.msra.mxu0 0.0
        %1970 = vmatpush.msra.mxu0 0.0
        %1971 = vmatpush.msra.mxu0 0.0
        %1972 = vmatpush.msra.mxu0 0.0
        %1973 = vmatpush.msra.mxu0 0.0
        %1974 = vmatpush.msra.mxu0 %v1930
        %1975 = vmatpush.msra.mxu0 %v1926
        %1976 = vmatpush.msra.mxu0 %v1922
        %1977 = vmatpush.msra.mxu0 %v1918
        %1978 = vmatmul.f32.gmra.mxu0 %v1951
        %v1979 = vpop.f32.mrf.mxu0
        %v1980 = vadd.f32 0.0, %v1979
        %1981 = vmatmul.f32.gmra.mxu0 %v1954
        %v1982 = vpop.f32.mrf.mxu0
        %v1983 = vadd.f32 0.0, %v1982
        %1984 = vmatmul.f32.gmra.mxu0 %v1957
        %v1985 = vpop.f32.mrf.mxu0
        %v1986 = vadd.f32 0.0, %v1985
        %1987 = vmatmul.f32.gmra.mxu0 %v1960
        %v1988 = vpop.f32.mrf.mxu0
        %v1989 = vadd.f32 0.0, %v1988
        %1990 = vdwg.mxu0
        %1991 = vmatpush.msra.mxu0 0.0
        %1992 = vmatpush.msra.mxu0 0.0
        %1993 = vmatpush.msra.mxu0 0.0
        %1994 = vmatpush.msra.mxu0 0.0
        %1995 = vmatpush.msra.mxu0 0.0
        %1996 = vmatpush.msra.mxu0 0.0
        %1997 = vmatpush.msra.mxu0 0.0
        %1998 = vmatpush.msra.mxu0 0.0
        %1999 = vmatpush.msra.mxu0 0.0
        %2000 = vmatpush.msra.mxu0 0.0
        %2001 = vmatpush.msra.mxu0 0.0
        %2002 = vmatpush.msra.mxu0 0.0
        %2003 = vmatpush.msra.mxu0 %v1931
        %2004 = vmatpush.msra.mxu0 %v1927
        %2005 = vmatpush.msra.mxu0 %v1923
        %2006 = vmatpush.msra.mxu0 %v1919
        %2007 = vmatmul.f32.gmra.mxu0 %v1951
        %v2008 = vpop.f32.mrf.mxu0
        %v2009 = vadd.f32 0.0, %v2008
        %2010 = vmatmul.f32.gmra.mxu0 %v1954
        %v2011 = vpop.f32.mrf.mxu0
        %v2012 = vadd.f32 0.0, %v2011
        %2013 = vmatmul.f32.gmra.mxu0 %v1957
        %v2014 = vpop.f32.mrf.mxu0
        %v2015 = vadd.f32 0.0, %v2014
        %2016 = vmatmul.f32.gmra.mxu0 %v1960
        %v2017 = vpop.f32.mrf.mxu0
        %v2018 = vadd.f32 0.0, %v2017
        %2019 = vdwg.mxu0
        %2020 = vmatpush.msra.mxu0 0.0
        %2021 = vmatpush.msra.mxu0 0.0
        %2022 = vmatpush.msra.mxu0 0.0
        %2023 = vmatpush.msra.mxu0 0.0
        %2024 = vmatpush.msra.mxu0 0.0
        %2025 = vmatpush.msra.mxu0 0.0
        %2026 = vmatpush.msra.mxu0 0.0
        %2027 = vmatpush.msra.mxu0 0.0
        %2028 = vmatpush.msra.mxu0 0.0
        %2029 = vmatpush.msra.mxu0 0.0
        %2030 = vmatpush.msra.mxu0 0.0
        %2031 = vmatpush.msra.mxu0 0.0
        %2032 = vmatpush.msra.mxu0 %v1932
        %2033 = vmatpush.msra.mxu0 %v1928
        %2034 = vmatpush.msra.mxu0 %v1924
        %2035 = vmatpush.msra.mxu0 %v1920
        %2036 = vmatmul.f32.gmra.mxu0 %v1951
        %v2037 = vpop.f32.mrf.mxu0
        %v2038 = vadd.f32 0.0, %v2037
        %2039 = vmatmul.f32.gmra.mxu0 %v1954
        %v2040 = vpop.f32.mrf.mxu0
        %v2041 = vadd.f32 0.0, %v2040
        %2042 = vmatmul.f32.gmra.mxu0 %v1957
        %v2043 = vpop.f32.mrf.mxu0
        %v2044 = vadd.f32 0.0, %v2043
        %2045 = vmatmul.f32.gmra.mxu0 %v1960
        %v2046 = vpop.f32.mrf.mxu0
        %v2047 = vadd.f32 0.0, %v2046
        %2048 = vdwg.mxu0
        %2049 = vmatpush.msra.mxu0 0.0
        %2050 = vmatpush.msra.mxu0 0.0
        %2051 = vmatpush.msra.mxu0 0.0
        %2052 = vmatpush.msra.mxu0 0.0
        %2053 = vmatpush.msra.mxu0 0.0
        %2054 = vmatpush.msra.mxu0 0.0
        %2055 = vmatpush.msra.mxu0 0.0
        %2056 = vmatpush.msra.mxu0 0.0
        %2057 = vmatpush.msra.mxu0 0.0
        %2058 = vmatpush.msra.mxu0 0.0
        %2059 = vmatpush.msra.mxu0 0.0
        %2060 = vmatpush.msra.mxu0 0.0
        %2061 = vmatpush.msra.mxu0 %v1933
        %2062 = vmatpush.msra.mxu0 %v1929
        %2063 = vmatpush.msra.mxu0 %v1925
        %2064 = vmatpush.msra.mxu0 %v1921
        %2065 = vmatmul.f32.gmra.mxu0 %v1951
        %v2066 = vpop.f32.mrf.mxu0
        %v2067 = vadd.f32 0.0, %v2066
        %2068 = vmatmul.f32.gmra.mxu0 %v1954
        %v2069 = vpop.f32.mrf.mxu0
        %v2070 = vadd.f32 0.0, %v2069
        %2071 = vmatmul.f32.gmra.mxu0 %v1957
        %v2072 = vpop.f32.mrf.mxu0
        %v2073 = vadd.f32 0.0, %v2072
        %2074 = vmatmul.f32.gmra.mxu0 %v1960
        %v2075 = vpop.f32.mrf.mxu0
        %v2076 = vadd.f32 0.0, %v2075
        %2077 = vdwg.mxu0
        %v2078 = vadd.f32 %v1856, %v1980
        %v2079 = vadd.f32 %v1857, %v2009
        %v2080 = vadd.f32 %v1858, %v2038
        %v2081 = vadd.f32 %v1859, %v2067
        %v2082 = vadd.f32 %v1860, %v1983
        %v2083 = vadd.f32 %v1861, %v2012
        %v2084 = vadd.f32 %v1862, %v2041
        %v2085 = vadd.f32 %v1863, %v2070
        %v2086 = vadd.f32 %v1864, %v1986
        %v2087 = vadd.f32 %v1865, %v2015
        %v2088 = vadd.f32 %v1866, %v2044
        %v2089 = vadd.f32 %v1867, %v2073
        %v2090 = vadd.f32 %v1868, %v1989
        %v2091 = vadd.f32 %v1869, %v2018
        %v2092 = vadd.f32 %v1870, %v2047
        %v2093 = vadd.f32 %v1871, %v2076
        %s2094 = scalar_lea.vmem %s2, 256
        %v2095 = vld [vmem:[%s2094] sm:$0xff]
        %v2096 = vld [vmem:[%s2094 + $0x8] sm:$0xff]
        %v2097 = vld [vmem:[%s2094 + $0x10] sm:$0xff]
        %v2098 = vld [vmem:[%s2094 + $0x18] sm:$0xff]
        %2099 = vrot.lane.b32.xlu0 %v383, 86
        %v2100 = vpop.permute.xlu0 %2099
        %2101 = vrot.lane.b32.xlu0 %v384, 86
        %v2102 = vpop.permute.xlu0 %2101
        %2103 = vrot.lane.b32.xlu0 %v385, 86
        %v2104 = vpop.permute.xlu0 %2103
        %2105 = vrot.lane.b32.xlu0 %v386, 86
        %v2106 = vpop.permute.xlu0 %2105
        %2107 = vrot.lane.b32.xlu0 %v403, 86
        %v2108 = vpop.permute.xlu0 %2107
        %2109 = vrot.lane.b32.xlu0 %v387, 86
        %v2110 = vpop.permute.xlu0 %2109
        %2111 = vrot.lane.b32.xlu0 %v388, 86
        %v2112 = vpop.permute.xlu0 %2111
        %2113 = vrot.lane.b32.xlu0 %v389, 86
        %v2114 = vpop.permute.xlu0 %2113
        %2115 = vrot.lane.b32.xlu0 %v390, 86
        %v2116 = vpop.permute.xlu0 %2115
        %2117 = vrot.lane.b32.xlu0 %v404, 86
        %v2118 = vpop.permute.xlu0 %2117
        %2119 = vrot.lane.b32.xlu0 %v391, 86
        %v2120 = vpop.permute.xlu0 %2119
        %2121 = vrot.lane.b32.xlu0 %v392, 86
        %v2122 = vpop.permute.xlu0 %2121
        %2123 = vrot.lane.b32.xlu0 %v393, 86
        %v2124 = vpop.permute.xlu0 %2123
        %2125 = vrot.lane.b32.xlu0 %v394, 86
        %v2126 = vpop.permute.xlu0 %2125
        %2127 = vrot.lane.b32.xlu0 %v405, 86
        %v2128 = vpop.permute.xlu0 %2127
        %2129 = vrot.lane.b32.xlu0 %v395, 86
        %v2130 = vpop.permute.xlu0 %2129
        %2131 = vrot.lane.b32.xlu0 %v396, 86
        %v2132 = vpop.permute.xlu0 %2131
        %2133 = vrot.lane.b32.xlu0 %v397, 86
        %v2134 = vpop.permute.xlu0 %2133
        %2135 = vrot.lane.b32.xlu0 %v398, 86
        %v2136 = vpop.permute.xlu0 %2135
        %2137 = vrot.lane.b32.xlu0 %v406, 86
        %v2138 = vpop.permute.xlu0 %2137
        %vm2139 = vcmask 703488
        %v2140 = vsel %vm2139, %v2100, %v2102
        %v2141 = vsel %vm2139, %v2102, %v2104
        %v2142 = vsel %vm2139, %v2104, %v2106
        %v2143 = vsel %vm2139, %v2106, %v2108
        %v2144 = vsel %vm2139, %v2110, %v2112
        %v2145 = vsel %vm2139, %v2112, %v2114
        %v2146 = vsel %vm2139, %v2114, %v2116
        %v2147 = vsel %vm2139, %v2116, %v2118
        %v2148 = vsel %vm2139, %v2120, %v2122
        %v2149 = vsel %vm2139, %v2122, %v2124
        %v2150 = vsel %vm2139, %v2124, %v2126
        %v2151 = vsel %vm2139, %v2126, %v2128
        %v2152 = vsel %vm2139, %v2130, %v2132
        %v2153 = vsel %vm2139, %v2132, %v2134
        %v2154 = vsel %vm2139, %v2134, %v2136
        %v2155 = vsel %vm2139, %v2136, %v2138
        %v2173 = vsel %vm505, %v2095, 0
        %v2176 = vsel %vm505, %v2096, 0
        %v2179 = vsel %vm505, %v2097, 0
        %v2182 = vsel %vm505, %v2098, 0
        %2184 = vmatpush.msra.mxu0 0.0
        %2185 = vmatpush.msra.mxu0 0.0
        %2186 = vmatpush.msra.mxu0 0.0
        %2187 = vmatpush.msra.mxu0 0.0
        %2188 = vmatpush.msra.mxu0 0.0
        %2189 = vmatpush.msra.mxu0 0.0
        %2190 = vmatpush.msra.mxu0 0.0
        %2191 = vmatpush.msra.mxu0 0.0
        %2192 = vmatpush.msra.mxu0 0.0
        %2193 = vmatpush.msra.mxu0 0.0
        %2194 = vmatpush.msra.mxu0 0.0
        %2195 = vmatpush.msra.mxu0 0.0
        %2196 = vmatpush.msra.mxu0 %v2152
        %2197 = vmatpush.msra.mxu0 %v2148
        %2198 = vmatpush.msra.mxu0 %v2144
        %2199 = vmatpush.msra.mxu0 %v2140
        %2200 = vmatmul.f32.gmra.mxu0 %v2173
        %v2201 = vpop.f32.mrf.mxu0
        %v2202 = vadd.f32 0.0, %v2201
        %2203 = vmatmul.f32.gmra.mxu0 %v2176
        %v2204 = vpop.f32.mrf.mxu0
        %v2205 = vadd.f32 0.0, %v2204
        %2206 = vmatmul.f32.gmra.mxu0 %v2179
        %v2207 = vpop.f32.mrf.mxu0
        %v2208 = vadd.f32 0.0, %v2207
        %2209 = vmatmul.f32.gmra.mxu0 %v2182
        %v2210 = vpop.f32.mrf.mxu0
        %v2211 = vadd.f32 0.0, %v2210
        %2212 = vdwg.mxu0
        %2213 = vmatpush.msra.mxu0 0.0
        %2214 = vmatpush.msra.mxu0 0.0
        %2215 = vmatpush.msra.mxu0 0.0
        %2216 = vmatpush.msra.mxu0 0.0
        %2217 = vmatpush.msra.mxu0 0.0
        %2218 = vmatpush.msra.mxu0 0.0
        %2219 = vmatpush.msra.mxu0 0.0
        %2220 = vmatpush.msra.mxu0 0.0
        %2221 = vmatpush.msra.mxu0 0.0
        %2222 = vmatpush.msra.mxu0 0.0
        %2223 = vmatpush.msra.mxu0 0.0
        %2224 = vmatpush.msra.mxu0 0.0
        %2225 = vmatpush.msra.mxu0 %v2153
        %2226 = vmatpush.msra.mxu0 %v2149
        %2227 = vmatpush.msra.mxu0 %v2145
        %2228 = vmatpush.msra.mxu0 %v2141
        %2229 = vmatmul.f32.gmra.mxu0 %v2173
        %v2230 = vpop.f32.mrf.mxu0
        %v2231 = vadd.f32 0.0, %v2230
        %2232 = vmatmul.f32.gmra.mxu0 %v2176
        %v2233 = vpop.f32.mrf.mxu0
        %v2234 = vadd.f32 0.0, %v2233
        %2235 = vmatmul.f32.gmra.mxu0 %v2179
        %v2236 = vpop.f32.mrf.mxu0
        %v2237 = vadd.f32 0.0, %v2236
        %2238 = vmatmul.f32.gmra.mxu0 %v2182
        %v2239 = vpop.f32.mrf.mxu0
        %v2240 = vadd.f32 0.0, %v2239
        %2241 = vdwg.mxu0
        %2242 = vmatpush.msra.mxu0 0.0
        %2243 = vmatpush.msra.mxu0 0.0
        %2244 = vmatpush.msra.mxu0 0.0
        %2245 = vmatpush.msra.mxu0 0.0
        %2246 = vmatpush.msra.mxu0 0.0
        %2247 = vmatpush.msra.mxu0 0.0
        %2248 = vmatpush.msra.mxu0 0.0
        %2249 = vmatpush.msra.mxu0 0.0
        %2250 = vmatpush.msra.mxu0 0.0
        %2251 = vmatpush.msra.mxu0 0.0
        %2252 = vmatpush.msra.mxu0 0.0
        %2253 = vmatpush.msra.mxu0 0.0
        %2254 = vmatpush.msra.mxu0 %v2154
        %2255 = vmatpush.msra.mxu0 %v2150
        %2256 = vmatpush.msra.mxu0 %v2146
        %2257 = vmatpush.msra.mxu0 %v2142
        %2258 = vmatmul.f32.gmra.mxu0 %v2173
        %v2259 = vpop.f32.mrf.mxu0
        %v2260 = vadd.f32 0.0, %v2259
        %2261 = vmatmul.f32.gmra.mxu0 %v2176
        %v2262 = vpop.f32.mrf.mxu0
        %v2263 = vadd.f32 0.0, %v2262
        %2264 = vmatmul.f32.gmra.mxu0 %v2179
        %v2265 = vpop.f32.mrf.mxu0
        %v2266 = vadd.f32 0.0, %v2265
        %2267 = vmatmul.f32.gmra.mxu0 %v2182
        %v2268 = vpop.f32.mrf.mxu0
        %v2269 = vadd.f32 0.0, %v2268
        %2270 = vdwg.mxu0
        %2271 = vmatpush.msra.mxu0 0.0
        %2272 = vmatpush.msra.mxu0 0.0
        %2273 = vmatpush.msra.mxu0 0.0
        %2274 = vmatpush.msra.mxu0 0.0
        %2275 = vmatpush.msra.mxu0 0.0
        %2276 = vmatpush.msra.mxu0 0.0
        %2277 = vmatpush.msra.mxu0 0.0
        %2278 = vmatpush.msra.mxu0 0.0
        %2279 = vmatpush.msra.mxu0 0.0
        %2280 = vmatpush.msra.mxu0 0.0
        %2281 = vmatpush.msra.mxu0 0.0
        %2282 = vmatpush.msra.mxu0 0.0
        %2283 = vmatpush.msra.mxu0 %v2155
        %2284 = vmatpush.msra.mxu0 %v2151
        %2285 = vmatpush.msra.mxu0 %v2147
        %2286 = vmatpush.msra.mxu0 %v2143
        %2287 = vmatmul.f32.gmra.mxu0 %v2173
        %v2288 = vpop.f32.mrf.mxu0
        %v2289 = vadd.f32 0.0, %v2288
        %2290 = vmatmul.f32.gmra.mxu0 %v2176
        %v2291 = vpop.f32.mrf.mxu0
        %v2292 = vadd.f32 0.0, %v2291
        %2293 = vmatmul.f32.gmra.mxu0 %v2179
        %v2294 = vpop.f32.mrf.mxu0
        %v2295 = vadd.f32 0.0, %v2294
        %2296 = vmatmul.f32.gmra.mxu0 %v2182
        %v2297 = vpop.f32.mrf.mxu0
        %v2298 = vadd.f32 0.0, %v2297
        %2299 = vdwg.mxu0
        %v2300 = vadd.f32 %v2078, %v2202
        %v2301 = vadd.f32 %v2079, %v2231
        %v2302 = vadd.f32 %v2080, %v2260
        %v2303 = vadd.f32 %v2081, %v2289
        %v2304 = vadd.f32 %v2082, %v2205
        %v2305 = vadd.f32 %v2083, %v2234
        %v2306 = vadd.f32 %v2084, %v2263
        %v2307 = vadd.f32 %v2085, %v2292
        %v2308 = vadd.f32 %v2086, %v2208
        %v2309 = vadd.f32 %v2087, %v2237
        %v2310 = vadd.f32 %v2088, %v2266
        %v2311 = vadd.f32 %v2089, %v2295
        %v2312 = vadd.f32 %v2090, %v2211
        %v2313 = vadd.f32 %v2091, %v2240
        %v2314 = vadd.f32 %v2092, %v2269
        %v2315 = vadd.f32 %v2093, %v2298
        %v2316 = vld [vmem:[%s3] sm:$0xff]
        %v2317 = vld [vmem:[%s3 + $0x8] sm:$0xff]
        %v2318 = vld [vmem:[%s3 + $0x10] sm:$0xff]
        %v2319 = vld [vmem:[%s3 + $0x18] sm:$0xff]
        %2321 = vset.pattern.permute.xlu0 0
        %2322 = vperm.xlu0 %2321, %v2316
        %v2323 = vpop.permute.xlu0 %2322
        %2326 = vset.pattern.permute.xlu0 0
        %2327 = vperm.xlu0 %2326, %v2317
        %v2328 = vpop.permute.xlu0 %2327
        %2331 = vset.pattern.permute.xlu0 0
        %2332 = vperm.xlu0 %2331, %v2318
        %v2333 = vpop.permute.xlu0 %2332
        %2336 = vset.pattern.permute.xlu0 0
        %2337 = vperm.xlu0 %2336, %v2319
        %v2338 = vpop.permute.xlu0 %2337
        %v2340 = vadd.f32 %v2300, %v2323
        %v2341 = vadd.f32 %v2301, %v2323
        %v2342 = vadd.f32 %v2302, %v2323
        %v2343 = vadd.f32 %v2303, %v2323
        %v2344 = vadd.f32 %v2304, %v2328
        %v2345 = vadd.f32 %v2305, %v2328
        %v2346 = vadd.f32 %v2306, %v2328
        %v2347 = vadd.f32 %v2307, %v2328
        %v2348 = vadd.f32 %v2308, %v2333
        %v2349 = vadd.f32 %v2309, %v2333
        %v2350 = vadd.f32 %v2310, %v2333
        %v2351 = vadd.f32 %v2311, %v2333
        %v2352 = vadd.f32 %v2312, %v2338
        %v2353 = vadd.f32 %v2313, %v2338
        %v2354 = vadd.f32 %v2314, %v2338
        %v2355 = vadd.f32 %v2315, %v2338
        %v2356 = vmax.f32 %v2340, 0.0
        %v2357 = vmax.f32 %v2341, 0.0
        %v2358 = vmax.f32 %v2342, 0.0
        %v2359 = vmax.f32 %v2343, 0.0
        %v2360 = vmax.f32 %v2344, 0.0
        %v2361 = vmax.f32 %v2345, 0.0
        %v2362 = vmax.f32 %v2346, 0.0
        %v2363 = vmax.f32 %v2347, 0.0
        %v2364 = vmax.f32 %v2348, 0.0
        %v2365 = vmax.f32 %v2349, 0.0
        %v2366 = vmax.f32 %v2350, 0.0
        %v2367 = vmax.f32 %v2351, 0.0
        %v2368 = vmax.f32 %v2352, 0.0
        %v2369 = vmax.f32 %v2353, 0.0
        %v2370 = vmax.f32 %v2354, 0.0
        %v2371 = vmax.f32 %v2355, 0.0
        %2372 = vst [vmem:[%s314] sm:$0xff] %v2356
        %2373 = vst [vmem:[%s314 + $0x8] sm:$0xff] %v2357
        %2374 = vst [vmem:[%s314 + $0x10] sm:$0xff] %v2358
        %2375 = vst [vmem:[%s314 + $0x18] sm:$0xff] %v2359
        %2376 = vst [vmem:[%s314 + $0x20] sm:$0xff] %v2360
        %2377 = vst [vmem:[%s314 + $0x28] sm:$0xff] %v2361
        %2378 = vst [vmem:[%s314 + $0x30] sm:$0xff] %v2362
        %2379 = vst [vmem:[%s314 + $0x38] sm:$0xff] %v2363
        %2380 = vst [vmem:[%s314 + $0x40] sm:$0xff] %v2364
        %2381 = vst [vmem:[%s314 + $0x48] sm:$0xff] %v2365
        %2382 = vst [vmem:[%s314 + $0x50] sm:$0xff] %v2366
        %2383 = vst [vmem:[%s314 + $0x58] sm:$0xff] %v2367
        %2384 = vst [vmem:[%s314 + $0x60] sm:$0xff] %v2368
        %2385 = vst [vmem:[%s314 + $0x68] sm:$0xff] %v2369
        %2386 = vst [vmem:[%s314 + $0x70] sm:$0xff] %v2370
        %2387 = vst [vmem:[%s314 + $0x78] sm:$0xff] %v2371
        %s2388 = sand.u32 %s119, 1
        %s2389 = sand.u32 %s119, 1
        %s2390 = smul.addr %s2389, 128
        %s2391 = scalar_lea.vmem [#allocation5], %s2390
        // Predicated region
        $region83: #{augmenter_forward.8} parent=73 // pred_check
          %p2392 = pneg %p129
        $region84: #{augmenter_forward.8} parent=73 // pred_check_branch
          %2394 = sbr.rel (%p2392) target = $region86
        $region85: #{augmenter_forward.8} parent=73 // pred_region
          %s2395 = smul.u32 4, %s15
          %s2396 = smul.addr %s2395, 8
          %s2397 = scalar_lea.vmem %s4, %s2396
          // Predicated region
          $region87: #{augmenter_forward.8} parent=85 // pred_check
            _
          $region88: #{augmenter_forward.8} parent=85 // pred_check_branch
            %2399 = sbr.rel (0) target = $region90
          $region89: #{augmenter_forward.8} parent=85 // pred_region
            // Predicated region
            $region91: #{augmenter_forward.8} parent=89 // pred_check
              _
            $region92: #{augmenter_forward.8} parent=89 // pred_check_branch
              %2401 = sbr.rel (0) target = $region94
            $region93: #{augmenter_forward.8} parent=89 // pred_region
              loop: start=0, step=1, limit=1
              $region95: #{augmenter_forward.8} parent=93 // loop_pre_header
                _
              $region96: #{augmenter_forward.8} parent=93 // loop_header
                %s2403 = sphi 0, %s2407
                %p2404 = scmp.ge.s32.totalorder %s2403, 1
                %s2408 = sphi %s2391, %s2391
                %s2409 = sphi %s2397, %s2397
              $region97: #{augmenter_forward.8} parent=93 // loop_header_branch
                %2406 = sbr.rel (%p2404) target = $region101
              $region98: #{augmenter_forward.8} parent=93 // loop_body
                %v2410 = vld [vmem:[%s2408] sm:$0xff]
                %2411 = vst [vmem:[%s2409] sm:$0xff] %v2410
                %v2412 = vld [vmem:[%s2408 + $0x8] sm:$0xff]
                %2413 = vst [vmem:[%s2409 + $0x8] sm:$0xff] %v2412
                %v2414 = vld [vmem:[%s2408 + $0x10] sm:$0xff]
                %2415 = vst [vmem:[%s2409 + $0x10] sm:$0xff] %v2414
                %v2416 = vld [vmem:[%s2408 + $0x18] sm:$0xff]
                %2417 = vst [vmem:[%s2409 + $0x18] sm:$0xff] %v2416
                %v2418 = vld [vmem:[%s2408 + $0x20] sm:$0xff]
                %2419 = vst [vmem:[%s2409 + $0x40] sm:$0xff] %v2418
                %v2420 = vld [vmem:[%s2408 + $0x28] sm:$0xff]
                %2421 = vst [vmem:[%s2409 + $0x48] sm:$0xff] %v2420
                %v2422 = vld [vmem:[%s2408 + $0x30] sm:$0xff]
                %2423 = vst [vmem:[%s2409 + $0x50] sm:$0xff] %v2422
                %v2424 = vld [vmem:[%s2408 + $0x38] sm:$0xff]
                %2425 = vst [vmem:[%s2409 + $0x58] sm:$0xff] %v2424
                %v2426 = vld [vmem:[%s2408 + $0x40] sm:$0xff]
                %2427 = vst [vmem:[%s2409 + $0x80] sm:$0xff] %v2426
                %v2428 = vld [vmem:[%s2408 + $0x48] sm:$0xff]
                %2429 = vst [vmem:[%s2409 + $0x88] sm:$0xff] %v2428
                %v2430 = vld [vmem:[%s2408 + $0x50] sm:$0xff]
                %2431 = vst [vmem:[%s2409 + $0x90] sm:$0xff] %v2430
                %v2432 = vld [vmem:[%s2408 + $0x58] sm:$0xff]
                %2433 = vst [vmem:[%s2409 + $0x98] sm:$0xff] %v2432
                %v2434 = vld [vmem:[%s2408 + $0x60] sm:$0xff]
                %2435 = vst [vmem:[%s2409 + $0xc0] sm:$0xff] %v2434
                %v2436 = vld [vmem:[%s2408 + $0x68] sm:$0xff]
                %2437 = vst [vmem:[%s2409 + $0xc8] sm:$0xff] %v2436
                %v2438 = vld [vmem:[%s2408 + $0x70] sm:$0xff]
                %2439 = vst [vmem:[%s2409 + $0xd0] sm:$0xff] %v2438
                %v2440 = vld [vmem:[%s2408 + $0x78] sm:$0xff]
                %2441 = vst [vmem:[%s2409 + $0xd8] sm:$0xff] %v2440
              $region99: #{augmenter_forward.8} parent=93 // loop_footer
                %s2407 = sadd.s32 1, %s2403
              $region100: #{augmenter_forward.8} parent=93 // loop_footer_branch
                %2402 = sbr.rel target = $region96
              $region101: #{augmenter_forward.8} parent=93 // loop_exit
                _
            $region94: #{augmenter_forward.8} parent=89 // pred_fallthru
              _
            // Predicated region
            $region102: #{augmenter_forward.8} parent=89 // pred_check
              _
            $region103: #{augmenter_forward.8} parent=89 // pred_check_branch
              %2443 = sbr.rel target = $region105
            $region104: #{augmenter_forward.8} parent=89 // pred_region
              _
            $region105: #{augmenter_forward.8} parent=89 // pred_fallthru
              _
          $region90: #{augmenter_forward.8} parent=85 // pred_fallthru
            _
          %2444 = vnop
        $region86: #{augmenter_forward.8} parent=73 // pred_fallthru
          _
      $region74: #{augmenter_forward.8} parent=5 // pred_fallthru
        _
      %p2445 = scmp.le.s32.totalorder 2, %s10
      // Predicated region
      $region106: #{augmenter_forward.8} parent=5 // pred_check
        %p2446 = pneg %p2445
      $region107: #{augmenter_forward.8} parent=5 // pred_check_branch
        %2448 = sbr.rel (%p2446) target = $region109
      $region108: #{augmenter_forward.8} parent=5 // pred_region
        %s2449 = ssub.s32 %s10, 2
        // Predicated region
        $region110: #{augmenter_forward.8} parent=108 // pred_check
          %p2450 = pneg %p135
        $region111: #{augmenter_forward.8} parent=108 // pred_check_branch
          %2452 = sbr.rel (%p2450) target = $region113
        $region112: #{augmenter_forward.8} parent=108 // pred_region
          %s2453 = sand.u32 %s120, 1
          %s2454 = sand.u32 %s120, 1
          %s2455 = smul.addr %s2454, 128
          %s2456 = scalar_lea.vmem [#allocation5], %s2455
        $region113: #{augmenter_forward.8} parent=108 // pred_fallthru
          _
      $region109: #{augmenter_forward.8} parent=5 // pred_fallthru
        _
    $region6: #{augmenter_forward.8} parent=1 // loop_footer
      %s14 = sadd.s32 1, %s10
    $region7: #{augmenter_forward.8} parent=1 // loop_footer_branch
      %9 = sbr.rel target = $region3
    $region8: #{augmenter_forward.8} parent=1 // loop_exit
      _

// kernel: augmenter_forward.9
$region0: #{augmenter_forward.9}
  #allocation0 [shape = 'u32[]', space=smem, size = 0x4, offset = 0x4, fixed_abs, tag = 'smem constant byte address 0x4 - core index']
  #allocation1 [shape = 'u32[72,128]{1,0:T(1,128)}', space=vmem, size = 0x9000, scoped, tag = 'internal scratch']
  #allocation2 [shape = 'f32[32,1024]{1,0:T(8,128)}', space=vmem, size = 0x20000, scoped, tag = 'scratch operand']
  %s0 = inlined_call_operand.vmem [shape: f32[32,1536], index: 0, kind: input, shape index: {}, may-alias: {0,1}]
  %s1 = inlined_call_operand.vmem [shape: f32[32,1536], index: 1, kind: input, shape index: {}, may-alias: {0,1}]
  %s2 = inlined_call_operand.vmem [shape: f32[9,32,32], index: 2, kind: input, shape index: {}]
  %s3 = inlined_call_operand.vmem [shape: f32[32,1], index: 3, kind: input, shape index: {}]
  %s4 = inlined_call_operand.vmem [shape: f32[32,1024], index: 4, kind: input, shape index: {}, may-alias: {4,5}]
  %s5 = inlined_call_operand.vmem [shape: f32[32,1024], index: 5, kind: output, shape index: {}, may-alias: {4,5}]
  %s6 = sld [smem:[#allocation0]]
  $region141: #{augmenter_forward.9} parent=0
    _
  %s8 = ssub.s32 1, %s6
  %s9 = scalar_select 0, %s8, %s6
  $region1: #{augmenter_forward.9} parent=0
    #allocation3 [shape = 'u8[131072]{0}', space=vmem, size = 0x20000, scoped, tag = 'input window, operand 0']
    #allocation4 [shape = 'u8[131072]{0}', space=vmem, size = 0x20000, scoped, tag = 'input window, operand 1']
    #allocation5 [shape = 'u8[131072]{0}', space=vmem, size = 0x20000, scoped, tag = 'input window, operand 4']
    #allocation6 [shape = 'u8[131072]{0}', space=vmem, size = 0x20000, scoped, tag = 'output window, operand 0']
    loop: start=0, step=1, limit=4
    $region2: #{augmenter_forward.9} parent=1 // loop_pre_header
      _
    $region3: #{augmenter_forward.9} parent=1 // loop_header
      %s11 = sphi 0, %s15
      %p12 = scmp.ge.s32.totalorder %s11, 4
      %s21 = sphi 0, %s23
      %s24 = sphi 0, %s21
      %s25 = sphi 0, %s24
      %s41 = sphi 0, %s25
      %s49 = sphi 0, %s51
      %s52 = sphi 0, %s49
      %s53 = sphi 0, %s52
      %s69 = sphi 0, %s53
      %s73 = sphi 0, %s73
      %s75 = sphi 0, %s73
      %s76 = sphi 0, %s75
      %s90 = sphi 0, %s76
      %s94 = sphi 0, %s94
      %s96 = sphi 0, %s94
      %s97 = sphi 0, %s96
      %s111 = sphi 0, %s97
      %s117 = sphi 0, %s119
      %s120 = sphi 0, %s117
      %s121 = sphi 0, %s120
      %s137 = sphi 0, %s121
      %s143 = sphi 0, %s145
      %s146 = sphi 0, %s143
      %s147 = sphi 0, %s146
      %s163 = sphi 0, %s147
    $region4: #{augmenter_forward.9} parent=1 // loop_header_branch
      %14 = sbr.rel (%p12) target = $region8
    $region5: #{augmenter_forward.9} parent=1 // loop_body
      %s16 = ssub.s32 %s11, 1
      %s17 = ssub.s32 %s11, 2
      %s18 = sadd.s32 %s11, 1
      %s19 = ssub.s32 %s11, %s18
      %p20 = scmp.eq.s32.totalorder %s19, 0
      %s22 = sadd.s32 %s21, 1
      %s23 = scalar_select %p20, %s21, %s22
      %p26 = pneg %p20
      %p27 = scmp.eq.s32.totalorder %s11, 1
      %p28 = por %p26, %p27
      %p29 = scmp.ne.s32.totalorder %s21, %s24
      %p30 = scmp.eq.s32.totalorder %s11, 0
      %p31 = por %p29, %p30
      %p32 = scmp.ne.s32.totalorder %s21, %s24
      %p33 = scmp.eq.s32.totalorder %s16, 1
      %p34 = por %p32, %p33
      %p35 = scmp.ne.s32.totalorder %s24, %s25
      %p36 = scmp.eq.s32.totalorder %s16, 0
      %p37 = por %p35, %p36
      %p38 = scmp.ne.s32.totalorder %s24, %s25
      %p39 = scmp.eq.s32.totalorder %s17, 1
      %p40 = por %p38, %p39
      %p42 = scmp.ne.s32.totalorder %s25, %s41
      %p43 = scmp.eq.s32.totalorder %s17, 0
      %p44 = por %p42, %p43
      %s45 = sadd.s32 %s11, 1
      %s46 = sadd.s32 %s18, 1
      %s47 = ssub.s32 %s45, %s46
      %p48 = scmp.eq.s32.totalorder %s47, 0
      %s50 = sadd.s32 %s49, 1
      %s51 = scalar_select %p48, %s49, %s50
      %p54 = pneg %p48
      %p55 = scmp.eq.s32.totalorder %s11, 1
      %p56 = por %p54, %p55
      %p57 = scmp.ne.s32.totalorder %s49, %s52
      %p58 = scmp.eq.s32.totalorder %s11, 0
      %p59 = por %p57, %p58
      %p60 = scmp.ne.s32.totalorder %s49, %s52
      %p61 = scmp.eq.s32.totalorder %s16, 1
      %p62 = por %p60, %p61
      %p63 = scmp.ne.s32.totalorder %s52, %s53
      %p64 = scmp.eq.s32.totalorder %s16, 0
      %p65 = por %p63, %p64
      %p66 = scmp.ne.s32.totalorder %s52, %s53
      %p67 = scmp.eq.s32.totalorder %s17, 1
      %p68 = por %p66, %p67
      %p70 = scmp.ne.s32.totalorder %s53, %s69
      %p71 = scmp.eq.s32.totalorder %s17, 0
      %p72 = por %p70, %p71
      %s74 = sadd.s32 %s73, 1
      %p77 = scmp.eq.s32.totalorder %s11, 1
      %p78 = scmp.ne.s32.totalorder %s73, %s75
      %p79 = scmp.eq.s32.totalorder %s11, 0
      %p80 = por %p78, %p79
      %p81 = scmp.ne.s32.totalorder %s73, %s75
      %p82 = scmp.eq.s32.totalorder %s16, 1
      %p83 = por %p81, %p82
      %p84 = scmp.ne.s32.totalorder %s75, %s76
      %p85 = scmp.eq.s32.totalorder %s16, 0
      %p86 = por %p84, %p85
      %p87 = scmp.ne.s32.totalorder %s75, %s76
      %p88 = scmp.eq.s32.totalorder %s17, 1
      %p89 = por %p87, %p88
      %p91 = scmp.ne.s32.totalorder %s76, %s90
      %p92 = scmp.eq.s32.totalorder %s17, 0
      %p93 = por %p91, %p92
      %s95 = sadd.s32 %s94, 1
      %p98 = scmp.eq.s32.totalorder %s11, 1
      %p99 = scmp.ne.s32.totalorder %s94, %s96
      %p100 = scmp.eq.s32.totalorder %s11, 0
      %p101 = por %p99, %p100
      %p102 = scmp.ne.s32.totalorder %s94, %s96
      %p103 = scmp.eq.s32.totalorder %s16, 1
      %p104 = por %p102, %p103
      %p105 = scmp.ne.s32.totalorder %s96, %s97
      %p106 = scmp.eq.s32.totalorder %s16, 0
      %p107 = por %p105, %p106
      %p108 = scmp.ne.s32.totalorder %s96, %s97
      %p109 = scmp.eq.s32.totalorder %s17, 1
      %p110 = por %p108, %p109
      %p112 = scmp.ne.s32.totalorder %s97, %s111
      %p113 = scmp.eq.s32.totalorder %s17, 0
      %p114 = por %p112, %p113
      %s115 = ssub.s32 %s11, %s18
      %p116 = scmp.eq.s32.totalorder %s115, 0
      %s118 = sadd.s32 %s117, 1
      %s119 = scalar_select %p116, %s117, %s118
      %p122 = pneg %p116
      %p123 = scmp.eq.s32.totalorder %s11, 1
      %p124 = por %p122, %p123
      %p125 = scmp.ne.s32.totalorder %s117, %s120
      %p126 = scmp.eq.s32.totalorder %s11, 0
      %p127 = por %p125, %p126
      %p128 = scmp.ne.s32.totalorder %s117, %s120
      %p129 = scmp.eq.s32.totalorder %s16, 1
      %p130 = por %p128, %p129
      %p131 = scmp.ne.s32.totalorder %s120, %s121
      %p132 = scmp.eq.s32.totalorder %s16, 0
      %p133 = por %p131, %p132
      %p134 = scmp.ne.s32.totalorder %s120, %s121
      %p135 = scmp.eq.s32.totalorder %s17, 1
      %p136 = por %p134, %p135
      %p138 = scmp.ne.s32.totalorder %s121, %s137
      %p139 = scmp.eq.s32.totalorder %s17, 0
      %p140 = por %p138, %p139
      %s141 = ssub.s32 %s11, %s18
      %p142 = scmp.eq.s32.totalorder %s141, 0
      %s144 = sadd.s32 %s143, 1
      %s145 = scalar_select %p142, %s143, %s144
      %p148 = pneg %p142
      %p149 = scmp.eq.s32.totalorder %s11, 1
      %p150 = por %p148, %p149
      %p151 = scmp.ne.s32.totalorder %s143, %s146
      %p152 = scmp.eq.s32.totalorder %s11, 0
      %p153 = por %p151, %p152
      %p154 = scmp.ne.s32.totalorder %s143, %s146
      %p155 = scmp.eq.s32.totalorder %s16, 1
      %p156 = por %p154, %p155
      %p157 = scmp.ne.s32.totalorder %s146, %s147
      %p158 = scmp.eq.s32.totalorder %s16, 0
      %p159 = por %p157, %p158
      %p160 = scmp.ne.s32.totalorder %s146, %s147
      %p161 = scmp.eq.s32.totalorder %s17, 1
      %p162 = por %p160, %p161
      %p164 = scmp.ne.s32.totalorder %s147, %s163
      %p165 = scmp.eq.s32.totalorder %s17, 0
      %p166 = por %p164, %p165
      %p167 = scmp.le.s32.totalorder 1, %s11
      %p168 = scmp.lt.s32.totalorder %s11, 3
      %p169 = pnand %p167, %p168
      %p170 = pneg %p169
      // Predicated region
      $region9: #{augmenter_forward.9} parent=5 // pred_check
        _
      $region10: #{augmenter_forward.9} parent=5 // pred_check_branch
        %172 = sbr.rel (%p169) target = $region12
      $region11: #{augmenter_forward.9} parent=5 // pred_region
        %s173 = ssub.s32 %s11, 1
        // Predicated region
        $region13: #{augmenter_forward.9} parent=11 // pred_check
          %p174 = pneg %p86
        $region14: #{augmenter_forward.9} parent=11 // pred_check_branch
          %176 = sbr.rel (%p174) target = $region16
        $region15: #{augmenter_forward.9} parent=11 // pred_region
          _
        $region16: #{augmenter_forward.9} parent=11 // pred_fallthru
          _
        // Predicated region
        $region17: #{augmenter_forward.9} parent=11 // pred_check
          %p177 = pneg %p107
        $region18: #{augmenter_forward.9} parent=11 // pred_check_branch
          %179 = sbr.rel (%p177) target = $region20
        $region19: #{augmenter_forward.9} parent=11 // pred_region
          _
        $region20: #{augmenter_forward.9} parent=11 // pred_fallthru
          _
      $region12: #{augmenter_forward.9} parent=5 // pred_fallthru
        _
      %p180 = scmp.lt.s32.totalorder %s11, 2
      // Predicated region
      $region21: #{augmenter_forward.9} parent=5 // pred_check
        %p181 = pneg %p180
      $region22: #{augmenter_forward.9} parent=5 // pred_check_branch
        %183 = sbr.rel (%p181) target = $region24
      $region23: #{augmenter_forward.9} parent=5 // pred_region
        // Predicated region
        $region25: #{augmenter_forward.9} parent=23 // pred_check
          %p184 = pneg %p31
        $region26: #{augmenter_forward.9} parent=23 // pred_check_branch
          %186 = sbr.rel (%p184) target = $region28
        $region27: #{augmenter_forward.9} parent=23 // pred_region
          %s187 = sand.u32 %s21, 1
          %s188 = sand.u32 %s21, 1
          %s189 = smul.addr %s188, 128
          %s190 = scalar_lea.vmem [#allocation3], %s189
          %s191 = smul.u32 4, %s11
          %s192 = smul.addr %s191, 8
          %s193 = scalar_lea.vmem %s0, %s192
          // Predicated region
          $region29: #{augmenter_forward.9} parent=27 // pred_check
            _
          $region30: #{augmenter_forward.9} parent=27 // pred_check_branch
            %195 = sbr.rel (0) target = $region32
          $region31: #{augmenter_forward.9} parent=27 // pred_region
            // Predicated region
            $region33: #{augmenter_forward.9} parent=31 // pred_check
              _
            $region34: #{augmenter_forward.9} parent=31 // pred_check_branch
              %197 = sbr.rel (0) target = $region36
            $region35: #{augmenter_forward.9} parent=31 // pred_region
              loop: start=0, step=1, limit=1
              $region37: #{augmenter_forward.9} parent=35 // loop_pre_header
                _
              $region38: #{augmenter_forward.9} parent=35 // loop_header
                %s199 = sphi 0, %s203
                %p200 = scmp.ge.s32.totalorder %s199, 1
                %s204 = sphi %s193, %s193
                %s205 = sphi %s190, %s190
              $region39: #{augmenter_forward.9} parent=35 // loop_header_branch
                %202 = sbr.rel (%p200) target = $region43
              $region40: #{augmenter_forward.9} parent=35 // loop_body
                %v206 = vld [vmem:[%s204] sm:$0xff]
                %207 = vst [vmem:[%s205] sm:$0xff] %v206
                %v208 = vld [vmem:[%s204 + $0x8] sm:$0xff]
                %209 = vst [vmem:[%s205 + $0x8] sm:$0xff] %v208
                %v210 = vld [vmem:[%s204 + $0x10] sm:$0xff]
                %211 = vst [vmem:[%s205 + $0x10] sm:$0xff] %v210
                %v212 = vld [vmem:[%s204 + $0x18] sm:$0xff]
                %213 = vst [vmem:[%s205 + $0x18] sm:$0xff] %v212
                %v214 = vld [vmem:[%s204 + $0x60] sm:$0xff]
                %215 = vst [vmem:[%s205 + $0x20] sm:$0xff] %v214
                %v216 = vld [vmem:[%s204 + $0x68] sm:$0xff]
                %217 = vst [vmem:[%s205 + $0x28] sm:$0xff] %v216
                %v218 = vld [vmem:[%s204 + $0x70] sm:$0xff]
                %219 = vst [vmem:[%s205 + $0x30] sm:$0xff] %v218
                %v220 = vld [vmem:[%s204 + $0x78] sm:$0xff]
                %221 = vst [vmem:[%s205 + $0x38] sm:$0xff] %v220
                %v222 = vld [vmem:[%s204 + $0xc0] sm:$0xff]
                %223 = vst [vmem:[%s205 + $0x40] sm:$0xff] %v222
                %v224 = vld [vmem:[%s204 + $0xc8] sm:$0xff]
                %225 = vst [vmem:[%s205 + $0x48] sm:$0xff] %v224
                %v226 = vld [vmem:[%s204 + $0xd0] sm:$0xff]
                %227 = vst [vmem:[%s205 + $0x50] sm:$0xff] %v226
                %v228 = vld [vmem:[%s204 + $0xd8] sm:$0xff]
                %229 = vst [vmem:[%s205 + $0x58] sm:$0xff] %v228
                %v230 = vld [vmem:[%s204 + $0x120] sm:$0xff]
                %231 = vst [vmem:[%s205 + $0x60] sm:$0xff] %v230
                %v232 = vld [vmem:[%s204 + $0x128] sm:$0xff]
                %233 = vst [vmem:[%s205 + $0x68] sm:$0xff] %v232
                %v234 = vld [vmem:[%s204 + $0x130] sm:$0xff]
                %235 = vst [vmem:[%s205 + $0x70] sm:$0xff] %v234
                %v236 = vld [vmem:[%s204 + $0x138] sm:$0xff]
                %237 = vst [vmem:[%s205 + $0x78] sm:$0xff] %v236
              $region41: #{augmenter_forward.9} parent=35 // loop_footer
                %s203 = sadd.s32 1, %s199
              $region42: #{augmenter_forward.9} parent=35 // loop_footer_branch
                %198 = sbr.rel target = $region38
              $region43: #{augmenter_forward.9} parent=35 // loop_exit
                _
            $region36: #{augmenter_forward.9} parent=31 // pred_fallthru
              _
            // Predicated region
            $region44: #{augmenter_forward.9} parent=31 // pred_check
              _
            $region45: #{augmenter_forward.9} parent=31 // pred_check_branch
              %239 = sbr.rel target = $region47
            $region46: #{augmenter_forward.9} parent=31 // pred_region
              _
            $region47: #{augmenter_forward.9} parent=31 // pred_fallthru
              _
          $region32: #{augmenter_forward.9} parent=27 // pred_fallthru
            _
          %240 = vnop
        $region28: #{augmenter_forward.9} parent=23 // pred_fallthru
          _
        // Predicated region
        $region48: #{augmenter_forward.9} parent=23 // pred_check
          %p241 = pneg %p59
        $region49: #{augmenter_forward.9} parent=23 // pred_check_branch
          %243 = sbr.rel (%p241) target = $region51
        $region50: #{augmenter_forward.9} parent=23 // pred_region
          %s244 = sand.u32 %s49, 1
          %s245 = sand.u32 %s49, 1
          %s246 = smul.addr %s245, 128
          %s247 = scalar_lea.vmem [#allocation4], %s246
          %s248 = sadd.s32 %s11, 1
          %s249 = smul.u32 4, %s248
          %s250 = smul.addr %s249, 8
          %s251 = scalar_lea.vmem %s1, %s250
          // Predicated region
          $region52: #{augmenter_forward.9} parent=50 // pred_check
            _
          $region53: #{augmenter_forward.9} parent=50 // pred_check_branch
            %253 = sbr.rel (0) target = $region55
          $region54: #{augmenter_forward.9} parent=50 // pred_region
            // Predicated region
            $region56: #{augmenter_forward.9} parent=54 // pred_check
              _
            $region57: #{augmenter_forward.9} parent=54 // pred_check_branch
              %255 = sbr.rel (0) target = $region59
            $region58: #{augmenter_forward.9} parent=54 // pred_region
              loop: start=0, step=1, limit=1
              $region60: #{augmenter_forward.9} parent=58 // loop_pre_header
                _
              $region61: #{augmenter_forward.9} parent=58 // loop_header
                %s257 = sphi 0, %s261
                %p258 = scmp.ge.s32.totalorder %s257, 1
                %s262 = sphi %s251, %s251
                %s263 = sphi %s247, %s247
              $region62: #{augmenter_forward.9} parent=58 // loop_header_branch
                %260 = sbr.rel (%p258) target = $region66
              $region63: #{augmenter_forward.9} parent=58 // loop_body
                %v264 = vld [vmem:[%s262] sm:$0xff]
                %265 = vst [vmem:[%s263] sm:$0xff] %v264
                %v266 = vld [vmem:[%s262 + $0x8] sm:$0xff]
                %267 = vst [vmem:[%s263 + $0x8] sm:$0xff] %v266
                %v268 = vld [vmem:[%s262 + $0x10] sm:$0xff]
                %269 = vst [vmem:[%s263 + $0x10] sm:$0xff] %v268
                %v270 = vld [vmem:[%s262 + $0x18] sm:$0xff]
                %271 = vst [vmem:[%s263 + $0x18] sm:$0xff] %v270
                %v272 = vld [vmem:[%s262 + $0x60] sm:$0xff]
                %273 = vst [vmem:[%s263 + $0x20] sm:$0xff] %v272
                %v274 = vld [vmem:[%s262 + $0x68] sm:$0xff]
                %275 = vst [vmem:[%s263 + $0x28] sm:$0xff] %v274
                %v276 = vld [vmem:[%s262 + $0x70] sm:$0xff]
                %277 = vst [vmem:[%s263 + $0x30] sm:$0xff] %v276
                %v278 = vld [vmem:[%s262 + $0x78] sm:$0xff]
                %279 = vst [vmem:[%s263 + $0x38] sm:$0xff] %v278
                %v280 = vld [vmem:[%s262 + $0xc0] sm:$0xff]
                %281 = vst [vmem:[%s263 + $0x40] sm:$0xff] %v280
                %v282 = vld [vmem:[%s262 + $0xc8] sm:$0xff]
                %283 = vst [vmem:[%s263 + $0x48] sm:$0xff] %v282
                %v284 = vld [vmem:[%s262 + $0xd0] sm:$0xff]
                %285 = vst [vmem:[%s263 + $0x50] sm:$0xff] %v284
                %v286 = vld [vmem:[%s262 + $0xd8] sm:$0xff]
                %287 = vst [vmem:[%s263 + $0x58] sm:$0xff] %v286
                %v288 = vld [vmem:[%s262 + $0x120] sm:$0xff]
                %289 = vst [vmem:[%s263 + $0x60] sm:$0xff] %v288
                %v290 = vld [vmem:[%s262 + $0x128] sm:$0xff]
                %291 = vst [vmem:[%s263 + $0x68] sm:$0xff] %v290
                %v292 = vld [vmem:[%s262 + $0x130] sm:$0xff]
                %293 = vst [vmem:[%s263 + $0x70] sm:$0xff] %v292
                %v294 = vld [vmem:[%s262 + $0x138] sm:$0xff]
                %295 = vst [vmem:[%s263 + $0x78] sm:$0xff] %v294
              $region64: #{augmenter_forward.9} parent=58 // loop_footer
                %s261 = sadd.s32 1, %s257
              $region65: #{augmenter_forward.9} parent=58 // loop_footer_branch
                %256 = sbr.rel target = $region61
              $region66: #{augmenter_forward.9} parent=58 // loop_exit
                _
            $region59: #{augmenter_forward.9} parent=54 // pred_fallthru
              _
            // Predicated region
            $region67: #{augmenter_forward.9} parent=54 // pred_check
              _
            $region68: #{augmenter_forward.9} parent=54 // pred_check_branch
              %297 = sbr.rel target = $region70
            $region69: #{augmenter_forward.9} parent=54 // pred_region
              _
            $region70: #{augmenter_forward.9} parent=54 // pred_fallthru
              _
          $region55: #{augmenter_forward.9} parent=50 // pred_fallthru
            _
          %298 = vnop
        $region51: #{augmenter_forward.9} parent=23 // pred_fallthru
          _
        // Predicated region
        $region71: #{augmenter_forward.9} parent=23 // pred_check
          %p299 = pneg %p127
        $region72: #{augmenter_forward.9} parent=23 // pred_check_branch
          %301 = sbr.rel (%p299) target = $region74
        $region73: #{augmenter_forward.9} parent=23 // pred_region
          %s302 = sand.u32 %s117, 1
          %s303 = sand.u32 %s117, 1
          %s304 = smul.addr %s303, 128
          %s305 = scalar_lea.vmem [#allocation5], %s304
          %s306 = smul.u32 4, %s11
          %s307 = smul.addr %s306, 8
          %s308 = scalar_lea.vmem %s4, %s307
          // Predicated region
          $region75: #{augmenter_forward.9} parent=73 // pred_check
            _
          $region76: #{augmenter_forward.9} parent=73 // pred_check_branch
            %310 = sbr.rel (0) target = $region78
          $region77: #{augmenter_forward.9} parent=73 // pred_region
            // Predicated region
            $region79: #{augmenter_forward.9} parent=77 // pred_check
              _
            $region80: #{augmenter_forward.9} parent=77 // pred_check_branch
              %312 = sbr.rel (0) target = $region82
            $region81: #{augmenter_forward.9} parent=77 // pred_region
              loop: start=0, step=1, limit=1
              $region83: #{augmenter_forward.9} parent=81 // loop_pre_header
                _
              $region84: #{augmenter_forward.9} parent=81 // loop_header
                %s314 = sphi 0, %s318
                %p315 = scmp.ge.s32.totalorder %s314, 1
                %s319 = sphi %s308, %s308
                %s320 = sphi %s305, %s305
              $region85: #{augmenter_forward.9} parent=81 // loop_header_branch
                %317 = sbr.rel (%p315) target = $region89
              $region86: #{augmenter_forward.9} parent=81 // loop_body
                %v321 = vld [vmem:[%s319] sm:$0xff]
                %322 = vst [vmem:[%s320] sm:$0xff] %v321
                %v323 = vld [vmem:[%s319 + $0x8] sm:$0xff]
                %324 = vst [vmem:[%s320 + $0x8] sm:$0xff] %v323
                %v325 = vld [vmem:[%s319 + $0x10] sm:$0xff]
                %326 = vst [vmem:[%s320 + $0x10] sm:$0xff] %v325
                %v327 = vld [vmem:[%s319 + $0x18] sm:$0xff]
                %328 = vst [vmem:[%s320 + $0x18] sm:$0xff] %v327
                %v329 = vld [vmem:[%s319 + $0x40] sm:$0xff]
                %330 = vst [vmem:[%s320 + $0x20] sm:$0xff] %v329
                %v331 = vld [vmem:[%s319 + $0x48] sm:$0xff]
                %332 = vst [vmem:[%s320 + $0x28] sm:$0xff] %v331
                %v333 = vld [vmem:[%s319 + $0x50] sm:$0xff]
                %334 = vst [vmem:[%s320 + $0x30] sm:$0xff] %v333
                %v335 = vld [vmem:[%s319 + $0x58] sm:$0xff]
                %336 = vst [vmem:[%s320 + $0x38] sm:$0xff] %v335
                %v337 = vld [vmem:[%s319 + $0x80] sm:$0xff]
                %338 = vst [vmem:[%s320 + $0x40] sm:$0xff] %v337
                %v339 = vld [vmem:[%s319 + $0x88] sm:$0xff]
                %340 = vst [vmem:[%s320 + $0x48] sm:$0xff] %v339
                %v341 = vld [vmem:[%s319 + $0x90] sm:$0xff]
                %342 = vst [vmem:[%s320 + $0x50] sm:$0xff] %v341
                %v343 = vld [vmem:[%s319 + $0x98] sm:$0xff]
                %344 = vst [vmem:[%s320 + $0x58] sm:$0xff] %v343
                %v345 = vld [vmem:[%s319 + $0xc0] sm:$0xff]
                %346 = vst [vmem:[%s320 + $0x60] sm:$0xff] %v345
                %v347 = vld [vmem:[%s319 + $0xc8] sm:$0xff]
                %348 = vst [vmem:[%s320 + $0x68] sm:$0xff] %v347
                %v349 = vld [vmem:[%s319 + $0xd0] sm:$0xff]
                %350 = vst [vmem:[%s320 + $0x70] sm:$0xff] %v349
                %v351 = vld [vmem:[%s319 + $0xd8] sm:$0xff]
                %352 = vst [vmem:[%s320 + $0x78] sm:$0xff] %v351
              $region87: #{augmenter_forward.9} parent=81 // loop_footer
                %s318 = sadd.s32 1, %s314
              $region88: #{augmenter_forward.9} parent=81 // loop_footer_branch
                %313 = sbr.rel target = $region84
              $region89: #{augmenter_forward.9} parent=81 // loop_exit
                _
            $region82: #{augmenter_forward.9} parent=77 // pred_fallthru
              _
            // Predicated region
            $region90: #{augmenter_forward.9} parent=77 // pred_check
              _
            $region91: #{augmenter_forward.9} parent=77 // pred_check_branch
              %354 = sbr.rel target = $region93
            $region92: #{augmenter_forward.9} parent=77 // pred_region
              _
            $region93: #{augmenter_forward.9} parent=77 // pred_fallthru
              _
          $region78: #{augmenter_forward.9} parent=73 // pred_fallthru
            _
          %355 = vnop
        $region74: #{augmenter_forward.9} parent=23 // pred_fallthru
          _
      $region24: #{augmenter_forward.9} parent=5 // pred_fallthru
        _
      %p356 = scmp.le.s32.totalorder 1, %s11
      %p357 = scmp.lt.s32.totalorder %s11, 3
      %p358 = pnand %p356, %p357
      %p359 = pneg %p358
      // Predicated region
      $region94: #{augmenter_forward.9} parent=5 // pred_check
        _
      $region95: #{augmenter_forward.9} parent=5 // pred_check_branch
        %361 = sbr.rel (%p358) target = $region97
      $region96: #{augmenter_forward.9} parent=5 // pred_region
        %s362 = ssub.s32 %s11, 1
        %s363 = sand.u32 %s24, 1
        %s364 = sand.u32 %s24, 1
        %s365 = smul.addr %s364, 128
        %s366 = scalar_lea.vmem [#allocation3], %s365
        // Predicated region
        $region98: #{augmenter_forward.9} parent=96 // pred_check
          %p367 = pneg %p37
        $region99: #{augmenter_forward.9} parent=96 // pred_check_branch
          %369 = sbr.rel (%p367) target = $region101
        $region100: #{augmenter_forward.9} parent=96 // pred_region
          _
        $region101: #{augmenter_forward.9} parent=96 // pred_fallthru
          _
        %s370 = sand.u32 %s52, 1
        %s371 = sand.u32 %s52, 1
        %s372 = smul.addr %s371, 128
        %s373 = scalar_lea.vmem [#allocation4], %s372
        // Predicated region
        $region102: #{augmenter_forward.9} parent=96 // pred_check
          %p374 = pneg %p65
        $region103: #{augmenter_forward.9} parent=96 // pred_check_branch
          %376 = sbr.rel (%p374) target = $region105
        $region104: #{augmenter_forward.9} parent=96 // pred_region
          _
        $region105: #{augmenter_forward.9} parent=96 // pred_fallthru
          _
        %s377 = sand.u32 %s120, 1
        %s378 = sand.u32 %s120, 1
        %s379 = smul.addr %s378, 128
        %s380 = scalar_lea.vmem [#allocation5], %s379
        // Predicated region
        $region106: #{augmenter_forward.9} parent=96 // pred_check
          %p381 = pneg %p133
        $region107: #{augmenter_forward.9} parent=96 // pred_check_branch
          %383 = sbr.rel (%p381) target = $region109
        $region108: #{augmenter_forward.9} parent=96 // pred_region
          _
        $region109: #{augmenter_forward.9} parent=96 // pred_fallthru
          _
        %s384 = sand.u32 %s24, 1
        %s385 = sand.u32 %s24, 1
        %s386 = smul.addr %s385, 128
        %s387 = scalar_lea.vmem [#allocation3], %s386
        %p388 = pneg %p37
        %p389 = pneg %p34
        %s390 = sand.u32 %s52, 1
        %s391 = sand.u32 %s52, 1
        %s392 = smul.addr %s391, 128
        %s393 = scalar_lea.vmem [#allocation4], %s392
        %p394 = pneg %p65
        %p395 = pneg %p62
        %p396 = pneg %p86
        %p397 = pneg %p83
        %p398 = pneg %p107
        %p399 = pneg %p104
        %s400 = sand.u32 %s120, 1
        %s401 = sand.u32 %s120, 1
        %s402 = smul.addr %s401, 128
        %s403 = scalar_lea.vmem [#allocation5], %s402
        %p404 = pneg %p133
        %p405 = pneg %p130
        %p406 = pneg %p159
        %p407 = pneg %p156
        %s408 = sand.u32 %s146, 1
        %s409 = sand.u32 %s146, 1
        %s410 = smul.addr %s409, 128
        %s411 = scalar_lea.vmem [#allocation6], %s410
        %s412 = smul.u32 4, %s16
        %s413 = sadd.s32 %s16, 1
        %s414 = smul.u32 4, %s413
        %s415 = smul.u32 4, %s16
        %s416 = smul.u32 4, %s16
        %v417 = vld [vmem:[%s366] sm:$0xff]
        %v418 = vld [vmem:[%s366 + $0x8] sm:$0xff]
        %v419 = vld [vmem:[%s366 + $0x10] sm:$0xff]
        %v420 = vld [vmem:[%s366 + $0x18] sm:$0xff]
        %v421 = vld [vmem:[%s366 + $0x20] sm:$0xff]
        %v422 = vld [vmem:[%s366 + $0x28] sm:$0xff]
        %v423 = vld [vmem:[%s366 + $0x30] sm:$0xff]
        %v424 = vld [vmem:[%s366 + $0x38] sm:$0xff]
        %v425 = vld [vmem:[%s366 + $0x40] sm:$0xff]
        %v426 = vld [vmem:[%s366 + $0x48] sm:$0xff]
        %v427 = vld [vmem:[%s366 + $0x50] sm:$0xff]
        %v428 = vld [vmem:[%s366 + $0x58] sm:$0xff]
        %v429 = vld [vmem:[%s366 + $0x60] sm:$0xff]
        %v430 = vld [vmem:[%s366 + $0x68] sm:$0xff]
        %v431 = vld [vmem:[%s366 + $0x70] sm:$0xff]
        %v432 = vld [vmem:[%s366 + $0x78] sm:$0xff]
        %433 = vst [vmem:[#allocation2] sm:$0xff] %v417
        %434 = vst [vmem:[#allocation2 + $0x8] sm:$0xff] %v418
        %435 = vst [vmem:[#allocation2 + $0x10] sm:$0xff] %v419
        %436 = vst [vmem:[#allocation2 + $0x18] sm:$0xff] %v420
        %437 = vst [vmem:[#allocation2 + $0x40] sm:$0xff] %v421
        %438 = vst [vmem:[#allocation2 + $0x48] sm:$0xff] %v422
        %439 = vst [vmem:[#allocation2 + $0x50] sm:$0xff] %v423
        %440 = vst [vmem:[#allocation2 + $0x58] sm:$0xff] %v424
        %441 = vst [vmem:[#allocation2 + $0x80] sm:$0xff] %v425
        %442 = vst [vmem:[#allocation2 + $0x88] sm:$0xff] %v426
        %443 = vst [vmem:[#allocation2 + $0x90] sm:$0xff] %v427
        %444 = vst [vmem:[#allocation2 + $0x98] sm:$0xff] %v428
        %445 = vst [vmem:[#allocation2 + $0xc0] sm:$0xff] %v429
        %446 = vst [vmem:[#allocation2 + $0xc8] sm:$0xff] %v430
        %447 = vst [vmem:[#allocation2 + $0xd0] sm:$0xff] %v431
        %448 = vst [vmem:[#allocation2 + $0xd8] sm:$0xff] %v432
        %v449 = vld [vmem:[%s373] sm:$0xff]
        %v450 = vld [vmem:[%s373 + $0x8] sm:$0xff]
        %v451 = vld [vmem:[%s373 + $0x10] sm:$0xff]
        %v452 = vld [vmem:[%s373 + $0x18] sm:$0xff]
        %v453 = vld [vmem:[%s373 + $0x20] sm:$0xff]
        %v454 = vld [vmem:[%s373 + $0x28] sm:$0xff]
        %v455 = vld [vmem:[%s373 + $0x30] sm:$0xff]
        %v456 = vld [vmem:[%s373 + $0x38] sm:$0xff]
        %v457 = vld [vmem:[%s373 + $0x40] sm:$0xff]
        %v458 = vld [vmem:[%s373 + $0x48] sm:$0xff]
        %v459 = vld [vmem:[%s373 + $0x50] sm:$0xff]
        %v460 = vld [vmem:[%s373 + $0x58] sm:$0xff]
        %v461 = vld [vmem:[%s373 + $0x60] sm:$0xff]
        %v462 = vld [vmem:[%s373 + $0x68] sm:$0xff]
        %v463 = vld [vmem:[%s373 + $0x70] sm:$0xff]
        %v464 = vld [vmem:[%s373 + $0x78] sm:$0xff]
        %465 = vst [vmem:[#allocation2 + $0x20] sm:$0xff] %v449
        %466 = vst [vmem:[#allocation2 + $0x28] sm:$0xff] %v450
        %467 = vst [vmem:[#allocation2 + $0x30] sm:$0xff] %v451
        %468 = vst [vmem:[#allocation2 + $0x38] sm:$0xff] %v452
        %469 = vst [vmem:[#allocation2 + $0x60] sm:$0xff] %v453
        %470 = vst [vmem:[#allocation2 + $0x68] sm:$0xff] %v454
        %471 = vst [vmem:[#allocation2 + $0x70] sm:$0xff] %v455
        %472 = vst [vmem:[#allocation2 + $0x78] sm:$0xff] %v456
        %473 = vst [vmem:[#allocation2 + $0xa0] sm:$0xff] %v457
        %474 = vst [vmem:[#allocation2 + $0xa8] sm:$0xff] %v458
        %475 = vst [vmem:[#allocation2 + $0xb0] sm:$0xff] %v459
        %476 = vst [vmem:[#allocation2 + $0xb8] sm:$0xff] %v460
        %477 = vst [vmem:[#allocation2 + $0xe0] sm:$0xff] %v461
        %478 = vst [vmem:[#allocation2 + $0xe8] sm:$0xff] %v462
        %479 = vst [vmem:[#allocation2 + $0xf0] sm:$0xff] %v463
        %480 = vst [vmem:[#allocation2 + $0xf8] sm:$0xff] %v464
        %v481 = vld [vmem:[#allocation2] sm:$0xff]
        %v482 = vld [vmem:[#allocation2 + $0x8] sm:$0xff]
        %v483 = vld [vmem:[#allocation2 + $0x10] sm:$0xff]
        %v484 = vld [vmem:[#allocation2 + $0x18] sm:$0xff]
        %v485 = vld [vmem:[#allocation2 + $0x40] sm:$0xff]
        %v486 = vld [vmem:[#allocation2 + $0x48] sm:$0xff]
        %v487 = vld [vmem:[#allocation2 + $0x50] sm:$0xff]
        %v488 = vld [vmem:[#allocation2 + $0x58] sm:$0xff]
        %v489 = vld [vmem:[#allocation2 + $0x80] sm:$0xff]
        %v490 = vld [vmem:[#allocation2 + $0x88] sm:$0xff]
        %v491 = vld [vmem:[#allocation2 + $0x90] sm:$0xff]
        %v492 = vld [vmem:[#allocation2 + $0x98] sm:$0xff]
        %v493 = vld [vmem:[#allocation2 + $0xc0] sm:$0xff]
        %v494 = vld [vmem:[#allocation2 + $0xc8] sm:$0xff]
        %v495 = vld [vmem:[#allocation2 + $0xd0] sm:$0xff]
        %v496 = vld [vmem:[#allocation2 + $0xd8] sm:$0xff]
        %v497 = vld [vmem:[%s2] sm:$0xff]
        %v498 = vld [vmem:[%s2 + $0x8] sm:$0xff]
        %v499 = vld [vmem:[%s2 + $0x10] sm:$0xff]
        %v500 = vld [vmem:[%s2 + $0x18] sm:$0xff]
        %v501 = vld [vmem:[#allocation2 + $0x20] sm:$0xff]
        %v502 = vld [vmem:[#allocation2 + $0x60] sm:$0xff]
        %v503 = vld [vmem:[#allocation2 + $0xa0] sm:$0xff]
        %v504 = vld [vmem:[#allocation2 + $0xe0] sm:$0xff]
        %s505 = scalar_lea.vmem %s2, 32
        %v506 = vld [vmem:[%s505] sm:$0xff]
        %v507 = vld [vmem:[%s505 + $0x8] sm:$0xff]
        %v508 = vld [vmem:[%s505 + $0x10] sm:$0xff]
        %v509 = vld [vmem:[%s505 + $0x18] sm:$0xff]
        %530 = vrot.lane.b32.xlu0 %v481, 127
        %v531 = vpop.permute.xlu0 %530
        %532 = vrot.lane.b32.xlu0 %v482, 127
        %v533 = vpop.permute.xlu0 %532
        %534 = vrot.lane.b32.xlu0 %v483, 127
        %v535 = vpop.permute.xlu0 %534
        %536 = vrot.lane.b32.xlu0 %v484, 127
        %v537 = vpop.permute.xlu0 %536
        %538 = vrot.lane.b32.xlu0 %v501, 127
        %v539 = vpop.permute.xlu0 %538
        %540 = vrot.lane.b32.xlu0 %v485, 127
        %v541 = vpop.permute.xlu0 %540
        %542 = vrot.lane.b32.xlu0 %v486, 127
        %v543 = vpop.permute.xlu0 %542
        %544 = vrot.lane.b32.xlu0 %v487, 127
        %v545 = vpop.permute.xlu0 %544
        %546 = vrot.lane.b32.xlu0 %v488, 127
        %v547 = vpop.permute.xlu0 %546
        %548 = vrot.lane.b32.xlu0 %v502, 127
        %v549 = vpop.permute.xlu0 %548
        %550 = vrot.lane.b32.xlu0 %v489, 127
        %v551 = vpop.permute.xlu0 %550
        %552 = vrot.lane.b32.xlu0 %v490, 127
        %v553 = vpop.permute.xlu0 %552
        %554 = vrot.lane.b32.xlu0 %v491, 127
        %v555 = vpop.permute.xlu0 %554
        %556 = vrot.lane.b32.xlu0 %v492, 127
        %v557 = vpop.permute.xlu0 %556
        %558 = vrot.lane.b32.xlu0 %v503, 127
        %v559 = vpop.permute.xlu0 %558
        %560 = vrot.lane.b32.xlu0 %v493, 127
        %v561 = vpop.permute.xlu0 %560
        %562 = vrot.lane.b32.xlu0 %v494, 127
        %v563 = vpop.permute.xlu0 %562
        %564 = vrot.lane.b32.xlu0 %v495, 127
        %v565 = vpop.permute.xlu0 %564
        %566 = vrot.lane.b32.xlu0 %v496, 127
        %v567 = vpop.permute.xlu0 %566
        %568 = vrot.lane.b32.xlu0 %v504, 127
        %v569 = vpop.permute.xlu0 %568
        %vm570 = vcmask 1039360
        %v571 = vsel %vm570, %v531, %v533
        %v572 = vsel %vm570, %v533, %v535
        %v573 = vsel %vm570, %v535, %v537
        %v574 = vsel %vm570, %v537, %v539
        %v575 = vsel %vm570, %v541, %v543
        %v576 = vsel %vm570, %v543, %v545
        %v577 = vsel %vm570, %v545, %v547
        %v578 = vsel %vm570, %v547, %v549
        %v579 = vsel %vm570, %v551, %v553
        %v580 = vsel %vm570, %v553, %v555
        %v581 = vsel %vm570, %v555, %v557
        %v582 = vsel %vm570, %v557, %v559
        %v583 = vsel %vm570, %v561, %v563
        %v584 = vsel %vm570, %v563, %v565
        %v585 = vsel %vm570, %v565, %v567
        %v586 = vsel %vm570, %v567, %v569
        %vm603 = vcmask 261120
        %v605 = vsel %vm603, %v506, 0
        %v608 = vsel %vm603, %v507, 0
        %v611 = vsel %vm603, %v508, 0
        %v614 = vsel %vm603, %v509, 0
        %616 = vmatpush.msra.mxu0 0.0
        %617 = vmatpush.msra.mxu0 0.0
        %618 = vmatpush.msra.mxu0 0.0
        %619 = vmatpush.msra.mxu0 0.0
        %620 = vmatpush.msra.mxu0 0.0
        %621 = vmatpush.msra.mxu0 0.0
        %622 = vmatpush.msra.mxu0 0.0
        %623 = vmatpush.msra.mxu0 0.0
        %624 = vmatpush.msra.mxu0 0.0
        %625 = vmatpush.msra.mxu0 0.0
        %626 = vmatpush.msra.mxu0 0.0
        %627 = vmatpush.msra.mxu0 0.0
        %628 = vmatpush.msra.mxu0 %v583
        %629 = vmatpush.msra.mxu0 %v579
        %630 = vmatpush.msra.mxu0 %v575
        %631 = vmatpush.msra.mxu0 %v571
        %632 = vmatmul.f32.gmra.mxu0 %v605
        %v633 = vpop.f32.mrf.mxu0
        %v634 = vadd.f32 0.0, %v633
        %635 = vmatmul.f32.gmra.mxu0 %v608
        %v636 = vpop.f32.mrf.mxu0
        %v637 = vadd.f32 0.0, %v636
        %638 = vmatmul.f32.gmra.mxu0 %v611
        %v639 = vpop.f32.mrf.mxu0
        %v640 = vadd.f32 0.0, %v639
        %641 = vmatmul.f32.gmra.mxu0 %v614
        %v642 = vpop.f32.mrf.mxu0
        %v643 = vadd.f32 0.0, %v642
        %644 = vdwg.mxu0
        %645 = vmatpush.msra.mxu0 0.0
        %646 = vmatpush.msra.mxu0 0.0
        %647 = vmatpush.msra.mxu0 0.0
        %648 = vmatpush.msra.mxu0 0.0
        %649 = vmatpush.msra.mxu0 0.0
        %650 = vmatpush.msra.mxu0 0.0
        %651 = vmatpush.msra.mxu0 0.0
        %652 = vmatpush.msra.mxu0 0.0
        %653 = vmatpush.msra.mxu0 0.0
        %654 = vmatpush.msra.mxu0 0.0
        %655 = vmatpush.msra.mxu0 0.0
        %656 = vmatpush.msra.mxu0 0.0
        %657 = vmatpush.msra.mxu0 %v584
        %658 = vmatpush.msra.mxu0 %v580
        %659 = vmatpush.msra.mxu0 %v576
        %660 = vmatpush.msra.mxu0 %v572
        %661 = vmatmul.f32.gmra.mxu0 %v605
        %v662 = vpop.f32.mrf.mxu0
        %v663 = vadd.f32 0.0, %v662
        %664 = vmatmul.f32.gmra.mxu0 %v608
        %v665 = vpop.f32.mrf.mxu0
        %v666 = vadd.f32 0.0, %v665
        %667 = vmatmul.f32.gmra.mxu0 %v611
        %v668 = vpop.f32.mrf.mxu0
        %v669 = vadd.f32 0.0, %v668
        %670 = vmatmul.f32.gmra.mxu0 %v614
        %v671 = vpop.f32.mrf.mxu0
        %v672 = vadd.f32 0.0, %v671
        %673 = vdwg.mxu0
        %674 = vmatpush.msra.mxu0 0.0
        %675 = vmatpush.msra.mxu0 0.0
        %676 = vmatpush.msra.mxu0 0.0
        %677 = vmatpush.msra.mxu0 0.0
        %678 = vmatpush.msra.mxu0 0.0
        %679 = vmatpush.msra.mxu0 0.0
        %680 = vmatpush.msra.mxu0 0.0
        %681 = vmatpush.msra.mxu0 0.0
        %682 = vmatpush.msra.mxu0 0.0
        %683 = vmatpush.msra.mxu0 0.0
        %684 = vmatpush.msra.mxu0 0.0
        %685 = vmatpush.msra.mxu0 0.0
        %686 = vmatpush.msra.mxu0 %v585
        %687 = vmatpush.msra.mxu0 %v581
        %688 = vmatpush.msra.mxu0 %v577
        %689 = vmatpush.msra.mxu0 %v573
        %690 = vmatmul.f32.gmra.mxu0 %v605
        %v691 = vpop.f32.mrf.mxu0
        %v692 = vadd.f32 0.0, %v691
        %693 = vmatmul.f32.gmra.mxu0 %v608
        %v694 = vpop.f32.mrf.mxu0
        %v695 = vadd.f32 0.0, %v694
        %696 = vmatmul.f32.gmra.mxu0 %v611
        %v697 = vpop.f32.mrf.mxu0
        %v698 = vadd.f32 0.0, %v697
        %699 = vmatmul.f32.gmra.mxu0 %v614
        %v700 = vpop.f32.mrf.mxu0
        %v701 = vadd.f32 0.0, %v700
        %702 = vdwg.mxu0
        %703 = vmatpush.msra.mxu0 0.0
        %704 = vmatpush.msra.mxu0 0.0
        %705 = vmatpush.msra.mxu0 0.0
        %706 = vmatpush.msra.mxu0 0.0
        %707 = vmatpush.msra.mxu0 0.0
        %708 = vmatpush.msra.mxu0 0.0
        %709 = vmatpush.msra.mxu0 0.0
        %710 = vmatpush.msra.mxu0 0.0
        %711 = vmatpush.msra.mxu0 0.0
        %712 = vmatpush.msra.mxu0 0.0
        %713 = vmatpush.msra.mxu0 0.0
        %714 = vmatpush.msra.mxu0 0.0
        %715 = vmatpush.msra.mxu0 %v586
        %716 = vmatpush.msra.mxu0 %v582
        %717 = vmatpush.msra.mxu0 %v578
        %718 = vmatpush.msra.mxu0 %v574
        %719 = vmatmul.f32.gmra.mxu0 %v605
        %v720 = vpop.f32.mrf.mxu0
        %v721 = vadd.f32 0.0, %v720
        %722 = vmatmul.f32.gmra.mxu0 %v608
        %v723 = vpop.f32.mrf.mxu0
        %v724 = vadd.f32 0.0, %v723
        %725 = vmatmul.f32.gmra.mxu0 %v611
        %v726 = vpop.f32.mrf.mxu0
        %v727 = vadd.f32 0.0, %v726
        %728 = vmatmul.f32.gmra.mxu0 %v614
        %v729 = vpop.f32.mrf.mxu0
        %v730 = vadd.f32 0.0, %v729
        %731 = vdwg.mxu0
        %v733 = vsel %vm603, %v497, 0
        %v736 = vsel %vm603, %v498, 0
        %v739 = vsel %vm603, %v499, 0
        %v742 = vsel %vm603, %v500, 0
        %744 = vmatpush.msra.mxu0 0.0
        %745 = vmatpush.msra.mxu0 0.0
        %746 = vmatpush.msra.mxu0 0.0
        %747 = vmatpush.msra.mxu0 0.0
        %748 = vmatpush.msra.mxu0 0.0
        %749 = vmatpush.msra.mxu0 0.0
        %750 = vmatpush.msra.mxu0 0.0
        %751 = vmatpush.msra.mxu0 0.0
        %752 = vmatpush.msra.mxu0 0.0
        %753 = vmatpush.msra.mxu0 0.0
        %754 = vmatpush.msra.mxu0 0.0
        %755 = vmatpush.msra.mxu0 0.0
        %756 = vmatpush.msra.mxu0 %v493
        %757 = vmatpush.msra.mxu0 %v489
        %758 = vmatpush.msra.mxu0 %v485
        %759 = vmatpush.msra.mxu0 %v481
        %760 = vmatmul.f32.gmra.mxu0 %v733
        %v761 = vpop.f32.mrf.mxu0
        %v762 = vadd.f32 %v634, %v761
        %763 = vmatmul.f32.gmra.mxu0 %v736
        %v764 = vpop.f32.mrf.mxu0
        %v765 = vadd.f32 %v637, %v764
        %766 = vmatmul.f32.gmra.mxu0 %v739
        %v767 = vpop.f32.mrf.mxu0
        %v768 = vadd.f32 %v640, %v767
        %769 = vmatmul.f32.gmra.mxu0 %v742
        %v770 = vpop.f32.mrf.mxu0
        %v771 = vadd.f32 %v643, %v770
        %772 = vdwg.mxu0
        %773 = vmatpush.msra.mxu0 0.0
        %774 = vmatpush.msra.mxu0 0.0
        %775 = vmatpush.msra.mxu0 0.0
        %776 = vmatpush.msra.mxu0 0.0
        %777 = vmatpush.msra.mxu0 0.0
        %778 = vmatpush.msra.mxu0 0.0
        %779 = vmatpush.msra.mxu0 0.0
        %780 = vmatpush.msra.mxu0 0.0
        %781 = vmatpush.msra.mxu0 0.0
        %782 = vmatpush.msra.mxu0 0.0
        %783 = vmatpush.msra.mxu0 0.0
        %784 = vmatpush.msra.mxu0 0.0
        %785 = vmatpush.msra.mxu0 %v494
        %786 = vmatpush.msra.mxu0 %v490
        %787 = vmatpush.msra.mxu0 %v486
        %788 = vmatpush.msra.mxu0 %v482
        %789 = vmatmul.f32.gmra.mxu0 %v733
        %v790 = vpop.f32.mrf.mxu0
        %v791 = vadd.f32 %v663, %v790
        %792 = vmatmul.f32.gmra.mxu0 %v736
        %v793 = vpop.f32.mrf.mxu0
        %v794 = vadd.f32 %v666, %v793
        %795 = vmatmul.f32.gmra.mxu0 %v739
        %v796 = vpop.f32.mrf.mxu0
        %v797 = vadd.f32 %v669, %v796
        %798 = vmatmul.f32.gmra.mxu0 %v742
        %v799 = vpop.f32.mrf.mxu0
        %v800 = vadd.f32 %v672, %v799
        %801 = vdwg.mxu0
        %802 = vmatpush.msra.mxu0 0.0
        %803 = vmatpush.msra.mxu0 0.0
        %804 = vmatpush.msra.mxu0 0.0
        %805 = vmatpush.msra.mxu0 0.0
        %806 = vmatpush.msra.mxu0 0.0
        %807 = vmatpush.msra.mxu0 0.0
        %808 = vmatpush.msra.mxu0 0.0
        %809 = vmatpush.msra.mxu0 0.0
        %810 = vmatpush.msra.mxu0 0.0
        %811 = vmatpush.msra.mxu0 0.0
        %812 = vmatpush.msra.mxu0 0.0
        %813 = vmatpush.msra.mxu0 0.0
        %814 = vmatpush.msra.mxu0 %v495
        %815 = vmatpush.msra.mxu0 %v491
        %816 = vmatpush.msra.mxu0 %v487
        %817 = vmatpush.msra.mxu0 %v483
        %818 = vmatmul.f32.gmra.mxu0 %v733
        %v819 = vpop.f32.mrf.mxu0
        %v820 = vadd.f32 %v692, %v819
        %821 = vmatmul.f32.gmra.mxu0 %v736
        %v822 = vpop.f32.mrf.mxu0
        %v823 = vadd.f32 %v695, %v822
        %824 = vmatmul.f32.gmra.mxu0 %v739
        %v825 = vpop.f32.mrf.mxu0
        %v826 = vadd.f32 %v698, %v825
        %827 = vmatmul.f32.gmra.mxu0 %v742
        %v828 = vpop.f32.mrf.mxu0
        %v829 = vadd.f32 %v701, %v828
        %830 = vdwg.mxu0
        %831 = vmatpush.msra.mxu0 0.0
        %832 = vmatpush.msra.mxu0 0.0
        %833 = vmatpush.msra.mxu0 0.0
        %834 = vmatpush.msra.mxu0 0.0
        %835 = vmatpush.msra.mxu0 0.0
        %836 = vmatpush.msra.mxu0 0.0
        %837 = vmatpush.msra.mxu0 0.0
        %838 = vmatpush.msra.mxu0 0.0
        %839 = vmatpush.msra.mxu0 0.0
        %840 = vmatpush.msra.mxu0 0.0
        %841 = vmatpush.msra.mxu0 0.0
        %842 = vmatpush.msra.mxu0 0.0
        %843 = vmatpush.msra.mxu0 %v496
        %844 = vmatpush.msra.mxu0 %v492
        %845 = vmatpush.msra.mxu0 %v488
        %846 = vmatpush.msra.mxu0 %v484
        %847 = vmatmul.f32.gmra.mxu0 %v733
        %v848 = vpop.f32.mrf.mxu0
        %v849 = vadd.f32 %v721, %v848
        %850 = vmatmul.f32.gmra.mxu0 %v736
        %v851 = vpop.f32.mrf.mxu0
        %v852 = vadd.f32 %v724, %v851
        %853 = vmatmul.f32.gmra.mxu0 %v739
        %v854 = vpop.f32.mrf.mxu0
        %v855 = vadd.f32 %v727, %v854
        %856 = vmatmul.f32.gmra.mxu0 %v742
        %v857 = vpop.f32.mrf.mxu0
        %v858 = vadd.f32 %v730, %v857
        %859 = vdwg.mxu0
        %s860 = scalar_lea.vmem %s2, 64
        %v861 = vld [vmem:[%s860] sm:$0xff]
        %v862 = vld [vmem:[%s860 + $0x8] sm:$0xff]
        %v863 = vld [vmem:[%s860 + $0x10] sm:$0xff]
        %v864 = vld [vmem:[%s860 + $0x18] sm:$0xff]
        %865 = vrot.lane.b32.xlu0 %v481, 126
        %v866 = vpop.permute.xlu0 %865
        %867 = vrot.lane.b32.xlu0 %v482, 126
        %v868 = vpop.permute.xlu0 %867
        %869 = vrot.lane.b32.xlu0 %v483, 126
        %v870 = vpop.permute.xlu0 %869
        %871 = vrot.lane.b32.xlu0 %v484, 126
        %v872 = vpop.permute.xlu0 %871
        %873 = vrot.lane.b32.xlu0 %v501, 126
        %v874 = vpop.permute.xlu0 %873
        %875 = vrot.lane.b32.xlu0 %v485, 126
        %v876 = vpop.permute.xlu0 %875
        %877 = vrot.lane.b32.xlu0 %v486, 126
        %v878 = vpop.permute.xlu0 %877
        %879 = vrot.lane.b32.xlu0 %v487, 126
        %v880 = vpop.permute.xlu0 %879
        %881 = vrot.lane.b32.xlu0 %v488, 126
        %v882 = vpop.permute.xlu0 %881
        %883 = vrot.lane.b32.xlu0 %v502, 126
        %v884 = vpop.permute.xlu0 %883
        %885 = vrot.lane.b32.xlu0 %v489, 126
        %v886 = vpop.permute.xlu0 %885
        %887 = vrot.lane.b32.xlu0 %v490, 126
        %v888 = vpop.permute.xlu0 %887
        %889 = vrot.lane.b32.xlu0 %v491, 126
        %v890 = vpop.permute.xlu0 %889
        %891 = vrot.lane.b32.xlu0 %v492, 126
        %v892 = vpop.permute.xlu0 %891
        %893 = vrot.lane.b32.xlu0 %v503, 126
        %v894 = vpop.permute.xlu0 %893
        %895 = vrot.lane.b32.xlu0 %v493, 126
        %v896 = vpop.permute.xlu0 %895
        %897 = vrot.lane.b32.xlu0 %v494, 126
        %v898 = vpop.permute.xlu0 %897
        %899 = vrot.lane.b32.xlu0 %v495, 126
        %v900 = vpop.permute.xlu0 %899
        %901 = vrot.lane.b32.xlu0 %v496, 126
        %v902 = vpop.permute.xlu0 %901
        %903 = vrot.lane.b32.xlu0 %v504, 126
        %v904 = vpop.permute.xlu0 %903
        %vm905 = vcmask 1031168
        %v906 = vsel %vm905, %v866, %v868
        %v907 = vsel %vm905, %v868, %v870
        %v908 = vsel %vm905, %v870, %v872
        %v909 = vsel %vm905, %v872, %v874
        %v910 = vsel %vm905, %v876, %v878
        %v911 = vsel %vm905, %v878, %v880
        %v912 = vsel %vm905, %v880, %v882
        %v913 = vsel %vm905, %v882, %v884
        %v914 = vsel %vm905, %v886, %v888
        %v915 = vsel %vm905, %v888, %v890
        %v916 = vsel %vm905, %v890, %v892
        %v917 = vsel %vm905, %v892, %v894
        %v918 = vsel %vm905, %v896, %v898
        %v919 = vsel %vm905, %v898, %v900
        %v920 = vsel %vm905, %v900, %v902
        %v921 = vsel %vm905, %v902, %v904
        %v939 = vsel %vm603, %v861, 0
        %v942 = vsel %vm603, %v862, 0
        %v945 = vsel %vm603, %v863, 0
        %v948 = vsel %vm603, %v864, 0
        %950 = vmatpush.msra.mxu0 0.0
        %951 = vmatpush.msra.mxu0 0.0
        %952 = vmatpush.msra.mxu0 0.0
        %953 = vmatpush.msra.mxu0 0.0
        %954 = vmatpush.msra.mxu0 0.0
        %955 = vmatpush.msra.mxu0 0.0
        %956 = vmatpush.msra.mxu0 0.0
        %957 = vmatpush.msra.mxu0 0.0
        %958 = vmatpush.msra.mxu0 0.0
        %959 = vmatpush.msra.mxu0 0.0
        %960 = vmatpush.msra.mxu0 0.0
        %961 = vmatpush.msra.mxu0 0.0
        %962 = vmatpush.msra.mxu0 %v918
        %963 = vmatpush.msra.mxu0 %v914
        %964 = vmatpush.msra.mxu0 %v910
        %965 = vmatpush.msra.mxu0 %v906
        %966 = vmatmul.f32.gmra.mxu0 %v939
        %v967 = vpop.f32.mrf.mxu0
        %v968 = vadd.f32 0.0, %v967
        %969 = vmatmul.f32.gmra.mxu0 %v942
        %v970 = vpop.f32.mrf.mxu0
        %v971 = vadd.f32 0.0, %v970
        %972 = vmatmul.f32.gmra.mxu0 %v945
        %v973 = vpop.f32.mrf.mxu0
        %v974 = vadd.f32 0.0, %v973
        %975 = vmatmul.f32.gmra.mxu0 %v948
        %v976 = vpop.f32.mrf.mxu0
        %v977 = vadd.f32 0.0, %v976
        %978 = vdwg.mxu0
        %979 = vmatpush.msra.mxu0 0.0
        %980 = vmatpush.msra.mxu0 0.0
        %981 = vmatpush.msra.mxu0 0.0
        %982 = vmatpush.msra.mxu0 0.0
        %983 = vmatpush.msra.mxu0 0.0
        %984 = vmatpush.msra.mxu0 0.0
        %985 = vmatpush.msra.mxu0 0.0
        %986 = vmatpush.msra.mxu0 0.0
        %987 = vmatpush.msra.mxu0 0.0
        %988 = vmatpush.msra.mxu0 0.0
        %989 = vmatpush.msra.mxu0 0.0
        %990 = vmatpush.msra.mxu0 0.0
        %991 = vmatpush.msra.mxu0 %v919
        %992 = vmatpush.msra.mxu0 %v915
        %993 = vmatpush.msra.mxu0 %v911
        %994 = vmatpush.msra.mxu0 %v907
        %995 = vmatmul.f32.gmra.mxu0 %v939
        %v996 = vpop.f32.mrf.mxu0
        %v997 = vadd.f32 0.0, %v996
        %998 = vmatmul.f32.gmra.mxu0 %v942
        %v999 = vpop.f32.mrf.mxu0
        %v1000 = vadd.f32 0.0, %v999
        %1001 = vmatmul.f32.gmra.mxu0 %v945
        %v1002 = vpop.f32.mrf.mxu0
        %v1003 = vadd.f32 0.0, %v1002
        %1004 = vmatmul.f32.gmra.mxu0 %v948
        %v1005 = vpop.f32.mrf.mxu0
        %v1006 = vadd.f32 0.0, %v1005
        %1007 = vdwg.mxu0
        %1008 = vmatpush.msra.mxu0 0.0
        %1009 = vmatpush.msra.mxu0 0.0
        %1010 = vmatpush.msra.mxu0 0.0
        %1011 = vmatpush.msra.mxu0 0.0
        %1012 = vmatpush.msra.mxu0 0.0
        %1013 = vmatpush.msra.mxu0 0.0
        %1014 = vmatpush.msra.mxu0 0.0
        %1015 = vmatpush.msra.mxu0 0.0
        %1016 = vmatpush.msra.mxu0 0.0
        %1017 = vmatpush.msra.mxu0 0.0
        %1018 = vmatpush.msra.mxu0 0.0
        %1019 = vmatpush.msra.mxu0 0.0
        %1020 = vmatpush.msra.mxu0 %v920
        %1021 = vmatpush.msra.mxu0 %v916
        %1022 = vmatpush.msra.mxu0 %v912
        %1023 = vmatpush.msra.mxu0 %v908
        %1024 = vmatmul.f32.gmra.mxu0 %v939
        %v1025 = vpop.f32.mrf.mxu0
        %v1026 = vadd.f32 0.0, %v1025
        %1027 = vmatmul.f32.gmra.mxu0 %v942
        %v1028 = vpop.f32.mrf.mxu0
        %v1029 = vadd.f32 0.0, %v1028
        %1030 = vmatmul.f32.gmra.mxu0 %v945
        %v1031 = vpop.f32.mrf.mxu0
        %v1032 = vadd.f32 0.0, %v1031
        %1033 = vmatmul.f32.gmra.mxu0 %v948
        %v1034 = vpop.f32.mrf.mxu0
        %v1035 = vadd.f32 0.0, %v1034
        %1036 = vdwg.mxu0
        %1037 = vmatpush.msra.mxu0 0.0
        %1038 = vmatpush.msra.mxu0 0.0
        %1039 = vmatpush.msra.mxu0 0.0
        %1040 = vmatpush.msra.mxu0 0.0
        %1041 = vmatpush.msra.mxu0 0.0
        %1042 = vmatpush.msra.mxu0 0.0
        %1043 = vmatpush.msra.mxu0 0.0
        %1044 = vmatpush.msra.mxu0 0.0
        %1045 = vmatpush.msra.mxu0 0.0
        %1046 = vmatpush.msra.mxu0 0.0
        %1047 = vmatpush.msra.mxu0 0.0
        %1048 = vmatpush.msra.mxu0 0.0
        %1049 = vmatpush.msra.mxu0 %v921
        %1050 = vmatpush.msra.mxu0 %v917
        %1051 = vmatpush.msra.mxu0 %v913
        %1052 = vmatpush.msra.mxu0 %v909
        %1053 = vmatmul.f32.gmra.mxu0 %v939
        %v1054 = vpop.f32.mrf.mxu0
        %v1055 = vadd.f32 0.0, %v1054
        %1056 = vmatmul.f32.gmra.mxu0 %v942
        %v1057 = vpop.f32.mrf.mxu0
        %v1058 = vadd.f32 0.0, %v1057
        %1059 = vmatmul.f32.gmra.mxu0 %v945
        %v1060 = vpop.f32.mrf.mxu0
        %v1061 = vadd.f32 0.0, %v1060
        %1062 = vmatmul.f32.gmra.mxu0 %v948
        %v1063 = vpop.f32.mrf.mxu0
        %v1064 = vadd.f32 0.0, %v1063
        %1065 = vdwg.mxu0
        %v1066 = vadd.f32 %v762, %v968
        %v1067 = vadd.f32 %v791, %v997
        %v1068 = vadd.f32 %v820, %v1026
        %v1069 = vadd.f32 %v849, %v1055
        %v1070 = vadd.f32 %v765, %v971
        %v1071 = vadd.f32 %v794, %v1000
        %v1072 = vadd.f32 %v823, %v1029
        %v1073 = vadd.f32 %v852, %v1058
        %v1074 = vadd.f32 %v768, %v974
        %v1075 = vadd.f32 %v797, %v1003
        %v1076 = vadd.f32 %v826, %v1032
        %v1077 = vadd.f32 %v855, %v1061
        %v1078 = vadd.f32 %v771, %v977
        %v1079 = vadd.f32 %v800, %v1006
        %v1080 = vadd.f32 %v829, %v1035
        %v1081 = vadd.f32 %v858, %v1064
        %s1082 = scalar_lea.vmem %s2, 96
        %v1083 = vld [vmem:[%s1082] sm:$0xff]
        %v1084 = vld [vmem:[%s1082 + $0x8] sm:$0xff]
        %v1085 = vld [vmem:[%s1082 + $0x10] sm:$0xff]
        %v1086 = vld [vmem:[%s1082 + $0x18] sm:$0xff]
        %1087 = vrot.lane.b32.xlu0 %v481, 108
        %v1088 = vpop.permute.xlu0 %1087
        %1089 = vrot.lane.b32.xlu0 %v482, 108
        %v1090 = vpop.permute.xlu0 %1089
        %1091 = vrot.lane.b32.xlu0 %v483, 108
        %v1092 = vpop.permute.xlu0 %1091
        %1093 = vrot.lane.b32.xlu0 %v484, 108
        %v1094 = vpop.permute.xlu0 %1093
        %1095 = vrot.lane.b32.xlu0 %v501, 108
        %v1096 = vpop.permute.xlu0 %1095
        %1097 = vrot.lane.b32.xlu0 %v485, 108
        %v1098 = vpop.permute.xlu0 %1097
        %1099 = vrot.lane.b32.xlu0 %v486, 108
        %v1100 = vpop.permute.xlu0 %1099
        %1101 = vrot.lane.b32.xlu0 %v487, 108
        %v1102 = vpop.permute.xlu0 %1101
        %1103 = vrot.lane.b32.xlu0 %v488, 108
        %v1104 = vpop.permute.xlu0 %1103
        %1105 = vrot.lane.b32.xlu0 %v502, 108
        %v1106 = vpop.permute.xlu0 %1105
        %1107 = vrot.lane.b32.xlu0 %v489, 108
        %v1108 = vpop.permute.xlu0 %1107
        %1109 = vrot.lane.b32.xlu0 %v490, 108
        %v1110 = vpop.permute.xlu0 %1109
        %1111 = vrot.lane.b32.xlu0 %v491, 108
        %v1112 = vpop.permute.xlu0 %1111
        %1113 = vrot.lane.b32.xlu0 %v492, 108
        %v1114 = vpop.permute.xlu0 %1113
        %1115 = vrot.lane.b32.xlu0 %v503, 108
        %v1116 = vpop.permute.xlu0 %1115
        %1117 = vrot.lane.b32.xlu0 %v493, 108
        %v1118 = vpop.permute.xlu0 %1117
        %1119 = vrot.lane.b32.xlu0 %v494, 108
        %v1120 = vpop.permute.xlu0 %1119
        %1121 = vrot.lane.b32.xlu0 %v495, 108
        %v1122 = vpop.permute.xlu0 %1121
        %1123 = vrot.lane.b32.xlu0 %v496, 108
        %v1124 = vpop.permute.xlu0 %1123
        %1125 = vrot.lane.b32.xlu0 %v504, 108
        %v1126 = vpop.permute.xlu0 %1125
        %vm1127 = vcmask 883712
        %v1128 = vsel %vm1127, %v1088, %v1090
        %v1129 = vsel %vm1127, %v1090, %v1092
        %v1130 = vsel %vm1127, %v1092, %v1094
        %v1131 = vsel %vm1127, %v1094, %v1096
        %v1132 = vsel %vm1127, %v1098, %v1100
        %v1133 = vsel %vm1127, %v1100, %v1102
        %v1134 = vsel %vm1127, %v1102, %v1104
        %v1135 = vsel %vm1127, %v1104, %v1106
        %v1136 = vsel %vm1127, %v1108, %v1110
        %v1137 = vsel %vm1127, %v1110, %v1112
        %v1138 = vsel %vm1127, %v1112, %v1114
        %v1139 = vsel %vm1127, %v1114, %v1116
        %v1140 = vsel %vm1127, %v1118, %v1120
        %v1141 = vsel %vm1127, %v1120, %v1122
        %v1142 = vsel %vm1127, %v1122, %v1124
        %v1143 = vsel %vm1127, %v1124, %v1126
        %v1161 = vsel %vm603, %v1083, 0
        %v1164 = vsel %vm603, %v1084, 0
        %v1167 = vsel %vm603, %v1085, 0
        %v1170 = vsel %vm603, %v1086, 0
        %1172 = vmatpush.msra.mxu0 0.0
        %1173 = vmatpush.msra.mxu0 0.0
        %1174 = vmatpush.msra.mxu0 0.0
        %1175 = vmatpush.msra.mxu0 0.0
        %1176 = vmatpush.msra.mxu0 0.0
        %1177 = vmatpush.msra.mxu0 0.0
        %1178 = vmatpush.msra.mxu0 0.0
        %1179 = vmatpush.msra.mxu0 0.0
        %1180 = vmatpush.msra.mxu0 0.0
        %1181 = vmatpush.msra.mxu0 0.0
        %1182 = vmatpush.msra.mxu0 0.0
        %1183 = vmatpush.msra.mxu0 0.0
        %1184 = vmatpush.msra.mxu0 %v1140
        %1185 = vmatpush.msra.mxu0 %v1136
        %1186 = vmatpush.msra.mxu0 %v1132
        %1187 = vmatpush.msra.mxu0 %v1128
        %1188 = vmatmul.f32.gmra.mxu0 %v1161
        %v1189 = vpop.f32.mrf.mxu0
        %v1190 = vadd.f32 0.0, %v1189
        %1191 = vmatmul.f32.gmra.mxu0 %v1164
        %v1192 = vpop.f32.mrf.mxu0
        %v1193 = vadd.f32 0.0, %v1192
        %1194 = vmatmul.f32.gmra.mxu0 %v1167
        %v1195 = vpop.f32.mrf.mxu0
        %v1196 = vadd.f32 0.0, %v1195
        %1197 = vmatmul.f32.gmra.mxu0 %v1170
        %v1198 = vpop.f32.mrf.mxu0
        %v1199 = vadd.f32 0.0, %v1198
        %1200 = vdwg.mxu0
        %1201 = vmatpush.msra.mxu0 0.0
        %1202 = vmatpush.msra.mxu0 0.0
        %1203 = vmatpush.msra.mxu0 0.0
        %1204 = vmatpush.msra.mxu0 0.0
        %1205 = vmatpush.msra.mxu0 0.0
        %1206 = vmatpush.msra.mxu0 0.0
        %1207 = vmatpush.msra.mxu0 0.0
        %1208 = vmatpush.msra.mxu0 0.0
        %1209 = vmatpush.msra.mxu0 0.0
        %1210 = vmatpush.msra.mxu0 0.0
        %1211 = vmatpush.msra.mxu0 0.0
        %1212 = vmatpush.msra.mxu0 0.0
        %1213 = vmatpush.msra.mxu0 %v1141
        %1214 = vmatpush.msra.mxu0 %v1137
        %1215 = vmatpush.msra.mxu0 %v1133
        %1216 = vmatpush.msra.mxu0 %v1129
        %1217 = vmatmul.f32.gmra.mxu0 %v1161
        %v1218 = vpop.f32.mrf.mxu0
        %v1219 = vadd.f32 0.0, %v1218
        %1220 = vmatmul.f32.gmra.mxu0 %v1164
        %v1221 = vpop.f32.mrf.mxu0
        %v1222 = vadd.f32 0.0, %v1221
        %1223 = vmatmul.f32.gmra.mxu0 %v1167
        %v1224 = vpop.f32.mrf.mxu0
        %v1225 = vadd.f32 0.0, %v1224
        %1226 = vmatmul.f32.gmra.mxu0 %v1170
        %v1227 = vpop.f32.mrf.mxu0
        %v1228 = vadd.f32 0.0, %v1227
        %1229 = vdwg.mxu0
        %1230 = vmatpush.msra.mxu0 0.0
        %1231 = vmatpush.msra.mxu0 0.0
        %1232 = vmatpush.msra.mxu0 0.0
        %1233 = vmatpush.msra.mxu0 0.0
        %1234 = vmatpush.msra.mxu0 0.0
        %1235 = vmatpush.msra.mxu0 0.0
        %1236 = vmatpush.msra.mxu0 0.0
        %1237 = vmatpush.msra.mxu0 0.0
        %1238 = vmatpush.msra.mxu0 0.0
        %1239 = vmatpush.msra.mxu0 0.0
        %1240 = vmatpush.msra.mxu0 0.0
        %1241 = vmatpush.msra.mxu0 0.0
        %1242 = vmatpush.msra.mxu0 %v1142
        %1243 = vmatpush.msra.mxu0 %v1138
        %1244 = vmatpush.msra.mxu0 %v1134
        %1245 = vmatpush.msra.mxu0 %v1130
        %1246 = vmatmul.f32.gmra.mxu0 %v1161
        %v1247 = vpop.f32.mrf.mxu0
        %v1248 = vadd.f32 0.0, %v1247
        %1249 = vmatmul.f32.gmra.mxu0 %v1164
        %v1250 = vpop.f32.mrf.mxu0
        %v1251 = vadd.f32 0.0, %v1250
        %1252 = vmatmul.f32.gmra.mxu0 %v1167
        %v1253 = vpop.f32.mrf.mxu0
        %v1254 = vadd.f32 0.0, %v1253
        %1255 = vmatmul.f32.gmra.mxu0 %v1170
        %v1256 = vpop.f32.mrf.mxu0
        %v1257 = vadd.f32 0.0, %v1256
        %1258 = vdwg.mxu0
        %1259 = vmatpush.msra.mxu0 0.0
        %1260 = vmatpush.msra.mxu0 0.0
        %1261 = vmatpush.msra.mxu0 0.0
        %1262 = vmatpush.msra.mxu0 0.0
        %1263 = vmatpush.msra.mxu0 0.0
        %1264 = vmatpush.msra.mxu0 0.0
        %1265 = vmatpush.msra.mxu0 0.0
        %1266 = vmatpush.msra.mxu0 0.0
        %1267 = vmatpush.msra.mxu0 0.0
        %1268 = vmatpush.msra.mxu0 0.0
        %1269 = vmatpush.msra.mxu0 0.0
        %1270 = vmatpush.msra.mxu0 0.0
        %1271 = vmatpush.msra.mxu0 %v1143
        %1272 = vmatpush.msra.mxu0 %v1139
        %1273 = vmatpush.msra.mxu0 %v1135
        %1274 = vmatpush.msra.mxu0 %v1131
        %1275 = vmatmul.f32.gmra.mxu0 %v1161
        %v1276 = vpop.f32.mrf.mxu0
        %v1277 = vadd.f32 0.0, %v1276
        %1278 = vmatmul.f32.gmra.mxu0 %v1164
        %v1279 = vpop.f32.mrf.mxu0
        %v1280 = vadd.f32 0.0, %v1279
        %1281 = vmatmul.f32.gmra.mxu0 %v1167
        %v1282 = vpop.f32.mrf.mxu0
        %v1283 = vadd.f32 0.0, %v1282
        %1284 = vmatmul.f32.gmra.mxu0 %v1170
        %v1285 = vpop.f32.mrf.mxu0
        %v1286 = vadd.f32 0.0, %v1285
        %1287 = vdwg.mxu0
        %v1288 = vadd.f32 %v1066, %v1190
        %v1289 = vadd.f32 %v1067, %v1219
        %v1290 = vadd.f32 %v1068, %v1248
        %v1291 = vadd.f32 %v1069, %v1277
        %v1292 = vadd.f32 %v1070, %v1193
        %v1293 = vadd.f32 %v1071, %v1222
        %v1294 = vadd.f32 %v1072, %v1251
        %v1295 = vadd.f32 %v1073, %v1280
        %v1296 = vadd.f32 %v1074, %v1196
        %v1297 = vadd.f32 %v1075, %v1225
        %v1298 = vadd.f32 %v1076, %v1254
        %v1299 = vadd.f32 %v1077, %v1283
        %v1300 = vadd.f32 %v1078, %v1199
        %v1301 = vadd.f32 %v1079, %v1228
        %v1302 = vadd.f32 %v1080, %v1257
        %v1303 = vadd.f32 %v1081, %v1286
        %s1304 = scalar_lea.vmem %s2, 128
        %v1305 = vld [vmem:[%s1304] sm:$0xff]
        %v1306 = vld [vmem:[%s1304 + $0x8] sm:$0xff]
        %v1307 = vld [vmem:[%s1304 + $0x10] sm:$0xff]
        %v1308 = vld [vmem:[%s1304 + $0x18] sm:$0xff]
        %1309 = vrot.lane.b32.xlu0 %v481, 107
        %v1310 = vpop.permute.xlu0 %1309
        %1311 = vrot.lane.b32.xlu0 %v482, 107
        %v1312 = vpop.permute.xlu0 %1311
        %1313 = vrot.lane.b32.xlu0 %v483, 107
        %v1314 = vpop.permute.xlu0 %1313
        %1315 = vrot.lane.b32.xlu0 %v484, 107
        %v1316 = vpop.permute.xlu0 %1315
        %1317 = vrot.lane.b32.xlu0 %v501, 107
        %v1318 = vpop.permute.xlu0 %1317
        %1319 = vrot.lane.b32.xlu0 %v485, 107
        %v1320 = vpop.permute.xlu0 %1319
        %1321 = vrot.lane.b32.xlu0 %v486, 107
        %v1322 = vpop.permute.xlu0 %1321
        %1323 = vrot.lane.b32.xlu0 %v487, 107
        %v1324 = vpop.permute.xlu0 %1323
        %1325 = vrot.lane.b32.xlu0 %v488, 107
        %v1326 = vpop.permute.xlu0 %1325
        %1327 = vrot.lane.b32.xlu0 %v502, 107
        %v1328 = vpop.permute.xlu0 %1327
        %1329 = vrot.lane.b32.xlu0 %v489, 107
        %v1330 = vpop.permute.xlu0 %1329
        %1331 = vrot.lane.b32.xlu0 %v490, 107
        %v1332 = vpop.permute.xlu0 %1331
        %1333 = vrot.lane.b32.xlu0 %v491, 107
        %v1334 = vpop.permute.xlu0 %1333
        %1335 = vrot.lane.b32.xlu0 %v492, 107
        %v1336 = vpop.permute.xlu0 %1335
        %1337 = vrot.lane.b32.xlu0 %v503, 107
        %v1338 = vpop.permute.xlu0 %1337
        %1339 = vrot.lane.b32.xlu0 %v493, 107
        %v1340 = vpop.permute.xlu0 %1339
        %1341 = vrot.lane.b32.xlu0 %v494, 107
        %v1342 = vpop.permute.xlu0 %1341
        %1343 = vrot.lane.b32.xlu0 %v495, 107
        %v1344 = vpop.permute.xlu0 %1343
        %1345 = vrot.lane.b32.xlu0 %v496, 107
        %v1346 = vpop.permute.xlu0 %1345
        %1347 = vrot.lane.b32.xlu0 %v504, 107
        %v1348 = vpop.permute.xlu0 %1347
        %vm1349 = vcmask 875520
        %v1350 = vsel %vm1349, %v1310, %v1312
        %v1351 = vsel %vm1349, %v1312, %v1314
        %v1352 = vsel %vm1349, %v1314, %v1316
        %v1353 = vsel %vm1349, %v1316, %v1318
        %v1354 = vsel %vm1349, %v1320, %v1322
        %v1355 = vsel %vm1349, %v1322, %v1324
        %v1356 = vsel %vm1349, %v1324, %v1326
        %v1357 = vsel %vm1349, %v1326, %v1328
        %v1358 = vsel %vm1349, %v1330, %v1332
        %v1359 = vsel %vm1349, %v1332, %v1334
        %v1360 = vsel %vm1349, %v1334, %v1336
        %v1361 = vsel %vm1349, %v1336, %v1338
        %v1362 = vsel %vm1349, %v1340, %v1342
        %v1363 = vsel %vm1349, %v1342, %v1344
        %v1364 = vsel %vm1349, %v1344, %v1346
        %v1365 = vsel %vm1349, %v1346, %v1348
        %v1383 = vsel %vm603, %v1305, 0
        %v1386 = vsel %vm603, %v1306, 0
        %v1389 = vsel %vm603, %v1307, 0
        %v1392 = vsel %vm603, %v1308, 0
        %1394 = vmatpush.msra.mxu0 0.0
        %1395 = vmatpush.msra.mxu0 0.0
        %1396 = vmatpush.msra.mxu0 0.0
        %1397 = vmatpush.msra.mxu0 0.0
        %1398 = vmatpush.msra.mxu0 0.0
        %1399 = vmatpush.msra.mxu0 0.0
        %1400 = vmatpush.msra.mxu0 0.0
        %1401 = vmatpush.msra.mxu0 0.0
        %1402 = vmatpush.msra.mxu0 0.0
        %1403 = vmatpush.msra.mxu0 0.0
        %1404 = vmatpush.msra.mxu0 0.0
        %1405 = vmatpush.msra.mxu0 0.0
        %1406 = vmatpush.msra.mxu0 %v1362
        %1407 = vmatpush.msra.mxu0 %v1358
        %1408 = vmatpush.msra.mxu0 %v1354
        %1409 = vmatpush.msra.mxu0 %v1350
        %1410 = vmatmul.f32.gmra.mxu0 %v1383
        %v1411 = vpop.f32.mrf.mxu0
        %v1412 = vadd.f32 0.0, %v1411
        %1413 = vmatmul.f32.gmra.mxu0 %v1386
        %v1414 = vpop.f32.mrf.mxu0
        %v1415 = vadd.f32 0.0, %v1414
        %1416 = vmatmul.f32.gmra.mxu0 %v1389
        %v1417 = vpop.f32.mrf.mxu0
        %v1418 = vadd.f32 0.0, %v1417
        %1419 = vmatmul.f32.gmra.mxu0 %v1392
        %v1420 = vpop.f32.mrf.mxu0
        %v1421 = vadd.f32 0.0, %v1420
        %1422 = vdwg.mxu0
        %1423 = vmatpush.msra.mxu0 0.0
        %1424 = vmatpush.msra.mxu0 0.0
        %1425 = vmatpush.msra.mxu0 0.0
        %1426 = vmatpush.msra.mxu0 0.0
        %1427 = vmatpush.msra.mxu0 0.0
        %1428 = vmatpush.msra.mxu0 0.0
        %1429 = vmatpush.msra.mxu0 0.0
        %1430 = vmatpush.msra.mxu0 0.0
        %1431 = vmatpush.msra.mxu0 0.0
        %1432 = vmatpush.msra.mxu0 0.0
        %1433 = vmatpush.msra.mxu0 0.0
        %1434 = vmatpush.msra.mxu0 0.0
        %1435 = vmatpush.msra.mxu0 %v1363
        %1436 = vmatpush.msra.mxu0 %v1359
        %1437 = vmatpush.msra.mxu0 %v1355
        %1438 = vmatpush.msra.mxu0 %v1351
        %1439 = vmatmul.f32.gmra.mxu0 %v1383
        %v1440 = vpop.f32.mrf.mxu0
        %v1441 = vadd.f32 0.0, %v1440
        %1442 = vmatmul.f32.gmra.mxu0 %v1386
        %v1443 = vpop.f32.mrf.mxu0
        %v1444 = vadd.f32 0.0, %v1443
        %1445 = vmatmul.f32.gmra.mxu0 %v1389
        %v1446 = vpop.f32.mrf.mxu0
        %v1447 = vadd.f32 0.0, %v1446
        %1448 = vmatmul.f32.gmra.mxu0 %v1392
        %v1449 = vpop.f32.mrf.mxu0
        %v1450 = vadd.f32 0.0, %v1449
        %1451 = vdwg.mxu0
        %1452 = vmatpush.msra.mxu0 0.0
        %1453 = vmatpush.msra.mxu0 0.0
        %1454 = vmatpush.msra.mxu0 0.0
        %1455 = vmatpush.msra.mxu0 0.0
        %1456 = vmatpush.msra.mxu0 0.0
        %1457 = vmatpush.msra.mxu0 0.0
        %1458 = vmatpush.msra.mxu0 0.0
        %1459 = vmatpush.msra.mxu0 0.0
        %1460 = vmatpush.msra.mxu0 0.0
        %1461 = vmatpush.msra.mxu0 0.0
        %1462 = vmatpush.msra.mxu0 0.0
        %1463 = vmatpush.msra.mxu0 0.0
        %1464 = vmatpush.msra.mxu0 %v1364
        %1465 = vmatpush.msra.mxu0 %v1360
        %1466 = vmatpush.msra.mxu0 %v1356
        %1467 = vmatpush.msra.mxu0 %v1352
        %1468 = vmatmul.f32.gmra.mxu0 %v1383
        %v1469 = vpop.f32.mrf.mxu0
        %v1470 = vadd.f32 0.0, %v1469
        %1471 = vmatmul.f32.gmra.mxu0 %v1386
        %v1472 = vpop.f32.mrf.mxu0
        %v1473 = vadd.f32 0.0, %v1472
        %1474 = vmatmul.f32.gmra.mxu0 %v1389
        %v1475 = vpop.f32.mrf.mxu0
        %v1476 = vadd.f32 0.0, %v1475
        %1477 = vmatmul.f32.gmra.mxu0 %v1392
        %v1478 = vpop.f32.mrf.mxu0
        %v1479 = vadd.f32 0.0, %v1478
        %1480 = vdwg.mxu0
        %1481 = vmatpush.msra.mxu0 0.0
        %1482 = vmatpush.msra.mxu0 0.0
        %1483 = vmatpush.msra.mxu0 0.0
        %1484 = vmatpush.msra.mxu0 0.0
        %1485 = vmatpush.msra.mxu0 0.0
        %1486 = vmatpush.msra.mxu0 0.0
        %1487 = vmatpush.msra.mxu0 0.0
        %1488 = vmatpush.msra.mxu0 0.0
        %1489 = vmatpush.msra.mxu0 0.0
        %1490 = vmatpush.msra.mxu0 0.0
        %1491 = vmatpush.msra.mxu0 0.0
        %1492 = vmatpush.msra.mxu0 0.0
        %1493 = vmatpush.msra.mxu0 %v1365
        %1494 = vmatpush.msra.mxu0 %v1361
        %1495 = vmatpush.msra.mxu0 %v1357
        %1496 = vmatpush.msra.mxu0 %v1353
        %1497 = vmatmul.f32.gmra.mxu0 %v1383
        %v1498 = vpop.f32.mrf.mxu0
        %v1499 = vadd.f32 0.0, %v1498
        %1500 = vmatmul.f32.gmra.mxu0 %v1386
        %v1501 = vpop.f32.mrf.mxu0
        %v1502 = vadd.f32 0.0, %v1501
        %1503 = vmatmul.f32.gmra.mxu0 %v1389
        %v1504 = vpop.f32.mrf.mxu0
        %v1505 = vadd.f32 0.0, %v1504
        %1506 = vmatmul.f32.gmra.mxu0 %v1392
        %v1507 = vpop.f32.mrf.mxu0
        %v1508 = vadd.f32 0.0, %v1507
        %1509 = vdwg.mxu0
        %v1510 = vadd.f32 %v1288, %v1412
        %v1511 = vadd.f32 %v1289, %v1441
        %v1512 = vadd.f32 %v1290, %v1470
        %v1513 = vadd.f32 %v1291, %v1499
        %v1514 = vadd.f32 %v1292, %v1415
        %v1515 = vadd.f32 %v1293, %v1444
        %v1516 = vadd.f32 %v1294, %v1473
        %v1517 = vadd.f32 %v1295, %v1502
        %v1518 = vadd.f32 %v1296, %v1418
        %v1519 = vadd.f32 %v1297, %v1447
        %v1520 = vadd.f32 %v1298, %v1476
        %v1521 = vadd.f32 %v1299, %v1505
        %v1522 = vadd.f32 %v1300, %v1421
        %v1523 = vadd.f32 %v1301, %v1450
        %v1524 = vadd.f32 %v1302, %v1479
        %v1525 = vadd.f32 %v1303, %v1508
        %s1526 = scalar_lea.vmem %s2, 160
        %v1527 = vld [vmem:[%s1526] sm:$0xff]
        %v1528 = vld [vmem:[%s1526 + $0x8] sm:$0xff]
        %v1529 = vld [vmem:[%s1526 + $0x10] sm:$0xff]
        %v1530 = vld [vmem:[%s1526 + $0x18] sm:$0xff]
        %1531 = vrot.lane.b32.xlu0 %v481, 106
        %v1532 = vpop.permute.xlu0 %1531
        %1533 = vrot.lane.b32.xlu0 %v482, 106
        %v1534 = vpop.permute.xlu0 %1533
        %1535 = vrot.lane.b32.xlu0 %v483, 106
        %v1536 = vpop.permute.xlu0 %1535
        %1537 = vrot.lane.b32.xlu0 %v484, 106
        %v1538 = vpop.permute.xlu0 %1537
        %1539 = vrot.lane.b32.xlu0 %v501, 106
        %v1540 = vpop.permute.xlu0 %1539
        %1541 = vrot.lane.b32.xlu0 %v485, 106
        %v1542 = vpop.permute.xlu0 %1541
        %1543 = vrot.lane.b32.xlu0 %v486, 106
        %v1544 = vpop.permute.xlu0 %1543
        %1545 = vrot.lane.b32.xlu0 %v487, 106
        %v1546 = vpop.permute.xlu0 %1545
        %1547 = vrot.lane.b32.xlu0 %v488, 106
        %v1548 = vpop.permute.xlu0 %1547
        %1549 = vrot.lane.b32.xlu0 %v502, 106
        %v1550 = vpop.permute.xlu0 %1549
        %1551 = vrot.lane.b32.xlu0 %v489, 106
        %v1552 = vpop.permute.xlu0 %1551
        %1553 = vrot.lane.b32.xlu0 %v490, 106
        %v1554 = vpop.permute.xlu0 %1553
        %1555 = vrot.lane.b32.xlu0 %v491, 106
        %v1556 = vpop.permute.xlu0 %1555
        %1557 = vrot.lane.b32.xlu0 %v492, 106
        %v1558 = vpop.permute.xlu0 %1557
        %1559 = vrot.lane.b32.xlu0 %v503, 106
        %v1560 = vpop.permute.xlu0 %1559
        %1561 = vrot.lane.b32.xlu0 %v493, 106
        %v1562 = vpop.permute.xlu0 %1561
        %1563 = vrot.lane.b32.xlu0 %v494, 106
        %v1564 = vpop.permute.xlu0 %1563
        %1565 = vrot.lane.b32.xlu0 %v495, 106
        %v1566 = vpop.permute.xlu0 %1565
        %1567 = vrot.lane.b32.xlu0 %v496, 106
        %v1568 = vpop.permute.xlu0 %1567
        %1569 = vrot.lane.b32.xlu0 %v504, 106
        %v1570 = vpop.permute.xlu0 %1569
        %vm1571 = vcmask 867328
        %v1572 = vsel %vm1571, %v1532, %v1534
        %v1573 = vsel %vm1571, %v1534, %v1536
        %v1574 = vsel %vm1571, %v1536, %v1538
        %v1575 = vsel %vm1571, %v1538, %v1540
        %v1576 = vsel %vm1571, %v1542, %v1544
        %v1577 = vsel %vm1571, %v1544, %v1546
        %v1578 = vsel %vm1571, %v1546, %v1548
        %v1579 = vsel %vm1571, %v1548, %v1550
        %v1580 = vsel %vm1571, %v1552, %v1554
        %v1581 = vsel %vm1571, %v1554, %v1556
        %v1582 = vsel %vm1571, %v1556, %v1558
        %v1583 = vsel %vm1571, %v1558, %v1560
        %v1584 = vsel %vm1571, %v1562, %v1564
        %v1585 = vsel %vm1571, %v1564, %v1566
        %v1586 = vsel %vm1571, %v1566, %v1568
        %v1587 = vsel %vm1571, %v1568, %v1570
        %v1605 = vsel %vm603, %v1527, 0
        %v1608 = vsel %vm603, %v1528, 0
        %v1611 = vsel %vm603, %v1529, 0
        %v1614 = vsel %vm603, %v1530, 0
        %1616 = vmatpush.msra.mxu0 0.0
        %1617 = vmatpush.msra.mxu0 0.0
        %1618 = vmatpush.msra.mxu0 0.0
        %1619 = vmatpush.msra.mxu0 0.0
        %1620 = vmatpush.msra.mxu0 0.0
        %1621 = vmatpush.msra.mxu0 0.0
        %1622 = vmatpush.msra.mxu0 0.0
        %1623 = vmatpush.msra.mxu0 0.0
        %1624 = vmatpush.msra.mxu0 0.0
        %1625 = vmatpush.msra.mxu0 0.0
        %1626 = vmatpush.msra.mxu0 0.0
        %1627 = vmatpush.msra.mxu0 0.0
        %1628 = vmatpush.msra.mxu0 %v1584
        %1629 = vmatpush.msra.mxu0 %v1580
        %1630 = vmatpush.msra.mxu0 %v1576
        %1631 = vmatpush.msra.mxu0 %v1572
        %1632 = vmatmul.f32.gmra.mxu0 %v1605
        %v1633 = vpop.f32.mrf.mxu0
        %v1634 = vadd.f32 0.0, %v1633
        %1635 = vmatmul.f32.gmra.mxu0 %v1608
        %v1636 = vpop.f32.mrf.mxu0
        %v1637 = vadd.f32 0.0, %v1636
        %1638 = vmatmul.f32.gmra.mxu0 %v1611
        %v1639 = vpop.f32.mrf.mxu0
        %v1640 = vadd.f32 0.0, %v1639
        %1641 = vmatmul.f32.gmra.mxu0 %v1614
        %v1642 = vpop.f32.mrf.mxu0
        %v1643 = vadd.f32 0.0, %v1642
        %1644 = vdwg.mxu0
        %1645 = vmatpush.msra.mxu0 0.0
        %1646 = vmatpush.msra.mxu0 0.0
        %1647 = vmatpush.msra.mxu0 0.0
        %1648 = vmatpush.msra.mxu0 0.0
        %1649 = vmatpush.msra.mxu0 0.0
        %1650 = vmatpush.msra.mxu0 0.0
        %1651 = vmatpush.msra.mxu0 0.0
        %1652 = vmatpush.msra.mxu0 0.0
        %1653 = vmatpush.msra.mxu0 0.0
        %1654 = vmatpush.msra.mxu0 0.0
        %1655 = vmatpush.msra.mxu0 0.0
        %1656 = vmatpush.msra.mxu0 0.0
        %1657 = vmatpush.msra.mxu0 %v1585
        %1658 = vmatpush.msra.mxu0 %v1581
        %1659 = vmatpush.msra.mxu0 %v1577
        %1660 = vmatpush.msra.mxu0 %v1573
        %1661 = vmatmul.f32.gmra.mxu0 %v1605
        %v1662 = vpop.f32.mrf.mxu0
        %v1663 = vadd.f32 0.0, %v1662
        %1664 = vmatmul.f32.gmra.mxu0 %v1608
        %v1665 = vpop.f32.mrf.mxu0
        %v1666 = vadd.f32 0.0, %v1665
        %1667 = vmatmul.f32.gmra.mxu0 %v1611
        %v1668 = vpop.f32.mrf.mxu0
        %v1669 = vadd.f32 0.0, %v1668
        %1670 = vmatmul.f32.gmra.mxu0 %v1614
        %v1671 = vpop.f32.mrf.mxu0
        %v1672 = vadd.f32 0.0, %v1671
        %1673 = vdwg.mxu0
        %1674 = vmatpush.msra.mxu0 0.0
        %1675 = vmatpush.msra.mxu0 0.0
        %1676 = vmatpush.msra.mxu0 0.0
        %1677 = vmatpush.msra.mxu0 0.0
        %1678 = vmatpush.msra.mxu0 0.0
        %1679 = vmatpush.msra.mxu0 0.0
        %1680 = vmatpush.msra.mxu0 0.0
        %1681 = vmatpush.msra.mxu0 0.0
        %1682 = vmatpush.msra.mxu0 0.0
        %1683 = vmatpush.msra.mxu0 0.0
        %1684 = vmatpush.msra.mxu0 0.0
        %1685 = vmatpush.msra.mxu0 0.0
        %1686 = vmatpush.msra.mxu0 %v1586
        %1687 = vmatpush.msra.mxu0 %v1582
        %1688 = vmatpush.msra.mxu0 %v1578
        %1689 = vmatpush.msra.mxu0 %v1574
        %1690 = vmatmul.f32.gmra.mxu0 %v1605
        %v1691 = vpop.f32.mrf.mxu0
        %v1692 = vadd.f32 0.0, %v1691
        %1693 = vmatmul.f32.gmra.mxu0 %v1608
        %v1694 = vpop.f32.mrf.mxu0
        %v1695 = vadd.f32 0.0, %v1694
        %1696 = vmatmul.f32.gmra.mxu0 %v1611
        %v1697 = vpop.f32.mrf.mxu0
        %v1698 = vadd.f32 0.0, %v1697
        %1699 = vmatmul.f32.gmra.mxu0 %v1614
        %v1700 = vpop.f32.mrf.mxu0
        %v1701 = vadd.f32 0.0, %v1700
        %1702 = vdwg.mxu0
        %1703 = vmatpush.msra.mxu0 0.0
        %1704 = vmatpush.msra.mxu0 0.0
        %1705 = vmatpush.msra.mxu0 0.0
        %1706 = vmatpush.msra.mxu0 0.0
        %1707 = vmatpush.msra.mxu0 0.0
        %1708 = vmatpush.msra.mxu0 0.0
        %1709 = vmatpush.msra.mxu0 0.0
        %1710 = vmatpush.msra.mxu0 0.0
        %1711 = vmatpush.msra.mxu0 0.0
        %1712 = vmatpush.msra.mxu0 0.0
        %1713 = vmatpush.msra.mxu0 0.0
        %1714 = vmatpush.msra.mxu0 0.0
        %1715 = vmatpush.msra.mxu0 %v1587
        %1716 = vmatpush.msra.mxu0 %v1583
        %1717 = vmatpush.msra.mxu0 %v1579
        %1718 = vmatpush.msra.mxu0 %v1575
        %1719 = vmatmul.f32.gmra.mxu0 %v1605
        %v1720 = vpop.f32.mrf.mxu0
        %v1721 = vadd.f32 0.0, %v1720
        %1722 = vmatmul.f32.gmra.mxu0 %v1608
        %v1723 = vpop.f32.mrf.mxu0
        %v1724 = vadd.f32 0.0, %v1723
        %1725 = vmatmul.f32.gmra.mxu0 %v1611
        %v1726 = vpop.f32.mrf.mxu0
        %v1727 = vadd.f32 0.0, %v1726
        %1728 = vmatmul.f32.gmra.mxu0 %v1614
        %v1729 = vpop.f32.mrf.mxu0
        %v1730 = vadd.f32 0.0, %v1729
        %1731 = vdwg.mxu0
        %v1732 = vadd.f32 %v1510, %v1634
        %v1733 = vadd.f32 %v1511, %v1663
        %v1734 = vadd.f32 %v1512, %v1692
        %v1735 = vadd.f32 %v1513, %v1721
        %v1736 = vadd.f32 %v1514, %v1637
        %v1737 = vadd.f32 %v1515, %v1666
        %v1738 = vadd.f32 %v1516, %v1695
        %v1739 = vadd.f32 %v1517, %v1724
        %v1740 = vadd.f32 %v1518, %v1640
        %v1741 = vadd.f32 %v1519, %v1669
        %v1742 = vadd.f32 %v1520, %v1698
        %v1743 = vadd.f32 %v1521, %v1727
        %v1744 = vadd.f32 %v1522, %v1643
        %v1745 = vadd.f32 %v1523, %v1672
        %v1746 = vadd.f32 %v1524, %v1701
        %v1747 = vadd.f32 %v1525, %v1730
        %s1748 = scalar_lea.vmem %s2, 192
        %v1749 = vld [vmem:[%s1748] sm:$0xff]
        %v1750 = vld [vmem:[%s1748 + $0x8] sm:$0xff]
        %v1751 = vld [vmem:[%s1748 + $0x10] sm:$0xff]
        %v1752 = vld [vmem:[%s1748 + $0x18] sm:$0xff]
        %1753 = vrot.lane.b32.xlu0 %v481, 88
        %v1754 = vpop.permute.xlu0 %1753
        %1755 = vrot.lane.b32.xlu0 %v482, 88
        %v1756 = vpop.permute.xlu0 %1755
        %1757 = vrot.lane.b32.xlu0 %v483, 88
        %v1758 = vpop.permute.xlu0 %1757
        %1759 = vrot.lane.b32.xlu0 %v484, 88
        %v1760 = vpop.permute.xlu0 %1759
        %1761 = vrot.lane.b32.xlu0 %v501, 88
        %v1762 = vpop.permute.xlu0 %1761
        %1763 = vrot.lane.b32.xlu0 %v485, 88
        %v1764 = vpop.permute.xlu0 %1763
        %1765 = vrot.lane.b32.xlu0 %v486, 88
        %v1766 = vpop.permute.xlu0 %1765
        %1767 = vrot.lane.b32.xlu0 %v487, 88
        %v1768 = vpop.permute.xlu0 %1767
        %1769 = vrot.lane.b32.xlu0 %v488, 88
        %v1770 = vpop.permute.xlu0 %1769
        %1771 = vrot.lane.b32.xlu0 %v502, 88
        %v1772 = vpop.permute.xlu0 %1771
        %1773 = vrot.lane.b32.xlu0 %v489, 88
        %v1774 = vpop.permute.xlu0 %1773
        %1775 = vrot.lane.b32.xlu0 %v490, 88
        %v1776 = vpop.permute.xlu0 %1775
        %1777 = vrot.lane.b32.xlu0 %v491, 88
        %v1778 = vpop.permute.xlu0 %1777
        %1779 = vrot.lane.b32.xlu0 %v492, 88
        %v1780 = vpop.permute.xlu0 %1779
        %1781 = vrot.lane.b32.xlu0 %v503, 88
        %v1782 = vpop.permute.xlu0 %1781
        %1783 = vrot.lane.b32.xlu0 %v493, 88
        %v1784 = vpop.permute.xlu0 %1783
        %1785 = vrot.lane.b32.xlu0 %v494, 88
        %v1786 = vpop.permute.xlu0 %1785
        %1787 = vrot.lane.b32.xlu0 %v495, 88
        %v1788 = vpop.permute.xlu0 %1787
        %1789 = vrot.lane.b32.xlu0 %v496, 88
        %v1790 = vpop.permute.xlu0 %1789
        %1791 = vrot.lane.b32.xlu0 %v504, 88
        %v1792 = vpop.permute.xlu0 %1791
        %vm1793 = vcmask 719872
        %v1794 = vsel %vm1793, %v1754, %v1756
        %v1795 = vsel %vm1793, %v1756, %v1758
        %v1796 = vsel %vm1793, %v1758, %v1760
        %v1797 = vsel %vm1793, %v1760, %v1762
        %v1798 = vsel %vm1793, %v1764, %v1766
        %v1799 = vsel %vm1793, %v1766, %v1768
        %v1800 = vsel %vm1793, %v1768, %v1770
        %v1801 = vsel %vm1793, %v1770, %v1772
        %v1802 = vsel %vm1793, %v1774, %v1776
        %v1803 = vsel %vm1793, %v1776, %v1778
        %v1804 = vsel %vm1793, %v1778, %v1780
        %v1805 = vsel %vm1793, %v1780, %v1782
        %v1806 = vsel %vm1793, %v1784, %v1786
        %v1807 = vsel %vm1793, %v1786, %v1788
        %v1808 = vsel %vm1793, %v1788, %v1790
        %v1809 = vsel %vm1793, %v1790, %v1792
        %v1827 = vsel %vm603, %v1749, 0
        %v1830 = vsel %vm603, %v1750, 0
        %v1833 = vsel %vm603, %v1751, 0
        %v1836 = vsel %vm603, %v1752, 0
        %1838 = vmatpush.msra.mxu0 0.0
        %1839 = vmatpush.msra.mxu0 0.0
        %1840 = vmatpush.msra.mxu0 0.0
        %1841 = vmatpush.msra.mxu0 0.0
        %1842 = vmatpush.msra.mxu0 0.0
        %1843 = vmatpush.msra.mxu0 0.0
        %1844 = vmatpush.msra.mxu0 0.0
        %1845 = vmatpush.msra.mxu0 0.0
        %1846 = vmatpush.msra.mxu0 0.0
        %1847 = vmatpush.msra.mxu0 0.0
        %1848 = vmatpush.msra.mxu0 0.0
        %1849 = vmatpush.msra.mxu0 0.0
        %1850 = vmatpush.msra.mxu0 %v1806
        %1851 = vmatpush.msra.mxu0 %v1802
        %1852 = vmatpush.msra.mxu0 %v1798
        %1853 = vmatpush.msra.mxu0 %v1794
        %1854 = vmatmul.f32.gmra.mxu0 %v1827
        %v1855 = vpop.f32.mrf.mxu0
        %v1856 = vadd.f32 0.0, %v1855
        %1857 = vmatmul.f32.gmra.mxu0 %v1830
        %v1858 = vpop.f32.mrf.mxu0
        %v1859 = vadd.f32 0.0, %v1858
        %1860 = vmatmul.f32.gmra.mxu0 %v1833
        %v1861 = vpop.f32.mrf.mxu0
        %v1862 = vadd.f32 0.0, %v1861
        %1863 = vmatmul.f32.gmra.mxu0 %v1836
        %v1864 = vpop.f32.mrf.mxu0
        %v1865 = vadd.f32 0.0, %v1864
        %1866 = vdwg.mxu0
        %1867 = vmatpush.msra.mxu0 0.0
        %1868 = vmatpush.msra.mxu0 0.0
        %1869 = vmatpush.msra.mxu0 0.0
        %1870 = vmatpush.msra.mxu0 0.0
        %1871 = vmatpush.msra.mxu0 0.0
        %1872 = vmatpush.msra.mxu0 0.0
        %1873 = vmatpush.msra.mxu0 0.0
        %1874 = vmatpush.msra.mxu0 0.0
        %1875 = vmatpush.msra.mxu0 0.0
        %1876 = vmatpush.msra.mxu0 0.0
        %1877 = vmatpush.msra.mxu0 0.0
        %1878 = vmatpush.msra.mxu0 0.0
        %1879 = vmatpush.msra.mxu0 %v1807
        %1880 = vmatpush.msra.mxu0 %v1803
        %1881 = vmatpush.msra.mxu0 %v1799
        %1882 = vmatpush.msra.mxu0 %v1795
        %1883 = vmatmul.f32.gmra.mxu0 %v1827
        %v1884 = vpop.f32.mrf.mxu0
        %v1885 = vadd.f32 0.0, %v1884
        %1886 = vmatmul.f32.gmra.mxu0 %v1830
        %v1887 = vpop.f32.mrf.mxu0
        %v1888 = vadd.f32 0.0, %v1887
        %1889 = vmatmul.f32.gmra.mxu0 %v1833
        %v1890 = vpop.f32.mrf.mxu0
        %v1891 = vadd.f32 0.0, %v1890
        %1892 = vmatmul.f32.gmra.mxu0 %v1836
        %v1893 = vpop.f32.mrf.mxu0
        %v1894 = vadd.f32 0.0, %v1893
        %1895 = vdwg.mxu0
        %1896 = vmatpush.msra.mxu0 0.0
        %1897 = vmatpush.msra.mxu0 0.0
        %1898 = vmatpush.msra.mxu0 0.0
        %1899 = vmatpush.msra.mxu0 0.0
        %1900 = vmatpush.msra.mxu0 0.0
        %1901 = vmatpush.msra.mxu0 0.0
        %1902 = vmatpush.msra.mxu0 0.0
        %1903 = vmatpush.msra.mxu0 0.0
        %1904 = vmatpush.msra.mxu0 0.0
        %1905 = vmatpush.msra.mxu0 0.0
        %1906 = vmatpush.msra.mxu0 0.0
        %1907 = vmatpush.msra.mxu0 0.0
        %1908 = vmatpush.msra.mxu0 %v1808
        %1909 = vmatpush.msra.mxu0 %v1804
        %1910 = vmatpush.msra.mxu0 %v1800
        %1911 = vmatpush.msra.mxu0 %v1796
        %1912 = vmatmul.f32.gmra.mxu0 %v1827
        %v1913 = vpop.f32.mrf.mxu0
        %v1914 = vadd.f32 0.0, %v1913
        %1915 = vmatmul.f32.gmra.mxu0 %v1830
        %v1916 = vpop.f32.mrf.mxu0
        %v1917 = vadd.f32 0.0, %v1916
        %1918 = vmatmul.f32.gmra.mxu0 %v1833
        %v1919 = vpop.f32.mrf.mxu0
        %v1920 = vadd.f32 0.0, %v1919
        %1921 = vmatmul.f32.gmra.mxu0 %v1836
        %v1922 = vpop.f32.mrf.mxu0
        %v1923 = vadd.f32 0.0, %v1922
        %1924 = vdwg.mxu0
        %1925 = vmatpush.msra.mxu0 0.0
        %1926 = vmatpush.msra.mxu0 0.0
        %1927 = vmatpush.msra.mxu0 0.0
        %1928 = vmatpush.msra.mxu0 0.0
        %1929 = vmatpush.msra.mxu0 0.0
        %1930 = vmatpush.msra.mxu0 0.0
        %1931 = vmatpush.msra.mxu0 0.0
        %1932 = vmatpush.msra.mxu0 0.0
        %1933 = vmatpush.msra.mxu0 0.0
        %1934 = vmatpush.msra.mxu0 0.0
        %1935 = vmatpush.msra.mxu0 0.0
        %1936 = vmatpush.msra.mxu0 0.0
        %1937 = vmatpush.msra.mxu0 %v1809
        %1938 = vmatpush.msra.mxu0 %v1805
        %1939 = vmatpush.msra.mxu0 %v1801
        %1940 = vmatpush.msra.mxu0 %v1797
        %1941 = vmatmul.f32.gmra.mxu0 %v1827
        %v1942 = vpop.f32.mrf.mxu0
        %v1943 = vadd.f32 0.0, %v1942
        %1944 = vmatmul.f32.gmra.mxu0 %v1830
        %v1945 = vpop.f32.mrf.mxu0
        %v1946 = vadd.f32 0.0, %v1945
        %1947 = vmatmul.f32.gmra.mxu0 %v1833
        %v1948 = vpop.f32.mrf.mxu0
        %v1949 = vadd.f32 0.0, %v1948
        %1950 = vmatmul.f32.gmra.mxu0 %v1836
        %v1951 = vpop.f32.mrf.mxu0
        %v1952 = vadd.f32 0.0, %v1951
        %1953 = vdwg.mxu0
        %v1954 = vadd.f32 %v1732, %v1856
        %v1955 = vadd.f32 %v1733, %v1885
        %v1956 = vadd.f32 %v1734, %v1914
        %v1957 = vadd.f32 %v1735, %v1943
        %v1958 = vadd.f32 %v1736, %v1859
        %v1959 = vadd.f32 %v1737, %v1888
        %v1960 = vadd.f32 %v1738, %v1917
        %v1961 = vadd.f32 %v1739, %v1946
        %v1962 = vadd.f32 %v1740, %v1862
        %v1963 = vadd.f32 %v1741, %v1891
        %v1964 = vadd.f32 %v1742, %v1920
        %v1965 = vadd.f32 %v1743, %v1949
        %v1966 = vadd.f32 %v1744, %v1865
        %v1967 = vadd.f32 %v1745, %v1894
        %v1968 = vadd.f32 %v1746, %v1923
        %v1969 = vadd.f32 %v1747, %v1952
        %s1970 = scalar_lea.vmem %s2, 224
        %v1971 = vld [vmem:[%s1970] sm:$0xff]
        %v1972 = vld [vmem:[%s1970 + $0x8] sm:$0xff]
        %v1973 = vld [vmem:[%s1970 + $0x10] sm:$0xff]
        %v1974 = vld [vmem:[%s1970 + $0x18] sm:$0xff]
        %1975 = vrot.lane.b32.xlu0 %v481, 87
        %v1976 = vpop.permute.xlu0 %1975
        %1977 = vrot.lane.b32.xlu0 %v482, 87
        %v1978 = vpop.permute.xlu0 %1977
        %1979 = vrot.lane.b32.xlu0 %v483, 87
        %v1980 = vpop.permute.xlu0 %1979
        %1981 = vrot.lane.b32.xlu0 %v484, 87
        %v1982 = vpop.permute.xlu0 %1981
        %1983 = vrot.lane.b32.xlu0 %v501, 87
        %v1984 = vpop.permute.xlu0 %1983
        %1985 = vrot.lane.b32.xlu0 %v485, 87
        %v1986 = vpop.permute.xlu0 %1985
        %1987 = vrot.lane.b32.xlu0 %v486, 87
        %v1988 = vpop.permute.xlu0 %1987
        %1989 = vrot.lane.b32.xlu0 %v487, 87
        %v1990 = vpop.permute.xlu0 %1989
        %1991 = vrot.lane.b32.xlu0 %v488, 87
        %v1992 = vpop.permute.xlu0 %1991
        %1993 = vrot.lane.b32.xlu0 %v502, 87
        %v1994 = vpop.permute.xlu0 %1993
        %1995 = vrot.lane.b32.xlu0 %v489, 87
        %v1996 = vpop.permute.xlu0 %1995
        %1997 = vrot.lane.b32.xlu0 %v490, 87
        %v1998 = vpop.permute.xlu0 %1997
        %1999 = vrot.lane.b32.xlu0 %v491, 87
        %v2000 = vpop.permute.xlu0 %1999
        %2001 = vrot.lane.b32.xlu0 %v492, 87
        %v2002 = vpop.permute.xlu0 %2001
        %2003 = vrot.lane.b32.xlu0 %v503, 87
        %v2004 = vpop.permute.xlu0 %2003
        %2005 = vrot.lane.b32.xlu0 %v493, 87
        %v2006 = vpop.permute.xlu0 %2005
        %2007 = vrot.lane.b32.xlu0 %v494, 87
        %v2008 = vpop.permute.xlu0 %2007
        %2009 = vrot.lane.b32.xlu0 %v495, 87
        %v2010 = vpop.permute.xlu0 %2009
        %2011 = vrot.lane.b32.xlu0 %v496, 87
        %v2012 = vpop.permute.xlu0 %2011
        %2013 = vrot.lane.b32.xlu0 %v504, 87
        %v2014 = vpop.permute.xlu0 %2013
        %vm2015 = vcmask 711680
        %v2016 = vsel %vm2015, %v1976, %v1978
        %v2017 = vsel %vm2015, %v1978, %v1980
        %v2018 = vsel %vm2015, %v1980, %v1982
        %v2019 = vsel %vm2015, %v1982, %v1984
        %v2020 = vsel %vm2015, %v1986, %v1988
        %v2021 = vsel %vm2015, %v1988, %v1990
        %v2022 = vsel %vm2015, %v1990, %v1992
        %v2023 = vsel %vm2015, %v1992, %v1994
        %v2024 = vsel %vm2015, %v1996, %v1998
        %v2025 = vsel %vm2015, %v1998, %v2000
        %v2026 = vsel %vm2015, %v2000, %v2002
        %v2027 = vsel %vm2015, %v2002, %v2004
        %v2028 = vsel %vm2015, %v2006, %v2008
        %v2029 = vsel %vm2015, %v2008, %v2010
        %v2030 = vsel %vm2015, %v2010, %v2012
        %v2031 = vsel %vm2015, %v2012, %v2014
        %v2049 = vsel %vm603, %v1971, 0
        %v2052 = vsel %vm603, %v1972, 0
        %v2055 = vsel %vm603, %v1973, 0
        %v2058 = vsel %vm603, %v1974, 0
        %2060 = vmatpush.msra.mxu0 0.0
        %2061 = vmatpush.msra.mxu0 0.0
        %2062 = vmatpush.msra.mxu0 0.0
        %2063 = vmatpush.msra.mxu0 0.0
        %2064 = vmatpush.msra.mxu0 0.0
        %2065 = vmatpush.msra.mxu0 0.0
        %2066 = vmatpush.msra.mxu0 0.0
        %2067 = vmatpush.msra.mxu0 0.0
        %2068 = vmatpush.msra.mxu0 0.0
        %2069 = vmatpush.msra.mxu0 0.0
        %2070 = vmatpush.msra.mxu0 0.0
        %2071 = vmatpush.msra.mxu0 0.0
        %2072 = vmatpush.msra.mxu0 %v2028
        %2073 = vmatpush.msra.mxu0 %v2024
        %2074 = vmatpush.msra.mxu0 %v2020
        %2075 = vmatpush.msra.mxu0 %v2016
        %2076 = vmatmul.f32.gmra.mxu0 %v2049
        %v2077 = vpop.f32.mrf.mxu0
        %v2078 = vadd.f32 0.0, %v2077
        %2079 = vmatmul.f32.gmra.mxu0 %v2052
        %v2080 = vpop.f32.mrf.mxu0
        %v2081 = vadd.f32 0.0, %v2080
        %2082 = vmatmul.f32.gmra.mxu0 %v2055
        %v2083 = vpop.f32.mrf.mxu0
        %v2084 = vadd.f32 0.0, %v2083
        %2085 = vmatmul.f32.gmra.mxu0 %v2058
        %v2086 = vpop.f32.mrf.mxu0
        %v2087 = vadd.f32 0.0, %v2086
        %2088 = vdwg.mxu0
        %2089 = vmatpush.msra.mxu0 0.0
        %2090 = vmatpush.msra.mxu0 0.0
        %2091 = vmatpush.msra.mxu0 0.0
        %2092 = vmatpush.msra.mxu0 0.0
        %2093 = vmatpush.msra.mxu0 0.0
        %2094 = vmatpush.msra.mxu0 0.0
        %2095 = vmatpush.msra.mxu0 0.0
        %2096 = vmatpush.msra.mxu0 0.0
        %2097 = vmatpush.msra.mxu0 0.0
        %2098 = vmatpush.msra.mxu0 0.0
        %2099 = vmatpush.msra.mxu0 0.0
        %2100 = vmatpush.msra.mxu0 0.0
        %2101 = vmatpush.msra.mxu0 %v2029
        %2102 = vmatpush.msra.mxu0 %v2025
        %2103 = vmatpush.msra.mxu0 %v2021
        %2104 = vmatpush.msra.mxu0 %v2017
        %2105 = vmatmul.f32.gmra.mxu0 %v2049
        %v2106 = vpop.f32.mrf.mxu0
        %v2107 = vadd.f32 0.0, %v2106
        %2108 = vmatmul.f32.gmra.mxu0 %v2052
        %v2109 = vpop.f32.mrf.mxu0
        %v2110 = vadd.f32 0.0, %v2109
        %2111 = vmatmul.f32.gmra.mxu0 %v2055
        %v2112 = vpop.f32.mrf.mxu0
        %v2113 = vadd.f32 0.0, %v2112
        %2114 = vmatmul.f32.gmra.mxu0 %v2058
        %v2115 = vpop.f32.mrf.mxu0
        %v2116 = vadd.f32 0.0, %v2115
        %2117 = vdwg.mxu0
        %2118 = vmatpush.msra.mxu0 0.0
        %2119 = vmatpush.msra.mxu0 0.0
        %2120 = vmatpush.msra.mxu0 0.0
        %2121 = vmatpush.msra.mxu0 0.0
        %2122 = vmatpush.msra.mxu0 0.0
        %2123 = vmatpush.msra.mxu0 0.0
        %2124 = vmatpush.msra.mxu0 0.0
        %2125 = vmatpush.msra.mxu0 0.0
        %2126 = vmatpush.msra.mxu0 0.0
        %2127 = vmatpush.msra.mxu0 0.0
        %2128 = vmatpush.msra.mxu0 0.0
        %2129 = vmatpush.msra.mxu0 0.0
        %2130 = vmatpush.msra.mxu0 %v2030
        %2131 = vmatpush.msra.mxu0 %v2026
        %2132 = vmatpush.msra.mxu0 %v2022
        %2133 = vmatpush.msra.mxu0 %v2018
        %2134 = vmatmul.f32.gmra.mxu0 %v2049
        %v2135 = vpop.f32.mrf.mxu0
        %v2136 = vadd.f32 0.0, %v2135
        %2137 = vmatmul.f32.gmra.mxu0 %v2052
        %v2138 = vpop.f32.mrf.mxu0
        %v2139 = vadd.f32 0.0, %v2138
        %2140 = vmatmul.f32.gmra.mxu0 %v2055
        %v2141 = vpop.f32.mrf.mxu0
        %v2142 = vadd.f32 0.0, %v2141
        %2143 = vmatmul.f32.gmra.mxu0 %v2058
        %v2144 = vpop.f32.mrf.mxu0
        %v2145 = vadd.f32 0.0, %v2144
        %2146 = vdwg.mxu0
        %2147 = vmatpush.msra.mxu0 0.0
        %2148 = vmatpush.msra.mxu0 0.0
        %2149 = vmatpush.msra.mxu0 0.0
        %2150 = vmatpush.msra.mxu0 0.0
        %2151 = vmatpush.msra.mxu0 0.0
        %2152 = vmatpush.msra.mxu0 0.0
        %2153 = vmatpush.msra.mxu0 0.0
        %2154 = vmatpush.msra.mxu0 0.0
        %2155 = vmatpush.msra.mxu0 0.0
        %2156 = vmatpush.msra.mxu0 0.0
        %2157 = vmatpush.msra.mxu0 0.0
        %2158 = vmatpush.msra.mxu0 0.0
        %2159 = vmatpush.msra.mxu0 %v2031
        %2160 = vmatpush.msra.mxu0 %v2027
        %2161 = vmatpush.msra.mxu0 %v2023
        %2162 = vmatpush.msra.mxu0 %v2019
        %2163 = vmatmul.f32.gmra.mxu0 %v2049
        %v2164 = vpop.f32.mrf.mxu0
        %v2165 = vadd.f32 0.0, %v2164
        %2166 = vmatmul.f32.gmra.mxu0 %v2052
        %v2167 = vpop.f32.mrf.mxu0
        %v2168 = vadd.f32 0.0, %v2167
        %2169 = vmatmul.f32.gmra.mxu0 %v2055
        %v2170 = vpop.f32.mrf.mxu0
        %v2171 = vadd.f32 0.0, %v2170
        %2172 = vmatmul.f32.gmra.mxu0 %v2058
        %v2173 = vpop.f32.mrf.mxu0
        %v2174 = vadd.f32 0.0, %v2173
        %2175 = vdwg.mxu0
        %v2176 = vadd.f32 %v1954, %v2078
        %v2177 = vadd.f32 %v1955, %v2107
        %v2178 = vadd.f32 %v1956, %v2136
        %v2179 = vadd.f32 %v1957, %v2165
        %v2180 = vadd.f32 %v1958, %v2081
        %v2181 = vadd.f32 %v1959, %v2110
        %v2182 = vadd.f32 %v1960, %v2139
        %v2183 = vadd.f32 %v1961, %v2168
        %v2184 = vadd.f32 %v1962, %v2084
        %v2185 = vadd.f32 %v1963, %v2113
        %v2186 = vadd.f32 %v1964, %v2142
        %v2187 = vadd.f32 %v1965, %v2171
        %v2188 = vadd.f32 %v1966, %v2087
        %v2189 = vadd.f32 %v1967, %v2116
        %v2190 = vadd.f32 %v1968, %v2145
        %v2191 = vadd.f32 %v1969, %v2174
        %s2192 = scalar_lea.vmem %s2, 256
        %v2193 = vld [vmem:[%s2192] sm:$0xff]
        %v2194 = vld [vmem:[%s2192 + $0x8] sm:$0xff]
        %v2195 = vld [vmem:[%s2192 + $0x10] sm:$0xff]
        %v2196 = vld [vmem:[%s2192 + $0x18] sm:$0xff]
        %2197 = vrot.lane.b32.xlu0 %v481, 86
        %v2198 = vpop.permute.xlu0 %2197
        %2199 = vrot.lane.b32.xlu0 %v482, 86
        %v2200 = vpop.permute.xlu0 %2199
        %2201 = vrot.lane.b32.xlu0 %v483, 86
        %v2202 = vpop.permute.xlu0 %2201
        %2203 = vrot.lane.b32.xlu0 %v484, 86
        %v2204 = vpop.permute.xlu0 %2203
        %2205 = vrot.lane.b32.xlu0 %v501, 86
        %v2206 = vpop.permute.xlu0 %2205
        %2207 = vrot.lane.b32.xlu0 %v485, 86
        %v2208 = vpop.permute.xlu0 %2207
        %2209 = vrot.lane.b32.xlu0 %v486, 86
        %v2210 = vpop.permute.xlu0 %2209
        %2211 = vrot.lane.b32.xlu0 %v487, 86
        %v2212 = vpop.permute.xlu0 %2211
        %2213 = vrot.lane.b32.xlu0 %v488, 86
        %v2214 = vpop.permute.xlu0 %2213
        %2215 = vrot.lane.b32.xlu0 %v502, 86
        %v2216 = vpop.permute.xlu0 %2215
        %2217 = vrot.lane.b32.xlu0 %v489, 86
        %v2218 = vpop.permute.xlu0 %2217
        %2219 = vrot.lane.b32.xlu0 %v490, 86
        %v2220 = vpop.permute.xlu0 %2219
        %2221 = vrot.lane.b32.xlu0 %v491, 86
        %v2222 = vpop.permute.xlu0 %2221
        %2223 = vrot.lane.b32.xlu0 %v492, 86
        %v2224 = vpop.permute.xlu0 %2223
        %2225 = vrot.lane.b32.xlu0 %v503, 86
        %v2226 = vpop.permute.xlu0 %2225
        %2227 = vrot.lane.b32.xlu0 %v493, 86
        %v2228 = vpop.permute.xlu0 %2227
        %2229 = vrot.lane.b32.xlu0 %v494, 86
        %v2230 = vpop.permute.xlu0 %2229
        %2231 = vrot.lane.b32.xlu0 %v495, 86
        %v2232 = vpop.permute.xlu0 %2231
        %2233 = vrot.lane.b32.xlu0 %v496, 86
        %v2234 = vpop.permute.xlu0 %2233
        %2235 = vrot.lane.b32.xlu0 %v504, 86
        %v2236 = vpop.permute.xlu0 %2235
        %vm2237 = vcmask 703488
        %v2238 = vsel %vm2237, %v2198, %v2200
        %v2239 = vsel %vm2237, %v2200, %v2202
        %v2240 = vsel %vm2237, %v2202, %v2204
        %v2241 = vsel %vm2237, %v2204, %v2206
        %v2242 = vsel %vm2237, %v2208, %v2210
        %v2243 = vsel %vm2237, %v2210, %v2212
        %v2244 = vsel %vm2237, %v2212, %v2214
        %v2245 = vsel %vm2237, %v2214, %v2216
        %v2246 = vsel %vm2237, %v2218, %v2220
        %v2247 = vsel %vm2237, %v2220, %v2222
        %v2248 = vsel %vm2237, %v2222, %v2224
        %v2249 = vsel %vm2237, %v2224, %v2226
        %v2250 = vsel %vm2237, %v2228, %v2230
        %v2251 = vsel %vm2237, %v2230, %v2232
        %v2252 = vsel %vm2237, %v2232, %v2234
        %v2253 = vsel %vm2237, %v2234, %v2236
        %v2271 = vsel %vm603, %v2193, 0
        %v2274 = vsel %vm603, %v2194, 0
        %v2277 = vsel %vm603, %v2195, 0
        %v2280 = vsel %vm603, %v2196, 0
        %2282 = vmatpush.msra.mxu0 0.0
        %2283 = vmatpush.msra.mxu0 0.0
        %2284 = vmatpush.msra.mxu0 0.0
        %2285 = vmatpush.msra.mxu0 0.0
        %2286 = vmatpush.msra.mxu0 0.0
        %2287 = vmatpush.msra.mxu0 0.0
        %2288 = vmatpush.msra.mxu0 0.0
        %2289 = vmatpush.msra.mxu0 0.0
        %2290 = vmatpush.msra.mxu0 0.0
        %2291 = vmatpush.msra.mxu0 0.0
        %2292 = vmatpush.msra.mxu0 0.0
        %2293 = vmatpush.msra.mxu0 0.0
        %2294 = vmatpush.msra.mxu0 %v2250
        %2295 = vmatpush.msra.mxu0 %v2246
        %2296 = vmatpush.msra.mxu0 %v2242
        %2297 = vmatpush.msra.mxu0 %v2238
        %2298 = vmatmul.f32.gmra.mxu0 %v2271
        %v2299 = vpop.f32.mrf.mxu0
        %v2300 = vadd.f32 0.0, %v2299
        %2301 = vmatmul.f32.gmra.mxu0 %v2274
        %v2302 = vpop.f32.mrf.mxu0
        %v2303 = vadd.f32 0.0, %v2302
        %2304 = vmatmul.f32.gmra.mxu0 %v2277
        %v2305 = vpop.f32.mrf.mxu0
        %v2306 = vadd.f32 0.0, %v2305
        %2307 = vmatmul.f32.gmra.mxu0 %v2280
        %v2308 = vpop.f32.mrf.mxu0
        %v2309 = vadd.f32 0.0, %v2308
        %2310 = vdwg.mxu0
        %2311 = vmatpush.msra.mxu0 0.0
        %2312 = vmatpush.msra.mxu0 0.0
        %2313 = vmatpush.msra.mxu0 0.0
        %2314 = vmatpush.msra.mxu0 0.0
        %2315 = vmatpush.msra.mxu0 0.0
        %2316 = vmatpush.msra.mxu0 0.0
        %2317 = vmatpush.msra.mxu0 0.0
        %2318 = vmatpush.msra.mxu0 0.0
        %2319 = vmatpush.msra.mxu0 0.0
        %2320 = vmatpush.msra.mxu0 0.0
        %2321 = vmatpush.msra.mxu0 0.0
        %2322 = vmatpush.msra.mxu0 0.0
        %2323 = vmatpush.msra.mxu0 %v2251
        %2324 = vmatpush.msra.mxu0 %v2247
        %2325 = vmatpush.msra.mxu0 %v2243
        %2326 = vmatpush.msra.mxu0 %v2239
        %2327 = vmatmul.f32.gmra.mxu0 %v2271
        %v2328 = vpop.f32.mrf.mxu0
        %v2329 = vadd.f32 0.0, %v2328
        %2330 = vmatmul.f32.gmra.mxu0 %v2274
        %v2331 = vpop.f32.mrf.mxu0
        %v2332 = vadd.f32 0.0, %v2331
        %2333 = vmatmul.f32.gmra.mxu0 %v2277
        %v2334 = vpop.f32.mrf.mxu0
        %v2335 = vadd.f32 0.0, %v2334
        %2336 = vmatmul.f32.gmra.mxu0 %v2280
        %v2337 = vpop.f32.mrf.mxu0
        %v2338 = vadd.f32 0.0, %v2337
        %2339 = vdwg.mxu0
        %2340 = vmatpush.msra.mxu0 0.0
        %2341 = vmatpush.msra.mxu0 0.0
        %2342 = vmatpush.msra.mxu0 0.0
        %2343 = vmatpush.msra.mxu0 0.0
        %2344 = vmatpush.msra.mxu0 0.0
        %2345 = vmatpush.msra.mxu0 0.0
        %2346 = vmatpush.msra.mxu0 0.0
        %2347 = vmatpush.msra.mxu0 0.0
        %2348 = vmatpush.msra.mxu0 0.0
        %2349 = vmatpush.msra.mxu0 0.0
        %2350 = vmatpush.msra.mxu0 0.0
        %2351 = vmatpush.msra.mxu0 0.0
        %2352 = vmatpush.msra.mxu0 %v2252
        %2353 = vmatpush.msra.mxu0 %v2248
        %2354 = vmatpush.msra.mxu0 %v2244
        %2355 = vmatpush.msra.mxu0 %v2240
        %2356 = vmatmul.f32.gmra.mxu0 %v2271
        %v2357 = vpop.f32.mrf.mxu0
        %v2358 = vadd.f32 0.0, %v2357
        %2359 = vmatmul.f32.gmra.mxu0 %v2274
        %v2360 = vpop.f32.mrf.mxu0
        %v2361 = vadd.f32 0.0, %v2360
        %2362 = vmatmul.f32.gmra.mxu0 %v2277
        %v2363 = vpop.f32.mrf.mxu0
        %v2364 = vadd.f32 0.0, %v2363
        %2365 = vmatmul.f32.gmra.mxu0 %v2280
        %v2366 = vpop.f32.mrf.mxu0
        %v2367 = vadd.f32 0.0, %v2366
        %2368 = vdwg.mxu0
        %2369 = vmatpush.msra.mxu0 0.0
        %2370 = vmatpush.msra.mxu0 0.0
        %2371 = vmatpush.msra.mxu0 0.0
        %2372 = vmatpush.msra.mxu0 0.0
        %2373 = vmatpush.msra.mxu0 0.0
        %2374 = vmatpush.msra.mxu0 0.0
        %2375 = vmatpush.msra.mxu0 0.0
        %2376 = vmatpush.msra.mxu0 0.0
        %2377 = vmatpush.msra.mxu0 0.0
        %2378 = vmatpush.msra.mxu0 0.0
        %2379 = vmatpush.msra.mxu0 0.0
        %2380 = vmatpush.msra.mxu0 0.0
        %2381 = vmatpush.msra.mxu0 %v2253
        %2382 = vmatpush.msra.mxu0 %v2249
        %2383 = vmatpush.msra.mxu0 %v2245
        %2384 = vmatpush.msra.mxu0 %v2241
        %2385 = vmatmul.f32.gmra.mxu0 %v2271
        %v2386 = vpop.f32.mrf.mxu0
        %v2387 = vadd.f32 0.0, %v2386
        %2388 = vmatmul.f32.gmra.mxu0 %v2274
        %v2389 = vpop.f32.mrf.mxu0
        %v2390 = vadd.f32 0.0, %v2389
        %2391 = vmatmul.f32.gmra.mxu0 %v2277
        %v2392 = vpop.f32.mrf.mxu0
        %v2393 = vadd.f32 0.0, %v2392
        %2394 = vmatmul.f32.gmra.mxu0 %v2280
        %v2395 = vpop.f32.mrf.mxu0
        %v2396 = vadd.f32 0.0, %v2395
        %2397 = vdwg.mxu0
        %v2398 = vadd.f32 %v2176, %v2300
        %v2399 = vadd.f32 %v2177, %v2329
        %v2400 = vadd.f32 %v2178, %v2358
        %v2401 = vadd.f32 %v2179, %v2387
        %v2402 = vadd.f32 %v2180, %v2303
        %v2403 = vadd.f32 %v2181, %v2332
        %v2404 = vadd.f32 %v2182, %v2361
        %v2405 = vadd.f32 %v2183, %v2390
        %v2406 = vadd.f32 %v2184, %v2306
        %v2407 = vadd.f32 %v2185, %v2335
        %v2408 = vadd.f32 %v2186, %v2364
        %v2409 = vadd.f32 %v2187, %v2393
        %v2410 = vadd.f32 %v2188, %v2309
        %v2411 = vadd.f32 %v2189, %v2338
        %v2412 = vadd.f32 %v2190, %v2367
        %v2413 = vadd.f32 %v2191, %v2396
        %v2414 = vld [vmem:[%s3] sm:$0xff]
        %v2415 = vld [vmem:[%s3 + $0x8] sm:$0xff]
        %v2416 = vld [vmem:[%s3 + $0x10] sm:$0xff]
        %v2417 = vld [vmem:[%s3 + $0x18] sm:$0xff]
        %2419 = vset.pattern.permute.xlu0 0
        %2420 = vperm.xlu0 %2419, %v2414
        %v2421 = vpop.permute.xlu0 %2420
        %2424 = vset.pattern.permute.xlu0 0
        %2425 = vperm.xlu0 %2424, %v2415
        %v2426 = vpop.permute.xlu0 %2425
        %2429 = vset.pattern.permute.xlu0 0
        %2430 = vperm.xlu0 %2429, %v2416
        %v2431 = vpop.permute.xlu0 %2430
        %2434 = vset.pattern.permute.xlu0 0
        %2435 = vperm.xlu0 %2434, %v2417
        %v2436 = vpop.permute.xlu0 %2435
        %v2438 = vadd.f32 %v2398, %v2421
        %v2439 = vadd.f32 %v2399, %v2421
        %v2440 = vadd.f32 %v2400, %v2421
        %v2441 = vadd.f32 %v2401, %v2421
        %v2442 = vadd.f32 %v2402, %v2426
        %v2443 = vadd.f32 %v2403, %v2426
        %v2444 = vadd.f32 %v2404, %v2426
        %v2445 = vadd.f32 %v2405, %v2426
        %v2446 = vadd.f32 %v2406, %v2431
        %v2447 = vadd.f32 %v2407, %v2431
        %v2448 = vadd.f32 %v2408, %v2431
        %v2449 = vadd.f32 %v2409, %v2431
        %v2450 = vadd.f32 %v2410, %v2436
        %v2451 = vadd.f32 %v2411, %v2436
        %v2452 = vadd.f32 %v2412, %v2436
        %v2453 = vadd.f32 %v2413, %v2436
        %v2454 = vld [vmem:[%s380] sm:$0xff]
        %v2455 = vld [vmem:[%s380 + $0x8] sm:$0xff]
        %v2456 = vld [vmem:[%s380 + $0x10] sm:$0xff]
        %v2457 = vld [vmem:[%s380 + $0x18] sm:$0xff]
        %v2458 = vld [vmem:[%s380 + $0x20] sm:$0xff]
        %v2459 = vld [vmem:[%s380 + $0x28] sm:$0xff]
        %v2460 = vld [vmem:[%s380 + $0x30] sm:$0xff]
        %v2461 = vld [vmem:[%s380 + $0x38] sm:$0xff]
        %v2462 = vld [vmem:[%s380 + $0x40] sm:$0xff]
        %v2463 = vld [vmem:[%s380 + $0x48] sm:$0xff]
        %v2464 = vld [vmem:[%s380 + $0x50] sm:$0xff]
        %v2465 = vld [vmem:[%s380 + $0x58] sm:$0xff]
        %v2466 = vld [vmem:[%s380 + $0x60] sm:$0xff]
        %v2467 = vld [vmem:[%s380 + $0x68] sm:$0xff]
        %v2468 = vld [vmem:[%s380 + $0x70] sm:$0xff]
        %v2469 = vld [vmem:[%s380 + $0x78] sm:$0xff]
        %v2470 = vadd.f32 %v2438, %v2454
        %v2471 = vadd.f32 %v2439, %v2455
        %v2472 = vadd.f32 %v2440, %v2456
        %v2473 = vadd.f32 %v2441, %v2457
        %v2474 = vadd.f32 %v2442, %v2458
        %v2475 = vadd.f32 %v2443, %v2459
        %v2476 = vadd.f32 %v2444, %v2460
        %v2477 = vadd.f32 %v2445, %v2461
        %v2478 = vadd.f32 %v2446, %v2462
        %v2479 = vadd.f32 %v2447, %v2463
        %v2480 = vadd.f32 %v2448, %v2464
        %v2481 = vadd.f32 %v2449, %v2465
        %v2482 = vadd.f32 %v2450, %v2466
        %v2483 = vadd.f32 %v2451, %v2467
        %v2484 = vadd.f32 %v2452, %v2468
        %v2485 = vadd.f32 %v2453, %v2469
        %2486 = vst [vmem:[%s411] sm:$0xff] %v2470
        %2487 = vst [vmem:[%s411 + $0x8] sm:$0xff] %v2471
        %2488 = vst [vmem:[%s411 + $0x10] sm:$0xff] %v2472
        %2489 = vst [vmem:[%s411 + $0x18] sm:$0xff] %v2473
        %2490 = vst [vmem:[%s411 + $0x20] sm:$0xff] %v2474
        %2491 = vst [vmem:[%s411 + $0x28] sm:$0xff] %v2475
        %2492 = vst [vmem:[%s411 + $0x30] sm:$0xff] %v2476
        %2493 = vst [vmem:[%s411 + $0x38] sm:$0xff] %v2477
        %2494 = vst [vmem:[%s411 + $0x40] sm:$0xff] %v2478
        %2495 = vst [vmem:[%s411 + $0x48] sm:$0xff] %v2479
        %2496 = vst [vmem:[%s411 + $0x50] sm:$0xff] %v2480
        %2497 = vst [vmem:[%s411 + $0x58] sm:$0xff] %v2481
        %2498 = vst [vmem:[%s411 + $0x60] sm:$0xff] %v2482
        %2499 = vst [vmem:[%s411 + $0x68] sm:$0xff] %v2483
        %2500 = vst [vmem:[%s411 + $0x70] sm:$0xff] %v2484
        %2501 = vst [vmem:[%s411 + $0x78] sm:$0xff] %v2485
        %s2502 = sand.u32 %s146, 1
        %s2503 = sand.u32 %s146, 1
        %s2504 = smul.addr %s2503, 128
        %s2505 = scalar_lea.vmem [#allocation6], %s2504
        // Predicated region
        $region110: #{augmenter_forward.9} parent=96 // pred_check
          %p2506 = pneg %p156
        $region111: #{augmenter_forward.9} parent=96 // pred_check_branch
          %2508 = sbr.rel (%p2506) target = $region113
        $region112: #{augmenter_forward.9} parent=96 // pred_region
          %s2509 = smul.u32 4, %s16
          %s2510 = smul.addr %s2509, 8
          %s2511 = scalar_lea.vmem %s5, %s2510
          // Predicated region
          $region114: #{augmenter_forward.9} parent=112 // pred_check
            _
          $region115: #{augmenter_forward.9} parent=112 // pred_check_branch
            %2513 = sbr.rel (0) target = $region117
          $region116: #{augmenter_forward.9} parent=112 // pred_region
            // Predicated region
            $region118: #{augmenter_forward.9} parent=116 // pred_check
              _
            $region119: #{augmenter_forward.9} parent=116 // pred_check_branch
              %2515 = sbr.rel (0) target = $region121
            $region120: #{augmenter_forward.9} parent=116 // pred_region
              loop: start=0, step=1, limit=1
              $region122: #{augmenter_forward.9} parent=120 // loop_pre_header
                _
              $region123: #{augmenter_forward.9} parent=120 // loop_header
                %s2517 = sphi 0, %s2521
                %p2518 = scmp.ge.s32.totalorder %s2517, 1
                %s2522 = sphi %s2505, %s2505
                %s2523 = sphi %s2511, %s2511
              $region124: #{augmenter_forward.9} parent=120 // loop_header_branch
                %2520 = sbr.rel (%p2518) target = $region128
              $region125: #{augmenter_forward.9} parent=120 // loop_body
                %v2524 = vld [vmem:[%s2522] sm:$0xff]
                %2525 = vst [vmem:[%s2523] sm:$0xff] %v2524
                %v2526 = vld [vmem:[%s2522 + $0x8] sm:$0xff]
                %2527 = vst [vmem:[%s2523 + $0x8] sm:$0xff] %v2526
                %v2528 = vld [vmem:[%s2522 + $0x10] sm:$0xff]
                %2529 = vst [vmem:[%s2523 + $0x10] sm:$0xff] %v2528
                %v2530 = vld [vmem:[%s2522 + $0x18] sm:$0xff]
                %2531 = vst [vmem:[%s2523 + $0x18] sm:$0xff] %v2530
                %v2532 = vld [vmem:[%s2522 + $0x20] sm:$0xff]
                %2533 = vst [vmem:[%s2523 + $0x40] sm:$0xff] %v2532
                %v2534 = vld [vmem:[%s2522 + $0x28] sm:$0xff]
                %2535 = vst [vmem:[%s2523 + $0x48] sm:$0xff] %v2534
                %v2536 = vld [vmem:[%s2522 + $0x30] sm:$0xff]
                %2537 = vst [vmem:[%s2523 + $0x50] sm:$0xff] %v2536
                %v2538 = vld [vmem:[%s2522 + $0x38] sm:$0xff]
                %2539 = vst [vmem:[%s2523 + $0x58] sm:$0xff] %v2538
                %v2540 = vld [vmem:[%s2522 + $0x40] sm:$0xff]
                %2541 = vst [vmem:[%s2523 + $0x80] sm:$0xff] %v2540
                %v2542 = vld [vmem:[%s2522 + $0x48] sm:$0xff]
                %2543 = vst [vmem:[%s2523 + $0x88] sm:$0xff] %v2542
                %v2544 = vld [vmem:[%s2522 + $0x50] sm:$0xff]
                %2545 = vst [vmem:[%s2523 + $0x90] sm:$0xff] %v2544
                %v2546 = vld [vmem:[%s2522 + $0x58] sm:$0xff]
                %2547 = vst [vmem:[%s2523 + $0x98] sm:$0xff] %v2546
                %v2548 = vld [vmem:[%s2522 + $0x60] sm:$0xff]
                %2549 = vst [vmem:[%s2523 + $0xc0] sm:$0xff] %v2548
                %v2550 = vld [vmem:[%s2522 + $0x68] sm:$0xff]
                %2551 = vst [vmem:[%s2523 + $0xc8] sm:$0xff] %v2550
                %v2552 = vld [vmem:[%s2522 + $0x70] sm:$0xff]
                %2553 = vst [vmem:[%s2523 + $0xd0] sm:$0xff] %v2552
                %v2554 = vld [vmem:[%s2522 + $0x78] sm:$0xff]
                %2555 = vst [vmem:[%s2523 + $0xd8] sm:$0xff] %v2554
              $region126: #{augmenter_forward.9} parent=120 // loop_footer
                %s2521 = sadd.s32 1, %s2517
              $region127: #{augmenter_forward.9} parent=120 // loop_footer_branch
                %2516 = sbr.rel target = $region123
              $region128: #{augmenter_forward.9} parent=120 // loop_exit
                _
            $region121: #{augmenter_forward.9} parent=116 // pred_fallthru
              _
            // Predicated region
            $region129: #{augmenter_forward.9} parent=116 // pred_check
              _
            $region130: #{augmenter_forward.9} parent=116 // pred_check_branch
              %2557 = sbr.rel target = $region132
            $region131: #{augmenter_forward.9} parent=116 // pred_region
              _
            $region132: #{augmenter_forward.9} parent=116 // pred_fallthru
              _
          $region117: #{augmenter_forward.9} parent=112 // pred_fallthru
            _
          %2558 = vnop
        $region113: #{augmenter_forward.9} parent=96 // pred_fallthru
          _
      $region97: #{augmenter_forward.9} parent=5 // pred_fallthru
        _
      %p2559 = scmp.le.s32.totalorder 2, %s11
      // Predicated region
      $region133: #{augmenter_forward.9} parent=5 // pred_check
        %p2560 = pneg %p2559
      $region134: #{augmenter_forward.9} parent=5 // pred_check_branch
        %2562 = sbr.rel (%p2560) target = $region136
      $region135: #{augmenter_forward.9} parent=5 // pred_region
        %s2563 = ssub.s32 %s11, 2
        // Predicated region
        $region137: #{augmenter_forward.9} parent=135 // pred_check
          %p2564 = pneg %p162
        $region138: #{augmenter_forward.9} parent=135 // pred_check_branch
          %2566 = sbr.rel (%p2564) target = $region140
        $region139: #{augmenter_forward.9} parent=135 // pred_region
          %s2567 = sand.u32 %s147, 1
          %s2568 = sand.u32 %s147, 1
          %s2569 = smul.addr %s2568, 128
          %s2570 = scalar_lea.vmem [#allocation6], %s2569
        $region140: #{augmenter_forward.9} parent=135 // pred_fallthru
          _
      $region136: #{augmenter_forward.9} parent=5 // pred_fallthru
        _
    $region6: #{augmenter_forward.9} parent=1 // loop_footer
      %s15 = sadd.s32 1, %s11
    $region7: #{augmenter_forward.9} parent=1 // loop_footer_branch
      %10 = sbr.rel target = $region3
    $region8: #{augmenter_forward.9} parent=1 // loop_exit
      _

// kernel: augmenter_forward.13
$region0: #{augmenter_forward.13}
  #allocation0 [shape = 'u32[]', space=smem, size = 0x4, offset = 0x4, fixed_abs, tag = 'smem constant byte address 0x4 - core index']
  #allocation1 [shape = 'u32[72,128]{1,0:T(1,128)}', space=vmem, size = 0x9000, scoped, tag = 'internal scratch']
  #allocation2 [shape = 'f32[32,1024]{1,0:T(8,128)}', space=vmem, size = 0x20000, scoped, tag = 'scratch operand']
  %s0 = inlined_call_operand.vmem [shape: f32[32,1536], index: 0, kind: input, shape index: {}, may-alias: {0,1}]
  %s1 = inlined_call_operand.vmem [shape: f32[32,1536], index: 1, kind: input, shape index: {}, may-alias: {0,1}]
  %s2 = inlined_call_operand.vmem [shape: f32[9,32,32], index: 2, kind: input, shape index: {}]
  %s3 = inlined_call_operand.vmem [shape: f32[32,1], index: 3, kind: input, shape index: {}]
  %s4 = inlined_call_operand.vmem [shape: f32[32,1024], index: 4, kind: input, shape index: {}, may-alias: {4,6}]
  %s5 = inlined_call_operand.vmem [shape: f32[4,32], index: 5, kind: input, shape index: {}]
  %s6 = inlined_call_operand.vmem [shape: f32[32,1024], index: 6, kind: output, shape index: {0}, may-alias: {4,6}]
  %s7 = inlined_call_operand.vmem [shape: f32[4,1024], index: 7, kind: output, shape index: {1}]
  %8 = xla_tuple %s6, %s7
  %s9 = sld [smem:[#allocation0]]
  $region153: #{augmenter_forward.13} parent=0
    _
  %s11 = ssub.s32 1, %s9
  %s12 = scalar_select 0, %s11, %s9
  $region1: #{augmenter_forward.13} parent=0
    #allocation3 [shape = 'u8[131072]{0}', space=vmem, size = 0x20000, scoped, tag = 'input window, operand 0']
    #allocation4 [shape = 'u8[131072]{0}', space=vmem, size = 0x20000, scoped, tag = 'input window, operand 1']
    #allocation5 [shape = 'u8[131072]{0}', space=vmem, size = 0x20000, scoped, tag = 'input window, operand 4']
    #allocation6 [shape = 'u8[131072]{0}', space=vmem, size = 0x20000, scoped, tag = 'output window, operand 0']
    loop: start=0, step=1, limit=4
    $region2: #{augmenter_forward.13} parent=1 // loop_pre_header
      _
    $region3: #{augmenter_forward.13} parent=1 // loop_header
      %s14 = sphi 0, %s18
      %p15 = scmp.ge.s32.totalorder %s14, 4
      %s24 = sphi 0, %s26
      %s27 = sphi 0, %s24
      %s28 = sphi 0, %s27
      %s44 = sphi 0, %s28
      %s52 = sphi 0, %s54
      %s55 = sphi 0, %s52
      %s56 = sphi 0, %s55
      %s72 = sphi 0, %s56
      %s76 = sphi 0, %s76
      %s78 = sphi 0, %s76
      %s79 = sphi 0, %s78
      %s93 = sphi 0, %s79
      %s97 = sphi 0, %s97
      %s99 = sphi 0, %s97
      %s100 = sphi 0, %s99
      %s114 = sphi 0, %s100
      %s120 = sphi 0, %s122
      %s123 = sphi 0, %s120
      %s124 = sphi 0, %s123
      %s140 = sphi 0, %s124
      %s144 = sphi 0, %s144
      %s146 = sphi 0, %s144
      %s147 = sphi 0, %s146
      %s161 = sphi 0, %s147
      %s167 = sphi 0, %s169
      %s170 = sphi 0, %s167
      %s171 = sphi 0, %s170
      %s187 = sphi 0, %s171
      %s193 = sphi 0, %s195
      %s196 = sphi 0, %s193
      %s197 = sphi 0, %s196
      %s213 = sphi 0, %s197
    $region4: #{augmenter_forward.13} parent=1 // loop_header_branch
      %17 = sbr.rel (%p15) target = $region8
    $region5: #{augmenter_forward.13} parent=1 // loop_body
      %s19 = ssub.s32 %s14, 1
      %s20 = ssub.s32 %s14, 2
      %s21 = sadd.s32 %s14, 1
      %s22 = ssub.s32 %s14, %s21
      %p23 = scmp.eq.s32.totalorder %s22, 0
      %s25 = sadd.s32 %s24, 1
      %s26 = scalar_select %p23, %s24, %s25
      %p29 = pneg %p23
      %p30 = scmp.eq.s32.totalorder %s14, 1
      %p31 = por %p29, %p30
      %p32 = scmp.ne.s32.totalorder %s24, %s27
      %p33 = scmp.eq.s32.totalorder %s14, 0
      %p34 = por %p32, %p33
      %p35 = scmp.ne.s32.totalorder %s24, %s27
      %p36 = scmp.eq.s32.totalorder %s19, 1
      %p37 = por %p35, %p36
      %p38 = scmp.ne.s32.totalorder %s27, %s28
      %p39 = scmp.eq.s32.totalorder %s19, 0
      %p40 = por %p38, %p39
      %p41 = scmp.ne.s32.totalorder %s27, %s28
      %p42 = scmp.eq.s32.totalorder %s20, 1
      %p43 = por %p41, %p42
      %p45 = scmp.ne.s32.totalorder %s28, %s44
      %p46 = scmp.eq.s32.totalorder %s20, 0
      %p47 = por %p45, %p46
      %s48 = sadd.s32 %s14, 1
      %s49 = sadd.s32 %s21, 1
      %s50 = ssub.s32 %s48, %s49
      %p51 = scmp.eq.s32.totalorder %s50, 0
      %s53 = sadd.s32 %s52, 1
      %s54 = scalar_select %p51, %s52, %s53
      %p57 = pneg %p51
      %p58 = scmp.eq.s32.totalorder %s14, 1
      %p59 = por %p57, %p58
      %p60 = scmp.ne.s32.totalorder %s52, %s55
      %p61 = scmp.eq.s32.totalorder %s14, 0
      %p62 = por %p60, %p61
      %p63 = scmp.ne.s32.totalorder %s52, %s55
      %p64 = scmp.eq.s32.totalorder %s19, 1
      %p65 = por %p63, %p64
      %p66 = scmp.ne.s32.totalorder %s55, %s56
      %p67 = scmp.eq.s32.totalorder %s19, 0
      %p68 = por %p66, %p67
      %p69 = scmp.ne.s32.totalorder %s55, %s56
      %p70 = scmp.eq.s32.totalorder %s20, 1
      %p71 = por %p69, %p70
      %p73 = scmp.ne.s32.totalorder %s56, %s72
      %p74 = scmp.eq.s32.totalorder %s20, 0
      %p75 = por %p73, %p74
      %s77 = sadd.s32 %s76, 1
      %p80 = scmp.eq.s32.totalorder %s14, 1
      %p81 = scmp.ne.s32.totalorder %s76, %s78
      %p82 = scmp.eq.s32.totalorder %s14, 0
      %p83 = por %p81, %p82
      %p84 = scmp.ne.s32.totalorder %s76, %s78
      %p85 = scmp.eq.s32.totalorder %s19, 1
      %p86 = por %p84, %p85
      %p87 = scmp.ne.s32.totalorder %s78, %s79
      %p88 = scmp.eq.s32.totalorder %s19, 0
      %p89 = por %p87, %p88
      %p90 = scmp.ne.s32.totalorder %s78, %s79
      %p91 = scmp.eq.s32.totalorder %s20, 1
      %p92 = por %p90, %p91
      %p94 = scmp.ne.s32.totalorder %s79, %s93
      %p95 = scmp.eq.s32.totalorder %s20, 0
      %p96 = por %p94, %p95
      %s98 = sadd.s32 %s97, 1
      %p101 = scmp.eq.s32.totalorder %s14, 1
      %p102 = scmp.ne.s32.totalorder %s97, %s99
      %p103 = scmp.eq.s32.totalorder %s14, 0
      %p104 = por %p102, %p103
      %p105 = scmp.ne.s32.totalorder %s97, %s99
      %p106 = scmp.eq.s32.totalorder %s19, 1
      %p107 = por %p105, %p106
      %p108 = scmp.ne.s32.totalorder %s99, %s100
      %p109 = scmp.eq.s32.totalorder %s19, 0
      %p110 = por %p108, %p109
      %p111 = scmp.ne.s32.totalorder %s99, %s100
      %p112 = scmp.eq.s32.totalorder %s20, 1
      %p113 = por %p111, %p112
      %p115 = scmp.ne.s32.totalorder %s100, %s114
      %p116 = scmp.eq.s32.totalorder %s20, 0
      %p117 = por %p115, %p116
      %s118 = ssub.s32 %s14, %s21
      %p119 = scmp.eq.s32.totalorder %s118, 0
      %s121 = sadd.s32 %s120, 1
      %s122 = scalar_select %p119, %s120, %s121
      %p125 = pneg %p119
      %p126 = scmp.eq.s32.totalorder %s14, 1
      %p127 = por %p125, %p126
      %p128 = scmp.ne.s32.totalorder %s120, %s123
      %p129 = scmp.eq.s32.totalorder %s14, 0
      %p130 = por %p128, %p129
      %p131 = scmp.ne.s32.totalorder %s120, %s123
      %p132 = scmp.eq.s32.totalorder %s19, 1
      %p133 = por %p131, %p132
      %p134 = scmp.ne.s32.totalorder %s123, %s124
      %p135 = scmp.eq.s32.totalorder %s19, 0
      %p136 = por %p134, %p135
      %p137 = scmp.ne.s32.totalorder %s123, %s124
      %p138 = scmp.eq.s32.totalorder %s20, 1
      %p139 = por %p137, %p138
      %p141 = scmp.ne.s32.totalorder %s124, %s140
      %p142 = scmp.eq.s32.totalorder %s20, 0
      %p143 = por %p141, %p142
      %s145 = sadd.s32 %s144, 1
      %p148 = scmp.eq.s32.totalorder %s14, 1
      %p149 = scmp.ne.s32.totalorder %s144, %s146
      %p150 = scmp.eq.s32.totalorder %s14, 0
      %p151 = por %p149, %p150
      %p152 = scmp.ne.s32.totalorder %s144, %s146
      %p153 = scmp.eq.s32.totalorder %s19, 1
      %p154 = por %p152, %p153
      %p155 = scmp.ne.s32.totalorder %s146, %s147
      %p156 = scmp.eq.s32.totalorder %s19, 0
      %p157 = por %p155, %p156
      %p158 = scmp.ne.s32.totalorder %s146, %s147
      %p159 = scmp.eq.s32.totalorder %s20, 1
      %p160 = por %p158, %p159
      %p162 = scmp.ne.s32.totalorder %s147, %s161
      %p163 = scmp.eq.s32.totalorder %s20, 0
      %p164 = por %p162, %p163
      %s165 = ssub.s32 %s14, %s21
      %p166 = scmp.eq.s32.totalorder %s165, 0
      %s168 = sadd.s32 %s167, 1
      %s169 = scalar_select %p166, %s167, %s168
      %p172 = pneg %p166
      %p173 = scmp.eq.s32.totalorder %s14, 1
      %p174 = por %p172, %p173
      %p175 = scmp.ne.s32.totalorder %s167, %s170
      %p176 = scmp.eq.s32.totalorder %s14, 0
      %p177 = por %p175, %p176
      %p178 = scmp.ne.s32.totalorder %s167, %s170
      %p179 = scmp.eq.s32.totalorder %s19, 1
      %p180 = por %p178, %p179
      %p181 = scmp.ne.s32.totalorder %s170, %s171
      %p182 = scmp.eq.s32.totalorder %s19, 0
      %p183 = por %p181, %p182
      %p184 = scmp.ne.s32.totalorder %s170, %s171
      %p185 = scmp.eq.s32.totalorder %s20, 1
      %p186 = por %p184, %p185
      %p188 = scmp.ne.s32.totalorder %s171, %s187
      %p189 = scmp.eq.s32.totalorder %s20, 0
      %p190 = por %p188, %p189
      %s191 = ssub.s32 %s14, %s21
      %p192 = scmp.eq.s32.totalorder %s191, 0
      %s194 = sadd.s32 %s193, 1
      %s195 = scalar_select %p192, %s193, %s194
      %p198 = pneg %p192
      %p199 = scmp.eq.s32.totalorder %s14, 1
      %p200 = por %p198, %p199
      %p201 = scmp.ne.s32.totalorder %s193, %s196
      %p202 = scmp.eq.s32.totalorder %s14, 0
      %p203 = por %p201, %p202
      %p204 = scmp.ne.s32.totalorder %s193, %s196
      %p205 = scmp.eq.s32.totalorder %s19, 1
      %p206 = por %p204, %p205
      %p207 = scmp.ne.s32.totalorder %s196, %s197
      %p208 = scmp.eq.s32.totalorder %s19, 0
      %p209 = por %p207, %p208
      %p210 = scmp.ne.s32.totalorder %s196, %s197
      %p211 = scmp.eq.s32.totalorder %s20, 1
      %p212 = por %p210, %p211
      %p214 = scmp.ne.s32.totalorder %s197, %s213
      %p215 = scmp.eq.s32.totalorder %s20, 0
      %p216 = por %p214, %p215
      %p217 = scmp.le.s32.totalorder 1, %s14
      %p218 = scmp.lt.s32.totalorder %s14, 3
      %p219 = pnand %p217, %p218
      %p220 = pneg %p219
      // Predicated region
      $region9: #{augmenter_forward.13} parent=5 // pred_check
        _
      $region10: #{augmenter_forward.13} parent=5 // pred_check_branch
        %222 = sbr.rel (%p219) target = $region12
      $region11: #{augmenter_forward.13} parent=5 // pred_region
        %s223 = ssub.s32 %s14, 1
        // Predicated region
        $region13: #{augmenter_forward.13} parent=11 // pred_check
          %p224 = pneg %p89
        $region14: #{augmenter_forward.13} parent=11 // pred_check_branch
          %226 = sbr.rel (%p224) target = $region16
        $region15: #{augmenter_forward.13} parent=11 // pred_region
          _
        $region16: #{augmenter_forward.13} parent=11 // pred_fallthru
          _
        // Predicated region
        $region17: #{augmenter_forward.13} parent=11 // pred_check
          %p227 = pneg %p110
        $region18: #{augmenter_forward.13} parent=11 // pred_check_branch
          %229 = sbr.rel (%p227) target = $region20
        $region19: #{augmenter_forward.13} parent=11 // pred_region
          _
        $region20: #{augmenter_forward.13} parent=11 // pred_fallthru
          _
        // Predicated region
        $region21: #{augmenter_forward.13} parent=11 // pred_check
          %p230 = pneg %p157
        $region22: #{augmenter_forward.13} parent=11 // pred_check_branch
          %232 = sbr.rel (%p230) target = $region24
        $region23: #{augmenter_forward.13} parent=11 // pred_region
          _
        $region24: #{augmenter_forward.13} parent=11 // pred_fallthru
          _
      $region12: #{augmenter_forward.13} parent=5 // pred_fallthru
        _
      %p233 = scmp.lt.s32.totalorder %s14, 2
      // Predicated region
      $region25: #{augmenter_forward.13} parent=5 // pred_check
        %p234 = pneg %p233
      $region26: #{augmenter_forward.13} parent=5 // pred_check_branch
        %236 = sbr.rel (%p234) target = $region28
      $region27: #{augmenter_forward.13} parent=5 // pred_region
        // Predicated region
        $region29: #{augmenter_forward.13} parent=27 // pred_check
          %p237 = pneg %p34
        $region30: #{augmenter_forward.13} parent=27 // pred_check_branch
          %239 = sbr.rel (%p237) target = $region32
        $region31: #{augmenter_forward.13} parent=27 // pred_region
          %s240 = sand.u32 %s24, 1
          %s241 = sand.u32 %s24, 1
          %s242 = smul.addr %s241, 128
          %s243 = scalar_lea.vmem [#allocation3], %s242
          %s244 = smul.u32 4, %s14
          %s245 = smul.addr %s244, 8
          %s246 = scalar_lea.vmem %s0, %s245
          // Predicated region
          $region33: #{augmenter_forward.13} parent=31 // pred_check
            _
          $region34: #{augmenter_forward.13} parent=31 // pred_check_branch
            %248 = sbr.rel (0) target = $region36
          $region35: #{augmenter_forward.13} parent=31 // pred_region
            // Predicated region
            $region37: #{augmenter_forward.13} parent=35 // pred_check
              _
            $region38: #{augmenter_forward.13} parent=35 // pred_check_branch
              %250 = sbr.rel (0) target = $region40
            $region39: #{augmenter_forward.13} parent=35 // pred_region
              loop: start=0, step=1, limit=1
              $region41: #{augmenter_forward.13} parent=39 // loop_pre_header
                _
              $region42: #{augmenter_forward.13} parent=39 // loop_header
                %s252 = sphi 0, %s256
                %p253 = scmp.ge.s32.totalorder %s252, 1
                %s257 = sphi %s246, %s246
                %s258 = sphi %s243, %s243
              $region43: #{augmenter_forward.13} parent=39 // loop_header_branch
                %255 = sbr.rel (%p253) target = $region47
              $region44: #{augmenter_forward.13} parent=39 // loop_body
                %v259 = vld [vmem:[%s257] sm:$0xff]
                %260 = vst [vmem:[%s258] sm:$0xff] %v259
                %v261 = vld [vmem:[%s257 + $0x8] sm:$0xff]
                %262 = vst [vmem:[%s258 + $0x8] sm:$0xff] %v261
                %v263 = vld [vmem:[%s257 + $0x10] sm:$0xff]
                %264 = vst [vmem:[%s258 + $0x10] sm:$0xff] %v263
                %v265 = vld [vmem:[%s257 + $0x18] sm:$0xff]
                %266 = vst [vmem:[%s258 + $0x18] sm:$0xff] %v265
                %v267 = vld [vmem:[%s257 + $0x60] sm:$0xff]
                %268 = vst [vmem:[%s258 + $0x20] sm:$0xff] %v267
                %v269 = vld [vmem:[%s257 + $0x68] sm:$0xff]
                %270 = vst [vmem:[%s258 + $0x28] sm:$0xff] %v269
                %v271 = vld [vmem:[%s257 + $0x70] sm:$0xff]
                %272 = vst [vmem:[%s258 + $0x30] sm:$0xff] %v271
                %v273 = vld [vmem:[%s257 + $0x78] sm:$0xff]
                %274 = vst [vmem:[%s258 + $0x38] sm:$0xff] %v273
                %v275 = vld [vmem:[%s257 + $0xc0] sm:$0xff]
                %276 = vst [vmem:[%s258 + $0x40] sm:$0xff] %v275
                %v277 = vld [vmem:[%s257 + $0xc8] sm:$0xff]
                %278 = vst [vmem:[%s258 + $0x48] sm:$0xff] %v277
                %v279 = vld [vmem:[%s257 + $0xd0] sm:$0xff]
                %280 = vst [vmem:[%s258 + $0x50] sm:$0xff] %v279
                %v281 = vld [vmem:[%s257 + $0xd8] sm:$0xff]
                %282 = vst [vmem:[%s258 + $0x58] sm:$0xff] %v281
                %v283 = vld [vmem:[%s257 + $0x120] sm:$0xff]
                %284 = vst [vmem:[%s258 + $0x60] sm:$0xff] %v283
                %v285 = vld [vmem:[%s257 + $0x128] sm:$0xff]
                %286 = vst [vmem:[%s258 + $0x68] sm:$0xff] %v285
                %v287 = vld [vmem:[%s257 + $0x130] sm:$0xff]
                %288 = vst [vmem:[%s258 + $0x70] sm:$0xff] %v287
                %v289 = vld [vmem:[%s257 + $0x138] sm:$0xff]
                %290 = vst [vmem:[%s258 + $0x78] sm:$0xff] %v289
              $region45: #{augmenter_forward.13} parent=39 // loop_footer
                %s256 = sadd.s32 1, %s252
              $region46: #{augmenter_forward.13} parent=39 // loop_footer_branch
                %251 = sbr.rel target = $region42
              $region47: #{augmenter_forward.13} parent=39 // loop_exit
                _
            $region40: #{augmenter_forward.13} parent=35 // pred_fallthru
              _
            // Predicated region
            $region48: #{augmenter_forward.13} parent=35 // pred_check
              _
            $region49: #{augmenter_forward.13} parent=35 // pred_check_branch
              %292 = sbr.rel target = $region51
            $region50: #{augmenter_forward.13} parent=35 // pred_region
              _
            $region51: #{augmenter_forward.13} parent=35 // pred_fallthru
              _
          $region36: #{augmenter_forward.13} parent=31 // pred_fallthru
            _
          %293 = vnop
        $region32: #{augmenter_forward.13} parent=27 // pred_fallthru
          _
        // Predicated region
        $region52: #{augmenter_forward.13} parent=27 // pred_check
          %p294 = pneg %p62
        $region53: #{augmenter_forward.13} parent=27 // pred_check_branch
          %296 = sbr.rel (%p294) target = $region55
        $region54: #{augmenter_forward.13} parent=27 // pred_region
          %s297 = sand.u32 %s52, 1
          %s298 = sand.u32 %s52, 1
          %s299 = smul.addr %s298, 128
          %s300 = scalar_lea.vmem [#allocation4], %s299
          %s301 = sadd.s32 %s14, 1
          %s302 = smul.u32 4, %s301
          %s303 = smul.addr %s302, 8
          %s304 = scalar_lea.vmem %s1, %s303
          // Predicated region
          $region56: #{augmenter_forward.13} parent=54 // pred_check
            _
          $region57: #{augmenter_forward.13} parent=54 // pred_check_branch
            %306 = sbr.rel (0) target = $region59
          $region58: #{augmenter_forward.13} parent=54 // pred_region
            // Predicated region
            $region60: #{augmenter_forward.13} parent=58 // pred_check
              _
            $region61: #{augmenter_forward.13} parent=58 // pred_check_branch
              %308 = sbr.rel (0) target = $region63
            $region62: #{augmenter_forward.13} parent=58 // pred_region
              loop: start=0, step=1, limit=1
              $region64: #{augmenter_forward.13} parent=62 // loop_pre_header
                _
              $region65: #{augmenter_forward.13} parent=62 // loop_header
                %s310 = sphi 0, %s314
                %p311 = scmp.ge.s32.totalorder %s310, 1
                %s315 = sphi %s304, %s304
                %s316 = sphi %s300, %s300
              $region66: #{augmenter_forward.13} parent=62 // loop_header_branch
                %313 = sbr.rel (%p311) target = $region70
              $region67: #{augmenter_forward.13} parent=62 // loop_body
                %v317 = vld [vmem:[%s315] sm:$0xff]
                %318 = vst [vmem:[%s316] sm:$0xff] %v317
                %v319 = vld [vmem:[%s315 + $0x8] sm:$0xff]
                %320 = vst [vmem:[%s316 + $0x8] sm:$0xff] %v319
                %v321 = vld [vmem:[%s315 + $0x10] sm:$0xff]
                %322 = vst [vmem:[%s316 + $0x10] sm:$0xff] %v321
                %v323 = vld [vmem:[%s315 + $0x18] sm:$0xff]
                %324 = vst [vmem:[%s316 + $0x18] sm:$0xff] %v323
                %v325 = vld [vmem:[%s315 + $0x60] sm:$0xff]
                %326 = vst [vmem:[%s316 + $0x20] sm:$0xff] %v325
                %v327 = vld [vmem:[%s315 + $0x68] sm:$0xff]
                %328 = vst [vmem:[%s316 + $0x28] sm:$0xff] %v327
                %v329 = vld [vmem:[%s315 + $0x70] sm:$0xff]
                %330 = vst [vmem:[%s316 + $0x30] sm:$0xff] %v329
                %v331 = vld [vmem:[%s315 + $0x78] sm:$0xff]
                %332 = vst [vmem:[%s316 + $0x38] sm:$0xff] %v331
                %v333 = vld [vmem:[%s315 + $0xc0] sm:$0xff]
                %334 = vst [vmem:[%s316 + $0x40] sm:$0xff] %v333
                %v335 = vld [vmem:[%s315 + $0xc8] sm:$0xff]
                %336 = vst [vmem:[%s316 + $0x48] sm:$0xff] %v335
                %v337 = vld [vmem:[%s315 + $0xd0] sm:$0xff]
                %338 = vst [vmem:[%s316 + $0x50] sm:$0xff] %v337
                %v339 = vld [vmem:[%s315 + $0xd8] sm:$0xff]
                %340 = vst [vmem:[%s316 + $0x58] sm:$0xff] %v339
                %v341 = vld [vmem:[%s315 + $0x120] sm:$0xff]
                %342 = vst [vmem:[%s316 + $0x60] sm:$0xff] %v341
                %v343 = vld [vmem:[%s315 + $0x128] sm:$0xff]
                %344 = vst [vmem:[%s316 + $0x68] sm:$0xff] %v343
                %v345 = vld [vmem:[%s315 + $0x130] sm:$0xff]
                %346 = vst [vmem:[%s316 + $0x70] sm:$0xff] %v345
                %v347 = vld [vmem:[%s315 + $0x138] sm:$0xff]
                %348 = vst [vmem:[%s316 + $0x78] sm:$0xff] %v347
              $region68: #{augmenter_forward.13} parent=62 // loop_footer
                %s314 = sadd.s32 1, %s310
              $region69: #{augmenter_forward.13} parent=62 // loop_footer_branch
                %309 = sbr.rel target = $region65
              $region70: #{augmenter_forward.13} parent=62 // loop_exit
                _
            $region63: #{augmenter_forward.13} parent=58 // pred_fallthru
              _
            // Predicated region
            $region71: #{augmenter_forward.13} parent=58 // pred_check
              _
            $region72: #{augmenter_forward.13} parent=58 // pred_check_branch
              %350 = sbr.rel target = $region74
            $region73: #{augmenter_forward.13} parent=58 // pred_region
              _
            $region74: #{augmenter_forward.13} parent=58 // pred_fallthru
              _
          $region59: #{augmenter_forward.13} parent=54 // pred_fallthru
            _
          %351 = vnop
        $region55: #{augmenter_forward.13} parent=27 // pred_fallthru
          _
        // Predicated region
        $region75: #{augmenter_forward.13} parent=27 // pred_check
          %p352 = pneg %p130
        $region76: #{augmenter_forward.13} parent=27 // pred_check_branch
          %354 = sbr.rel (%p352) target = $region78
        $region77: #{augmenter_forward.13} parent=27 // pred_region
          %s355 = sand.u32 %s120, 1
          %s356 = sand.u32 %s120, 1
          %s357 = smul.addr %s356, 128
          %s358 = scalar_lea.vmem [#allocation5], %s357
          %s359 = smul.u32 4, %s14
          %s360 = smul.addr %s359, 8
          %s361 = scalar_lea.vmem %s4, %s360
          // Predicated region
          $region79: #{augmenter_forward.13} parent=77 // pred_check
            _
          $region80: #{augmenter_forward.13} parent=77 // pred_check_branch
            %363 = sbr.rel (0) target = $region82
          $region81: #{augmenter_forward.13} parent=77 // pred_region
            // Predicated region
            $region83: #{augmenter_forward.13} parent=81 // pred_check
              _
            $region84: #{augmenter_forward.13} parent=81 // pred_check_branch
              %365 = sbr.rel (0) target = $region86
            $region85: #{augmenter_forward.13} parent=81 // pred_region
              loop: start=0, step=1, limit=1
              $region87: #{augmenter_forward.13} parent=85 // loop_pre_header
                _
              $region88: #{augmenter_forward.13} parent=85 // loop_header
                %s367 = sphi 0, %s371
                %p368 = scmp.ge.s32.totalorder %s367, 1
                %s372 = sphi %s361, %s361
                %s373 = sphi %s358, %s358
              $region89: #{augmenter_forward.13} parent=85 // loop_header_branch
                %370 = sbr.rel (%p368) target = $region93
              $region90: #{augmenter_forward.13} parent=85 // loop_body
                %v374 = vld [vmem:[%s372] sm:$0xff]
                %375 = vst [vmem:[%s373] sm:$0xff] %v374
                %v376 = vld [vmem:[%s372 + $0x8] sm:$0xff]
                %377 = vst [vmem:[%s373 + $0x8] sm:$0xff] %v376
                %v378 = vld [vmem:[%s372 + $0x10] sm:$0xff]
                %379 = vst [vmem:[%s373 + $0x10] sm:$0xff] %v378
                %v380 = vld [vmem:[%s372 + $0x18] sm:$0xff]
                %381 = vst [vmem:[%s373 + $0x18] sm:$0xff] %v380
                %v382 = vld [vmem:[%s372 + $0x40] sm:$0xff]
                %383 = vst [vmem:[%s373 + $0x20] sm:$0xff] %v382
                %v384 = vld [vmem:[%s372 + $0x48] sm:$0xff]
                %385 = vst [vmem:[%s373 + $0x28] sm:$0xff] %v384
                %v386 = vld [vmem:[%s372 + $0x50] sm:$0xff]
                %387 = vst [vmem:[%s373 + $0x30] sm:$0xff] %v386
                %v388 = vld [vmem:[%s372 + $0x58] sm:$0xff]
                %389 = vst [vmem:[%s373 + $0x38] sm:$0xff] %v388
                %v390 = vld [vmem:[%s372 + $0x80] sm:$0xff]
                %391 = vst [vmem:[%s373 + $0x40] sm:$0xff] %v390
                %v392 = vld [vmem:[%s372 + $0x88] sm:$0xff]
                %393 = vst [vmem:[%s373 + $0x48] sm:$0xff] %v392
                %v394 = vld [vmem:[%s372 + $0x90] sm:$0xff]
                %395 = vst [vmem:[%s373 + $0x50] sm:$0xff] %v394
                %v396 = vld [vmem:[%s372 + $0x98] sm:$0xff]
                %397 = vst [vmem:[%s373 + $0x58] sm:$0xff] %v396
                %v398 = vld [vmem:[%s372 + $0xc0] sm:$0xff]
                %399 = vst [vmem:[%s373 + $0x60] sm:$0xff] %v398
                %v400 = vld [vmem:[%s372 + $0xc8] sm:$0xff]
                %401 = vst [vmem:[%s373 + $0x68] sm:$0xff] %v400
                %v402 = vld [vmem:[%s372 + $0xd0] sm:$0xff]
                %403 = vst [vmem:[%s373 + $0x70] sm:$0xff] %v402
                %v404 = vld [vmem:[%s372 + $0xd8] sm:$0xff]
                %405 = vst [vmem:[%s373 + $0x78] sm:$0xff] %v404
              $region91: #{augmenter_forward.13} parent=85 // loop_footer
                %s371 = sadd.s32 1, %s367
              $region92: #{augmenter_forward.13} parent=85 // loop_footer_branch
                %366 = sbr.rel target = $region88
              $region93: #{augmenter_forward.13} parent=85 // loop_exit
                _
            $region86: #{augmenter_forward.13} parent=81 // pred_fallthru
              _
            // Predicated region
            $region94: #{augmenter_forward.13} parent=81 // pred_check
              _
            $region95: #{augmenter_forward.13} parent=81 // pred_check_branch
              %407 = sbr.rel target = $region97
            $region96: #{augmenter_forward.13} parent=81 // pred_region
              _
            $region97: #{augmenter_forward.13} parent=81 // pred_fallthru
              _
          $region82: #{augmenter_forward.13} parent=77 // pred_fallthru
            _
          %408 = vnop
        $region78: #{augmenter_forward.13} parent=27 // pred_fallthru
          _
      $region28: #{augmenter_forward.13} parent=5 // pred_fallthru
        _
      %p409 = scmp.le.s32.totalorder 1, %s14
      %p410 = scmp.lt.s32.totalorder %s14, 3
      %p411 = pnand %p409, %p410
      %p412 = pneg %p411
      // Predicated region
      $region98: #{augmenter_forward.13} parent=5 // pred_check
        _
      $region99: #{augmenter_forward.13} parent=5 // pred_check_branch
        %414 = sbr.rel (%p411) target = $region101
      $region100: #{augmenter_forward.13} parent=5 // pred_region
        %s415 = ssub.s32 %s14, 1
        %s416 = sand.u32 %s27, 1
        %s417 = sand.u32 %s27, 1
        %s418 = smul.addr %s417, 128
        %s419 = scalar_lea.vmem [#allocation3], %s418
        // Predicated region
        $region102: #{augmenter_forward.13} parent=100 // pred_check
          %p420 = pneg %p40
        $region103: #{augmenter_forward.13} parent=100 // pred_check_branch
          %422 = sbr.rel (%p420) target = $region105
        $region104: #{augmenter_forward.13} parent=100 // pred_region
          _
        $region105: #{augmenter_forward.13} parent=100 // pred_fallthru
          _
        %s423 = sand.u32 %s55, 1
        %s424 = sand.u32 %s55, 1
        %s425 = smul.addr %s424, 128
        %s426 = scalar_lea.vmem [#allocation4], %s425
        // Predicated region
        $region106: #{augmenter_forward.13} parent=100 // pred_check
          %p427 = pneg %p68
        $region107: #{augmenter_forward.13} parent=100 // pred_check_branch
          %429 = sbr.rel (%p427) target = $region109
        $region108: #{augmenter_forward.13} parent=100 // pred_region
          _
        $region109: #{augmenter_forward.13} parent=100 // pred_fallthru
          _
        %s430 = sand.u32 %s123, 1
        %s431 = sand.u32 %s123, 1
        %s432 = smul.addr %s431, 128
        %s433 = scalar_lea.vmem [#allocation5], %s432
        // Predicated region
        $region110: #{augmenter_forward.13} parent=100 // pred_check
          %p434 = pneg %p136
        $region111: #{augmenter_forward.13} parent=100 // pred_check_branch
          %436 = sbr.rel (%p434) target = $region113
        $region112: #{augmenter_forward.13} parent=100 // pred_region
          _
        $region113: #{augmenter_forward.13} parent=100 // pred_fallthru
          _
        %s437 = sand.u32 %s27, 1
        %s438 = sand.u32 %s27, 1
        %s439 = smul.addr %s438, 128
        %s440 = scalar_lea.vmem [#allocation3], %s439
        %p441 = pneg %p40
        %p442 = pneg %p37
        %s443 = sand.u32 %s55, 1
        %s444 = sand.u32 %s55, 1
        %s445 = smul.addr %s444, 128
        %s446 = scalar_lea.vmem [#allocation4], %s445
        %p447 = pneg %p68
        %p448 = pneg %p65
        %p449 = pneg %p89
        %p450 = pneg %p86
        %p451 = pneg %p110
        %p452 = pneg %p107
        %s453 = sand.u32 %s123, 1
        %s454 = sand.u32 %s123, 1
        %s455 = smul.addr %s454, 128
        %s456 = scalar_lea.vmem [#allocation5], %s455
        %p457 = pneg %p136
        %p458 = pneg %p133
        %p459 = pneg %p157
        %p460 = pneg %p154
        %p461 = pneg %p183
        %p462 = pneg %p180
        %s463 = sand.u32 %s170, 1
        %s464 = sand.u32 %s170, 1
        %s465 = smul.addr %s464, 128
        %s466 = scalar_lea.vmem [#allocation6], %s465
        %p467 = pneg %p209
        %p468 = pneg %p206
        %s469 = smul.u32 4, %s19
        %p470 = scmp.lt.s32.totalorder %s469, 7
        %s471 = scalar_select %p470, %s469, 7
        %s472 = smul.addr %s471, 4
        %s473 = scalar_lea.vmem %s7, %s472
        %s474 = smul.u32 4, %s19
        %s475 = sadd.s32 %s19, 1
        %s476 = smul.u32 4, %s475
        %s477 = smul.u32 4, %s19
        %s478 = smul.u32 4, %s19
        %s479 = smul.u32 4, %s19
        %p480 = scmp.lt.s32.totalorder %s479, 7
        %s481 = scalar_select %p480, %s479, 7
        %s482 = smul.addr %s481, 4
        %s483 = scalar_lea.vmem %s7, %s482
        %s484 = smul.u32 4, %s19
        %v485 = vld [vmem:[%s419] sm:$0xff]
        %v486 = vld [vmem:[%s419 + $0x8] sm:$0xff]
        %v487 = vld [vmem:[%s419 + $0x10] sm:$0xff]
        %v488 = vld [vmem:[%s419 + $0x18] sm:$0xff]
        %v489 = vld [vmem:[%s419 + $0x20] sm:$0xff]
        %v490 = vld [vmem:[%s419 + $0x28] sm:$0xff]
        %v491 = vld [vmem:[%s419 + $0x30] sm:$0xff]
        %v492 = vld [vmem:[%s419 + $0x38] sm:$0xff]
        %v493 = vld [vmem:[%s419 + $0x40] sm:$0xff]
        %v494 = vld [vmem:[%s419 + $0x48] sm:$0xff]
        %v495 = vld [vmem:[%s419 + $0x50] sm:$0xff]
        %v496 = vld [vmem:[%s419 + $0x58] sm:$0xff]
        %v497 = vld [vmem:[%s419 + $0x60] sm:$0xff]
        %v498 = vld [vmem:[%s419 + $0x68] sm:$0xff]
        %v499 = vld [vmem:[%s419 + $0x70] sm:$0xff]
        %v500 = vld [vmem:[%s419 + $0x78] sm:$0xff]
        %501 = vst [vmem:[#allocation2] sm:$0xff] %v485
        %502 = vst [vmem:[#allocation2 + $0x8] sm:$0xff] %v486
        %503 = vst [vmem:[#allocation2 + $0x10] sm:$0xff] %v487
        %504 = vst [vmem:[#allocation2 + $0x18] sm:$0xff] %v488
        %505 = vst [vmem:[#allocation2 + $0x40] sm:$0xff] %v489
        %506 = vst [vmem:[#allocation2 + $0x48] sm:$0xff] %v490
        %507 = vst [vmem:[#allocation2 + $0x50] sm:$0xff] %v491
        %508 = vst [vmem:[#allocation2 + $0x58] sm:$0xff] %v492
        %509 = vst [vmem:[#allocation2 + $0x80] sm:$0xff] %v493
        %510 = vst [vmem:[#allocation2 + $0x88] sm:$0xff] %v494
        %511 = vst [vmem:[#allocation2 + $0x90] sm:$0xff] %v495
        %512 = vst [vmem:[#allocation2 + $0x98] sm:$0xff] %v496
        %513 = vst [vmem:[#allocation2 + $0xc0] sm:$0xff] %v497
        %514 = vst [vmem:[#allocation2 + $0xc8] sm:$0xff] %v498
        %515 = vst [vmem:[#allocation2 + $0xd0] sm:$0xff] %v499
        %516 = vst [vmem:[#allocation2 + $0xd8] sm:$0xff] %v500
        %v517 = vld [vmem:[%s426] sm:$0xff]
        %v518 = vld [vmem:[%s426 + $0x8] sm:$0xff]
        %v519 = vld [vmem:[%s426 + $0x10] sm:$0xff]
        %v520 = vld [vmem:[%s426 + $0x18] sm:$0xff]
        %v521 = vld [vmem:[%s426 + $0x20] sm:$0xff]
        %v522 = vld [vmem:[%s426 + $0x28] sm:$0xff]
        %v523 = vld [vmem:[%s426 + $0x30] sm:$0xff]
        %v524 = vld [vmem:[%s426 + $0x38] sm:$0xff]
        %v525 = vld [vmem:[%s426 + $0x40] sm:$0xff]
        %v526 = vld [vmem:[%s426 + $0x48] sm:$0xff]
        %v527 = vld [vmem:[%s426 + $0x50] sm:$0xff]
        %v528 = vld [vmem:[%s426 + $0x58] sm:$0xff]
        %v529 = vld [vmem:[%s426 + $0x60] sm:$0xff]
        %v530 = vld [vmem:[%s426 + $0x68] sm:$0xff]
        %v531 = vld [vmem:[%s426 + $0x70] sm:$0xff]
        %v532 = vld [vmem:[%s426 + $0x78] sm:$0xff]
        %533 = vst [vmem:[#allocation2 + $0x20] sm:$0xff] %v517
        %534 = vst [vmem:[#allocation2 + $0x28] sm:$0xff] %v518
        %535 = vst [vmem:[#allocation2 + $0x30] sm:$0xff] %v519
        %536 = vst [vmem:[#allocation2 + $0x38] sm:$0xff] %v520
        %537 = vst [vmem:[#allocation2 + $0x60] sm:$0xff] %v521
        %538 = vst [vmem:[#allocation2 + $0x68] sm:$0xff] %v522
        %539 = vst [vmem:[#allocation2 + $0x70] sm:$0xff] %v523
        %540 = vst [vmem:[#allocation2 + $0x78] sm:$0xff] %v524
        %541 = vst [vmem:[#allocation2 + $0xa0] sm:$0xff] %v525
        %542 = vst [vmem:[#allocation2 + $0xa8] sm:$0xff] %v526
        %543 = vst [vmem:[#allocation2 + $0xb0] sm:$0xff] %v527
        %544 = vst [vmem:[#allocation2 + $0xb8] sm:$0xff] %v528
        %545 = vst [vmem:[#allocation2 + $0xe0] sm:$0xff] %v529
        %546 = vst [vmem:[#allocation2 + $0xe8] sm:$0xff] %v530
        %547 = vst [vmem:[#allocation2 + $0xf0] sm:$0xff] %v531
        %548 = vst [vmem:[#allocation2 + $0xf8] sm:$0xff] %v532
        %v549 = vld [vmem:[#allocation2] sm:$0xff]
        %v550 = vld [vmem:[#allocation2 + $0x8] sm:$0xff]
        %v551 = vld [vmem:[#allocation2 + $0x10] sm:$0xff]
        %v552 = vld [vmem:[#allocation2 + $0x18] sm:$0xff]
        %v553 = vld [vmem:[#allocation2 + $0x40] sm:$0xff]
        %v554 = vld [vmem:[#allocation2 + $0x48] sm:$0xff]
        %v555 = vld [vmem:[#allocation2 + $0x50] sm:$0xff]
        %v556 = vld [vmem:[#allocation2 + $0x58] sm:$0xff]
        %v557 = vld [vmem:[#allocation2 + $0x80] sm:$0xff]
        %v558 = vld [vmem:[#allocation2 + $0x88] sm:$0xff]
        %v559 = vld [vmem:[#allocation2 + $0x90] sm:$0xff]
        %v560 = vld [vmem:[#allocation2 + $0x98] sm:$0xff]
        %v561 = vld [vmem:[#allocation2 + $0xc0] sm:$0xff]
        %v562 = vld [vmem:[#allocation2 + $0xc8] sm:$0xff]
        %v563 = vld [vmem:[#allocation2 + $0xd0] sm:$0xff]
        %v564 = vld [vmem:[#allocation2 + $0xd8] sm:$0xff]
        %v565 = vld [vmem:[%s2] sm:$0xff]
        %v566 = vld [vmem:[%s2 + $0x8] sm:$0xff]
        %v567 = vld [vmem:[%s2 + $0x10] sm:$0xff]
        %v568 = vld [vmem:[%s2 + $0x18] sm:$0xff]
        %v569 = vld [vmem:[#allocation2 + $0x20] sm:$0xff]
        %v570 = vld [vmem:[#allocation2 + $0x60] sm:$0xff]
        %v571 = vld [vmem:[#allocation2 + $0xa0] sm:$0xff]
        %v572 = vld [vmem:[#allocation2 + $0xe0] sm:$0xff]
        %s573 = scalar_lea.vmem %s2, 32
        %v574 = vld [vmem:[%s573] sm:$0xff]
        %v575 = vld [vmem:[%s573 + $0x8] sm:$0xff]
        %v576 = vld [vmem:[%s573 + $0x10] sm:$0xff]
        %v577 = vld [vmem:[%s573 + $0x18] sm:$0xff]
        %598 = vrot.lane.b32.xlu0 %v549, 127
        %v599 = vpop.permute.xlu0 %598
        %600 = vrot.lane.b32.xlu0 %v550, 127
        %v601 = vpop.permute.xlu0 %600
        %602 = vrot.lane.b32.xlu0 %v551, 127
        %v603 = vpop.permute.xlu0 %602
        %604 = vrot.lane.b32.xlu0 %v552, 127
        %v605 = vpop.permute.xlu0 %604
        %606 = vrot.lane.b32.xlu0 %v569, 127
        %v607 = vpop.permute.xlu0 %606
        %608 = vrot.lane.b32.xlu0 %v553, 127
        %v609 = vpop.permute.xlu0 %608
        %610 = vrot.lane.b32.xlu0 %v554, 127
        %v611 = vpop.permute.xlu0 %610
        %612 = vrot.lane.b32.xlu0 %v555, 127
        %v613 = vpop.permute.xlu0 %612
        %614 = vrot.lane.b32.xlu0 %v556, 127
        %v615 = vpop.permute.xlu0 %614
        %616 = vrot.lane.b32.xlu0 %v570, 127
        %v617 = vpop.permute.xlu0 %616
        %618 = vrot.lane.b32.xlu0 %v557, 127
        %v619 = vpop.permute.xlu0 %618
        %620 = vrot.lane.b32.xlu0 %v558, 127
        %v621 = vpop.permute.xlu0 %620
        %622 = vrot.lane.b32.xlu0 %v559, 127
        %v623 = vpop.permute.xlu0 %622
        %624 = vrot.lane.b32.xlu0 %v560, 127
        %v625 = vpop.permute.xlu0 %624
        %626 = vrot.lane.b32.xlu0 %v571, 127
        %v627 = vpop.permute.xlu0 %626
        %628 = vrot.lane.b32.xlu0 %v561, 127
        %v629 = vpop.permute.xlu0 %628
        %630 = vrot.lane.b32.xlu0 %v562, 127
        %v631 = vpop.permute.xlu0 %630
        %632 = vrot.lane.b32.xlu0 %v563, 127
        %v633 = vpop.permute.xlu0 %632
        %634 = vrot.lane.b32.xlu0 %v564, 127
        %v635 = vpop.permute.xlu0 %634
        %636 = vrot.lane.b32.xlu0 %v572, 127
        %v637 = vpop.permute.xlu0 %636
        %vm638 = vcmask 1039360
        %v639 = vsel %vm638, %v599, %v601
        %v640 = vsel %vm638, %v601, %v603
        %v641 = vsel %vm638, %v603, %v605
        %v642 = vsel %vm638, %v605, %v607
        %v643 = vsel %vm638, %v609, %v611
        %v644 = vsel %vm638, %v611, %v613
        %v645 = vsel %vm638, %v613, %v615
        %v646 = vsel %vm638, %v615, %v617
        %v647 = vsel %vm638, %v619, %v621
        %v648 = vsel %vm638, %v621, %v623
        %v649 = vsel %vm638, %v623, %v625
        %v650 = vsel %vm638, %v625, %v627
        %v651 = vsel %vm638, %v629, %v631
        %v652 = vsel %vm638, %v631, %v633
        %v653 = vsel %vm638, %v633, %v635
        %v654 = vsel %vm638, %v635, %v637
        %vm671 = vcmask 261120
        %v673 = vsel %vm671, %v574, 0
        %v676 = vsel %vm671, %v575, 0
        %v679 = vsel %vm671, %v576, 0
        %v682 = vsel %vm671, %v577, 0
        %684 = vmatpush.msra.mxu0 0.0
        %685 = vmatpush.msra.mxu0 0.0
        %686 = vmatpush.msra.mxu0 0.0
        %687 = vmatpush.msra.mxu0 0.0
        %688 = vmatpush.msra.mxu0 0.0
        %689 = vmatpush.msra.mxu0 0.0
        %690 = vmatpush.msra.mxu0 0.0
        %691 = vmatpush.msra.mxu0 0.0
        %692 = vmatpush.msra.mxu0 0.0
        %693 = vmatpush.msra.mxu0 0.0
        %694 = vmatpush.msra.mxu0 0.0
        %695 = vmatpush.msra.mxu0 0.0
        %696 = vmatpush.msra.mxu0 %v651
        %697 = vmatpush.msra.mxu0 %v647
        %698 = vmatpush.msra.mxu0 %v643
        %699 = vmatpush.msra.mxu0 %v639
        %700 = vmatmul.f32.gmra.mxu0 %v673
        %v701 = vpop.f32.mrf.mxu0
        %v702 = vadd.f32 0.0, %v701
        %703 = vmatmul.f32.gmra.mxu0 %v676
        %v704 = vpop.f32.mrf.mxu0
        %v705 = vadd.f32 0.0, %v704
        %706 = vmatmul.f32.gmra.mxu0 %v679
        %v707 = vpop.f32.mrf.mxu0
        %v708 = vadd.f32 0.0, %v707
        %709 = vmatmul.f32.gmra.mxu0 %v682
        %v710 = vpop.f32.mrf.mxu0
        %v711 = vadd.f32 0.0, %v710
        %712 = vdwg.mxu0
        %713 = vmatpush.msra.mxu0 0.0
        %714 = vmatpush.msra.mxu0 0.0
        %715 = vmatpush.msra.mxu0 0.0
        %716 = vmatpush.msra.mxu0 0.0
        %717 = vmatpush.msra.mxu0 0.0
        %718 = vmatpush.msra.mxu0 0.0
        %719 = vmatpush.msra.mxu0 0.0
        %720 = vmatpush.msra.mxu0 0.0
        %721 = vmatpush.msra.mxu0 0.0
        %722 = vmatpush.msra.mxu0 0.0
        %723 = vmatpush.msra.mxu0 0.0
        %724 = vmatpush.msra.mxu0 0.0
        %725 = vmatpush.msra.mxu0 %v652
        %726 = vmatpush.msra.mxu0 %v648
        %727 = vmatpush.msra.mxu0 %v644
        %728 = vmatpush.msra.mxu0 %v640
        %729 = vmatmul.f32.gmra.mxu0 %v673
        %v730 = vpop.f32.mrf.mxu0
        %v731 = vadd.f32 0.0, %v730
        %732 = vmatmul.f32.gmra.mxu0 %v676
        %v733 = vpop.f32.mrf.mxu0
        %v734 = vadd.f32 0.0, %v733
        %735 = vmatmul.f32.gmra.mxu0 %v679
        %v736 = vpop.f32.mrf.mxu0
        %v737 = vadd.f32 0.0, %v736
        %738 = vmatmul.f32.gmra.mxu0 %v682
        %v739 = vpop.f32.mrf.mxu0
        %v740 = vadd.f32 0.0, %v739
        %741 = vdwg.mxu0
        %742 = vmatpush.msra.mxu0 0.0
        %743 = vmatpush.msra.mxu0 0.0
        %744 = vmatpush.msra.mxu0 0.0
        %745 = vmatpush.msra.mxu0 0.0
        %746 = vmatpush.msra.mxu0 0.0
        %747 = vmatpush.msra.mxu0 0.0
        %748 = vmatpush.msra.mxu0 0.0
        %749 = vmatpush.msra.mxu0 0.0
        %750 = vmatpush.msra.mxu0 0.0
        %751 = vmatpush.msra.mxu0 0.0
        %752 = vmatpush.msra.mxu0 0.0
        %753 = vmatpush.msra.mxu0 0.0
        %754 = vmatpush.msra.mxu0 %v653
        %755 = vmatpush.msra.mxu0 %v649
        %756 = vmatpush.msra.mxu0 %v645
        %757 = vmatpush.msra.mxu0 %v641
        %758 = vmatmul.f32.gmra.mxu0 %v673
        %v759 = vpop.f32.mrf.mxu0
        %v760 = vadd.f32 0.0, %v759
        %761 = vmatmul.f32.gmra.mxu0 %v676
        %v762 = vpop.f32.mrf.mxu0
        %v763 = vadd.f32 0.0, %v762
        %764 = vmatmul.f32.gmra.mxu0 %v679
        %v765 = vpop.f32.mrf.mxu0
        %v766 = vadd.f32 0.0, %v765
        %767 = vmatmul.f32.gmra.mxu0 %v682
        %v768 = vpop.f32.mrf.mxu0
        %v769 = vadd.f32 0.0, %v768
        %770 = vdwg.mxu0
        %771 = vmatpush.msra.mxu0 0.0
        %772 = vmatpush.msra.mxu0 0.0
        %773 = vmatpush.msra.mxu0 0.0
        %774 = vmatpush.msra.mxu0 0.0
        %775 = vmatpush.msra.mxu0 0.0
        %776 = vmatpush.msra.mxu0 0.0
        %777 = vmatpush.msra.mxu0 0.0
        %778 = vmatpush.msra.mxu0 0.0
        %779 = vmatpush.msra.mxu0 0.0
        %780 = vmatpush.msra.mxu0 0.0
        %781 = vmatpush.msra.mxu0 0.0
        %782 = vmatpush.msra.mxu0 0.0
        %783 = vmatpush.msra.mxu0 %v654
        %784 = vmatpush.msra.mxu0 %v650
        %785 = vmatpush.msra.mxu0 %v646
        %786 = vmatpush.msra.mxu0 %v642
        %787 = vmatmul.f32.gmra.mxu0 %v673
        %v788 = vpop.f32.mrf.mxu0
        %v789 = vadd.f32 0.0, %v788
        %790 = vmatmul.f32.gmra.mxu0 %v676
        %v791 = vpop.f32.mrf.mxu0
        %v792 = vadd.f32 0.0, %v791
        %793 = vmatmul.f32.gmra.mxu0 %v679
        %v794 = vpop.f32.mrf.mxu0
        %v795 = vadd.f32 0.0, %v794
        %796 = vmatmul.f32.gmra.mxu0 %v682
        %v797 = vpop.f32.mrf.mxu0
        %v798 = vadd.f32 0.0, %v797
        %799 = vdwg.mxu0
        %v801 = vsel %vm671, %v565, 0
        %v804 = vsel %vm671, %v566, 0
        %v807 = vsel %vm671, %v567, 0
        %v810 = vsel %vm671, %v568, 0
        %812 = vmatpush.msra.mxu0 0.0
        %813 = vmatpush.msra.mxu0 0.0
        %814 = vmatpush.msra.mxu0 0.0
        %815 = vmatpush.msra.mxu0 0.0
        %816 = vmatpush.msra.mxu0 0.0
        %817 = vmatpush.msra.mxu0 0.0
        %818 = vmatpush.msra.mxu0 0.0
        %819 = vmatpush.msra.mxu0 0.0
        %820 = vmatpush.msra.mxu0 0.0
        %821 = vmatpush.msra.mxu0 0.0
        %822 = vmatpush.msra.mxu0 0.0
        %823 = vmatpush.msra.mxu0 0.0
        %824 = vmatpush.msra.mxu0 %v561
        %825 = vmatpush.msra.mxu0 %v557
        %826 = vmatpush.msra.mxu0 %v553
        %827 = vmatpush.msra.mxu0 %v549
        %828 = vmatmul.f32.gmra.mxu0 %v801
        %v829 = vpop.f32.mrf.mxu0
        %v830 = vadd.f32 %v702, %v829
        %831 = vmatmul.f32.gmra.mxu0 %v804
        %v832 = vpop.f32.mrf.mxu0
        %v833 = vadd.f32 %v705, %v832
        %834 = vmatmul.f32.gmra.mxu0 %v807
        %v835 = vpop.f32.mrf.mxu0
        %v836 = vadd.f32 %v708, %v835
        %837 = vmatmul.f32.gmra.mxu0 %v810
        %v838 = vpop.f32.mrf.mxu0
        %v839 = vadd.f32 %v711, %v838
        %840 = vdwg.mxu0
        %841 = vmatpush.msra.mxu0 0.0
        %842 = vmatpush.msra.mxu0 0.0
        %843 = vmatpush.msra.mxu0 0.0
        %844 = vmatpush.msra.mxu0 0.0
        %845 = vmatpush.msra.mxu0 0.0
        %846 = vmatpush.msra.mxu0 0.0
        %847 = vmatpush.msra.mxu0 0.0
        %848 = vmatpush.msra.mxu0 0.0
        %849 = vmatpush.msra.mxu0 0.0
        %850 = vmatpush.msra.mxu0 0.0
        %851 = vmatpush.msra.mxu0 0.0
        %852 = vmatpush.msra.mxu0 0.0
        %853 = vmatpush.msra.mxu0 %v562
        %854 = vmatpush.msra.mxu0 %v558
        %855 = vmatpush.msra.mxu0 %v554
        %856 = vmatpush.msra.mxu0 %v550
        %857 = vmatmul.f32.gmra.mxu0 %v801
        %v858 = vpop.f32.mrf.mxu0
        %v859 = vadd.f32 %v731, %v858
        %860 = vmatmul.f32.gmra.mxu0 %v804
        %v861 = vpop.f32.mrf.mxu0
        %v862 = vadd.f32 %v734, %v861
        %863 = vmatmul.f32.gmra.mxu0 %v807
        %v864 = vpop.f32.mrf.mxu0
        %v865 = vadd.f32 %v737, %v864
        %866 = vmatmul.f32.gmra.mxu0 %v810
        %v867 = vpop.f32.mrf.mxu0
        %v868 = vadd.f32 %v740, %v867
        %869 = vdwg.mxu0
        %870 = vmatpush.msra.mxu0 0.0
        %871 = vmatpush.msra.mxu0 0.0
        %872 = vmatpush.msra.mxu0 0.0
        %873 = vmatpush.msra.mxu0 0.0
        %874 = vmatpush.msra.mxu0 0.0
        %875 = vmatpush.msra.mxu0 0.0
        %876 = vmatpush.msra.mxu0 0.0
        %877 = vmatpush.msra.mxu0 0.0
        %878 = vmatpush.msra.mxu0 0.0
        %879 = vmatpush.msra.mxu0 0.0
        %880 = vmatpush.msra.mxu0 0.0
        %881 = vmatpush.msra.mxu0 0.0
        %882 = vmatpush.msra.mxu0 %v563
        %883 = vmatpush.msra.mxu0 %v559
        %884 = vmatpush.msra.mxu0 %v555
        %885 = vmatpush.msra.mxu0 %v551
        %886 = vmatmul.f32.gmra.mxu0 %v801
        %v887 = vpop.f32.mrf.mxu0
        %v888 = vadd.f32 %v760, %v887
        %889 = vmatmul.f32.gmra.mxu0 %v804
        %v890 = vpop.f32.mrf.mxu0
        %v891 = vadd.f32 %v763, %v890
        %892 = vmatmul.f32.gmra.mxu0 %v807
        %v893 = vpop.f32.mrf.mxu0
        %v894 = vadd.f32 %v766, %v893
        %895 = vmatmul.f32.gmra.mxu0 %v810
        %v896 = vpop.f32.mrf.mxu0
        %v897 = vadd.f32 %v769, %v896
        %898 = vdwg.mxu0
        %899 = vmatpush.msra.mxu0 0.0
        %900 = vmatpush.msra.mxu0 0.0
        %901 = vmatpush.msra.mxu0 0.0
        %902 = vmatpush.msra.mxu0 0.0
        %903 = vmatpush.msra.mxu0 0.0
        %904 = vmatpush.msra.mxu0 0.0
        %905 = vmatpush.msra.mxu0 0.0
        %906 = vmatpush.msra.mxu0 0.0
        %907 = vmatpush.msra.mxu0 0.0
        %908 = vmatpush.msra.mxu0 0.0
        %909 = vmatpush.msra.mxu0 0.0
        %910 = vmatpush.msra.mxu0 0.0
        %911 = vmatpush.msra.mxu0 %v564
        %912 = vmatpush.msra.mxu0 %v560
        %913 = vmatpush.msra.mxu0 %v556
        %914 = vmatpush.msra.mxu0 %v552
        %915 = vmatmul.f32.gmra.mxu0 %v801
        %v916 = vpop.f32.mrf.mxu0
        %v917 = vadd.f32 %v789, %v916
        %918 = vmatmul.f32.gmra.mxu0 %v804
        %v919 = vpop.f32.mrf.mxu0
        %v920 = vadd.f32 %v792, %v919
        %921 = vmatmul.f32.gmra.mxu0 %v807
        %v922 = vpop.f32.mrf.mxu0
        %v923 = vadd.f32 %v795, %v922
        %924 = vmatmul.f32.gmra.mxu0 %v810
        %v925 = vpop.f32.mrf.mxu0
        %v926 = vadd.f32 %v798, %v925
        %927 = vdwg.mxu0
        %s928 = scalar_lea.vmem %s2, 64
        %v929 = vld [vmem:[%s928] sm:$0xff]
        %v930 = vld [vmem:[%s928 + $0x8] sm:$0xff]
        %v931 = vld [vmem:[%s928 + $0x10] sm:$0xff]
        %v932 = vld [vmem:[%s928 + $0x18] sm:$0xff]
        %933 = vrot.lane.b32.xlu0 %v549, 126
        %v934 = vpop.permute.xlu0 %933
        %935 = vrot.lane.b32.xlu0 %v550, 126
        %v936 = vpop.permute.xlu0 %935
        %937 = vrot.lane.b32.xlu0 %v551, 126
        %v938 = vpop.permute.xlu0 %937
        %939 = vrot.lane.b32.xlu0 %v552, 126
        %v940 = vpop.permute.xlu0 %939
        %941 = vrot.lane.b32.xlu0 %v569, 126
        %v942 = vpop.permute.xlu0 %941
        %943 = vrot.lane.b32.xlu0 %v553, 126
        %v944 = vpop.permute.xlu0 %943
        %945 = vrot.lane.b32.xlu0 %v554, 126
        %v946 = vpop.permute.xlu0 %945
        %947 = vrot.lane.b32.xlu0 %v555, 126
        %v948 = vpop.permute.xlu0 %947
        %949 = vrot.lane.b32.xlu0 %v556, 126
        %v950 = vpop.permute.xlu0 %949
        %951 = vrot.lane.b32.xlu0 %v570, 126
        %v952 = vpop.permute.xlu0 %951
        %953 = vrot.lane.b32.xlu0 %v557, 126
        %v954 = vpop.permute.xlu0 %953
        %955 = vrot.lane.b32.xlu0 %v558, 126
        %v956 = vpop.permute.xlu0 %955
        %957 = vrot.lane.b32.xlu0 %v559, 126
        %v958 = vpop.permute.xlu0 %957
        %959 = vrot.lane.b32.xlu0 %v560, 126
        %v960 = vpop.permute.xlu0 %959
        %961 = vrot.lane.b32.xlu0 %v571, 126
        %v962 = vpop.permute.xlu0 %961
        %963 = vrot.lane.b32.xlu0 %v561, 126
        %v964 = vpop.permute.xlu0 %963
        %965 = vrot.lane.b32.xlu0 %v562, 126
        %v966 = vpop.permute.xlu0 %965
        %967 = vrot.lane.b32.xlu0 %v563, 126
        %v968 = vpop.permute.xlu0 %967
        %969 = vrot.lane.b32.xlu0 %v564, 126
        %v970 = vpop.permute.xlu0 %969
        %971 = vrot.lane.b32.xlu0 %v572, 126
        %v972 = vpop.permute.xlu0 %971
        %vm973 = vcmask 1031168
        %v974 = vsel %vm973, %v934, %v936
        %v975 = vsel %vm973, %v936, %v938
        %v976 = vsel %vm973, %v938, %v940
        %v977 = vsel %vm973, %v940, %v942
        %v978 = vsel %vm973, %v944, %v946
        %v979 = vsel %vm973, %v946, %v948
        %v980 = vsel %vm973, %v948, %v950
        %v981 = vsel %vm973, %v950, %v952
        %v982 = vsel %vm973, %v954, %v956
        %v983 = vsel %vm973, %v956, %v958
        %v984 = vsel %vm973, %v958, %v960
        %v985 = vsel %vm973, %v960, %v962
        %v986 = vsel %vm973, %v964, %v966
        %v987 = vsel %vm973, %v966, %v968
        %v988 = vsel %vm973, %v968, %v970
        %v989 = vsel %vm973, %v970, %v972
        %v1007 = vsel %vm671, %v929, 0
        %v1010 = vsel %vm671, %v930, 0
        %v1013 = vsel %vm671, %v931, 0
        %v1016 = vsel %vm671, %v932, 0
        %1018 = vmatpush.msra.mxu0 0.0
        %1019 = vmatpush.msra.mxu0 0.0
        %1020 = vmatpush.msra.mxu0 0.0
        %1021 = vmatpush.msra.mxu0 0.0
        %1022 = vmatpush.msra.mxu0 0.0
        %1023 = vmatpush.msra.mxu0 0.0
        %1024 = vmatpush.msra.mxu0 0.0
        %1025 = vmatpush.msra.mxu0 0.0
        %1026 = vmatpush.msra.mxu0 0.0
        %1027 = vmatpush.msra.mxu0 0.0
        %1028 = vmatpush.msra.mxu0 0.0
        %1029 = vmatpush.msra.mxu0 0.0
        %1030 = vmatpush.msra.mxu0 %v986
        %1031 = vmatpush.msra.mxu0 %v982
        %1032 = vmatpush.msra.mxu0 %v978
        %1033 = vmatpush.msra.mxu0 %v974
        %1034 = vmatmul.f32.gmra.mxu0 %v1007
        %v1035 = vpop.f32.mrf.mxu0
        %v1036 = vadd.f32 0.0, %v1035
        %1037 = vmatmul.f32.gmra.mxu0 %v1010
        %v1038 = vpop.f32.mrf.mxu0
        %v1039 = vadd.f32 0.0, %v1038
        %1040 = vmatmul.f32.gmra.mxu0 %v1013
        %v1041 = vpop.f32.mrf.mxu0
        %v1042 = vadd.f32 0.0, %v1041
        %1043 = vmatmul.f32.gmra.mxu0 %v1016
        %v1044 = vpop.f32.mrf.mxu0
        %v1045 = vadd.f32 0.0, %v1044
        %1046 = vdwg.mxu0
        %1047 = vmatpush.msra.mxu0 0.0
        %1048 = vmatpush.msra.mxu0 0.0
        %1049 = vmatpush.msra.mxu0 0.0
        %1050 = vmatpush.msra.mxu0 0.0
        %1051 = vmatpush.msra.mxu0 0.0
        %1052 = vmatpush.msra.mxu0 0.0
        %1053 = vmatpush.msra.mxu0 0.0
        %1054 = vmatpush.msra.mxu0 0.0
        %1055 = vmatpush.msra.mxu0 0.0
        %1056 = vmatpush.msra.mxu0 0.0
        %1057 = vmatpush.msra.mxu0 0.0
        %1058 = vmatpush.msra.mxu0 0.0
        %1059 = vmatpush.msra.mxu0 %v987
        %1060 = vmatpush.msra.mxu0 %v983
        %1061 = vmatpush.msra.mxu0 %v979
        %1062 = vmatpush.msra.mxu0 %v975
        %1063 = vmatmul.f32.gmra.mxu0 %v1007
        %v1064 = vpop.f32.mrf.mxu0
        %v1065 = vadd.f32 0.0, %v1064
        %1066 = vmatmul.f32.gmra.mxu0 %v1010
        %v1067 = vpop.f32.mrf.mxu0
        %v1068 = vadd.f32 0.0, %v1067
        %1069 = vmatmul.f32.gmra.mxu0 %v1013
        %v1070 = vpop.f32.mrf.mxu0
        %v1071 = vadd.f32 0.0, %v1070
        %1072 = vmatmul.f32.gmra.mxu0 %v1016
        %v1073 = vpop.f32.mrf.mxu0
        %v1074 = vadd.f32 0.0, %v1073
        %1075 = vdwg.mxu0
        %1076 = vmatpush.msra.mxu0 0.0
        %1077 = vmatpush.msra.mxu0 0.0
        %1078 = vmatpush.msra.mxu0 0.0
        %1079 = vmatpush.msra.mxu0 0.0
        %1080 = vmatpush.msra.mxu0 0.0
        %1081 = vmatpush.msra.mxu0 0.0
        %1082 = vmatpush.msra.mxu0 0.0
        %1083 = vmatpush.msra.mxu0 0.0
        %1084 = vmatpush.msra.mxu0 0.0
        %1085 = vmatpush.msra.mxu0 0.0
        %1086 = vmatpush.msra.mxu0 0.0
        %1087 = vmatpush.msra.mxu0 0.0
        %1088 = vmatpush.msra.mxu0 %v988
        %1089 = vmatpush.msra.mxu0 %v984
        %1090 = vmatpush.msra.mxu0 %v980
        %1091 = vmatpush.msra.mxu0 %v976
        %1092 = vmatmul.f32.gmra.mxu0 %v1007
        %v1093 = vpop.f32.mrf.mxu0
        %v1094 = vadd.f32 0.0, %v1093
        %1095 = vmatmul.f32.gmra.mxu0 %v1010
        %v1096 = vpop.f32.mrf.mxu0
        %v1097 = vadd.f32 0.0, %v1096
        %1098 = vmatmul.f32.gmra.mxu0 %v1013
        %v1099 = vpop.f32.mrf.mxu0
        %v1100 = vadd.f32 0.0, %v1099
        %1101 = vmatmul.f32.gmra.mxu0 %v1016
        %v1102 = vpop.f32.mrf.mxu0
        %v1103 = vadd.f32 0.0, %v1102
        %1104 = vdwg.mxu0
        %1105 = vmatpush.msra.mxu0 0.0
        %1106 = vmatpush.msra.mxu0 0.0
        %1107 = vmatpush.msra.mxu0 0.0
        %1108 = vmatpush.msra.mxu0 0.0
        %1109 = vmatpush.msra.mxu0 0.0
        %1110 = vmatpush.msra.mxu0 0.0
        %1111 = vmatpush.msra.mxu0 0.0
        %1112 = vmatpush.msra.mxu0 0.0
        %1113 = vmatpush.msra.mxu0 0.0
        %1114 = vmatpush.msra.mxu0 0.0
        %1115 = vmatpush.msra.mxu0 0.0
        %1116 = vmatpush.msra.mxu0 0.0
        %1117 = vmatpush.msra.mxu0 %v989
        %1118 = vmatpush.msra.mxu0 %v985
        %1119 = vmatpush.msra.mxu0 %v981
        %1120 = vmatpush.msra.mxu0 %v977
        %1121 = vmatmul.f32.gmra.mxu0 %v1007
        %v1122 = vpop.f32.mrf.mxu0
        %v1123 = vadd.f32 0.0, %v1122
        %1124 = vmatmul.f32.gmra.mxu0 %v1010
        %v1125 = vpop.f32.mrf.mxu0
        %v1126 = vadd.f32 0.0, %v1125
        %1127 = vmatmul.f32.gmra.mxu0 %v1013
        %v1128 = vpop.f32.mrf.mxu0
        %v1129 = vadd.f32 0.0, %v1128
        %1130 = vmatmul.f32.gmra.mxu0 %v1016
        %v1131 = vpop.f32.mrf.mxu0
        %v1132 = vadd.f32 0.0, %v1131
        %1133 = vdwg.mxu0
        %v1134 = vadd.f32 %v830, %v1036
        %v1135 = vadd.f32 %v859, %v1065
        %v1136 = vadd.f32 %v888, %v1094
        %v1137 = vadd.f32 %v917, %v1123
        %v1138 = vadd.f32 %v833, %v1039
        %v1139 = vadd.f32 %v862, %v1068
        %v1140 = vadd.f32 %v891, %v1097
        %v1141 = vadd.f32 %v920, %v1126
        %v1142 = vadd.f32 %v836, %v1042
        %v1143 = vadd.f32 %v865, %v1071
        %v1144 = vadd.f32 %v894, %v1100
        %v1145 = vadd.f32 %v923, %v1129
        %v1146 = vadd.f32 %v839, %v1045
        %v1147 = vadd.f32 %v868, %v1074
        %v1148 = vadd.f32 %v897, %v1103
        %v1149 = vadd.f32 %v926, %v1132
        %s1150 = scalar_lea.vmem %s2, 96
        %v1151 = vld [vmem:[%s1150] sm:$0xff]
        %v1152 = vld [vmem:[%s1150 + $0x8] sm:$0xff]
        %v1153 = vld [vmem:[%s1150 + $0x10] sm:$0xff]
        %v1154 = vld [vmem:[%s1150 + $0x18] sm:$0xff]
        %1155 = vrot.lane.b32.xlu0 %v549, 108
        %v1156 = vpop.permute.xlu0 %1155
        %1157 = vrot.lane.b32.xlu0 %v550, 108
        %v1158 = vpop.permute.xlu0 %1157
        %1159 = vrot.lane.b32.xlu0 %v551, 108
        %v1160 = vpop.permute.xlu0 %1159
        %1161 = vrot.lane.b32.xlu0 %v552, 108
        %v1162 = vpop.permute.xlu0 %1161
        %1163 = vrot.lane.b32.xlu0 %v569, 108
        %v1164 = vpop.permute.xlu0 %1163
        %1165 = vrot.lane.b32.xlu0 %v553, 108
        %v1166 = vpop.permute.xlu0 %1165
        %1167 = vrot.lane.b32.xlu0 %v554, 108
        %v1168 = vpop.permute.xlu0 %1167
        %1169 = vrot.lane.b32.xlu0 %v555, 108
        %v1170 = vpop.permute.xlu0 %1169
        %1171 = vrot.lane.b32.xlu0 %v556, 108
        %v1172 = vpop.permute.xlu0 %1171
        %1173 = vrot.lane.b32.xlu0 %v570, 108
        %v1174 = vpop.permute.xlu0 %1173
        %1175 = vrot.lane.b32.xlu0 %v557, 108
        %v1176 = vpop.permute.xlu0 %1175
        %1177 = vrot.lane.b32.xlu0 %v558, 108
        %v1178 = vpop.permute.xlu0 %1177
        %1179 = vrot.lane.b32.xlu0 %v559, 108
        %v1180 = vpop.permute.xlu0 %1179
        %1181 = vrot.lane.b32.xlu0 %v560, 108
        %v1182 = vpop.permute.xlu0 %1181
        %1183 = vrot.lane.b32.xlu0 %v571, 108
        %v1184 = vpop.permute.xlu0 %1183
        %1185 = vrot.lane.b32.xlu0 %v561, 108
        %v1186 = vpop.permute.xlu0 %1185
        %1187 = vrot.lane.b32.xlu0 %v562, 108
        %v1188 = vpop.permute.xlu0 %1187
        %1189 = vrot.lane.b32.xlu0 %v563, 108
        %v1190 = vpop.permute.xlu0 %1189
        %1191 = vrot.lane.b32.xlu0 %v564, 108
        %v1192 = vpop.permute.xlu0 %1191
        %1193 = vrot.lane.b32.xlu0 %v572, 108
        %v1194 = vpop.permute.xlu0 %1193
        %vm1195 = vcmask 883712
        %v1196 = vsel %vm1195, %v1156, %v1158
        %v1197 = vsel %vm1195, %v1158, %v1160
        %v1198 = vsel %vm1195, %v1160, %v1162
        %v1199 = vsel %vm1195, %v1162, %v1164
        %v1200 = vsel %vm1195, %v1166, %v1168
        %v1201 = vsel %vm1195, %v1168, %v1170
        %v1202 = vsel %vm1195, %v1170, %v1172
        %v1203 = vsel %vm1195, %v1172, %v1174
        %v1204 = vsel %vm1195, %v1176, %v1178
        %v1205 = vsel %vm1195, %v1178, %v1180
        %v1206 = vsel %vm1195, %v1180, %v1182
        %v1207 = vsel %vm1195, %v1182, %v1184
        %v1208 = vsel %vm1195, %v1186, %v1188
        %v1209 = vsel %vm1195, %v1188, %v1190
        %v1210 = vsel %vm1195, %v1190, %v1192
        %v1211 = vsel %vm1195, %v1192, %v1194
        %v1229 = vsel %vm671, %v1151, 0
        %v1232 = vsel %vm671, %v1152, 0
        %v1235 = vsel %vm671, %v1153, 0
        %v1238 = vsel %vm671, %v1154, 0
        %1240 = vmatpush.msra.mxu0 0.0
        %1241 = vmatpush.msra.mxu0 0.0
        %1242 = vmatpush.msra.mxu0 0.0
        %1243 = vmatpush.msra.mxu0 0.0
        %1244 = vmatpush.msra.mxu0 0.0
        %1245 = vmatpush.msra.mxu0 0.0
        %1246 = vmatpush.msra.mxu0 0.0
        %1247 = vmatpush.msra.mxu0 0.0
        %1248 = vmatpush.msra.mxu0 0.0
        %1249 = vmatpush.msra.mxu0 0.0
        %1250 = vmatpush.msra.mxu0 0.0
        %1251 = vmatpush.msra.mxu0 0.0
        %1252 = vmatpush.msra.mxu0 %v1208
        %1253 = vmatpush.msra.mxu0 %v1204
        %1254 = vmatpush.msra.mxu0 %v1200
        %1255 = vmatpush.msra.mxu0 %v1196
        %1256 = vmatmul.f32.gmra.mxu0 %v1229
        %v1257 = vpop.f32.mrf.mxu0
        %v1258 = vadd.f32 0.0, %v1257
        %1259 = vmatmul.f32.gmra.mxu0 %v1232
        %v1260 = vpop.f32.mrf.mxu0
        %v1261 = vadd.f32 0.0, %v1260
        %1262 = vmatmul.f32.gmra.mxu0 %v1235
        %v1263 = vpop.f32.mrf.mxu0
        %v1264 = vadd.f32 0.0, %v1263
        %1265 = vmatmul.f32.gmra.mxu0 %v1238
        %v1266 = vpop.f32.mrf.mxu0
        %v1267 = vadd.f32 0.0, %v1266
        %1268 = vdwg.mxu0
        %1269 = vmatpush.msra.mxu0 0.0
        %1270 = vmatpush.msra.mxu0 0.0
        %1271 = vmatpush.msra.mxu0 0.0
        %1272 = vmatpush.msra.mxu0 0.0
        %1273 = vmatpush.msra.mxu0 0.0
        %1274 = vmatpush.msra.mxu0 0.0
        %1275 = vmatpush.msra.mxu0 0.0
        %1276 = vmatpush.msra.mxu0 0.0
        %1277 = vmatpush.msra.mxu0 0.0
        %1278 = vmatpush.msra.mxu0 0.0
        %1279 = vmatpush.msra.mxu0 0.0
        %1280 = vmatpush.msra.mxu0 0.0
        %1281 = vmatpush.msra.mxu0 %v1209
        %1282 = vmatpush.msra.mxu0 %v1205
        %1283 = vmatpush.msra.mxu0 %v1201
        %1284 = vmatpush.msra.mxu0 %v1197
        %1285 = vmatmul.f32.gmra.mxu0 %v1229
        %v1286 = vpop.f32.mrf.mxu0
        %v1287 = vadd.f32 0.0, %v1286
        %1288 = vmatmul.f32.gmra.mxu0 %v1232
        %v1289 = vpop.f32.mrf.mxu0
        %v1290 = vadd.f32 0.0, %v1289
        %1291 = vmatmul.f32.gmra.mxu0 %v1235
        %v1292 = vpop.f32.mrf.mxu0
        %v1293 = vadd.f32 0.0, %v1292
        %1294 = vmatmul.f32.gmra.mxu0 %v1238
        %v1295 = vpop.f32.mrf.mxu0
        %v1296 = vadd.f32 0.0, %v1295
        %1297 = vdwg.mxu0
        %1298 = vmatpush.msra.mxu0 0.0
        %1299 = vmatpush.msra.mxu0 0.0
        %1300 = vmatpush.msra.mxu0 0.0
        %1301 = vmatpush.msra.mxu0 0.0
        %1302 = vmatpush.msra.mxu0 0.0
        %1303 = vmatpush.msra.mxu0 0.0
        %1304 = vmatpush.msra.mxu0 0.0
        %1305 = vmatpush.msra.mxu0 0.0
        %1306 = vmatpush.msra.mxu0 0.0
        %1307 = vmatpush.msra.mxu0 0.0
        %1308 = vmatpush.msra.mxu0 0.0
        %1309 = vmatpush.msra.mxu0 0.0
        %1310 = vmatpush.msra.mxu0 %v1210
        %1311 = vmatpush.msra.mxu0 %v1206
        %1312 = vmatpush.msra.mxu0 %v1202
        %1313 = vmatpush.msra.mxu0 %v1198
        %1314 = vmatmul.f32.gmra.mxu0 %v1229
        %v1315 = vpop.f32.mrf.mxu0
        %v1316 = vadd.f32 0.0, %v1315
        %1317 = vmatmul.f32.gmra.mxu0 %v1232
        %v1318 = vpop.f32.mrf.mxu0
        %v1319 = vadd.f32 0.0, %v1318
        %1320 = vmatmul.f32.gmra.mxu0 %v1235
        %v1321 = vpop.f32.mrf.mxu0
        %v1322 = vadd.f32 0.0, %v1321
        %1323 = vmatmul.f32.gmra.mxu0 %v1238
        %v1324 = vpop.f32.mrf.mxu0
        %v1325 = vadd.f32 0.0, %v1324
        %1326 = vdwg.mxu0
        %1327 = vmatpush.msra.mxu0 0.0
        %1328 = vmatpush.msra.mxu0 0.0
        %1329 = vmatpush.msra.mxu0 0.0
        %1330 = vmatpush.msra.mxu0 0.0
        %1331 = vmatpush.msra.mxu0 0.0
        %1332 = vmatpush.msra.mxu0 0.0
        %1333 = vmatpush.msra.mxu0 0.0
        %1334 = vmatpush.msra.mxu0 0.0
        %1335 = vmatpush.msra.mxu0 0.0
        %1336 = vmatpush.msra.mxu0 0.0
        %1337 = vmatpush.msra.mxu0 0.0
        %1338 = vmatpush.msra.mxu0 0.0
        %1339 = vmatpush.msra.mxu0 %v1211
        %1340 = vmatpush.msra.mxu0 %v1207
        %1341 = vmatpush.msra.mxu0 %v1203
        %1342 = vmatpush.msra.mxu0 %v1199
        %1343 = vmatmul.f32.gmra.mxu0 %v1229
        %v1344 = vpop.f32.mrf.mxu0
        %v1345 = vadd.f32 0.0, %v1344
        %1346 = vmatmul.f32.gmra.mxu0 %v1232
        %v1347 = vpop.f32.mrf.mxu0
        %v1348 = vadd.f32 0.0, %v1347
        %1349 = vmatmul.f32.gmra.mxu0 %v1235
        %v1350 = vpop.f32.mrf.mxu0
        %v1351 = vadd.f32 0.0, %v1350
        %1352 = vmatmul.f32.gmra.mxu0 %v1238
        %v1353 = vpop.f32.mrf.mxu0
        %v1354 = vadd.f32 0.0, %v1353
        %1355 = vdwg.mxu0
        %v1356 = vadd.f32 %v1134, %v1258
        %v1357 = vadd.f32 %v1135, %v1287
        %v1358 = vadd.f32 %v1136, %v1316
        %v1359 = vadd.f32 %v1137, %v1345
        %v1360 = vadd.f32 %v1138, %v1261
        %v1361 = vadd.f32 %v1139, %v1290
        %v1362 = vadd.f32 %v1140, %v1319
        %v1363 = vadd.f32 %v1141, %v1348
        %v1364 = vadd.f32 %v1142, %v1264
        %v1365 = vadd.f32 %v1143, %v1293
        %v1366 = vadd.f32 %v1144, %v1322
        %v1367 = vadd.f32 %v1145, %v1351
        %v1368 = vadd.f32 %v1146, %v1267
        %v1369 = vadd.f32 %v1147, %v1296
        %v1370 = vadd.f32 %v1148, %v1325
        %v1371 = vadd.f32 %v1149, %v1354
        %s1372 = scalar_lea.vmem %s2, 128
        %v1373 = vld [vmem:[%s1372] sm:$0xff]
        %v1374 = vld [vmem:[%s1372 + $0x8] sm:$0xff]
        %v1375 = vld [vmem:[%s1372 + $0x10] sm:$0xff]
        %v1376 = vld [vmem:[%s1372 + $0x18] sm:$0xff]
        %1377 = vrot.lane.b32.xlu0 %v549, 107
        %v1378 = vpop.permute.xlu0 %1377
        %1379 = vrot.lane.b32.xlu0 %v550, 107
        %v1380 = vpop.permute.xlu0 %1379
        %1381 = vrot.lane.b32.xlu0 %v551, 107
        %v1382 = vpop.permute.xlu0 %1381
        %1383 = vrot.lane.b32.xlu0 %v552, 107
        %v1384 = vpop.permute.xlu0 %1383
        %1385 = vrot.lane.b32.xlu0 %v569, 107
        %v1386 = vpop.permute.xlu0 %1385
        %1387 = vrot.lane.b32.xlu0 %v553, 107
        %v1388 = vpop.permute.xlu0 %1387
        %1389 = vrot.lane.b32.xlu0 %v554, 107
        %v1390 = vpop.permute.xlu0 %1389
        %1391 = vrot.lane.b32.xlu0 %v555, 107
        %v1392 = vpop.permute.xlu0 %1391
        %1393 = vrot.lane.b32.xlu0 %v556, 107
        %v1394 = vpop.permute.xlu0 %1393
        %1395 = vrot.lane.b32.xlu0 %v570, 107
        %v1396 = vpop.permute.xlu0 %1395
        %1397 = vrot.lane.b32.xlu0 %v557, 107
        %v1398 = vpop.permute.xlu0 %1397
        %1399 = vrot.lane.b32.xlu0 %v558, 107
        %v1400 = vpop.permute.xlu0 %1399
        %1401 = vrot.lane.b32.xlu0 %v559, 107
        %v1402 = vpop.permute.xlu0 %1401
        %1403 = vrot.lane.b32.xlu0 %v560, 107
        %v1404 = vpop.permute.xlu0 %1403
        %1405 = vrot.lane.b32.xlu0 %v571, 107
        %v1406 = vpop.permute.xlu0 %1405
        %1407 = vrot.lane.b32.xlu0 %v561, 107
        %v1408 = vpop.permute.xlu0 %1407
        %1409 = vrot.lane.b32.xlu0 %v562, 107
        %v1410 = vpop.permute.xlu0 %1409
        %1411 = vrot.lane.b32.xlu0 %v563, 107
        %v1412 = vpop.permute.xlu0 %1411
        %1413 = vrot.lane.b32.xlu0 %v564, 107
        %v1414 = vpop.permute.xlu0 %1413
        %1415 = vrot.lane.b32.xlu0 %v572, 107
        %v1416 = vpop.permute.xlu0 %1415
        %vm1417 = vcmask 875520
        %v1418 = vsel %vm1417, %v1378, %v1380
        %v1419 = vsel %vm1417, %v1380, %v1382
        %v1420 = vsel %vm1417, %v1382, %v1384
        %v1421 = vsel %vm1417, %v1384, %v1386
        %v1422 = vsel %vm1417, %v1388, %v1390
        %v1423 = vsel %vm1417, %v1390, %v1392
        %v1424 = vsel %vm1417, %v1392, %v1394
        %v1425 = vsel %vm1417, %v1394, %v1396
        %v1426 = vsel %vm1417, %v1398, %v1400
        %v1427 = vsel %vm1417, %v1400, %v1402
        %v1428 = vsel %vm1417, %v1402, %v1404
        %v1429 = vsel %vm1417, %v1404, %v1406
        %v1430 = vsel %vm1417, %v1408, %v1410
        %v1431 = vsel %vm1417, %v1410, %v1412
        %v1432 = vsel %vm1417, %v1412, %v1414
        %v1433 = vsel %vm1417, %v1414, %v1416
        %v1451 = vsel %vm671, %v1373, 0
        %v1454 = vsel %vm671, %v1374, 0
        %v1457 = vsel %vm671, %v1375, 0
        %v1460 = vsel %vm671, %v1376, 0
        %1462 = vmatpush.msra.mxu0 0.0
        %1463 = vmatpush.msra.mxu0 0.0
        %1464 = vmatpush.msra.mxu0 0.0
        %1465 = vmatpush.msra.mxu0 0.0
        %1466 = vmatpush.msra.mxu0 0.0
        %1467 = vmatpush.msra.mxu0 0.0
        %1468 = vmatpush.msra.mxu0 0.0
        %1469 = vmatpush.msra.mxu0 0.0
        %1470 = vmatpush.msra.mxu0 0.0
        %1471 = vmatpush.msra.mxu0 0.0
        %1472 = vmatpush.msra.mxu0 0.0
        %1473 = vmatpush.msra.mxu0 0.0
        %1474 = vmatpush.msra.mxu0 %v1430
        %1475 = vmatpush.msra.mxu0 %v1426
        %1476 = vmatpush.msra.mxu0 %v1422
        %1477 = vmatpush.msra.mxu0 %v1418
        %1478 = vmatmul.f32.gmra.mxu0 %v1451
        %v1479 = vpop.f32.mrf.mxu0
        %v1480 = vadd.f32 0.0, %v1479
        %1481 = vmatmul.f32.gmra.mxu0 %v1454
        %v1482 = vpop.f32.mrf.mxu0
        %v1483 = vadd.f32 0.0, %v1482
        %1484 = vmatmul.f32.gmra.mxu0 %v1457
        %v1485 = vpop.f32.mrf.mxu0
        %v1486 = vadd.f32 0.0, %v1485
        %1487 = vmatmul.f32.gmra.mxu0 %v1460
        %v1488 = vpop.f32.mrf.mxu0
        %v1489 = vadd.f32 0.0, %v1488
        %1490 = vdwg.mxu0
        %1491 = vmatpush.msra.mxu0 0.0
        %1492 = vmatpush.msra.mxu0 0.0
        %1493 = vmatpush.msra.mxu0 0.0
        %1494 = vmatpush.msra.mxu0 0.0
        %1495 = vmatpush.msra.mxu0 0.0
        %1496 = vmatpush.msra.mxu0 0.0
        %1497 = vmatpush.msra.mxu0 0.0
        %1498 = vmatpush.msra.mxu0 0.0
        %1499 = vmatpush.msra.mxu0 0.0
        %1500 = vmatpush.msra.mxu0 0.0
        %1501 = vmatpush.msra.mxu0 0.0
        %1502 = vmatpush.msra.mxu0 0.0
        %1503 = vmatpush.msra.mxu0 %v1431
        %1504 = vmatpush.msra.mxu0 %v1427
        %1505 = vmatpush.msra.mxu0 %v1423
        %1506 = vmatpush.msra.mxu0 %v1419
        %1507 = vmatmul.f32.gmra.mxu0 %v1451
        %v1508 = vpop.f32.mrf.mxu0
        %v1509 = vadd.f32 0.0, %v1508
        %1510 = vmatmul.f32.gmra.mxu0 %v1454
        %v1511 = vpop.f32.mrf.mxu0
        %v1512 = vadd.f32 0.0, %v1511
        %1513 = vmatmul.f32.gmra.mxu0 %v1457
        %v1514 = vpop.f32.mrf.mxu0
        %v1515 = vadd.f32 0.0, %v1514
        %1516 = vmatmul.f32.gmra.mxu0 %v1460
        %v1517 = vpop.f32.mrf.mxu0
        %v1518 = vadd.f32 0.0, %v1517
        %1519 = vdwg.mxu0
        %1520 = vmatpush.msra.mxu0 0.0
        %1521 = vmatpush.msra.mxu0 0.0
        %1522 = vmatpush.msra.mxu0 0.0
        %1523 = vmatpush.msra.mxu0 0.0
        %1524 = vmatpush.msra.mxu0 0.0
        %1525 = vmatpush.msra.mxu0 0.0
        %1526 = vmatpush.msra.mxu0 0.0
        %1527 = vmatpush.msra.mxu0 0.0
        %1528 = vmatpush.msra.mxu0 0.0
        %1529 = vmatpush.msra.mxu0 0.0
        %1530 = vmatpush.msra.mxu0 0.0
        %1531 = vmatpush.msra.mxu0 0.0
        %1532 = vmatpush.msra.mxu0 %v1432
        %1533 = vmatpush.msra.mxu0 %v1428
        %1534 = vmatpush.msra.mxu0 %v1424
        %1535 = vmatpush.msra.mxu0 %v1420
        %1536 = vmatmul.f32.gmra.mxu0 %v1451
        %v1537 = vpop.f32.mrf.mxu0
        %v1538 = vadd.f32 0.0, %v1537
        %1539 = vmatmul.f32.gmra.mxu0 %v1454
        %v1540 = vpop.f32.mrf.mxu0
        %v1541 = vadd.f32 0.0, %v1540
        %1542 = vmatmul.f32.gmra.mxu0 %v1457
        %v1543 = vpop.f32.mrf.mxu0
        %v1544 = vadd.f32 0.0, %v1543
        %1545 = vmatmul.f32.gmra.mxu0 %v1460
        %v1546 = vpop.f32.mrf.mxu0
        %v1547 = vadd.f32 0.0, %v1546
        %1548 = vdwg.mxu0
        %1549 = vmatpush.msra.mxu0 0.0
        %1550 = vmatpush.msra.mxu0 0.0
        %1551 = vmatpush.msra.mxu0 0.0
        %1552 = vmatpush.msra.mxu0 0.0
        %1553 = vmatpush.msra.mxu0 0.0
        %1554 = vmatpush.msra.mxu0 0.0
        %1555 = vmatpush.msra.mxu0 0.0
        %1556 = vmatpush.msra.mxu0 0.0
        %1557 = vmatpush.msra.mxu0 0.0
        %1558 = vmatpush.msra.mxu0 0.0
        %1559 = vmatpush.msra.mxu0 0.0
        %1560 = vmatpush.msra.mxu0 0.0
        %1561 = vmatpush.msra.mxu0 %v1433
        %1562 = vmatpush.msra.mxu0 %v1429
        %1563 = vmatpush.msra.mxu0 %v1425
        %1564 = vmatpush.msra.mxu0 %v1421
        %1565 = vmatmul.f32.gmra.mxu0 %v1451
        %v1566 = vpop.f32.mrf.mxu0
        %v1567 = vadd.f32 0.0, %v1566
        %1568 = vmatmul.f32.gmra.mxu0 %v1454
        %v1569 = vpop.f32.mrf.mxu0
        %v1570 = vadd.f32 0.0, %v1569
        %1571 = vmatmul.f32.gmra.mxu0 %v1457
        %v1572 = vpop.f32.mrf.mxu0
        %v1573 = vadd.f32 0.0, %v1572
        %1574 = vmatmul.f32.gmra.mxu0 %v1460
        %v1575 = vpop.f32.mrf.mxu0
        %v1576 = vadd.f32 0.0, %v1575
        %1577 = vdwg.mxu0
        %v1578 = vadd.f32 %v1356, %v1480
        %v1579 = vadd.f32 %v1357, %v1509
        %v1580 = vadd.f32 %v1358, %v1538
        %v1581 = vadd.f32 %v1359, %v1567
        %v1582 = vadd.f32 %v1360, %v1483
        %v1583 = vadd.f32 %v1361, %v1512
        %v1584 = vadd.f32 %v1362, %v1541
        %v1585 = vadd.f32 %v1363, %v1570
        %v1586 = vadd.f32 %v1364, %v1486
        %v1587 = vadd.f32 %v1365, %v1515
        %v1588 = vadd.f32 %v1366, %v1544
        %v1589 = vadd.f32 %v1367, %v1573
        %v1590 = vadd.f32 %v1368, %v1489
        %v1591 = vadd.f32 %v1369, %v1518
        %v1592 = vadd.f32 %v1370, %v1547
        %v1593 = vadd.f32 %v1371, %v1576
        %s1594 = scalar_lea.vmem %s2, 160
        %v1595 = vld [vmem:[%s1594] sm:$0xff]
        %v1596 = vld [vmem:[%s1594 + $0x8] sm:$0xff]
        %v1597 = vld [vmem:[%s1594 + $0x10] sm:$0xff]
        %v1598 = vld [vmem:[%s1594 + $0x18] sm:$0xff]
        %1599 = vrot.lane.b32.xlu0 %v549, 106
        %v1600 = vpop.permute.xlu0 %1599
        %1601 = vrot.lane.b32.xlu0 %v550, 106
        %v1602 = vpop.permute.xlu0 %1601
        %1603 = vrot.lane.b32.xlu0 %v551, 106
        %v1604 = vpop.permute.xlu0 %1603
        %1605 = vrot.lane.b32.xlu0 %v552, 106
        %v1606 = vpop.permute.xlu0 %1605
        %1607 = vrot.lane.b32.xlu0 %v569, 106
        %v1608 = vpop.permute.xlu0 %1607
        %1609 = vrot.lane.b32.xlu0 %v553, 106
        %v1610 = vpop.permute.xlu0 %1609
        %1611 = vrot.lane.b32.xlu0 %v554, 106
        %v1612 = vpop.permute.xlu0 %1611
        %1613 = vrot.lane.b32.xlu0 %v555, 106
        %v1614 = vpop.permute.xlu0 %1613
        %1615 = vrot.lane.b32.xlu0 %v556, 106
        %v1616 = vpop.permute.xlu0 %1615
        %1617 = vrot.lane.b32.xlu0 %v570, 106
        %v1618 = vpop.permute.xlu0 %1617
        %1619 = vrot.lane.b32.xlu0 %v557, 106
        %v1620 = vpop.permute.xlu0 %1619
        %1621 = vrot.lane.b32.xlu0 %v558, 106
        %v1622 = vpop.permute.xlu0 %1621
        %1623 = vrot.lane.b32.xlu0 %v559, 106
        %v1624 = vpop.permute.xlu0 %1623
        %1625 = vrot.lane.b32.xlu0 %v560, 106
        %v1626 = vpop.permute.xlu0 %1625
        %1627 = vrot.lane.b32.xlu0 %v571, 106
        %v1628 = vpop.permute.xlu0 %1627
        %1629 = vrot.lane.b32.xlu0 %v561, 106
        %v1630 = vpop.permute.xlu0 %1629
        %1631 = vrot.lane.b32.xlu0 %v562, 106
        %v1632 = vpop.permute.xlu0 %1631
        %1633 = vrot.lane.b32.xlu0 %v563, 106
        %v1634 = vpop.permute.xlu0 %1633
        %1635 = vrot.lane.b32.xlu0 %v564, 106
        %v1636 = vpop.permute.xlu0 %1635
        %1637 = vrot.lane.b32.xlu0 %v572, 106
        %v1638 = vpop.permute.xlu0 %1637
        %vm1639 = vcmask 867328
        %v1640 = vsel %vm1639, %v1600, %v1602
        %v1641 = vsel %vm1639, %v1602, %v1604
        %v1642 = vsel %vm1639, %v1604, %v1606
        %v1643 = vsel %vm1639, %v1606, %v1608
        %v1644 = vsel %vm1639, %v1610, %v1612
        %v1645 = vsel %vm1639, %v1612, %v1614
        %v1646 = vsel %vm1639, %v1614, %v1616
        %v1647 = vsel %vm1639, %v1616, %v1618
        %v1648 = vsel %vm1639, %v1620, %v1622
        %v1649 = vsel %vm1639, %v1622, %v1624
        %v1650 = vsel %vm1639, %v1624, %v1626
        %v1651 = vsel %vm1639, %v1626, %v1628
        %v1652 = vsel %vm1639, %v1630, %v1632
        %v1653 = vsel %vm1639, %v1632, %v1634
        %v1654 = vsel %vm1639, %v1634, %v1636
        %v1655 = vsel %vm1639, %v1636, %v1638
        %v1673 = vsel %vm671, %v1595, 0
        %v1676 = vsel %vm671, %v1596, 0
        %v1679 = vsel %vm671, %v1597, 0
        %v1682 = vsel %vm671, %v1598, 0
        %1684 = vmatpush.msra.mxu0 0.0
        %1685 = vmatpush.msra.mxu0 0.0
        %1686 = vmatpush.msra.mxu0 0.0
        %1687 = vmatpush.msra.mxu0 0.0
        %1688 = vmatpush.msra.mxu0 0.0
        %1689 = vmatpush.msra.mxu0 0.0
        %1690 = vmatpush.msra.mxu0 0.0
        %1691 = vmatpush.msra.mxu0 0.0
        %1692 = vmatpush.msra.mxu0 0.0
        %1693 = vmatpush.msra.mxu0 0.0
        %1694 = vmatpush.msra.mxu0 0.0
        %1695 = vmatpush.msra.mxu0 0.0
        %1696 = vmatpush.msra.mxu0 %v1652
        %1697 = vmatpush.msra.mxu0 %v1648
        %1698 = vmatpush.msra.mxu0 %v1644
        %1699 = vmatpush.msra.mxu0 %v1640
        %1700 = vmatmul.f32.gmra.mxu0 %v1673
        %v1701 = vpop.f32.mrf.mxu0
        %v1702 = vadd.f32 0.0, %v1701
        %1703 = vmatmul.f32.gmra.mxu0 %v1676
        %v1704 = vpop.f32.mrf.mxu0
        %v1705 = vadd.f32 0.0, %v1704
        %1706 = vmatmul.f32.gmra.mxu0 %v1679
        %v1707 = vpop.f32.mrf.mxu0
        %v1708 = vadd.f32 0.0, %v1707
        %1709 = vmatmul.f32.gmra.mxu0 %v1682
        %v1710 = vpop.f32.mrf.mxu0
        %v1711 = vadd.f32 0.0, %v1710
        %1712 = vdwg.mxu0
        %1713 = vmatpush.msra.mxu0 0.0
        %1714 = vmatpush.msra.mxu0 0.0
        %1715 = vmatpush.msra.mxu0 0.0
        %1716 = vmatpush.msra.mxu0 0.0
        %1717 = vmatpush.msra.mxu0 0.0
        %1718 = vmatpush.msra.mxu0 0.0
        %1719 = vmatpush.msra.mxu0 0.0
        %1720 = vmatpush.msra.mxu0 0.0
        %1721 = vmatpush.msra.mxu0 0.0
        %1722 = vmatpush.msra.mxu0 0.0
        %1723 = vmatpush.msra.mxu0 0.0
        %1724 = vmatpush.msra.mxu0 0.0
        %1725 = vmatpush.msra.mxu0 %v1653
        %1726 = vmatpush.msra.mxu0 %v1649
        %1727 = vmatpush.msra.mxu0 %v1645
        %1728 = vmatpush.msra.mxu0 %v1641
        %1729 = vmatmul.f32.gmra.mxu0 %v1673
        %v1730 = vpop.f32.mrf.mxu0
        %v1731 = vadd.f32 0.0, %v1730
        %1732 = vmatmul.f32.gmra.mxu0 %v1676
        %v1733 = vpop.f32.mrf.mxu0
        %v1734 = vadd.f32 0.0, %v1733
        %1735 = vmatmul.f32.gmra.mxu0 %v1679
        %v1736 = vpop.f32.mrf.mxu0
        %v1737 = vadd.f32 0.0, %v1736
        %1738 = vmatmul.f32.gmra.mxu0 %v1682
        %v1739 = vpop.f32.mrf.mxu0
        %v1740 = vadd.f32 0.0, %v1739
        %1741 = vdwg.mxu0
        %1742 = vmatpush.msra.mxu0 0.0
        %1743 = vmatpush.msra.mxu0 0.0
        %1744 = vmatpush.msra.mxu0 0.0
        %1745 = vmatpush.msra.mxu0 0.0
        %1746 = vmatpush.msra.mxu0 0.0
        %1747 = vmatpush.msra.mxu0 0.0
        %1748 = vmatpush.msra.mxu0 0.0
        %1749 = vmatpush.msra.mxu0 0.0
        %1750 = vmatpush.msra.mxu0 0.0
        %1751 = vmatpush.msra.mxu0 0.0
        %1752 = vmatpush.msra.mxu0 0.0
        %1753 = vmatpush.msra.mxu0 0.0
        %1754 = vmatpush.msra.mxu0 %v1654
        %1755 = vmatpush.msra.mxu0 %v1650
        %1756 = vmatpush.msra.mxu0 %v1646
        %1757 = vmatpush.msra.mxu0 %v1642
        %1758 = vmatmul.f32.gmra.mxu0 %v1673
        %v1759 = vpop.f32.mrf.mxu0
        %v1760 = vadd.f32 0.0, %v1759
        %1761 = vmatmul.f32.gmra.mxu0 %v1676
        %v1762 = vpop.f32.mrf.mxu0
        %v1763 = vadd.f32 0.0, %v1762
        %1764 = vmatmul.f32.gmra.mxu0 %v1679
        %v1765 = vpop.f32.mrf.mxu0
        %v1766 = vadd.f32 0.0, %v1765
        %1767 = vmatmul.f32.gmra.mxu0 %v1682
        %v1768 = vpop.f32.mrf.mxu0
        %v1769 = vadd.f32 0.0, %v1768
        %1770 = vdwg.mxu0
        %1771 = vmatpush.msra.mxu0 0.0
        %1772 = vmatpush.msra.mxu0 0.0
        %1773 = vmatpush.msra.mxu0 0.0
        %1774 = vmatpush.msra.mxu0 0.0
        %1775 = vmatpush.msra.mxu0 0.0
        %1776 = vmatpush.msra.mxu0 0.0
        %1777 = vmatpush.msra.mxu0 0.0
        %1778 = vmatpush.msra.mxu0 0.0
        %1779 = vmatpush.msra.mxu0 0.0
        %1780 = vmatpush.msra.mxu0 0.0
        %1781 = vmatpush.msra.mxu0 0.0
        %1782 = vmatpush.msra.mxu0 0.0
        %1783 = vmatpush.msra.mxu0 %v1655
        %1784 = vmatpush.msra.mxu0 %v1651
        %1785 = vmatpush.msra.mxu0 %v1647
        %1786 = vmatpush.msra.mxu0 %v1643
        %1787 = vmatmul.f32.gmra.mxu0 %v1673
        %v1788 = vpop.f32.mrf.mxu0
        %v1789 = vadd.f32 0.0, %v1788
        %1790 = vmatmul.f32.gmra.mxu0 %v1676
        %v1791 = vpop.f32.mrf.mxu0
        %v1792 = vadd.f32 0.0, %v1791
        %1793 = vmatmul.f32.gmra.mxu0 %v1679
        %v1794 = vpop.f32.mrf.mxu0
        %v1795 = vadd.f32 0.0, %v1794
        %1796 = vmatmul.f32.gmra.mxu0 %v1682
        %v1797 = vpop.f32.mrf.mxu0
        %v1798 = vadd.f32 0.0, %v1797
        %1799 = vdwg.mxu0
        %v1800 = vadd.f32 %v1578, %v1702
        %v1801 = vadd.f32 %v1579, %v1731
        %v1802 = vadd.f32 %v1580, %v1760
        %v1803 = vadd.f32 %v1581, %v1789
        %v1804 = vadd.f32 %v1582, %v1705
        %v1805 = vadd.f32 %v1583, %v1734
        %v1806 = vadd.f32 %v1584, %v1763
        %v1807 = vadd.f32 %v1585, %v1792
        %v1808 = vadd.f32 %v1586, %v1708
        %v1809 = vadd.f32 %v1587, %v1737
        %v1810 = vadd.f32 %v1588, %v1766
        %v1811 = vadd.f32 %v1589, %v1795
        %v1812 = vadd.f32 %v1590, %v1711
        %v1813 = vadd.f32 %v1591, %v1740
        %v1814 = vadd.f32 %v1592, %v1769
        %v1815 = vadd.f32 %v1593, %v1798
        %s1816 = scalar_lea.vmem %s2, 192
        %v1817 = vld [vmem:[%s1816] sm:$0xff]
        %v1818 = vld [vmem:[%s1816 + $0x8] sm:$0xff]
        %v1819 = vld [vmem:[%s1816 + $0x10] sm:$0xff]
        %v1820 = vld [vmem:[%s1816 + $0x18] sm:$0xff]
        %1821 = vrot.lane.b32.xlu0 %v549, 88
        %v1822 = vpop.permute.xlu0 %1821
        %1823 = vrot.lane.b32.xlu0 %v550, 88
        %v1824 = vpop.permute.xlu0 %1823
        %1825 = vrot.lane.b32.xlu0 %v551, 88
        %v1826 = vpop.permute.xlu0 %1825
        %1827 = vrot.lane.b32.xlu0 %v552, 88
        %v1828 = vpop.permute.xlu0 %1827
        %1829 = vrot.lane.b32.xlu0 %v569, 88
        %v1830 = vpop.permute.xlu0 %1829
        %1831 = vrot.lane.b32.xlu0 %v553, 88
        %v1832 = vpop.permute.xlu0 %1831
        %1833 = vrot.lane.b32.xlu0 %v554, 88
        %v1834 = vpop.permute.xlu0 %1833
        %1835 = vrot.lane.b32.xlu0 %v555, 88
        %v1836 = vpop.permute.xlu0 %1835
        %1837 = vrot.lane.b32.xlu0 %v556, 88
        %v1838 = vpop.permute.xlu0 %1837
        %1839 = vrot.lane.b32.xlu0 %v570, 88
        %v1840 = vpop.permute.xlu0 %1839
        %1841 = vrot.lane.b32.xlu0 %v557, 88
        %v1842 = vpop.permute.xlu0 %1841
        %1843 = vrot.lane.b32.xlu0 %v558, 88
        %v1844 = vpop.permute.xlu0 %1843
        %1845 = vrot.lane.b32.xlu0 %v559, 88
        %v1846 = vpop.permute.xlu0 %1845
        %1847 = vrot.lane.b32.xlu0 %v560, 88
        %v1848 = vpop.permute.xlu0 %1847
        %1849 = vrot.lane.b32.xlu0 %v571, 88
        %v1850 = vpop.permute.xlu0 %1849
        %1851 = vrot.lane.b32.xlu0 %v561, 88
        %v1852 = vpop.permute.xlu0 %1851
        %1853 = vrot.lane.b32.xlu0 %v562, 88
        %v1854 = vpop.permute.xlu0 %1853
        %1855 = vrot.lane.b32.xlu0 %v563, 88
        %v1856 = vpop.permute.xlu0 %1855
        %1857 = vrot.lane.b32.xlu0 %v564, 88
        %v1858 = vpop.permute.xlu0 %1857
        %1859 = vrot.lane.b32.xlu0 %v572, 88
        %v1860 = vpop.permute.xlu0 %1859
        %vm1861 = vcmask 719872
        %v1862 = vsel %vm1861, %v1822, %v1824
        %v1863 = vsel %vm1861, %v1824, %v1826
        %v1864 = vsel %vm1861, %v1826, %v1828
        %v1865 = vsel %vm1861, %v1828, %v1830
        %v1866 = vsel %vm1861, %v1832, %v1834
        %v1867 = vsel %vm1861, %v1834, %v1836
        %v1868 = vsel %vm1861, %v1836, %v1838
        %v1869 = vsel %vm1861, %v1838, %v1840
        %v1870 = vsel %vm1861, %v1842, %v1844
        %v1871 = vsel %vm1861, %v1844, %v1846
        %v1872 = vsel %vm1861, %v1846, %v1848
        %v1873 = vsel %vm1861, %v1848, %v1850
        %v1874 = vsel %vm1861, %v1852, %v1854
        %v1875 = vsel %vm1861, %v1854, %v1856
        %v1876 = vsel %vm1861, %v1856, %v1858
        %v1877 = vsel %vm1861, %v1858, %v1860
        %v1895 = vsel %vm671, %v1817, 0
        %v1898 = vsel %vm671, %v1818, 0
        %v1901 = vsel %vm671, %v1819, 0
        %v1904 = vsel %vm671, %v1820, 0
        %1906 = vmatpush.msra.mxu0 0.0
        %1907 = vmatpush.msra.mxu0 0.0
        %1908 = vmatpush.msra.mxu0 0.0
        %1909 = vmatpush.msra.mxu0 0.0
        %1910 = vmatpush.msra.mxu0 0.0
        %1911 = vmatpush.msra.mxu0 0.0
        %1912 = vmatpush.msra.mxu0 0.0
        %1913 = vmatpush.msra.mxu0 0.0
        %1914 = vmatpush.msra.mxu0 0.0
        %1915 = vmatpush.msra.mxu0 0.0
        %1916 = vmatpush.msra.mxu0 0.0
        %1917 = vmatpush.msra.mxu0 0.0
        %1918 = vmatpush.msra.mxu0 %v1874
        %1919 = vmatpush.msra.mxu0 %v1870
        %1920 = vmatpush.msra.mxu0 %v1866
        %1921 = vmatpush.msra.mxu0 %v1862
        %1922 = vmatmul.f32.gmra.mxu0 %v1895
        %v1923 = vpop.f32.mrf.mxu0
        %v1924 = vadd.f32 0.0, %v1923
        %1925 = vmatmul.f32.gmra.mxu0 %v1898
        %v1926 = vpop.f32.mrf.mxu0
        %v1927 = vadd.f32 0.0, %v1926
        %1928 = vmatmul.f32.gmra.mxu0 %v1901
        %v1929 = vpop.f32.mrf.mxu0
        %v1930 = vadd.f32 0.0, %v1929
        %1931 = vmatmul.f32.gmra.mxu0 %v1904
        %v1932 = vpop.f32.mrf.mxu0
        %v1933 = vadd.f32 0.0, %v1932
        %1934 = vdwg.mxu0
        %1935 = vmatpush.msra.mxu0 0.0
        %1936 = vmatpush.msra.mxu0 0.0
        %1937 = vmatpush.msra.mxu0 0.0
        %1938 = vmatpush.msra.mxu0 0.0
        %1939 = vmatpush.msra.mxu0 0.0
        %1940 = vmatpush.msra.mxu0 0.0
        %1941 = vmatpush.msra.mxu0 0.0
        %1942 = vmatpush.msra.mxu0 0.0
        %1943 = vmatpush.msra.mxu0 0.0
        %1944 = vmatpush.msra.mxu0 0.0
        %1945 = vmatpush.msra.mxu0 0.0
        %1946 = vmatpush.msra.mxu0 0.0
        %1947 = vmatpush.msra.mxu0 %v1875
        %1948 = vmatpush.msra.mxu0 %v1871
        %1949 = vmatpush.msra.mxu0 %v1867
        %1950 = vmatpush.msra.mxu0 %v1863
        %1951 = vmatmul.f32.gmra.mxu0 %v1895
        %v1952 = vpop.f32.mrf.mxu0
        %v1953 = vadd.f32 0.0, %v1952
        %1954 = vmatmul.f32.gmra.mxu0 %v1898
        %v1955 = vpop.f32.mrf.mxu0
        %v1956 = vadd.f32 0.0, %v1955
        %1957 = vmatmul.f32.gmra.mxu0 %v1901
        %v1958 = vpop.f32.mrf.mxu0
        %v1959 = vadd.f32 0.0, %v1958
        %1960 = vmatmul.f32.gmra.mxu0 %v1904
        %v1961 = vpop.f32.mrf.mxu0
        %v1962 = vadd.f32 0.0, %v1961
        %1963 = vdwg.mxu0
        %1964 = vmatpush.msra.mxu0 0.0
        %1965 = vmatpush.msra.mxu0 0.0
        %1966 = vmatpush.msra.mxu0 0.0
        %1967 = vmatpush.msra.mxu0 0.0
        %1968 = vmatpush.msra.mxu0 0.0
        %1969 = vmatpush.msra.mxu0 0.0
        %1970 = vmatpush.msra.mxu0 0.0
        %1971 = vmatpush.msra.mxu0 0.0
        %1972 = vmatpush.msra.mxu0 0.0
        %1973 = vmatpush.msra.mxu0 0.0
        %1974 = vmatpush.msra.mxu0 0.0
        %1975 = vmatpush.msra.mxu0 0.0
        %1976 = vmatpush.msra.mxu0 %v1876
        %1977 = vmatpush.msra.mxu0 %v1872
        %1978 = vmatpush.msra.mxu0 %v1868
        %1979 = vmatpush.msra.mxu0 %v1864
        %1980 = vmatmul.f32.gmra.mxu0 %v1895
        %v1981 = vpop.f32.mrf.mxu0
        %v1982 = vadd.f32 0.0, %v1981
        %1983 = vmatmul.f32.gmra.mxu0 %v1898
        %v1984 = vpop.f32.mrf.mxu0
        %v1985 = vadd.f32 0.0, %v1984
        %1986 = vmatmul.f32.gmra.mxu0 %v1901
        %v1987 = vpop.f32.mrf.mxu0
        %v1988 = vadd.f32 0.0, %v1987
        %1989 = vmatmul.f32.gmra.mxu0 %v1904
        %v1990 = vpop.f32.mrf.mxu0
        %v1991 = vadd.f32 0.0, %v1990
        %1992 = vdwg.mxu0
        %1993 = vmatpush.msra.mxu0 0.0
        %1994 = vmatpush.msra.mxu0 0.0
        %1995 = vmatpush.msra.mxu0 0.0
        %1996 = vmatpush.msra.mxu0 0.0
        %1997 = vmatpush.msra.mxu0 0.0
        %1998 = vmatpush.msra.mxu0 0.0
        %1999 = vmatpush.msra.mxu0 0.0
        %2000 = vmatpush.msra.mxu0 0.0
        %2001 = vmatpush.msra.mxu0 0.0
        %2002 = vmatpush.msra.mxu0 0.0
        %2003 = vmatpush.msra.mxu0 0.0
        %2004 = vmatpush.msra.mxu0 0.0
        %2005 = vmatpush.msra.mxu0 %v1877
        %2006 = vmatpush.msra.mxu0 %v1873
        %2007 = vmatpush.msra.mxu0 %v1869
        %2008 = vmatpush.msra.mxu0 %v1865
        %2009 = vmatmul.f32.gmra.mxu0 %v1895
        %v2010 = vpop.f32.mrf.mxu0
        %v2011 = vadd.f32 0.0, %v2010
        %2012 = vmatmul.f32.gmra.mxu0 %v1898
        %v2013 = vpop.f32.mrf.mxu0
        %v2014 = vadd.f32 0.0, %v2013
        %2015 = vmatmul.f32.gmra.mxu0 %v1901
        %v2016 = vpop.f32.mrf.mxu0
        %v2017 = vadd.f32 0.0, %v2016
        %2018 = vmatmul.f32.gmra.mxu0 %v1904
        %v2019 = vpop.f32.mrf.mxu0
        %v2020 = vadd.f32 0.0, %v2019
        %2021 = vdwg.mxu0
        %v2022 = vadd.f32 %v1800, %v1924
        %v2023 = vadd.f32 %v1801, %v1953
        %v2024 = vadd.f32 %v1802, %v1982
        %v2025 = vadd.f32 %v1803, %v2011
        %v2026 = vadd.f32 %v1804, %v1927
        %v2027 = vadd.f32 %v1805, %v1956
        %v2028 = vadd.f32 %v1806, %v1985
        %v2029 = vadd.f32 %v1807, %v2014
        %v2030 = vadd.f32 %v1808, %v1930
        %v2031 = vadd.f32 %v1809, %v1959
        %v2032 = vadd.f32 %v1810, %v1988
        %v2033 = vadd.f32 %v1811, %v2017
        %v2034 = vadd.f32 %v1812, %v1933
        %v2035 = vadd.f32 %v1813, %v1962
        %v2036 = vadd.f32 %v1814, %v1991
        %v2037 = vadd.f32 %v1815, %v2020
        %s2038 = scalar_lea.vmem %s2, 224
        %v2039 = vld [vmem:[%s2038] sm:$0xff]
        %v2040 = vld [vmem:[%s2038 + $0x8] sm:$0xff]
        %v2041 = vld [vmem:[%s2038 + $0x10] sm:$0xff]
        %v2042 = vld [vmem:[%s2038 + $0x18] sm:$0xff]
        %2043 = vrot.lane.b32.xlu0 %v549, 87
        %v2044 = vpop.permute.xlu0 %2043
        %2045 = vrot.lane.b32.xlu0 %v550, 87
        %v2046 = vpop.permute.xlu0 %2045
        %2047 = vrot.lane.b32.xlu0 %v551, 87
        %v2048 = vpop.permute.xlu0 %2047
        %2049 = vrot.lane.b32.xlu0 %v552, 87
        %v2050 = vpop.permute.xlu0 %2049
        %2051 = vrot.lane.b32.xlu0 %v569, 87
        %v2052 = vpop.permute.xlu0 %2051
        %2053 = vrot.lane.b32.xlu0 %v553, 87
        %v2054 = vpop.permute.xlu0 %2053
        %2055 = vrot.lane.b32.xlu0 %v554, 87
        %v2056 = vpop.permute.xlu0 %2055
        %2057 = vrot.lane.b32.xlu0 %v555, 87
        %v2058 = vpop.permute.xlu0 %2057
        %2059 = vrot.lane.b32.xlu0 %v556, 87
        %v2060 = vpop.permute.xlu0 %2059
        %2061 = vrot.lane.b32.xlu0 %v570, 87
        %v2062 = vpop.permute.xlu0 %2061
        %2063 = vrot.lane.b32.xlu0 %v557, 87
        %v2064 = vpop.permute.xlu0 %2063
        %2065 = vrot.lane.b32.xlu0 %v558, 87
        %v2066 = vpop.permute.xlu0 %2065
        %2067 = vrot.lane.b32.xlu0 %v559, 87
        %v2068 = vpop.permute.xlu0 %2067
        %2069 = vrot.lane.b32.xlu0 %v560, 87
        %v2070 = vpop.permute.xlu0 %2069
        %2071 = vrot.lane.b32.xlu0 %v571, 87
        %v2072 = vpop.permute.xlu0 %2071
        %2073 = vrot.lane.b32.xlu0 %v561, 87
        %v2074 = vpop.permute.xlu0 %2073
        %2075 = vrot.lane.b32.xlu0 %v562, 87
        %v2076 = vpop.permute.xlu0 %2075
        %2077 = vrot.lane.b32.xlu0 %v563, 87
        %v2078 = vpop.permute.xlu0 %2077
        %2079 = vrot.lane.b32.xlu0 %v564, 87
        %v2080 = vpop.permute.xlu0 %2079
        %2081 = vrot.lane.b32.xlu0 %v572, 87
        %v2082 = vpop.permute.xlu0 %2081
        %vm2083 = vcmask 711680
        %v2084 = vsel %vm2083, %v2044, %v2046
        %v2085 = vsel %vm2083, %v2046, %v2048
        %v2086 = vsel %vm2083, %v2048, %v2050
        %v2087 = vsel %vm2083, %v2050, %v2052
        %v2088 = vsel %vm2083, %v2054, %v2056
        %v2089 = vsel %vm2083, %v2056, %v2058
        %v2090 = vsel %vm2083, %v2058, %v2060
        %v2091 = vsel %vm2083, %v2060, %v2062
        %v2092 = vsel %vm2083, %v2064, %v2066
        %v2093 = vsel %vm2083, %v2066, %v2068
        %v2094 = vsel %vm2083, %v2068, %v2070
        %v2095 = vsel %vm2083, %v2070, %v2072
        %v2096 = vsel %vm2083, %v2074, %v2076
        %v2097 = vsel %vm2083, %v2076, %v2078
        %v2098 = vsel %vm2083, %v2078, %v2080
        %v2099 = vsel %vm2083, %v2080, %v2082
        %v2117 = vsel %vm671, %v2039, 0
        %v2120 = vsel %vm671, %v2040, 0
        %v2123 = vsel %vm671, %v2041, 0
        %v2126 = vsel %vm671, %v2042, 0
        %2128 = vmatpush.msra.mxu0 0.0
        %2129 = vmatpush.msra.mxu0 0.0
        %2130 = vmatpush.msra.mxu0 0.0
        %2131 = vmatpush.msra.mxu0 0.0
        %2132 = vmatpush.msra.mxu0 0.0
        %2133 = vmatpush.msra.mxu0 0.0
        %2134 = vmatpush.msra.mxu0 0.0
        %2135 = vmatpush.msra.mxu0 0.0
        %2136 = vmatpush.msra.mxu0 0.0
        %2137 = vmatpush.msra.mxu0 0.0
        %2138 = vmatpush.msra.mxu0 0.0
        %2139 = vmatpush.msra.mxu0 0.0
        %2140 = vmatpush.msra.mxu0 %v2096
        %2141 = vmatpush.msra.mxu0 %v2092
        %2142 = vmatpush.msra.mxu0 %v2088
        %2143 = vmatpush.msra.mxu0 %v2084
        %2144 = vmatmul.f32.gmra.mxu0 %v2117
        %v2145 = vpop.f32.mrf.mxu0
        %v2146 = vadd.f32 0.0, %v2145
        %2147 = vmatmul.f32.gmra.mxu0 %v2120
        %v2148 = vpop.f32.mrf.mxu0
        %v2149 = vadd.f32 0.0, %v2148
        %2150 = vmatmul.f32.gmra.mxu0 %v2123
        %v2151 = vpop.f32.mrf.mxu0
        %v2152 = vadd.f32 0.0, %v2151
        %2153 = vmatmul.f32.gmra.mxu0 %v2126
        %v2154 = vpop.f32.mrf.mxu0
        %v2155 = vadd.f32 0.0, %v2154
        %2156 = vdwg.mxu0
        %2157 = vmatpush.msra.mxu0 0.0
        %2158 = vmatpush.msra.mxu0 0.0
        %2159 = vmatpush.msra.mxu0 0.0
        %2160 = vmatpush.msra.mxu0 0.0
        %2161 = vmatpush.msra.mxu0 0.0
        %2162 = vmatpush.msra.mxu0 0.0
        %2163 = vmatpush.msra.mxu0 0.0
        %2164 = vmatpush.msra.mxu0 0.0
        %2165 = vmatpush.msra.mxu0 0.0
        %2166 = vmatpush.msra.mxu0 0.0
        %2167 = vmatpush.msra.mxu0 0.0
        %2168 = vmatpush.msra.mxu0 0.0
        %2169 = vmatpush.msra.mxu0 %v2097
        %2170 = vmatpush.msra.mxu0 %v2093
        %2171 = vmatpush.msra.mxu0 %v2089
        %2172 = vmatpush.msra.mxu0 %v2085
        %2173 = vmatmul.f32.gmra.mxu0 %v2117
        %v2174 = vpop.f32.mrf.mxu0
        %v2175 = vadd.f32 0.0, %v2174
        %2176 = vmatmul.f32.gmra.mxu0 %v2120
        %v2177 = vpop.f32.mrf.mxu0
        %v2178 = vadd.f32 0.0, %v2177
        %2179 = vmatmul.f32.gmra.mxu0 %v2123
        %v2180 = vpop.f32.mrf.mxu0
        %v2181 = vadd.f32 0.0, %v2180
        %2182 = vmatmul.f32.gmra.mxu0 %v2126
        %v2183 = vpop.f32.mrf.mxu0
        %v2184 = vadd.f32 0.0, %v2183
        %2185 = vdwg.mxu0
        %2186 = vmatpush.msra.mxu0 0.0
        %2187 = vmatpush.msra.mxu0 0.0
        %2188 = vmatpush.msra.mxu0 0.0
        %2189 = vmatpush.msra.mxu0 0.0
        %2190 = vmatpush.msra.mxu0 0.0
        %2191 = vmatpush.msra.mxu0 0.0
        %2192 = vmatpush.msra.mxu0 0.0
        %2193 = vmatpush.msra.mxu0 0.0
        %2194 = vmatpush.msra.mxu0 0.0
        %2195 = vmatpush.msra.mxu0 0.0
        %2196 = vmatpush.msra.mxu0 0.0
        %2197 = vmatpush.msra.mxu0 0.0
        %2198 = vmatpush.msra.mxu0 %v2098
        %2199 = vmatpush.msra.mxu0 %v2094
        %2200 = vmatpush.msra.mxu0 %v2090
        %2201 = vmatpush.msra.mxu0 %v2086
        %2202 = vmatmul.f32.gmra.mxu0 %v2117
        %v2203 = vpop.f32.mrf.mxu0
        %v2204 = vadd.f32 0.0, %v2203
        %2205 = vmatmul.f32.gmra.mxu0 %v2120
        %v2206 = vpop.f32.mrf.mxu0
        %v2207 = vadd.f32 0.0, %v2206
        %2208 = vmatmul.f32.gmra.mxu0 %v2123
        %v2209 = vpop.f32.mrf.mxu0
        %v2210 = vadd.f32 0.0, %v2209
        %2211 = vmatmul.f32.gmra.mxu0 %v2126
        %v2212 = vpop.f32.mrf.mxu0
        %v2213 = vadd.f32 0.0, %v2212
        %2214 = vdwg.mxu0
        %2215 = vmatpush.msra.mxu0 0.0
        %2216 = vmatpush.msra.mxu0 0.0
        %2217 = vmatpush.msra.mxu0 0.0
        %2218 = vmatpush.msra.mxu0 0.0
        %2219 = vmatpush.msra.mxu0 0.0
        %2220 = vmatpush.msra.mxu0 0.0
        %2221 = vmatpush.msra.mxu0 0.0
        %2222 = vmatpush.msra.mxu0 0.0
        %2223 = vmatpush.msra.mxu0 0.0
        %2224 = vmatpush.msra.mxu0 0.0
        %2225 = vmatpush.msra.mxu0 0.0
        %2226 = vmatpush.msra.mxu0 0.0
        %2227 = vmatpush.msra.mxu0 %v2099
        %2228 = vmatpush.msra.mxu0 %v2095
        %2229 = vmatpush.msra.mxu0 %v2091
        %2230 = vmatpush.msra.mxu0 %v2087
        %2231 = vmatmul.f32.gmra.mxu0 %v2117
        %v2232 = vpop.f32.mrf.mxu0
        %v2233 = vadd.f32 0.0, %v2232
        %2234 = vmatmul.f32.gmra.mxu0 %v2120
        %v2235 = vpop.f32.mrf.mxu0
        %v2236 = vadd.f32 0.0, %v2235
        %2237 = vmatmul.f32.gmra.mxu0 %v2123
        %v2238 = vpop.f32.mrf.mxu0
        %v2239 = vadd.f32 0.0, %v2238
        %2240 = vmatmul.f32.gmra.mxu0 %v2126
        %v2241 = vpop.f32.mrf.mxu0
        %v2242 = vadd.f32 0.0, %v2241
        %2243 = vdwg.mxu0
        %v2244 = vadd.f32 %v2022, %v2146
        %v2245 = vadd.f32 %v2023, %v2175
        %v2246 = vadd.f32 %v2024, %v2204
        %v2247 = vadd.f32 %v2025, %v2233
        %v2248 = vadd.f32 %v2026, %v2149
        %v2249 = vadd.f32 %v2027, %v2178
        %v2250 = vadd.f32 %v2028, %v2207
        %v2251 = vadd.f32 %v2029, %v2236
        %v2252 = vadd.f32 %v2030, %v2152
        %v2253 = vadd.f32 %v2031, %v2181
        %v2254 = vadd.f32 %v2032, %v2210
        %v2255 = vadd.f32 %v2033, %v2239
        %v2256 = vadd.f32 %v2034, %v2155
        %v2257 = vadd.f32 %v2035, %v2184
        %v2258 = vadd.f32 %v2036, %v2213
        %v2259 = vadd.f32 %v2037, %v2242
        %s2260 = scalar_lea.vmem %s2, 256
        %v2261 = vld [vmem:[%s2260] sm:$0xff]
        %v2262 = vld [vmem:[%s2260 + $0x8] sm:$0xff]
        %v2263 = vld [vmem:[%s2260 + $0x10] sm:$0xff]
        %v2264 = vld [vmem:[%s2260 + $0x18] sm:$0xff]
        %2265 = vrot.lane.b32.xlu0 %v549, 86
        %v2266 = vpop.permute.xlu0 %2265
        %2267 = vrot.lane.b32.xlu0 %v550, 86
        %v2268 = vpop.permute.xlu0 %2267
        %2269 = vrot.lane.b32.xlu0 %v551, 86
        %v2270 = vpop.permute.xlu0 %2269
        %2271 = vrot.lane.b32.xlu0 %v552, 86
        %v2272 = vpop.permute.xlu0 %2271
        %2273 = vrot.lane.b32.xlu0 %v569, 86
        %v2274 = vpop.permute.xlu0 %2273
        %2275 = vrot.lane.b32.xlu0 %v553, 86
        %v2276 = vpop.permute.xlu0 %2275
        %2277 = vrot.lane.b32.xlu0 %v554, 86
        %v2278 = vpop.permute.xlu0 %2277
        %2279 = vrot.lane.b32.xlu0 %v555, 86
        %v2280 = vpop.permute.xlu0 %2279
        %2281 = vrot.lane.b32.xlu0 %v556, 86
        %v2282 = vpop.permute.xlu0 %2281
        %2283 = vrot.lane.b32.xlu0 %v570, 86
        %v2284 = vpop.permute.xlu0 %2283
        %2285 = vrot.lane.b32.xlu0 %v557, 86
        %v2286 = vpop.permute.xlu0 %2285
        %2287 = vrot.lane.b32.xlu0 %v558, 86
        %v2288 = vpop.permute.xlu0 %2287
        %2289 = vrot.lane.b32.xlu0 %v559, 86
        %v2290 = vpop.permute.xlu0 %2289
        %2291 = vrot.lane.b32.xlu0 %v560, 86
        %v2292 = vpop.permute.xlu0 %2291
        %2293 = vrot.lane.b32.xlu0 %v571, 86
        %v2294 = vpop.permute.xlu0 %2293
        %2295 = vrot.lane.b32.xlu0 %v561, 86
        %v2296 = vpop.permute.xlu0 %2295
        %2297 = vrot.lane.b32.xlu0 %v562, 86
        %v2298 = vpop.permute.xlu0 %2297
        %2299 = vrot.lane.b32.xlu0 %v563, 86
        %v2300 = vpop.permute.xlu0 %2299
        %2301 = vrot.lane.b32.xlu0 %v564, 86
        %v2302 = vpop.permute.xlu0 %2301
        %2303 = vrot.lane.b32.xlu0 %v572, 86
        %v2304 = vpop.permute.xlu0 %2303
        %vm2305 = vcmask 703488
        %v2306 = vsel %vm2305, %v2266, %v2268
        %v2307 = vsel %vm2305, %v2268, %v2270
        %v2308 = vsel %vm2305, %v2270, %v2272
        %v2309 = vsel %vm2305, %v2272, %v2274
        %v2310 = vsel %vm2305, %v2276, %v2278
        %v2311 = vsel %vm2305, %v2278, %v2280
        %v2312 = vsel %vm2305, %v2280, %v2282
        %v2313 = vsel %vm2305, %v2282, %v2284
        %v2314 = vsel %vm2305, %v2286, %v2288
        %v2315 = vsel %vm2305, %v2288, %v2290
        %v2316 = vsel %vm2305, %v2290, %v2292
        %v2317 = vsel %vm2305, %v2292, %v2294
        %v2318 = vsel %vm2305, %v2296, %v2298
        %v2319 = vsel %vm2305, %v2298, %v2300
        %v2320 = vsel %vm2305, %v2300, %v2302
        %v2321 = vsel %vm2305, %v2302, %v2304
        %v2339 = vsel %vm671, %v2261, 0
        %v2342 = vsel %vm671, %v2262, 0
        %v2345 = vsel %vm671, %v2263, 0
        %v2348 = vsel %vm671, %v2264, 0
        %2350 = vmatpush.msra.mxu0 0.0
        %2351 = vmatpush.msra.mxu0 0.0
        %2352 = vmatpush.msra.mxu0 0.0
        %2353 = vmatpush.msra.mxu0 0.0
        %2354 = vmatpush.msra.mxu0 0.0
        %2355 = vmatpush.msra.mxu0 0.0
        %2356 = vmatpush.msra.mxu0 0.0
        %2357 = vmatpush.msra.mxu0 0.0
        %2358 = vmatpush.msra.mxu0 0.0
        %2359 = vmatpush.msra.mxu0 0.0
        %2360 = vmatpush.msra.mxu0 0.0
        %2361 = vmatpush.msra.mxu0 0.0
        %2362 = vmatpush.msra.mxu0 %v2318
        %2363 = vmatpush.msra.mxu0 %v2314
        %2364 = vmatpush.msra.mxu0 %v2310
        %2365 = vmatpush.msra.mxu0 %v2306
        %2366 = vmatmul.f32.gmra.mxu0 %v2339
        %v2367 = vpop.f32.mrf.mxu0
        %v2368 = vadd.f32 0.0, %v2367
        %2369 = vmatmul.f32.gmra.mxu0 %v2342
        %v2370 = vpop.f32.mrf.mxu0
        %v2371 = vadd.f32 0.0, %v2370
        %2372 = vmatmul.f32.gmra.mxu0 %v2345
        %v2373 = vpop.f32.mrf.mxu0
        %v2374 = vadd.f32 0.0, %v2373
        %2375 = vmatmul.f32.gmra.mxu0 %v2348
        %v2376 = vpop.f32.mrf.mxu0
        %v2377 = vadd.f32 0.0, %v2376
        %2378 = vdwg.mxu0
        %2379 = vmatpush.msra.mxu0 0.0
        %2380 = vmatpush.msra.mxu0 0.0
        %2381 = vmatpush.msra.mxu0 0.0
        %2382 = vmatpush.msra.mxu0 0.0
        %2383 = vmatpush.msra.mxu0 0.0
        %2384 = vmatpush.msra.mxu0 0.0
        %2385 = vmatpush.msra.mxu0 0.0
        %2386 = vmatpush.msra.mxu0 0.0
        %2387 = vmatpush.msra.mxu0 0.0
        %2388 = vmatpush.msra.mxu0 0.0
        %2389 = vmatpush.msra.mxu0 0.0
        %2390 = vmatpush.msra.mxu0 0.0
        %2391 = vmatpush.msra.mxu0 %v2319
        %2392 = vmatpush.msra.mxu0 %v2315
        %2393 = vmatpush.msra.mxu0 %v2311
        %2394 = vmatpush.msra.mxu0 %v2307
        %2395 = vmatmul.f32.gmra.mxu0 %v2339
        %v2396 = vpop.f32.mrf.mxu0
        %v2397 = vadd.f32 0.0, %v2396
        %2398 = vmatmul.f32.gmra.mxu0 %v2342
        %v2399 = vpop.f32.mrf.mxu0
        %v2400 = vadd.f32 0.0, %v2399
        %2401 = vmatmul.f32.gmra.mxu0 %v2345
        %v2402 = vpop.f32.mrf.mxu0
        %v2403 = vadd.f32 0.0, %v2402
        %2404 = vmatmul.f32.gmra.mxu0 %v2348
        %v2405 = vpop.f32.mrf.mxu0
        %v2406 = vadd.f32 0.0, %v2405
        %2407 = vdwg.mxu0
        %2408 = vmatpush.msra.mxu0 0.0
        %2409 = vmatpush.msra.mxu0 0.0
        %2410 = vmatpush.msra.mxu0 0.0
        %2411 = vmatpush.msra.mxu0 0.0
        %2412 = vmatpush.msra.mxu0 0.0
        %2413 = vmatpush.msra.mxu0 0.0
        %2414 = vmatpush.msra.mxu0 0.0
        %2415 = vmatpush.msra.mxu0 0.0
        %2416 = vmatpush.msra.mxu0 0.0
        %2417 = vmatpush.msra.mxu0 0.0
        %2418 = vmatpush.msra.mxu0 0.0
        %2419 = vmatpush.msra.mxu0 0.0
        %2420 = vmatpush.msra.mxu0 %v2320
        %2421 = vmatpush.msra.mxu0 %v2316
        %2422 = vmatpush.msra.mxu0 %v2312
        %2423 = vmatpush.msra.mxu0 %v2308
        %2424 = vmatmul.f32.gmra.mxu0 %v2339
        %v2425 = vpop.f32.mrf.mxu0
        %v2426 = vadd.f32 0.0, %v2425
        %2427 = vmatmul.f32.gmra.mxu0 %v2342
        %v2428 = vpop.f32.mrf.mxu0
        %v2429 = vadd.f32 0.0, %v2428
        %2430 = vmatmul.f32.gmra.mxu0 %v2345
        %v2431 = vpop.f32.mrf.mxu0
        %v2432 = vadd.f32 0.0, %v2431
        %2433 = vmatmul.f32.gmra.mxu0 %v2348
        %v2434 = vpop.f32.mrf.mxu0
        %v2435 = vadd.f32 0.0, %v2434
        %2436 = vdwg.mxu0
        %2437 = vmatpush.msra.mxu0 0.0
        %2438 = vmatpush.msra.mxu0 0.0
        %2439 = vmatpush.msra.mxu0 0.0
        %2440 = vmatpush.msra.mxu0 0.0
        %2441 = vmatpush.msra.mxu0 0.0
        %2442 = vmatpush.msra.mxu0 0.0
        %2443 = vmatpush.msra.mxu0 0.0
        %2444 = vmatpush.msra.mxu0 0.0
        %2445 = vmatpush.msra.mxu0 0.0
        %2446 = vmatpush.msra.mxu0 0.0
        %2447 = vmatpush.msra.mxu0 0.0
        %2448 = vmatpush.msra.mxu0 0.0
        %2449 = vmatpush.msra.mxu0 %v2321
        %2450 = vmatpush.msra.mxu0 %v2317
        %2451 = vmatpush.msra.mxu0 %v2313
        %2452 = vmatpush.msra.mxu0 %v2309
        %2453 = vmatmul.f32.gmra.mxu0 %v2339
        %v2454 = vpop.f32.mrf.mxu0
        %v2455 = vadd.f32 0.0, %v2454
        %2456 = vmatmul.f32.gmra.mxu0 %v2342
        %v2457 = vpop.f32.mrf.mxu0
        %v2458 = vadd.f32 0.0, %v2457
        %2459 = vmatmul.f32.gmra.mxu0 %v2345
        %v2460 = vpop.f32.mrf.mxu0
        %v2461 = vadd.f32 0.0, %v2460
        %2462 = vmatmul.f32.gmra.mxu0 %v2348
        %v2463 = vpop.f32.mrf.mxu0
        %v2464 = vadd.f32 0.0, %v2463
        %2465 = vdwg.mxu0
        %v2466 = vadd.f32 %v2244, %v2368
        %v2467 = vadd.f32 %v2245, %v2397
        %v2468 = vadd.f32 %v2246, %v2426
        %v2469 = vadd.f32 %v2247, %v2455
        %v2470 = vadd.f32 %v2248, %v2371
        %v2471 = vadd.f32 %v2249, %v2400
        %v2472 = vadd.f32 %v2250, %v2429
        %v2473 = vadd.f32 %v2251, %v2458
        %v2474 = vadd.f32 %v2252, %v2374
        %v2475 = vadd.f32 %v2253, %v2403
        %v2476 = vadd.f32 %v2254, %v2432
        %v2477 = vadd.f32 %v2255, %v2461
        %v2478 = vadd.f32 %v2256, %v2377
        %v2479 = vadd.f32 %v2257, %v2406
        %v2480 = vadd.f32 %v2258, %v2435
        %v2481 = vadd.f32 %v2259, %v2464
        %v2482 = vld [vmem:[%s3] sm:$0xff]
        %v2483 = vld [vmem:[%s3 + $0x8] sm:$0xff]
        %v2484 = vld [vmem:[%s3 + $0x10] sm:$0xff]
        %v2485 = vld [vmem:[%s3 + $0x18] sm:$0xff]
        %2487 = vset.pattern.permute.xlu0 0
        %2488 = vperm.xlu0 %2487, %v2482
        %v2489 = vpop.permute.xlu0 %2488
        %2492 = vset.pattern.permute.xlu0 0
        %2493 = vperm.xlu0 %2492, %v2483
        %v2494 = vpop.permute.xlu0 %2493
        %2497 = vset.pattern.permute.xlu0 0
        %2498 = vperm.xlu0 %2497, %v2484
        %v2499 = vpop.permute.xlu0 %2498
        %2502 = vset.pattern.permute.xlu0 0
        %2503 = vperm.xlu0 %2502, %v2485
        %v2504 = vpop.permute.xlu0 %2503
        %v2506 = vadd.f32 %v2466, %v2489
        %v2507 = vadd.f32 %v2467, %v2489
        %v2508 = vadd.f32 %v2468, %v2489
        %v2509 = vadd.f32 %v2469, %v2489
        %v2510 = vadd.f32 %v2470, %v2494
        %v2511 = vadd.f32 %v2471, %v2494
        %v2512 = vadd.f32 %v2472, %v2494
        %v2513 = vadd.f32 %v2473, %v2494
        %v2514 = vadd.f32 %v2474, %v2499
        %v2515 = vadd.f32 %v2475, %v2499
        %v2516 = vadd.f32 %v2476, %v2499
        %v2517 = vadd.f32 %v2477, %v2499
        %v2518 = vadd.f32 %v2478, %v2504
        %v2519 = vadd.f32 %v2479, %v2504
        %v2520 = vadd.f32 %v2480, %v2504
        %v2521 = vadd.f32 %v2481, %v2504
        %v2522 = vld [vmem:[%s433] sm:$0xff]
        %v2523 = vld [vmem:[%s433 + $0x8] sm:$0xff]
        %v2524 = vld [vmem:[%s433 + $0x10] sm:$0xff]
        %v2525 = vld [vmem:[%s433 + $0x18] sm:$0xff]
        %v2526 = vld [vmem:[%s433 + $0x20] sm:$0xff]
        %v2527 = vld [vmem:[%s433 + $0x28] sm:$0xff]
        %v2528 = vld [vmem:[%s433 + $0x30] sm:$0xff]
        %v2529 = vld [vmem:[%s433 + $0x38] sm:$0xff]
        %v2530 = vld [vmem:[%s433 + $0x40] sm:$0xff]
        %v2531 = vld [vmem:[%s433 + $0x48] sm:$0xff]
        %v2532 = vld [vmem:[%s433 + $0x50] sm:$0xff]
        %v2533 = vld [vmem:[%s433 + $0x58] sm:$0xff]
        %v2534 = vld [vmem:[%s433 + $0x60] sm:$0xff]
        %v2535 = vld [vmem:[%s433 + $0x68] sm:$0xff]
        %v2536 = vld [vmem:[%s433 + $0x70] sm:$0xff]
        %v2537 = vld [vmem:[%s433 + $0x78] sm:$0xff]
        %v2538 = vadd.f32 %v2506, %v2522
        %v2539 = vadd.f32 %v2507, %v2523
        %v2540 = vadd.f32 %v2508, %v2524
        %v2541 = vadd.f32 %v2509, %v2525
        %v2542 = vadd.f32 %v2510, %v2526
        %v2543 = vadd.f32 %v2511, %v2527
        %v2544 = vadd.f32 %v2512, %v2528
        %v2545 = vadd.f32 %v2513, %v2529
        %v2546 = vadd.f32 %v2514, %v2530
        %v2547 = vadd.f32 %v2515, %v2531
        %v2548 = vadd.f32 %v2516, %v2532
        %v2549 = vadd.f32 %v2517, %v2533
        %v2550 = vadd.f32 %v2518, %v2534
        %v2551 = vadd.f32 %v2519, %v2535
        %v2552 = vadd.f32 %v2520, %v2536
        %v2553 = vadd.f32 %v2521, %v2537
        %2554 = vst [vmem:[%s466] sm:$0xff] %v2538
        %2555 = vst [vmem:[%s466 + $0x8] sm:$0xff] %v2539
        %2556 = vst [vmem:[%s466 + $0x10] sm:$0xff] %v2540
        %2557 = vst [vmem:[%s466 + $0x18] sm:$0xff] %v2541
        %2558 = vst [vmem:[%s466 + $0x20] sm:$0xff] %v2542
        %2559 = vst [vmem:[%s466 + $0x28] sm:$0xff] %v2543
        %2560 = vst [vmem:[%s466 + $0x30] sm:$0xff] %v2544
        %2561 = vst [vmem:[%s466 + $0x38] sm:$0xff] %v2545
        %2562 = vst [vmem:[%s466 + $0x40] sm:$0xff] %v2546
        %2563 = vst [vmem:[%s466 + $0x48] sm:$0xff] %v2547
        %2564 = vst [vmem:[%s466 + $0x50] sm:$0xff] %v2548
        %2565 = vst [vmem:[%s466 + $0x58] sm:$0xff] %v2549
        %2566 = vst [vmem:[%s466 + $0x60] sm:$0xff] %v2550
        %2567 = vst [vmem:[%s466 + $0x68] sm:$0xff] %v2551
        %2568 = vst [vmem:[%s466 + $0x70] sm:$0xff] %v2552
        %2569 = vst [vmem:[%s466 + $0x78] sm:$0xff] %v2553
        %v2570 = vld [vmem:[%s5] sm:$0xf]
        %v2572 = vsel %vm671, %v2570, 0
        %2574 = vmatpush.msra.mxu0 0.0
        %2575 = vmatpush.msra.mxu0 0.0
        %2576 = vmatpush.msra.mxu0 0.0
        %2577 = vmatpush.msra.mxu0 0.0
        %2578 = vmatpush.msra.mxu0 0.0
        %2579 = vmatpush.msra.mxu0 0.0
        %2580 = vmatpush.msra.mxu0 0.0
        %2581 = vmatpush.msra.mxu0 0.0
        %2582 = vmatpush.msra.mxu0 0.0
        %2583 = vmatpush.msra.mxu0 0.0
        %2584 = vmatpush.msra.mxu0 0.0
        %2585 = vmatpush.msra.mxu0 0.0
        %2586 = vmatpush.msra.mxu0 %v2550
        %2587 = vmatpush.msra.mxu0 %v2546
        %2588 = vmatpush.msra.mxu0 %v2542
        %2589 = vmatpush.msra.mxu0 %v2538
        %2590 = vmatmul.f32.gmra.mxu0 %v2572
        %v2591 = vpop.f32.mrf.mxu0
        %v2592 = vadd.f32 0.0, %v2591
        %2593 = vdwg.mxu0
        %2594 = vmatpush.msra.mxu0 0.0
        %2595 = vmatpush.msra.mxu0 0.0
        %2596 = vmatpush.msra.mxu0 0.0
        %2597 = vmatpush.msra.mxu0 0.0
        %2598 = vmatpush.msra.mxu0 0.0
        %2599 = vmatpush.msra.mxu0 0.0
        %2600 = vmatpush.msra.mxu0 0.0
        %2601 = vmatpush.msra.mxu0 0.0
        %2602 = vmatpush.msra.mxu0 0.0
        %2603 = vmatpush.msra.mxu0 0.0
        %2604 = vmatpush.msra.mxu0 0.0
        %2605 = vmatpush.msra.mxu0 0.0
        %2606 = vmatpush.msra.mxu0 %v2551
        %2607 = vmatpush.msra.mxu0 %v2547
        %2608 = vmatpush.msra.mxu0 %v2543
        %2609 = vmatpush.msra.mxu0 %v2539
        %2610 = vmatmul.f32.gmra.mxu0 %v2572
        %v2611 = vpop.f32.mrf.mxu0
        %v2612 = vadd.f32 0.0, %v2611
        %2613 = vdwg.mxu0
        %2614 = vmatpush.msra.mxu0 0.0
        %2615 = vmatpush.msra.mxu0 0.0
        %2616 = vmatpush.msra.mxu0 0.0
        %2617 = vmatpush.msra.mxu0 0.0
        %2618 = vmatpush.msra.mxu0 0.0
        %2619 = vmatpush.msra.mxu0 0.0
        %2620 = vmatpush.msra.mxu0 0.0
        %2621 = vmatpush.msra.mxu0 0.0
        %2622 = vmatpush.msra.mxu0 0.0
        %2623 = vmatpush.msra.mxu0 0.0
        %2624 = vmatpush.msra.mxu0 0.0
        %2625 = vmatpush.msra.mxu0 0.0
        %2626 = vmatpush.msra.mxu0 %v2552
        %2627 = vmatpush.msra.mxu0 %v2548
        %2628 = vmatpush.msra.mxu0 %v2544
        %2629 = vmatpush.msra.mxu0 %v2540
        %2630 = vmatmul.f32.gmra.mxu0 %v2572
        %v2631 = vpop.f32.mrf.mxu0
        %v2632 = vadd.f32 0.0, %v2631
        %2633 = vdwg.mxu0
        %2634 = vmatpush.msra.mxu0 0.0
        %2635 = vmatpush.msra.mxu0 0.0
        %2636 = vmatpush.msra.mxu0 0.0
        %2637 = vmatpush.msra.mxu0 0.0
        %2638 = vmatpush.msra.mxu0 0.0
        %2639 = vmatpush.msra.mxu0 0.0
        %2640 = vmatpush.msra.mxu0 0.0
        %2641 = vmatpush.msra.mxu0 0.0
        %2642 = vmatpush.msra.mxu0 0.0
        %2643 = vmatpush.msra.mxu0 0.0
        %2644 = vmatpush.msra.mxu0 0.0
        %2645 = vmatpush.msra.mxu0 0.0
        %2646 = vmatpush.msra.mxu0 %v2553
        %2647 = vmatpush.msra.mxu0 %v2549
        %2648 = vmatpush.msra.mxu0 %v2545
        %2649 = vmatpush.msra.mxu0 %v2541
        %2650 = vmatmul.f32.gmra.mxu0 %v2572
        %v2651 = vpop.f32.mrf.mxu0
        %v2652 = vadd.f32 0.0, %v2651
        %2653 = vdwg.mxu0
        %v2654 = vtanh.pop %v2592
        %v2655 = vtanh.pop %v2612
        %v2656 = vtanh.pop %v2632
        %v2657 = vtanh.pop %v2652
        %v2662 = vrot.slane %v2655, 4
        %v2663 = vrot.slane %v2657, 4
        %vm2664 = vcmask 1043456
        %v2665 = vsel %vm2664, %v2654, %v2662
        %v2666 = vsel %vm2664, %v2656, %v2663
        %2669 = vst [vmem:[%s483] sm:$0xff] %v2665
        %2670 = vst [vmem:[%s483 + $0x8] sm:$0xff] %v2666
        %s2671 = sand.u32 %s170, 1
        %s2672 = sand.u32 %s170, 1
        %s2673 = smul.addr %s2672, 128
        %s2674 = scalar_lea.vmem [#allocation6], %s2673
        %s2675 = smul.u32 4, %s19
        %p2676 = scmp.lt.s32.totalorder %s2675, 7
        %s2677 = scalar_select %p2676, %s2675, 7
        %s2678 = smul.addr %s2677, 4
        %s2679 = scalar_lea.vmem %s7, %s2678
        // Predicated region
        $region114: #{augmenter_forward.13} parent=100 // pred_check
          %p2680 = pneg %p180
        $region115: #{augmenter_forward.13} parent=100 // pred_check_branch
          %2682 = sbr.rel (%p2680) target = $region117
        $region116: #{augmenter_forward.13} parent=100 // pred_region
          %s2683 = smul.u32 4, %s19
          %s2684 = smul.addr %s2683, 8
          %s2685 = scalar_lea.vmem %s6, %s2684
          // Predicated region
          $region118: #{augmenter_forward.13} parent=116 // pred_check
            _
          $region119: #{augmenter_forward.13} parent=116 // pred_check_branch
            %2687 = sbr.rel (0) target = $region121
          $region120: #{augmenter_forward.13} parent=116 // pred_region
            // Predicated region
            $region122: #{augmenter_forward.13} parent=120 // pred_check
              _
            $region123: #{augmenter_forward.13} parent=120 // pred_check_branch
              %2689 = sbr.rel (0) target = $region125
            $region124: #{augmenter_forward.13} parent=120 // pred_region
              loop: start=0, step=1, limit=1
              $region126: #{augmenter_forward.13} parent=124 // loop_pre_header
                _
              $region127: #{augmenter_forward.13} parent=124 // loop_header
                %s2691 = sphi 0, %s2695
                %p2692 = scmp.ge.s32.totalorder %s2691, 1
                %s2696 = sphi %s2674, %s2674
                %s2697 = sphi %s2685, %s2685
              $region128: #{augmenter_forward.13} parent=124 // loop_header_branch
                %2694 = sbr.rel (%p2692) target = $region132
              $region129: #{augmenter_forward.13} parent=124 // loop_body
                %v2698 = vld [vmem:[%s2696] sm:$0xff]
                %2699 = vst [vmem:[%s2697] sm:$0xff] %v2698
                %v2700 = vld [vmem:[%s2696 + $0x8] sm:$0xff]
                %2701 = vst [vmem:[%s2697 + $0x8] sm:$0xff] %v2700
                %v2702 = vld [vmem:[%s2696 + $0x10] sm:$0xff]
                %2703 = vst [vmem:[%s2697 + $0x10] sm:$0xff] %v2702
                %v2704 = vld [vmem:[%s2696 + $0x18] sm:$0xff]
                %2705 = vst [vmem:[%s2697 + $0x18] sm:$0xff] %v2704
                %v2706 = vld [vmem:[%s2696 + $0x20] sm:$0xff]
                %2707 = vst [vmem:[%s2697 + $0x40] sm:$0xff] %v2706
                %v2708 = vld [vmem:[%s2696 + $0x28] sm:$0xff]
                %2709 = vst [vmem:[%s2697 + $0x48] sm:$0xff] %v2708
                %v2710 = vld [vmem:[%s2696 + $0x30] sm:$0xff]
                %2711 = vst [vmem:[%s2697 + $0x50] sm:$0xff] %v2710
                %v2712 = vld [vmem:[%s2696 + $0x38] sm:$0xff]
                %2713 = vst [vmem:[%s2697 + $0x58] sm:$0xff] %v2712
                %v2714 = vld [vmem:[%s2696 + $0x40] sm:$0xff]
                %2715 = vst [vmem:[%s2697 + $0x80] sm:$0xff] %v2714
                %v2716 = vld [vmem:[%s2696 + $0x48] sm:$0xff]
                %2717 = vst [vmem:[%s2697 + $0x88] sm:$0xff] %v2716
                %v2718 = vld [vmem:[%s2696 + $0x50] sm:$0xff]
                %2719 = vst [vmem:[%s2697 + $0x90] sm:$0xff] %v2718
                %v2720 = vld [vmem:[%s2696 + $0x58] sm:$0xff]
                %2721 = vst [vmem:[%s2697 + $0x98] sm:$0xff] %v2720
                %v2722 = vld [vmem:[%s2696 + $0x60] sm:$0xff]
                %2723 = vst [vmem:[%s2697 + $0xc0] sm:$0xff] %v2722
                %v2724 = vld [vmem:[%s2696 + $0x68] sm:$0xff]
                %2725 = vst [vmem:[%s2697 + $0xc8] sm:$0xff] %v2724
                %v2726 = vld [vmem:[%s2696 + $0x70] sm:$0xff]
                %2727 = vst [vmem:[%s2697 + $0xd0] sm:$0xff] %v2726
                %v2728 = vld [vmem:[%s2696 + $0x78] sm:$0xff]
                %2729 = vst [vmem:[%s2697 + $0xd8] sm:$0xff] %v2728
              $region130: #{augmenter_forward.13} parent=124 // loop_footer
                %s2695 = sadd.s32 1, %s2691
              $region131: #{augmenter_forward.13} parent=124 // loop_footer_branch
                %2690 = sbr.rel target = $region127
              $region132: #{augmenter_forward.13} parent=124 // loop_exit
                _
            $region125: #{augmenter_forward.13} parent=120 // pred_fallthru
              _
            // Predicated region
            $region133: #{augmenter_forward.13} parent=120 // pred_check
              _
            $region134: #{augmenter_forward.13} parent=120 // pred_check_branch
              %2731 = sbr.rel target = $region136
            $region135: #{augmenter_forward.13} parent=120 // pred_region
              _
            $region136: #{augmenter_forward.13} parent=120 // pred_fallthru
              _
          $region121: #{augmenter_forward.13} parent=116 // pred_fallthru
            _
          %2732 = vnop
        $region117: #{augmenter_forward.13} parent=100 // pred_fallthru
          _
        // Predicated region
        $region137: #{augmenter_forward.13} parent=100 // pred_check
          %p2733 = pneg %p206
        $region138: #{augmenter_forward.13} parent=100 // pred_check_branch
          %2735 = sbr.rel (%p2733) target = $region140
        $region139: #{augmenter_forward.13} parent=100 // pred_region
          %s2736 = smul.u32 4, %s19
        $region140: #{augmenter_forward.13} parent=100 // pred_fallthru
          _
      $region101: #{augmenter_forward.13} parent=5 // pred_fallthru
        _
      %p2737 = scmp.le.s32.totalorder 2, %s14
      // Predicated region
      $region141: #{augmenter_forward.13} parent=5 // pred_check
        %p2738 = pneg %p2737
      $region142: #{augmenter_forward.13} parent=5 // pred_check_branch
        %2740 = sbr.rel (%p2738) target = $region144
      $region143: #{augmenter_forward.13} parent=5 // pred_region
        %s2741 = ssub.s32 %s14, 2
        // Predicated region
        $region145: #{augmenter_forward.13} parent=143 // pred_check
          %p2742 = pneg %p186
        $region146: #{augmenter_forward.13} parent=143 // pred_check_branch
          %2744 = sbr.rel (%p2742) target = $region148
        $region147: #{augmenter_forward.13} parent=143 // pred_region
          %s2745 = sand.u32 %s171, 1
          %s2746 = sand.u32 %s171, 1
          %s2747 = smul.addr %s2746, 128
          %s2748 = scalar_lea.vmem [#allocation6], %s2747
        $region148: #{augmenter_forward.13} parent=143 // pred_fallthru
          _
        // Predicated region
        $region149: #{augmenter_forward.13} parent=143 // pred_check
          %p2749 = pneg %p212
        $region150: #{augmenter_forward.13} parent=143 // pred_check_branch
          %2751 = sbr.rel (%p2749) target = $region152
        $region151: #{augmenter_forward.13} parent=143 // pred_region
          %s2752 = smul.u32 4, %s20
          %p2753 = scmp.lt.s32.totalorder %s2752, 7
          %s2754 = scalar_select %p2753, %s2752, 7
          %s2755 = smul.addr %s2754, 4
          %s2756 = scalar_lea.vmem %s7, %s2755
        $region152: #{augmenter_forward.13} parent=143 // pred_fallthru
          _
      $region144: #{augmenter_forward.13} parent=5 // pred_fallthru
        _
    $region6: #{augmenter_forward.13} parent=1 // loop_footer
      %s18 = sadd.s32 1, %s14
    $region7: #{augmenter_forward.13} parent=1 // loop_footer_branch
      %13 = sbr.rel target = $region3
    $region8: #{augmenter_forward.13} parent=1 // loop_exit
      _

</llo_original>
